<compile_context>
chip_gen: v7x
topology: tpu7x:2x2x1
jax: 0.10.0
libtpu: 0.0.40
codegen_flags: <defaults>
</compile_context>

<pallas_src>
import functools

import jax
import jax.numpy as jnp
from jax.experimental import pallas as pl
from jax.experimental.pallas import tpu as pltpu


_TM_MAX = 2048     # max folded-M rows per output tile
_ROW_TILE = 512    # rows per elementwise tile
_LANES = 128


def _rup(x, m):
    return ((x + m - 1) // m) * m


def _cdiv(a, b):
    return -(-a // b)


def _pair(v):
    return (v, v) if isinstance(v, int) else tuple(v)


def _cout_pad(cout):
    """Smallest divisor of 128 that is >= cout (so g*cout_p == 128), else 128-multiple."""
    if cout <= _LANES:
        for d in (1, 2, 4, 8, 16, 32, 64, 128):
            if d >= cout:
                return d
    return _rup(cout, _LANES)


# ----------------------------------------------------------------------------
# Pallas kernels
# ----------------------------------------------------------------------------

def _fused_matmul_kernel(*refs, kt, act, has_skip, has_alpha):
    """Single grid axis over folded-M tiles.  All `kt` taps sit in the block; an
    unrolled tap loop accumulates f32 MXU matmuls, then the epilogue applies
    scale/shift (+skip) (+PReLU/ReLU) before one lane-dense store."""
    a_ref, w_ref, s_ref, t_ref = refs[:4]
    i = 4
    p_ref = None
    if has_alpha:
        p_ref = refs[i]
        i += 1
    k_ref = None
    if has_skip:
        k_ref = refs[i]
        i += 1
    o_ref = refs[i]

    acc = jnp.dot(a_ref[0], w_ref[0], preferred_element_type=jnp.float32)
    for t in range(1, kt):
        acc = acc + jnp.dot(a_ref[t], w_ref[t], preferred_element_type=jnp.float32)

    y = acc * s_ref[...] + t_ref[...]
    if has_skip:
        y = y + k_ref[...].astype(jnp.float32)
    if act == "prelu":
        y = jnp.where(y >= 0.0, y, y * p_ref[...])
    elif act == "relu":
        y = jnp.maximum(y, 0.0)
    o_ref[...] = y.astype(o_ref.dtype)


def fused_matmul(a_taps, w_taps, scale, shift, alpha=None, skip=None,
                 act="none", out_dtype=jnp.bfloat16):
    """y = (sum_t a_taps[t] @ w_taps[t]) * scale + shift (+skip), then PReLU/ReLU.

    a_taps: (KT, M, Cin)   w_taps: (KT, Cin, Cout)   returns (M, Cout) in out_dtype.
    Internally packs g = 128//Cout output pixels on the lane axis (block-diagonal
    weight) so stores are 128-lane dense and MXU K/N are well filled.
    """
    KT, M, Cin = a_taps.shape
    Cout = w_taps.shape[-1]

    cout_p = _cout_pad(Cout)
    g = max(1, _LANES // cout_p)
    # keep output >= 8 lanes and avoid silly M padding on tiny feature maps
    while g > 1 and M < 8 * g and g * cout_p > 8:
        g //= 2
    Ng = g * cout_p
    Kg = g * Cin
    Kgp = _rup(Kg, 16)                      # bf16 sublane packing on the weight operand

    mfold = _cdiv(M, g)
    nt = max(2, _cdiv(mfold, _TM_MAX)) if mfold >= 64 else 1   # >=2 tiles for v7x megacore
    tm = _rup(_cdiv(mfold, nt), 16)
    mfold_p = _rup(mfold, tm)
    Mp = mfold_p * g

    # activations: tap-stacked bf16, g-folded (free row-major reshape)
    a_p = a_taps.astype(jnp.bfloat16)
    if Mp != M:
        a_p = jnp.pad(a_p, ((0, 0), (0, Mp - M), (0, 0)))
    a_p = a_p.reshape(KT, mfold_p, Kg)
    if Kgp != Kg:
        a_p = jnp.pad(a_p, ((0, 0), (0, 0), (0, Kgp - Kg)))

    # block-diagonal weights: (KT, g*Cin, g*cout_p)  (constant-folded at compile time)
    w = w_taps.astype(jnp.float32)
    if cout_p != Cout:
        w = jnp.pad(w, ((0, 0), (0, 0), (0, cout_p - Cout)))
    if g > 1:
        eye = jnp.eye(g, dtype=jnp.float32)
        w = jnp.einsum("ij,tkc->tikjc", eye, w).reshape(KT, Kg, Ng)
    w = w.reshape(KT, Kg, Ng)
    if Kgp != Kg:
        w = jnp.pad(w, ((0, 0), (0, Kgp - Kg), (0, 0)))
    w_p = w.astype(jnp.bfloat16)

    def _row(v):
        v = jnp.pad(v.astype(jnp.float32), (0, cout_p - Cout))
        return jnp.tile(v, g).reshape(1, Ng)

    inputs = [a_p, w_p, _row(scale), _row(shift)]
    in_specs = [
        pl.BlockSpec((KT, tm, Kgp), lambda i: (0, i, 0)),
        pl.BlockSpec((KT, Kgp, Ng), lambda i: (0, 0, 0)),   # resident, DMA'd once
        pl.BlockSpec((1, Ng), lambda i: (0, 0)),
        pl.BlockSpec((1, Ng), lambda i: (0, 0)),
    ]
    has_alpha = act == "prelu"
    if has_alpha:
        inputs.append(_row(alpha))
        in_specs.append(pl.BlockSpec((1, Ng), lambda i: (0, 0)))
    has_skip = skip is not None
    if has_skip:
        k = skip.astype(jnp.bfloat16).reshape(M, Cout)
        if Mp != M:
            k = jnp.pad(k, ((0, Mp - M), (0, 0)))
        k = k.reshape(mfold_p, g, Cout)
        if cout_p != Cout:
            k = jnp.pad(k, ((0, 0), (0, 0), (0, cout_p - Cout)))
        inputs.append(k.reshape(mfold_p, Ng))
        in_specs.append(pl.BlockSpec((tm, Ng), lambda i: (i, 0)))

    out = pl.pallas_call(
        functools.partial(_fused_matmul_kernel, kt=KT, act=act,
                          has_skip=has_skip, has_alpha=has_alpha),
        out_shape=jax.ShapeDtypeStruct((mfold_p, Ng), out_dtype),
        grid=(mfold_p // tm,),
        in_specs=in_specs,
        out_specs=pl.BlockSpec((tm, Ng), lambda i: (i, 0)),
        compiler_params=pltpu.CompilerParams(
            dimension_semantics=("parallel",),
            vmem_limit_bytes=32 * 1024 * 1024),
    )(*inputs)

    out = out.reshape(mfold_p, g, cout_p)[:, :, :Cout].reshape(Mp, Cout)
    return out[:M]


def _affine_act_kernel(*refs, act, has_alpha):
    x_ref, s_ref, t_ref = refs[:3]
    i = 3
    p_ref = None
    if has_alpha:
        p_ref = refs[i]
        i += 1
    o_ref = refs[i]
    y = x_ref[...] * s_ref[...] + t_ref[...]
    if act == "prelu":
        y = jnp.where(y >= 0.0, y, y * p_ref[...])
    elif act == "relu":
        y = jnp.maximum(y, 0.0)
    o_ref[...] = y.astype(o_ref.dtype)


def affine_act(x, scale, shift, alpha=None, act="none", out_dtype=jnp.bfloat16):
    """y = x*scale[c] + shift[c] (+PReLU/ReLU).  Lane-dense when C divides 128."""
    C = x.shape[-1]
    shape = x.shape
    has_alpha = act == "prelu"

    if _LANES % C == 0:
        lanes = _LANES
        rep = lanes // C
        xf = x.reshape(-1).astype(jnp.float32)
        L = xf.shape[0]
        rows = _cdiv(L, lanes)
        x2 = jnp.pad(xf, (0, rows * lanes - L)).reshape(rows, lanes)
        s_row = jnp.tile(scale.astype(jnp.float32), rep).reshape(1, lanes)
        t_row = jnp.tile(shift.astype(jnp.float32), rep).reshape(1, lanes)
        p_row = (jnp.tile(alpha.astype(jnp.float32), rep).reshape(1, lanes)
                 if has_alpha else None)
    else:
        lanes = C
        x2 = x.reshape(-1, C).astype(jnp.float32)
        rows = x2.shape[0]
        L = rows * C
        s_row = scale.astype(jnp.float32).reshape(1, C)
        t_row = shift.astype(jnp.float32).reshape(1, C)
        p_row = alpha.astype(jnp.float32).reshape(1, C) if has_alpha else None

    tr = _ROW_TILE if rows >= _ROW_TILE else _rup(rows, 8)
    Rp = _rup(rows, tr)
    x2 = jnp.pad(x2, ((0, Rp - rows), (0, 0)))

    inputs = [x2, s_row, t_row]
    in_specs = [pl.BlockSpec((tr, lanes), lambda i: (i, 0)),
                pl.BlockSpec((1, lanes), lambda i: (0, 0)),
                pl.BlockSpec((1, lanes), lambda i: (0, 0))]
    if has_alpha:
        inputs.append(p_row)
        in_specs.append(pl.BlockSpec((1, lanes), lambda i: (0, 0)))

    out = pl.pallas_call(
        functools.partial(_affine_act_kernel, act=act, has_alpha=has_alpha),
        out_shape=jax.ShapeDtypeStruct((Rp, lanes), out_dtype),
        grid=(Rp // tr,),
        in_specs=in_specs,
        out_specs=pl.BlockSpec((tr, lanes), lambda i: (i, 0)),
        compiler_params=pltpu.CompilerParams(dimension_semantics=("parallel",)),
    )(*inputs)

    if _LANES % C == 0:
        return out.reshape(-1)[:L].reshape(shape)
    return out[:rows].reshape(shape)


# ----------------------------------------------------------------------------
# Conv application (tap gather in JAX, matmul + fused epilogue in Pallas)
# ----------------------------------------------------------------------------

def _tap_conv_fused(x, offsets, wmats, stride, pad, out_hw, cout,
                    scale, shift, alpha=None, skip=None, act="none",
                    out_dtype=jnp.bfloat16):
    """x: NHWC (bf16); offsets: (dy, dx) into the padded x; wmats: (KT, Cin, Cout)."""
    N, H, W, Cin = x.shape
    sh, sw = stride
    Ho, Wo = out_hw
    xp = x.astype(jnp.bfloat16)
    if pad != ((0, 0), (0, 0)):
        xp = jnp.pad(xp, ((0, 0), pad[0], pad[1], (0, 0)))
    cols = [xp[:, dy: dy + (Ho - 1) * sh + 1: sh,
               dx: dx + (Wo - 1) * sw + 1: sw, :] for dy, dx in offsets]
    a = jnp.stack(cols, axis=0).reshape(len(offsets), N * Ho * Wo, Cin)
    skip2 = skip.reshape(N * Ho * Wo, cout) if skip is not None else None
    y = fused_matmul(a, wmats, scale, shift, alpha=alpha, skip=skip2, act=act,
                     out_dtype=out_dtype)
    return y.reshape(N, Ho, Wo, cout)


def apply_conv(cp, x, skip=None, out_dtype=jnp.bfloat16):
    N, H, W, _ = x.shape
    kh, kw = cp["k"]
    sh, sw = cp["stride"]
    dh, dw = cp["dil"]
    ph = cp["pad"][0][0]
    pw = cp["pad"][1][0]
    Ho = (H + 2 * ph - dh * (kh - 1) - 1) // sh + 1
    Wo = (W + 2 * pw - dw * (kw - 1) - 1) // sw + 1
    return _tap_conv_fused(x, cp["offsets"], cp["wmats"], (sh, sw), cp["pad"],
                           (Ho, Wo), cp["cout"], cp["scale"], cp["shift"],
                           cp["alpha"], skip, cp["act"], out_dtype)


def _interleave_phases(y, N, H, W, C):
    """y: (N, H, W, 4, C) with phase q = 2r+s → (N, 2H, 2W, C)."""
    y = y.reshape(N, H, W, 2, 2, C).transpose(0, 1, 3, 2, 4, 5)
    return y.reshape(N, 2 * H, 2 * W, C)


def apply_deconv3(dp, x, out_dtype=jnp.bfloat16):
    """ConvTranspose2d(Cin,Cout,3,stride=2,padding=1,output_padding=1): all four
    sub-pixel phases batched in ONE fused call (phase-stacked Cout)."""
    N, H, W, _ = x.shape
    C = dp["cout"]
    y = _tap_conv_fused(x, ((0, 0), (0, 1), (1, 0), (1, 1)), dp["wmats"], (1, 1),
                        ((0, 1), (0, 1)), (H, W), 4 * C, dp["scale"], dp["shift"],
                        None, None, dp["act"], out_dtype)
    return _interleave_phases(y, N, H, W, C)


def apply_deconv2(dp, x, out_dtype=jnp.float32):
    """ConvTranspose2d(Cin,Cout,(2,2),(2,2)): four 1x1 phases in one fused call."""
    N, H, W, _ = x.shape
    C = dp["cout"]
    y = _tap_conv_fused(x, ((0, 0),), dp["wmats"], (1, 1), ((0, 0), (0, 0)),
                        (H, W), 4 * C, dp["scale"], dp["shift"], None, None,
                        "none", out_dtype)
    return _interleave_phases(y, N, H, W, C)


def maxpool2x2(x, return_indices=False):
    """2x2 / stride 2 max pool on NHWC. Indices are local (0..3) window argmax."""
    N, H, W, C = x.shape
    assert H % 2 == 0 and W % 2 == 0, "maxpool2x2 requires even spatial dims"
    x4 = x.reshape(N, H // 2, 2, W // 2, 2, C)
    win = jnp.stack([x4[:, :, 0, :, 0, :], x4[:, :, 0, :, 1, :],
                     x4[:, :, 1, :, 0, :], x4[:, :, 1, :, 1, :]], axis=3)
    vals = jnp.max(win, axis=3)
    if return_indices:
        idx = jnp.argmax(win, axis=3)
        return vals, idx
    return vals, None


def max_unpool2x2(x, idx):
    """Inverse of maxpool2x2 using the stored window argmax (F.max_unpool2d)."""
    N, Ho, Wo, C = x.shape
    onehot = (idx[..., None, :] == jnp.arange(4)[:, None]).astype(x.dtype)
    out4 = x[..., None, :] * onehot
    out = out4.reshape(N, Ho, Wo, 2, 2, C)
    return out.transpose(0, 1, 3, 2, 4, 5).reshape(N, 2 * Ho, 2 * Wo, C)


def bn_affine(bn):
    scale = bn["gamma"] / jnp.sqrt(bn["var"] + bn["eps"])
    shift = bn["beta"] - bn["mean"] * scale
    return scale, shift


# ----------------------------------------------------------------------------
# Parameter initialization (deterministic, shapes per the PyTorch __init__)
# ----------------------------------------------------------------------------

class _Keys:
    def __init__(self, key):
        self._k = key

    def __call__(self):
        self._k, sub = jax.random.split(self._k)
        return sub


def conv_init(kg, cout, cin, kh, kw, bias=True):
    std = (1.0 / max(cin * kh * kw, 1)) ** 0.5
    w = jax.random.normal(kg(), (cout, cin, kh, kw), jnp.float32) * std
    b = jax.random.normal(kg(), (cout,), jnp.float32) * std if bias else None
    return {"w": w, "b": b}


def deconv_init(kg, cin, cout, kh, kw, bias=True):
    std = (1.0 / max(cin * kh * kw, 1)) ** 0.5
    w = jax.random.normal(kg(), (cin, cout, kh, kw), jnp.float32) * std
    b = jax.random.normal(kg(), (cout,), jnp.float32) * std if bias else None
    return {"w": w, "b": b}


def bn_init(c):
    return {"gamma": jnp.ones((c,), jnp.float32), "beta": jnp.zeros((c,), jnp.float32),
            "mean": jnp.zeros((c,), jnp.float32), "var": jnp.ones((c,), jnp.float32),
            "eps": 1e-3}


def prelu_init(c):
    return jnp.full((c,), 0.25, jnp.float32)


def downsampler_init(kg, cin, cout):
    return {"type": "down",
            "conv": conv_init(kg, cout - cin, cin, 3, 3, bias=False),
            "bn": bn_init(cout), "prelu": prelu_init(cout)}


def bottleneck_init(kg, cin, cout, downsample=False, asym=None, dilation=1):
    bt = cin // 4
    s = 2 if downsample else 1
    p = {"type": "bottleneck", "downsample": downsample, "asym": asym,
         "dilation": dilation, "pad_c": cout - cin,
         "conv1": conv_init(kg, bt, cin, s, s, bias=False),
         "bn1": bn_init(bt), "prelu1": prelu_init(bt)}
    if asym is None:
        p["conv2"] = conv_init(kg, bt, bt, 3, 3, bias=True)
    else:
        p["conv2a"] = conv_init(kg, bt, bt, asym, 1, bias=False)
        p["conv2b"] = conv_init(kg, bt, bt, 1, asym, bias=True)
    p.update({"bn2": bn_init(bt), "prelu2": prelu_init(bt),
              "conv3": conv_init(kg, cout, bt, 1, 1, bias=False),
              "bn3": bn_init(cout), "prelu_out": prelu_init(cout)})
    return p


def upsampler_init(kg, cin, cout):
    bt = cin // 4
    return {"type": "up",
            "conv1": conv_init(kg, bt, cin, 1, 1, bias=False), "bn1": bn_init(bt),
            "deconv": deconv_init(kg, bt, bt, 3, 3, bias=True), "bn2": bn_init(bt),
            "conv3": conv_init(kg, cout, bt, 1, 1, bias=False), "bn3": bn_init(cout),
            "skip_conv": conv_init(kg, cout, cin, 1, 1, bias=False),
            "skip_bn": bn_init(cout)}


def enet_init(key, in_channels=1, out_channels=1, dc=32):
    kg = _Keys(key)
    return [downsampler_init(kg, in_channels, dc // 8),
            bottleneck_init(kg, dc // 8, dc // 2, downsample=True),
            bottleneck_init(kg, dc // 2, dc // 2),
            bottleneck_init(kg, dc // 2, dc // 2),
            bottleneck_init(kg, dc // 2, dc // 2),
            bottleneck_init(kg, dc // 2, dc // 2),
            bottleneck_init(kg, dc // 2, dc, downsample=True),
            bottleneck_init(kg, dc, dc),
            bottleneck_init(kg, dc, dc, dilation=2),
            bottleneck_init(kg, dc, dc, asym=5),
            bottleneck_init(kg, dc, dc, dilation=4),
            bottleneck_init(kg, dc, dc),
            bottleneck_init(kg, dc, dc, dilation=8),
            bottleneck_init(kg, dc, dc, asym=5),
            bottleneck_init(kg, dc, dc, dilation=16),
            bottleneck_init(kg, dc, dc),
            bottleneck_init(kg, dc, dc, dilation=2),
            bottleneck_init(kg, dc, dc, asym=5),
            bottleneck_init(kg, dc, dc, dilation=4),
            bottleneck_init(kg, dc, dc),
            bottleneck_init(kg, dc, dc, dilation=8),
            bottleneck_init(kg, dc, dc, asym=5),
            bottleneck_init(kg, dc, dc, dilation=16),
            upsampler_init(kg, dc, dc // 2),
            bottleneck_init(kg, dc // 2, dc // 2),
            bottleneck_init(kg, dc // 2, dc // 2),
            upsampler_init(kg, dc // 2, dc // 8),
            bottleneck_init(kg, dc // 8, dc // 8),
            {"type": "final",
             "deconv": deconv_init(kg, dc // 8, out_channels, 2, 2, bias=True)}]


# ----------------------------------------------------------------------------
# One-time prep: weight relayout, BN/bias folding, deconv phase stacking (hoisted)
# ----------------------------------------------------------------------------

def _prep_conv(conv, bn, alpha, act, stride=1, padding=0, dilation=1):
    w = conv["w"]                              # (Cout, Cin, kh, kw)
    cout, cin, kh, kw = w.shape
    wmats = jnp.transpose(w, (2, 3, 1, 0)).reshape(kh * kw, cin, cout)
    if bn is not None:
        scale, shift = bn_affine(bn)
    else:
        scale = jnp.ones((cout,), jnp.float32)
        shift = jnp.zeros((cout,), jnp.float32)
    if conv["b"] is not None:
        shift = shift + conv["b"].astype(jnp.float32) * scale
    sh, sw = _pair(stride)
    ph, pw = _pair(padding)
    dh, dw = _pair(dilation)
    offsets = tuple((i * dh, j * dw) for i in range(kh) for j in range(kw))
    return {"wmats": wmats, "scale": scale, "shift": shift, "alpha": alpha,
            "act": act, "stride": (sh, sw), "pad": ((ph, ph), (pw, pw)),
            "k": (kh, kw), "dil": (dh, dw), "offsets": offsets, "cout": cout}


def _prep_deconv3(deconv, bn, act="relu"):
    """Stack the 4 sub-pixel phases of ConvTranspose2d(3,3,s2,p1,op1) along Cout.
    Tap order: (0,0),(0,1),(1,0),(1,1); phase q = 2r+s."""
    w = deconv["w"]                            # (Cin, Cout, 3, 3)
    cin, cout = w.shape[0], w.shape[1]
    scale, shift = bn_affine(bn)
    if deconv["b"] is not None:
        shift = shift + deconv["b"].astype(jnp.float32) * scale
    z = jnp.zeros((cin, cout), jnp.float32)

    def wm(ky, kx):
        return w[:, :, ky, kx]

    taps = [jnp.concatenate([wm(1, 1), wm(1, 2), wm(2, 1), wm(2, 2)], axis=1),
            jnp.concatenate([z,        wm(1, 0), z,        wm(2, 0)], axis=1),
            jnp.concatenate([z,        z,        wm(0, 1), wm(0, 2)], axis=1),
            jnp.concatenate([z,        z,        z,        wm(0, 0)], axis=1)]
    return {"wmats": jnp.stack(taps, axis=0),          # (4, Cin, 4*Cout)
            "scale": jnp.tile(scale, 4), "shift": jnp.tile(shift, 4),
            "alpha": None, "act": act, "cout": cout}


def _prep_deconv2(deconv):
    """Stack the 4 one-tap phases of ConvTranspose2d(2,2,s2) along Cout."""
    w = deconv["w"]                            # (Cin, Cout, 2, 2)
    cout = w.shape[1]
    wmats = jnp.concatenate([w[:, :, 0, 0], w[:, :, 0, 1],
                             w[:, :, 1, 0], w[:, :, 1, 1]], axis=1)[None]
    b = (deconv["b"].astype(jnp.float32) if deconv["b"] is not None
         else jnp.zeros((cout,), jnp.float32))
    return {"wmats": wmats, "scale": jnp.ones((4 * cout,), jnp.float32),
            "shift": jnp.tile(b, 4), "alpha": None, "act": "none", "cout": cout}


def enet_prepare(layers):
    plans = []
    for p in layers:
        t = p["type"]
        if t == "down":
            cin = p["conv"]["w"].shape[1]
            scale, shift = bn_affine(p["bn"])
            alpha = p["prelu"]
            cp = _prep_conv(p["conv"], None, alpha[cin:], "prelu",
                            stride=2, padding=1)
            cp["scale"], cp["shift"] = scale[cin:], shift[cin:]
            plans.append({"type": "down", "conv": cp,
                          "pool_scale": scale[:cin], "pool_shift": shift[:cin],
                          "pool_alpha": alpha[:cin]})
        elif t == "bottleneck":
            s = 2 if p["downsample"] else 1
            q = {"type": "bottleneck", "downsample": p["downsample"],
                 "pad_c": p["pad_c"],
                 "conv1": _prep_conv(p["conv1"], p["bn1"], p["prelu1"], "prelu",
                                     stride=s)}
            if p["asym"] is None:
                d = p["dilation"]
                q["conv2"] = _prep_conv(p["conv2"], p["bn2"], p["prelu2"], "prelu",
                                        padding=d, dilation=d)
            else:
                pad = (p["asym"] - 1) // 2
                q["conv2a"] = _prep_conv(p["conv2a"], None, None, "none",
                                         padding=(pad, 0))
                q["conv2b"] = _prep_conv(p["conv2b"], p["bn2"], p["prelu2"],
                                         "prelu", padding=(0, pad))
            # Dropout2d: identity at inference time.
            q["conv3"] = _prep_conv(p["conv3"], p["bn3"], p["prelu_out"], "prelu")
            plans.append(q)
        elif t == "up":
            plans.append({"type": "up",
                          "skip_conv": _prep_conv(p["skip_conv"], p["skip_bn"],
                                                  None, "none"),
                          "conv1": _prep_conv(p["conv1"], p["bn1"], None, "relu"),
                          "deconv": _prep_deconv3(p["deconv"], p["bn2"], "relu"),
                          "conv3": _prep_conv(p["conv3"], p["bn3"], None, "relu")})
        else:
            plans.append({"type": "final", "deconv": _prep_deconv2(p["deconv"])})
    return plans


# ----------------------------------------------------------------------------
# Module forwards
# ----------------------------------------------------------------------------

def downsampler_fwd(p, x):
    pooled, _ = maxpool2x2(x)
    conv_out = apply_conv(p["conv"], x)                      # conv + BN[cin:] + PReLU
    pooled = affine_act(pooled, p["pool_scale"], p["pool_shift"],
                        p["pool_alpha"], act="prelu")        # BN[:cin] + PReLU
    return jnp.concatenate([pooled, conv_out], axis=-1)


def bottleneck_fwd(p, x):
    m = apply_conv(p["conv1"], x)
    if "conv2" in p:
        m = apply_conv(p["conv2"], m)
    else:
        m = apply_conv(p["conv2a"], m)
        m = apply_conv(p["conv2b"], m)
    if p["downsample"]:
        skip, idx = maxpool2x2(x, return_indices=True)
    else:
        skip, idx = x, None
    if p["pad_c"] > 0:
        skip = jnp.pad(skip, ((0, 0), (0, 0), (0, 0), (0, p["pad_c"])))
    # conv3 (1x1) fused with BN3 + residual add + output PReLU
    out = apply_conv(p["conv3"], m, skip=skip)
    return (out, idx) if p["downsample"] else out


def upsampler_fwd(p, x, idx):
    skip = apply_conv(p["skip_conv"], x)
    skip = max_unpool2x2(skip, idx)
    m = apply_conv(p["conv1"], x)
    m = apply_deconv3(p["deconv"], m)
    return apply_conv(p["conv3"], m, skip=skip)              # ReLU(skip + main)


def enet_forward(plans, x_nchw):
    x = jnp.transpose(x_nchw, (0, 2, 3, 1)).astype(jnp.bfloat16)   # NCHW -> NHWC
    stack = []
    for p in plans:
        t = p["type"]
        if t == "down":
            x = downsampler_fwd(p, x)
        elif t == "bottleneck":
            r = bottleneck_fwd(p, x)
            if isinstance(r, tuple):
                x, idx = r
                stack.append(idx)
            else:
                x = r
        elif t == "up":
            x = upsampler_fwd(p, x, stack.pop())
        else:
            x = apply_deconv2(p["deconv"], x, out_dtype=jnp.float32)
    return jnp.transpose(x, (0, 3, 1, 2)).astype(jnp.float32)       # NHWC -> NCHW


# ----------------------------------------------------------------------------

if __name__ == "__main__":
    key = jax.random.PRNGKey(0)
    pkey, xkey = jax.random.split(key)
    # small deterministic example: batch=2, in_channels=1, 16x16, decoder_channels=32
    layers = enet_init(pkey, in_channels=1, out_channels=1, dc=32)
    plans = enet_prepare(layers)          # one-time constant prep (hoisted out of jit)
    x = jax.random.normal(xkey, (2, 1, 16, 16), jnp.float32)

    fwd = jax.jit(lambda inp: enet_forward(plans, inp))
    y = jax.block_until_ready(fwd(x))

    assert y.shape == (2, 1, 16, 16), y.shape
    assert bool(jnp.all(jnp.isfinite(y)))
    print("KERNEL_OK")
</pallas_src>

<mosaic_0001>
module attributes {stable_mosaic.version = 11 : i64} {
  func.func @_fused_matmul_kernel(%arg0: i32, %arg1: memref<9x16x16xbf16, #tpu.memory_space<vmem>>, %arg2: memref<9x16x64xbf16, #tpu.memory_space<vmem>>, %arg3: memref<1x64xf32, #tpu.memory_space<vmem>>, %arg4: memref<1x64xf32, #tpu.memory_space<vmem>>, %arg5: memref<1x64xf32, #tpu.memory_space<vmem>>, %arg6: memref<16x64xbf16, #tpu.memory_space<vmem>>) attributes {dimension_semantics = [#tpu.dimension_semantics<parallel>], iteration_bounds = array<i64: 1>, scalar_prefetch = 0 : i64, scratch_operands = 0 : i64, tpu.core_type = #tpu.core_type<tc>, window_params = [{transform_indices = @transform_0, window_bounds = array<i64: 9, 16, 16>}, {pipeline_mode = #tpu.pipeline_mode<synchronous>, transform_indices = @transform_1, window_bounds = array<i64: 9, 16, 64>}, {pipeline_mode = #tpu.pipeline_mode<synchronous>, transform_indices = @transform_2, window_bounds = array<i64: 1, 64>}, {pipeline_mode = #tpu.pipeline_mode<synchronous>, transform_indices = @transform_3, window_bounds = array<i64: 1, 64>}, {pipeline_mode = #tpu.pipeline_mode<synchronous>, transform_indices = @transform_4, window_bounds = array<i64: 1, 64>}, {transform_indices = @transform_5, window_bounds = array<i64: 16, 64>}]} {
    %c0 = arith.constant 0 : index
    %c0_0 = arith.constant 0 : index
    %c0_1 = arith.constant 0 : index
    %0 = vector.load %arg1[%c0, %c0_0, %c0_1] : memref<9x16x16xbf16, #tpu.memory_space<vmem>>, vector<1x16x16xbf16>
    %1 = vector.shape_cast %0 : vector<1x16x16xbf16> to vector<16x16xbf16>
    %c0_2 = arith.constant 0 : index
    %c0_3 = arith.constant 0 : index
    %c0_4 = arith.constant 0 : index
    %2 = vector.load %arg2[%c0_2, %c0_3, %c0_4] : memref<9x16x64xbf16, #tpu.memory_space<vmem>>, vector<1x16x64xbf16>
    %3 = vector.shape_cast %2 : vector<1x16x64xbf16> to vector<16x64xbf16>
    %cst = arith.constant dense<0.000000e+00> : vector<16x64xf32>
    %4 = tpu.matmul %1, %3, %cst {dimension_numbers = #tpu.dot_dimension_numbers<[1], [0], [0], [1], [0, 0, 1, 1], [], []>} : vector<16x16xbf16>, vector<16x64xbf16>, vector<16x64xf32> -> vector<16x64xf32>
    %c1 = arith.constant 1 : index
    %c0_5 = arith.constant 0 : index
    %c0_6 = arith.constant 0 : index
    %5 = vector.load %arg1[%c1, %c0_5, %c0_6] : memref<9x16x16xbf16, #tpu.memory_space<vmem>>, vector<1x16x16xbf16>
    %6 = vector.shape_cast %5 : vector<1x16x16xbf16> to vector<16x16xbf16>
    %c1_7 = arith.constant 1 : index
    %c0_8 = arith.constant 0 : index
    %c0_9 = arith.constant 0 : index
    %7 = vector.load %arg2[%c1_7, %c0_8, %c0_9] : memref<9x16x64xbf16, #tpu.memory_space<vmem>>, vector<1x16x64xbf16>
    %8 = vector.shape_cast %7 : vector<1x16x64xbf16> to vector<16x64xbf16>
    %cst_10 = arith.constant dense<0.000000e+00> : vector<16x64xf32>
    %9 = tpu.matmul %6, %8, %cst_10 {dimension_numbers = #tpu.dot_dimension_numbers<[1], [0], [0], [1], [0, 0, 1, 1], [], []>} : vector<16x16xbf16>, vector<16x64xbf16>, vector<16x64xf32> -> vector<16x64xf32>
    %10 = arith.addf %4, %9 : vector<16x64xf32>
    %c2 = arith.constant 2 : index
    %c0_11 = arith.constant 0 : index
    %c0_12 = arith.constant 0 : index
    %11 = vector.load %arg1[%c2, %c0_11, %c0_12] : memref<9x16x16xbf16, #tpu.memory_space<vmem>>, vector<1x16x16xbf16>
    %12 = vector.shape_cast %11 : vector<1x16x16xbf16> to vector<16x16xbf16>
    %c2_13 = arith.constant 2 : index
    %c0_14 = arith.constant 0 : index
    %c0_15 = arith.constant 0 : index
    %13 = vector.load %arg2[%c2_13, %c0_14, %c0_15] : memref<9x16x64xbf16, #tpu.memory_space<vmem>>, vector<1x16x64xbf16>
    %14 = vector.shape_cast %13 : vector<1x16x64xbf16> to vector<16x64xbf16>
    %cst_16 = arith.constant dense<0.000000e+00> : vector<16x64xf32>
    %15 = tpu.matmul %12, %14, %cst_16 {dimension_numbers = #tpu.dot_dimension_numbers<[1], [0], [0], [1], [0, 0, 1, 1], [], []>} : vector<16x16xbf16>, vector<16x64xbf16>, vector<16x64xf32> -> vector<16x64xf32>
    %16 = arith.addf %10, %15 : vector<16x64xf32>
    %c3 = arith.constant 3 : index
    %c0_17 = arith.constant 0 : index
    %c0_18 = arith.constant 0 : index
    %17 = vector.load %arg1[%c3, %c0_17, %c0_18] : memref<9x16x16xbf16, #tpu.memory_space<vmem>>, vector<1x16x16xbf16>
    %18 = vector.shape_cast %17 : vector<1x16x16xbf16> to vector<16x16xbf16>
    %c3_19 = arith.constant 3 : index
    %c0_20 = arith.constant 0 : index
    %c0_21 = arith.constant 0 : index
    %19 = vector.load %arg2[%c3_19, %c0_20, %c0_21] : memref<9x16x64xbf16, #tpu.memory_space<vmem>>, vector<1x16x64xbf16>
    %20 = vector.shape_cast %19 : vector<1x16x64xbf16> to vector<16x64xbf16>
    %cst_22 = arith.constant dense<0.000000e+00> : vector<16x64xf32>
    %21 = tpu.matmul %18, %20, %cst_22 {dimension_numbers = #tpu.dot_dimension_numbers<[1], [0], [0], [1], [0, 0, 1, 1], [], []>} : vector<16x16xbf16>, vector<16x64xbf16>, vector<16x64xf32> -> vector<16x64xf32>
    %22 = arith.addf %16, %21 : vector<16x64xf32>
    %c4 = arith.constant 4 : index
    %c0_23 = arith.constant 0 : index
    %c0_24 = arith.constant 0 : index
    %23 = vector.load %arg1[%c4, %c0_23, %c0_24] : memref<9x16x16xbf16, #tpu.memory_space<vmem>>, vector<1x16x16xbf16>
    %24 = vector.shape_cast %23 : vector<1x16x16xbf16> to vector<16x16xbf16>
    %c4_25 = arith.constant 4 : index
    %c0_26 = arith.constant 0 : index
    %c0_27 = arith.constant 0 : index
    %25 = vector.load %arg2[%c4_25, %c0_26, %c0_27] : memref<9x16x64xbf16, #tpu.memory_space<vmem>>, vector<1x16x64xbf16>
    %26 = vector.shape_cast %25 : vector<1x16x64xbf16> to vector<16x64xbf16>
    %cst_28 = arith.constant dense<0.000000e+00> : vector<16x64xf32>
    %27 = tpu.matmul %24, %26, %cst_28 {dimension_numbers = #tpu.dot_dimension_numbers<[1], [0], [0], [1], [0, 0, 1, 1], [], []>} : vector<16x16xbf16>, vector<16x64xbf16>, vector<16x64xf32> -> vector<16x64xf32>
    %28 = arith.addf %22, %27 : vector<16x64xf32>
    %c5 = arith.constant 5 : index
    %c0_29 = arith.constant 0 : index
    %c0_30 = arith.constant 0 : index
    %29 = vector.load %arg1[%c5, %c0_29, %c0_30] : memref<9x16x16xbf16, #tpu.memory_space<vmem>>, vector<1x16x16xbf16>
    %30 = vector.shape_cast %29 : vector<1x16x16xbf16> to vector<16x16xbf16>
    %c5_31 = arith.constant 5 : index
    %c0_32 = arith.constant 0 : index
    %c0_33 = arith.constant 0 : index
    %31 = vector.load %arg2[%c5_31, %c0_32, %c0_33] : memref<9x16x64xbf16, #tpu.memory_space<vmem>>, vector<1x16x64xbf16>
    %32 = vector.shape_cast %31 : vector<1x16x64xbf16> to vector<16x64xbf16>
    %cst_34 = arith.constant dense<0.000000e+00> : vector<16x64xf32>
    %33 = tpu.matmul %30, %32, %cst_34 {dimension_numbers = #tpu.dot_dimension_numbers<[1], [0], [0], [1], [0, 0, 1, 1], [], []>} : vector<16x16xbf16>, vector<16x64xbf16>, vector<16x64xf32> -> vector<16x64xf32>
    %34 = arith.addf %28, %33 : vector<16x64xf32>
    %c6 = arith.constant 6 : index
    %c0_35 = arith.constant 0 : index
    %c0_36 = arith.constant 0 : index
    %35 = vector.load %arg1[%c6, %c0_35, %c0_36] : memref<9x16x16xbf16, #tpu.memory_space<vmem>>, vector<1x16x16xbf16>
    %36 = vector.shape_cast %35 : vector<1x16x16xbf16> to vector<16x16xbf16>
    %c6_37 = arith.constant 6 : index
    %c0_38 = arith.constant 0 : index
    %c0_39 = arith.constant 0 : index
    %37 = vector.load %arg2[%c6_37, %c0_38, %c0_39] : memref<9x16x64xbf16, #tpu.memory_space<vmem>>, vector<1x16x64xbf16>
    %38 = vector.shape_cast %37 : vector<1x16x64xbf16> to vector<16x64xbf16>
    %cst_40 = arith.constant dense<0.000000e+00> : vector<16x64xf32>
    %39 = tpu.matmul %36, %38, %cst_40 {dimension_numbers = #tpu.dot_dimension_numbers<[1], [0], [0], [1], [0, 0, 1, 1], [], []>} : vector<16x16xbf16>, vector<16x64xbf16>, vector<16x64xf32> -> vector<16x64xf32>
    %40 = arith.addf %34, %39 : vector<16x64xf32>
    %c7 = arith.constant 7 : index
    %c0_41 = arith.constant 0 : index
    %c0_42 = arith.constant 0 : index
    %41 = vector.load %arg1[%c7, %c0_41, %c0_42] : memref<9x16x16xbf16, #tpu.memory_space<vmem>>, vector<1x16x16xbf16>
    %42 = vector.shape_cast %41 : vector<1x16x16xbf16> to vector<16x16xbf16>
    %c7_43 = arith.constant 7 : index
    %c0_44 = arith.constant 0 : index
    %c0_45 = arith.constant 0 : index
    %43 = vector.load %arg2[%c7_43, %c0_44, %c0_45] : memref<9x16x64xbf16, #tpu.memory_space<vmem>>, vector<1x16x64xbf16>
    %44 = vector.shape_cast %43 : vector<1x16x64xbf16> to vector<16x64xbf16>
    %cst_46 = arith.constant dense<0.000000e+00> : vector<16x64xf32>
    %45 = tpu.matmul %42, %44, %cst_46 {dimension_numbers = #tpu.dot_dimension_numbers<[1], [0], [0], [1], [0, 0, 1, 1], [], []>} : vector<16x16xbf16>, vector<16x64xbf16>, vector<16x64xf32> -> vector<16x64xf32>
    %46 = arith.addf %40, %45 : vector<16x64xf32>
    %c8 = arith.constant 8 : index
    %c0_47 = arith.constant 0 : index
    %c0_48 = arith.constant 0 : index
    %47 = vector.load %arg1[%c8, %c0_47, %c0_48] : memref<9x16x16xbf16, #tpu.memory_space<vmem>>, vector<1x16x16xbf16>
    %48 = vector.shape_cast %47 : vector<1x16x16xbf16> to vector<16x16xbf16>
    %c8_49 = arith.constant 8 : index
    %c0_50 = arith.constant 0 : index
    %c0_51 = arith.constant 0 : index
    %49 = vector.load %arg2[%c8_49, %c0_50, %c0_51] : memref<9x16x64xbf16, #tpu.memory_space<vmem>>, vector<1x16x64xbf16>
    %50 = vector.shape_cast %49 : vector<1x16x64xbf16> to vector<16x64xbf16>
    %cst_52 = arith.constant dense<0.000000e+00> : vector<16x64xf32>
    %51 = tpu.matmul %48, %50, %cst_52 {dimension_numbers = #tpu.dot_dimension_numbers<[1], [0], [0], [1], [0, 0, 1, 1], [], []>} : vector<16x16xbf16>, vector<16x64xbf16>, vector<16x64xf32> -> vector<16x64xf32>
    %52 = arith.addf %46, %51 : vector<16x64xf32>
    %c0_53 = arith.constant 0 : index
    %c0_54 = arith.constant 0 : index
    %53 = vector.load %arg3[%c0_53, %c0_54] : memref<1x64xf32, #tpu.memory_space<vmem>>, vector<1x64xf32>
    %54 = vector.broadcast %53 : vector<1x64xf32> to vector<16x64xf32>
    %55 = arith.mulf %52, %54 : vector<16x64xf32>
    %c0_55 = arith.constant 0 : index
    %c0_56 = arith.constant 0 : index
    %56 = vector.load %arg4[%c0_55, %c0_56] : memref<1x64xf32, #tpu.memory_space<vmem>>, vector<1x64xf32>
    %57 = vector.broadcast %56 : vector<1x64xf32> to vector<16x64xf32>
    %58 = arith.addf %55, %57 : vector<16x64xf32>
    %cst_57 = arith.constant 0.000000e+00 : f32
    %59 = vector.broadcast %cst_57 : f32 to vector<16x64xf32>
    %60 = arith.cmpf oge, %58, %59 : vector<16x64xf32>
    %c0_58 = arith.constant 0 : index
    %c0_59 = arith.constant 0 : index
    %61 = vector.load %arg5[%c0_58, %c0_59] : memref<1x64xf32, #tpu.memory_space<vmem>>, vector<1x64xf32>
    %62 = vector.broadcast %61 : vector<1x64xf32> to vector<16x64xf32>
    %63 = arith.mulf %58, %62 : vector<16x64xf32>
    %64 = arith.select %60, %58, %63 : vector<16x64xi1>, vector<16x64xf32>
    %65 = arith.truncf %64 : vector<16x64xf32> to vector<16x64xbf16>
    %c0_60 = arith.constant 0 : index
    %c0_61 = arith.constant 0 : index
    %66 = vector.load %arg6[%c0_60, %c0_61] : memref<16x64xbf16, #tpu.memory_space<vmem>>, vector<16x64xbf16>
    tpu.vector_store %arg6[%c0_60, %c0_61], %65 {strides = array<i32>} : memref<16x64xbf16, #tpu.memory_space<vmem>>, vector<16x64xbf16>,
    return
  }
  func.func @transform_0(%arg0: i32) -> (i32, i32, i32) {
    %c0_i32 = arith.constant 0 : i32
    %c0_i32_0 = arith.constant 0 : i32
    %c0_i32_1 = arith.constant 0 : i32
    return %c0_i32, %arg0, %c0_i32_0 : i32, i32, i32
  }
  func.func @transform_1(%arg0: i32) -> (i32, i32, i32) {
    %c0_i32 = arith.constant 0 : i32
    %c0_i32_0 = arith.constant 0 : i32
    %c0_i32_1 = arith.constant 0 : i32
    %c0_i32_2 = arith.constant 0 : i32
    return %c0_i32, %c0_i32_0, %c0_i32_1 : i32, i32, i32
  }
  func.func @transform_2(%arg0: i32) -> (i32, i32) {
    %c0_i32 = arith.constant 0 : i32
    %c0_i32_0 = arith.constant 0 : i32
    %c0_i32_1 = arith.constant 0 : i32
    return %c0_i32, %c0_i32_0 : i32, i32
  }
  func.func @transform_3(%arg0: i32) -> (i32, i32) {
    %c0_i32 = arith.constant 0 : i32
    %c0_i32_0 = arith.constant 0 : i32
    %c0_i32_1 = arith.constant 0 : i32
    return %c0_i32, %c0_i32_0 : i32, i32
  }
  func.func @transform_4(%arg0: i32) -> (i32, i32) {
    %c0_i32 = arith.constant 0 : i32
    %c0_i32_0 = arith.constant 0 : i32
    %c0_i32_1 = arith.constant 0 : i32
    return %c0_i32, %c0_i32_0 : i32, i32
  }
  func.func @transform_5(%arg0: i32) -> (i32, i32) {
    %c0_i32 = arith.constant 0 : i32
    %c0_i32_0 = arith.constant 0 : i32
    return %arg0, %c0_i32 : i32, i32
  }
}

module attributes {stable_mosaic.version = 11 : i64} {
  func.func @_affine_act_kernel(%arg0: i32, %arg1: memref<8x128xf32, #tpu.memory_space<vmem>>, %arg2: memref<1x128xf32, #tpu.memory_space<vmem>>, %arg3: memref<1x128xf32, #tpu.memory_space<vmem>>, %arg4: memref<1x128xf32, #tpu.memory_space<vmem>>, %arg5: memref<8x128xbf16, #tpu.memory_space<vmem>>) attributes {dimension_semantics = [#tpu.dimension_semantics<parallel>], iteration_bounds = array<i64: 1>, scalar_prefetch = 0 : i64, scratch_operands = 0 : i64, tpu.core_type = #tpu.core_type<tc>, window_params = [{transform_indices = @transform_0, window_bounds = array<i64: 8, 128>}, {pipeline_mode = #tpu.pipeline_mode<synchronous>, transform_indices = @transform_1, window_bounds = array<i64: 1, 128>}, {pipeline_mode = #tpu.pipeline_mode<synchronous>, transform_indices = @transform_2, window_bounds = array<i64: 1, 128>}, {pipeline_mode = #tpu.pipeline_mode<synchronous>, transform_indices = @transform_3, window_bounds = array<i64: 1, 128>}, {transform_indices = @transform_4, window_bounds = array<i64: 8, 128>}]} {
    %c0 = arith.constant 0 : index
    %c0_0 = arith.constant 0 : index
    %0 = vector.load %arg1[%c0, %c0_0] : memref<8x128xf32, #tpu.memory_space<vmem>>, vector<8x128xf32>
    %c0_1 = arith.constant 0 : index
    %c0_2 = arith.constant 0 : index
    %1 = vector.load %arg2[%c0_1, %c0_2] : memref<1x128xf32, #tpu.memory_space<vmem>>, vector<1x128xf32>
    %2 = vector.broadcast %1 : vector<1x128xf32> to vector<8x128xf32>
    %3 = arith.mulf %0, %2 : vector<8x128xf32>
    %c0_3 = arith.constant 0 : index
    %c0_4 = arith.constant 0 : index
    %4 = vector.load %arg3[%c0_3, %c0_4] : memref<1x128xf32, #tpu.memory_space<vmem>>, vector<1x128xf32>
    %5 = vector.broadcast %4 : vector<1x128xf32> to vector<8x128xf32>
    %6 = arith.addf %3, %5 : vector<8x128xf32>
    %cst = arith.constant 0.000000e+00 : f32
    %7 = vector.broadcast %cst : f32 to vector<8x128xf32>
    %8 = arith.cmpf oge, %6, %7 : vector<8x128xf32>
    %c0_5 = arith.constant 0 : index
    %c0_6 = arith.constant 0 : index
    %9 = vector.load %arg4[%c0_5, %c0_6] : memref<1x128xf32, #tpu.memory_space<vmem>>, vector<1x128xf32>
    %10 = vector.broadcast %9 : vector<1x128xf32> to vector<8x128xf32>
    %11 = arith.mulf %6, %10 : vector<8x128xf32>
    %12 = arith.select %8, %6, %11 : vector<8x128xi1>, vector<8x128xf32>
    %13 = arith.truncf %12 : vector<8x128xf32> to vector<8x128xbf16>
    %c0_7 = arith.constant 0 : index
    %c0_8 = arith.constant 0 : index
    %14 = vector.load %arg5[%c0_7, %c0_8] : memref<8x128xbf16, #tpu.memory_space<vmem>>, vector<8x128xbf16>
    tpu.vector_store %arg5[%c0_7, %c0_8], %13 {strides = array<i32>} : memref<8x128xbf16, #tpu.memory_space<vmem>>, vector<8x128xbf16>,
    return
  }
  func.func @transform_0(%arg0: i32) -> (i32, i32) {
    %c0_i32 = arith.constant 0 : i32
    %c0_i32_0 = arith.constant 0 : i32
    return %arg0, %c0_i32 : i32, i32
  }
  func.func @transform_1(%arg0: i32) -> (i32, i32) {
    %c0_i32 = arith.constant 0 : i32
    %c0_i32_0 = arith.constant 0 : i32
    %c0_i32_1 = arith.constant 0 : i32
    return %c0_i32, %c0_i32_0 : i32, i32
  }
  func.func @transform_2(%arg0: i32) -> (i32, i32) {
    %c0_i32 = arith.constant 0 : i32
    %c0_i32_0 = arith.constant 0 : i32
    %c0_i32_1 = arith.constant 0 : i32
    return %c0_i32, %c0_i32_0 : i32, i32
  }
  func.func @transform_3(%arg0: i32) -> (i32, i32) {
    %c0_i32 = arith.constant 0 : i32
    %c0_i32_0 = arith.constant 0 : i32
    %c0_i32_1 = arith.constant 0 : i32
    return %c0_i32, %c0_i32_0 : i32, i32
  }
  func.func @transform_4(%arg0: i32) -> (i32, i32) {
    %c0_i32 = arith.constant 0 : i32
    %c0_i32_0 = arith.constant 0 : i32
    return %arg0, %c0_i32 : i32, i32
  }
}

module attributes {stable_mosaic.version = 11 : i64} {
  func.func @_fused_matmul_kernel(%arg0: i32, %arg1: memref<4x16x32xbf16, #tpu.memory_space<vmem>>, %arg2: memref<4x32x8xbf16, #tpu.memory_space<vmem>>, %arg3: memref<1x8xf32, #tpu.memory_space<vmem>>, %arg4: memref<1x8xf32, #tpu.memory_space<vmem>>, %arg5: memref<1x8xf32, #tpu.memory_space<vmem>>, %arg6: memref<16x8xbf16, #tpu.memory_space<vmem>>) attributes {dimension_semantics = [#tpu.dimension_semantics<parallel>], iteration_bounds = array<i64: 1>, scalar_prefetch = 0 : i64, scratch_operands = 0 : i64, tpu.core_type = #tpu.core_type<tc>, window_params = [{transform_indices = @transform_0, window_bounds = array<i64: 4, 16, 32>}, {pipeline_mode = #tpu.pipeline_mode<synchronous>, transform_indices = @transform_1, window_bounds = array<i64: 4, 32, 8>}, {pipeline_mode = #tpu.pipeline_mode<synchronous>, transform_indices = @transform_2, window_bounds = array<i64: 1, 8>}, {pipeline_mode = #tpu.pipeline_mode<synchronous>, transform_indices = @transform_3, window_bounds = array<i64: 1, 8>}, {pipeline_mode = #tpu.pipeline_mode<synchronous>, transform_indices = @transform_4, window_bounds = array<i64: 1, 8>}, {transform_indices = @transform_5, window_bounds = array<i64: 16, 8>}]} {
    %c0 = arith.constant 0 : index
    %c0_0 = arith.constant 0 : index
    %c0_1 = arith.constant 0 : index
    %0 = vector.load %arg1[%c0, %c0_0, %c0_1] : memref<4x16x32xbf16, #tpu.memory_space<vmem>>, vector<1x16x32xbf16>
    %1 = vector.shape_cast %0 : vector<1x16x32xbf16> to vector<16x32xbf16>
    %c0_2 = arith.constant 0 : index
    %c0_3 = arith.constant 0 : index
    %c0_4 = arith.constant 0 : index
    %2 = vector.load %arg2[%c0_2, %c0_3, %c0_4] : memref<4x32x8xbf16, #tpu.memory_space<vmem>>, vector<1x32x8xbf16>
    %3 = vector.shape_cast %2 : vector<1x32x8xbf16> to vector<32x8xbf16>
    %cst = arith.constant dense<0.000000e+00> : vector<16x8xf32>
    %4 = tpu.matmul %1, %3, %cst {dimension_numbers = #tpu.dot_dimension_numbers<[1], [0], [0], [1], [0, 0, 1, 1], [], []>} : vector<16x32xbf16>, vector<32x8xbf16>, vector<16x8xf32> -> vector<16x8xf32>
    %c1 = arith.constant 1 : index
    %c0_5 = arith.constant 0 : index
    %c0_6 = arith.constant 0 : index
    %5 = vector.load %arg1[%c1, %c0_5, %c0_6] : memref<4x16x32xbf16, #tpu.memory_space<vmem>>, vector<1x16x32xbf16>
    %6 = vector.shape_cast %5 : vector<1x16x32xbf16> to vector<16x32xbf16>
    %c1_7 = arith.constant 1 : index
    %c0_8 = arith.constant 0 : index
    %c0_9 = arith.constant 0 : index
    %7 = vector.load %arg2[%c1_7, %c0_8, %c0_9] : memref<4x32x8xbf16, #tpu.memory_space<vmem>>, vector<1x32x8xbf16>
    %8 = vector.shape_cast %7 : vector<1x32x8xbf16> to vector<32x8xbf16>
    %cst_10 = arith.constant dense<0.000000e+00> : vector<16x8xf32>
    %9 = tpu.matmul %6, %8, %cst_10 {dimension_numbers = #tpu.dot_dimension_numbers<[1], [0], [0], [1], [0, 0, 1, 1], [], []>} : vector<16x32xbf16>, vector<32x8xbf16>, vector<16x8xf32> -> vector<16x8xf32>
    %10 = arith.addf %4, %9 : vector<16x8xf32>
    %c2 = arith.constant 2 : index
    %c0_11 = arith.constant 0 : index
    %c0_12 = arith.constant 0 : index
    %11 = vector.load %arg1[%c2, %c0_11, %c0_12] : memref<4x16x32xbf16, #tpu.memory_space<vmem>>, vector<1x16x32xbf16>
    %12 = vector.shape_cast %11 : vector<1x16x32xbf16> to vector<16x32xbf16>
    %c2_13 = arith.constant 2 : index
    %c0_14 = arith.constant 0 : index
    %c0_15 = arith.constant 0 : index
    %13 = vector.load %arg2[%c2_13, %c0_14, %c0_15] : memref<4x32x8xbf16, #tpu.memory_space<vmem>>, vector<1x32x8xbf16>
    %14 = vector.shape_cast %13 : vector<1x32x8xbf16> to vector<32x8xbf16>
    %cst_16 = arith.constant dense<0.000000e+00> : vector<16x8xf32>
    %15 = tpu.matmul %12, %14, %cst_16 {dimension_numbers = #tpu.dot_dimension_numbers<[1], [0], [0], [1], [0, 0, 1, 1], [], []>} : vector<16x32xbf16>, vector<32x8xbf16>, vector<16x8xf32> -> vector<16x8xf32>
    %16 = arith.addf %10, %15 : vector<16x8xf32>
    %c3 = arith.constant 3 : index
    %c0_17 = arith.constant 0 : index
    %c0_18 = arith.constant 0 : index
    %17 = vector.load %arg1[%c3, %c0_17, %c0_18] : memref<4x16x32xbf16, #tpu.memory_space<vmem>>, vector<1x16x32xbf16>
    %18 = vector.shape_cast %17 : vector<1x16x32xbf16> to vector<16x32xbf16>
    %c3_19 = arith.constant 3 : index
    %c0_20 = arith.constant 0 : index
    %c0_21 = arith.constant 0 : index
    %19 = vector.load %arg2[%c3_19, %c0_20, %c0_21] : memref<4x32x8xbf16, #tpu.memory_space<vmem>>, vector<1x32x8xbf16>
    %20 = vector.shape_cast %19 : vector<1x32x8xbf16> to vector<32x8xbf16>
    %cst_22 = arith.constant dense<0.000000e+00> : vector<16x8xf32>
    %21 = tpu.matmul %18, %20, %cst_22 {dimension_numbers = #tpu.dot_dimension_numbers<[1], [0], [0], [1], [0, 0, 1, 1], [], []>} : vector<16x32xbf16>, vector<32x8xbf16>, vector<16x8xf32> -> vector<16x8xf32>
    %22 = arith.addf %16, %21 : vector<16x8xf32>
    %c0_23 = arith.constant 0 : index
    %c0_24 = arith.constant 0 : index
    %23 = vector.load %arg3[%c0_23, %c0_24] : memref<1x8xf32, #tpu.memory_space<vmem>>, vector<1x8xf32>
    %24 = vector.broadcast %23 : vector<1x8xf32> to vector<16x8xf32>
    %25 = arith.mulf %22, %24 : vector<16x8xf32>
    %c0_25 = arith.constant 0 : index
    %c0_26 = arith.constant 0 : index
    %26 = vector.load %arg4[%c0_25, %c0_26] : memref<1x8xf32, #tpu.memory_space<vmem>>, vector<1x8xf32>
    %27 = vector.broadcast %26 : vector<1x8xf32> to vector<16x8xf32>
    %28 = arith.addf %25, %27 : vector<16x8xf32>
    %cst_27 = arith.constant 0.000000e+00 : f32
    %29 = vector.broadcast %cst_27 : f32 to vector<16x8xf32>
    %30 = arith.cmpf oge, %28, %29 : vector<16x8xf32>
    %c0_28 = arith.constant 0 : index
    %c0_29 = arith.constant 0 : index
    %31 = vector.load %arg5[%c0_28, %c0_29] : memref<1x8xf32, #tpu.memory_space<vmem>>, vector<1x8xf32>
    %32 = vector.broadcast %31 : vector<1x8xf32> to vector<16x8xf32>
    %33 = arith.mulf %28, %32 : vector<16x8xf32>
    %34 = arith.select %30, %28, %33 : vector<16x8xi1>, vector<16x8xf32>
    %35 = arith.truncf %34 : vector<16x8xf32> to vector<16x8xbf16>
    %c0_30 = arith.constant 0 : index
    %c0_31 = arith.constant 0 : index
    %36 = vector.load %arg6[%c0_30, %c0_31] : memref<16x8xbf16, #tpu.memory_space<vmem>>, vector<16x8xbf16>
    tpu.vector_store %arg6[%c0_30, %c0_31], %35 {strides = array<i32>} : memref<16x8xbf16, #tpu.memory_space<vmem>>, vector<16x8xbf16>,
    return
  }
  func.func @transform_0(%arg0: i32) -> (i32, i32, i32) {
    %c0_i32 = arith.constant 0 : i32
    %c0_i32_0 = arith.constant 0 : i32
    %c0_i32_1 = arith.constant 0 : i32
    return %c0_i32, %arg0, %c0_i32_0 : i32, i32, i32
  }
  func.func @transform_1(%arg0: i32) -> (i32, i32, i32) {
    %c0_i32 = arith.constant 0 : i32
    %c0_i32_0 = arith.constant 0 : i32
    %c0_i32_1 = arith.constant 0 : i32
    %c0_i32_2 = arith.constant 0 : i32
    return %c0_i32, %c0_i32_0, %c0_i32_1 : i32, i32, i32
  }
  func.func @transform_2(%arg0: i32) -> (i32, i32) {
    %c0_i32 = arith.constant 0 : i32
    %c0_i32_0 = arith.constant 0 : i32
    %c0_i32_1 = arith.constant 0 : i32
    return %c0_i32, %c0_i32_0 : i32, i32
  }
  func.func @transform_3(%arg0: i32) -> (i32, i32) {
    %c0_i32 = arith.constant 0 : i32
    %c0_i32_0 = arith.constant 0 : i32
    %c0_i32_1 = arith.constant 0 : i32
    return %c0_i32, %c0_i32_0 : i32, i32
  }
  func.func @transform_4(%arg0: i32) -> (i32, i32) {
    %c0_i32 = arith.constant 0 : i32
    %c0_i32_0 = arith.constant 0 : i32
    %c0_i32_1 = arith.constant 0 : i32
    return %c0_i32, %c0_i32_0 : i32, i32
  }
  func.func @transform_5(%arg0: i32) -> (i32, i32) {
    %c0_i32 = arith.constant 0 : i32
    %c0_i32_0 = arith.constant 0 : i32
    return %arg0, %c0_i32 : i32, i32
  }
}

module attributes {stable_mosaic.version = 11 : i64} {
  func.func @_fused_matmul_kernel(%arg0: i32, %arg1: memref<9x16x16xbf16, #tpu.memory_space<vmem>>, %arg2: memref<9x16x8xbf16, #tpu.memory_space<vmem>>, %arg3: memref<1x8xf32, #tpu.memory_space<vmem>>, %arg4: memref<1x8xf32, #tpu.memory_space<vmem>>, %arg5: memref<1x8xf32, #tpu.memory_space<vmem>>, %arg6: memref<16x8xbf16, #tpu.memory_space<vmem>>) attributes {dimension_semantics = [#tpu.dimension_semantics<parallel>], iteration_bounds = array<i64: 1>, scalar_prefetch = 0 : i64, scratch_operands = 0 : i64, tpu.core_type = #tpu.core_type<tc>, window_params = [{transform_indices = @transform_0, window_bounds = array<i64: 9, 16, 16>}, {pipeline_mode = #tpu.pipeline_mode<synchronous>, transform_indices = @transform_1, window_bounds = array<i64: 9, 16, 8>}, {pipeline_mode = #tpu.pipeline_mode<synchronous>, transform_indices = @transform_2, window_bounds = array<i64: 1, 8>}, {pipeline_mode = #tpu.pipeline_mode<synchronous>, transform_indices = @transform_3, window_bounds = array<i64: 1, 8>}, {pipeline_mode = #tpu.pipeline_mode<synchronous>, transform_indices = @transform_4, window_bounds = array<i64: 1, 8>}, {transform_indices = @transform_5, window_bounds = array<i64: 16, 8>}]} {
    %c0 = arith.constant 0 : index
    %c0_0 = arith.constant 0 : index
    %c0_1 = arith.constant 0 : index
    %0 = vector.load %arg1[%c0, %c0_0, %c0_1] : memref<9x16x16xbf16, #tpu.memory_space<vmem>>, vector<1x16x16xbf16>
    %1 = vector.shape_cast %0 : vector<1x16x16xbf16> to vector<16x16xbf16>
    %c0_2 = arith.constant 0 : index
    %c0_3 = arith.constant 0 : index
    %c0_4 = arith.constant 0 : index
    %2 = vector.load %arg2[%c0_2, %c0_3, %c0_4] : memref<9x16x8xbf16, #tpu.memory_space<vmem>>, vector<1x16x8xbf16>
    %3 = vector.shape_cast %2 : vector<1x16x8xbf16> to vector<16x8xbf16>
    %cst = arith.constant dense<0.000000e+00> : vector<16x8xf32>
    %4 = tpu.matmul %1, %3, %cst {dimension_numbers = #tpu.dot_dimension_numbers<[1], [0], [0], [1], [0, 0, 1, 1], [], []>} : vector<16x16xbf16>, vector<16x8xbf16>, vector<16x8xf32> -> vector<16x8xf32>
    %c1 = arith.constant 1 : index
    %c0_5 = arith.constant 0 : index
    %c0_6 = arith.constant 0 : index
    %5 = vector.load %arg1[%c1, %c0_5, %c0_6] : memref<9x16x16xbf16, #tpu.memory_space<vmem>>, vector<1x16x16xbf16>
    %6 = vector.shape_cast %5 : vector<1x16x16xbf16> to vector<16x16xbf16>
    %c1_7 = arith.constant 1 : index
    %c0_8 = arith.constant 0 : index
    %c0_9 = arith.constant 0 : index
    %7 = vector.load %arg2[%c1_7, %c0_8, %c0_9] : memref<9x16x8xbf16, #tpu.memory_space<vmem>>, vector<1x16x8xbf16>
    %8 = vector.shape_cast %7 : vector<1x16x8xbf16> to vector<16x8xbf16>
    %cst_10 = arith.constant dense<0.000000e+00> : vector<16x8xf32>
    %9 = tpu.matmul %6, %8, %cst_10 {dimension_numbers = #tpu.dot_dimension_numbers<[1], [0], [0], [1], [0, 0, 1, 1], [], []>} : vector<16x16xbf16>, vector<16x8xbf16>, vector<16x8xf32> -> vector<16x8xf32>
    %10 = arith.addf %4, %9 : vector<16x8xf32>
    %c2 = arith.constant 2 : index
    %c0_11 = arith.constant 0 : index
    %c0_12 = arith.constant 0 : index
    %11 = vector.load %arg1[%c2, %c0_11, %c0_12] : memref<9x16x16xbf16, #tpu.memory_space<vmem>>, vector<1x16x16xbf16>
    %12 = vector.shape_cast %11 : vector<1x16x16xbf16> to vector<16x16xbf16>
    %c2_13 = arith.constant 2 : index
    %c0_14 = arith.constant 0 : index
    %c0_15 = arith.constant 0 : index
    %13 = vector.load %arg2[%c2_13, %c0_14, %c0_15] : memref<9x16x8xbf16, #tpu.memory_space<vmem>>, vector<1x16x8xbf16>
    %14 = vector.shape_cast %13 : vector<1x16x8xbf16> to vector<16x8xbf16>
    %cst_16 = arith.constant dense<0.000000e+00> : vector<16x8xf32>
    %15 = tpu.matmul %12, %14, %cst_16 {dimension_numbers = #tpu.dot_dimension_numbers<[1], [0], [0], [1], [0, 0, 1, 1], [], []>} : vector<16x16xbf16>, vector<16x8xbf16>, vector<16x8xf32> -> vector<16x8xf32>
    %16 = arith.addf %10, %15 : vector<16x8xf32>
    %c3 = arith.constant 3 : index
    %c0_17 = arith.constant 0 : index
    %c0_18 = arith.constant 0 : index
    %17 = vector.load %arg1[%c3, %c0_17, %c0_18] : memref<9x16x16xbf16, #tpu.memory_space<vmem>>, vector<1x16x16xbf16>
    %18 = vector.shape_cast %17 : vector<1x16x16xbf16> to vector<16x16xbf16>
    %c3_19 = arith.constant 3 : index
    %c0_20 = arith.constant 0 : index
    %c0_21 = arith.constant 0 : index
    %19 = vector.load %arg2[%c3_19, %c0_20, %c0_21] : memref<9x16x8xbf16, #tpu.memory_space<vmem>>, vector<1x16x8xbf16>
    %20 = vector.shape_cast %19 : vector<1x16x8xbf16> to vector<16x8xbf16>
    %cst_22 = arith.constant dense<0.000000e+00> : vector<16x8xf32>
    %21 = tpu.matmul %18, %20, %cst_22 {dimension_numbers = #tpu.dot_dimension_numbers<[1], [0], [0], [1], [0, 0, 1, 1], [], []>} : vector<16x16xbf16>, vector<16x8xbf16>, vector<16x8xf32> -> vector<16x8xf32>
    %22 = arith.addf %16, %21 : vector<16x8xf32>
    %c4 = arith.constant 4 : index
    %c0_23 = arith.constant 0 : index
    %c0_24 = arith.constant 0 : index
    %23 = vector.load %arg1[%c4, %c0_23, %c0_24] : memref<9x16x16xbf16, #tpu.memory_space<vmem>>, vector<1x16x16xbf16>
    %24 = vector.shape_cast %23 : vector<1x16x16xbf16> to vector<16x16xbf16>
    %c4_25 = arith.constant 4 : index
    %c0_26 = arith.constant 0 : index
    %c0_27 = arith.constant 0 : index
    %25 = vector.load %arg2[%c4_25, %c0_26, %c0_27] : memref<9x16x8xbf16, #tpu.memory_space<vmem>>, vector<1x16x8xbf16>
    %26 = vector.shape_cast %25 : vector<1x16x8xbf16> to vector<16x8xbf16>
    %cst_28 = arith.constant dense<0.000000e+00> : vector<16x8xf32>
    %27 = tpu.matmul %24, %26, %cst_28 {dimension_numbers = #tpu.dot_dimension_numbers<[1], [0], [0], [1], [0, 0, 1, 1], [], []>} : vector<16x16xbf16>, vector<16x8xbf16>, vector<16x8xf32> -> vector<16x8xf32>
    %28 = arith.addf %22, %27 : vector<16x8xf32>
    %c5 = arith.constant 5 : index
    %c0_29 = arith.constant 0 : index
    %c0_30 = arith.constant 0 : index
    %29 = vector.load %arg1[%c5, %c0_29, %c0_30] : memref<9x16x16xbf16, #tpu.memory_space<vmem>>, vector<1x16x16xbf16>
    %30 = vector.shape_cast %29 : vector<1x16x16xbf16> to vector<16x16xbf16>
    %c5_31 = arith.constant 5 : index
    %c0_32 = arith.constant 0 : index
    %c0_33 = arith.constant 0 : index
    %31 = vector.load %arg2[%c5_31, %c0_32, %c0_33] : memref<9x16x8xbf16, #tpu.memory_space<vmem>>, vector<1x16x8xbf16>
    %32 = vector.shape_cast %31 : vector<1x16x8xbf16> to vector<16x8xbf16>
    %cst_34 = arith.constant dense<0.000000e+00> : vector<16x8xf32>
    %33 = tpu.matmul %30, %32, %cst_34 {dimension_numbers = #tpu.dot_dimension_numbers<[1], [0], [0], [1], [0, 0, 1, 1], [], []>} : vector<16x16xbf16>, vector<16x8xbf16>, vector<16x8xf32> -> vector<16x8xf32>
    %34 = arith.addf %28, %33 : vector<16x8xf32>
    %c6 = arith.constant 6 : index
    %c0_35 = arith.constant 0 : index
    %c0_36 = arith.constant 0 : index
    %35 = vector.load %arg1[%c6, %c0_35, %c0_36] : memref<9x16x16xbf16, #tpu.memory_space<vmem>>, vector<1x16x16xbf16>
    %36 = vector.shape_cast %35 : vector<1x16x16xbf16> to vector<16x16xbf16>
    %c6_37 = arith.constant 6 : index
    %c0_38 = arith.constant 0 : index
    %c0_39 = arith.constant 0 : index
    %37 = vector.load %arg2[%c6_37, %c0_38, %c0_39] : memref<9x16x8xbf16, #tpu.memory_space<vmem>>, vector<1x16x8xbf16>
    %38 = vector.shape_cast %37 : vector<1x16x8xbf16> to vector<16x8xbf16>
    %cst_40 = arith.constant dense<0.000000e+00> : vector<16x8xf32>
    %39 = tpu.matmul %36, %38, %cst_40 {dimension_numbers = #tpu.dot_dimension_numbers<[1], [0], [0], [1], [0, 0, 1, 1], [], []>} : vector<16x16xbf16>, vector<16x8xbf16>, vector<16x8xf32> -> vector<16x8xf32>
    %40 = arith.addf %34, %39 : vector<16x8xf32>
    %c7 = arith.constant 7 : index
    %c0_41 = arith.constant 0 : index
    %c0_42 = arith.constant 0 : index
    %41 = vector.load %arg1[%c7, %c0_41, %c0_42] : memref<9x16x16xbf16, #tpu.memory_space<vmem>>, vector<1x16x16xbf16>
    %42 = vector.shape_cast %41 : vector<1x16x16xbf16> to vector<16x16xbf16>
    %c7_43 = arith.constant 7 : index
    %c0_44 = arith.constant 0 : index
    %c0_45 = arith.constant 0 : index
    %43 = vector.load %arg2[%c7_43, %c0_44, %c0_45] : memref<9x16x8xbf16, #tpu.memory_space<vmem>>, vector<1x16x8xbf16>
    %44 = vector.shape_cast %43 : vector<1x16x8xbf16> to vector<16x8xbf16>
    %cst_46 = arith.constant dense<0.000000e+00> : vector<16x8xf32>
    %45 = tpu.matmul %42, %44, %cst_46 {dimension_numbers = #tpu.dot_dimension_numbers<[1], [0], [0], [1], [0, 0, 1, 1], [], []>} : vector<16x16xbf16>, vector<16x8xbf16>, vector<16x8xf32> -> vector<16x8xf32>
    %46 = arith.addf %40, %45 : vector<16x8xf32>
    %c8 = arith.constant 8 : index
    %c0_47 = arith.constant 0 : index
    %c0_48 = arith.constant 0 : index
    %47 = vector.load %arg1[%c8, %c0_47, %c0_48] : memref<9x16x16xbf16, #tpu.memory_space<vmem>>, vector<1x16x16xbf16>
    %48 = vector.shape_cast %47 : vector<1x16x16xbf16> to vector<16x16xbf16>
    %c8_49 = arith.constant 8 : index
    %c0_50 = arith.constant 0 : index
    %c0_51 = arith.constant 0 : index
    %49 = vector.load %arg2[%c8_49, %c0_50, %c0_51] : memref<9x16x8xbf16, #tpu.memory_space<vmem>>, vector<1x16x8xbf16>
    %50 = vector.shape_cast %49 : vector<1x16x8xbf16> to vector<16x8xbf16>
    %cst_52 = arith.constant dense<0.000000e+00> : vector<16x8xf32>
    %51 = tpu.matmul %48, %50, %cst_52 {dimension_numbers = #tpu.dot_dimension_numbers<[1], [0], [0], [1], [0, 0, 1, 1], [], []>} : vector<16x16xbf16>, vector<16x8xbf16>, vector<16x8xf32> -> vector<16x8xf32>
    %52 = arith.addf %46, %51 : vector<16x8xf32>
    %c0_53 = arith.constant 0 : index
    %c0_54 = arith.constant 0 : index
    %53 = vector.load %arg3[%c0_53, %c0_54] : memref<1x8xf32, #tpu.memory_space<vmem>>, vector<1x8xf32>
    %54 = vector.broadcast %53 : vector<1x8xf32> to vector<16x8xf32>
    %55 = arith.mulf %52, %54 : vector<16x8xf32>
    %c0_55 = arith.constant 0 : index
    %c0_56 = arith.constant 0 : index
    %56 = vector.load %arg4[%c0_55, %c0_56] : memref<1x8xf32, #tpu.memory_space<vmem>>, vector<1x8xf32>
    %57 = vector.broadcast %56 : vector<1x8xf32> to vector<16x8xf32>
    %58 = arith.addf %55, %57 : vector<16x8xf32>
    %cst_57 = arith.constant 0.000000e+00 : f32
    %59 = vector.broadcast %cst_57 : f32 to vector<16x8xf32>
    %60 = arith.cmpf oge, %58, %59 : vector<16x8xf32>
    %c0_58 = arith.constant 0 : index
    %c0_59 = arith.constant 0 : index
    %61 = vector.load %arg5[%c0_58, %c0_59] : memref<1x8xf32, #tpu.memory_space<vmem>>, vector<1x8xf32>
    %62 = vector.broadcast %61 : vector<1x8xf32> to vector<16x8xf32>
    %63 = arith.mulf %58, %62 : vector<16x8xf32>
    %64 = arith.select %60, %58, %63 : vector<16x8xi1>, vector<16x8xf32>
    %65 = arith.truncf %64 : vector<16x8xf32> to vector<16x8xbf16>
    %c0_60 = arith.constant 0 : index
    %c0_61 = arith.constant 0 : index
    %66 = vector.load %arg6[%c0_60, %c0_61] : memref<16x8xbf16, #tpu.memory_space<vmem>>, vector<16x8xbf16>
    tpu.vector_store %arg6[%c0_60, %c0_61], %65 {strides = array<i32>} : memref<16x8xbf16, #tpu.memory_space<vmem>>, vector<16x8xbf16>,
    return
  }
  func.func @transform_0(%arg0: i32) -> (i32, i32, i32) {
    %c0_i32 = arith.constant 0 : i32
    %c0_i32_0 = arith.constant 0 : i32
    %c0_i32_1 = arith.constant 0 : i32
    return %c0_i32, %arg0, %c0_i32_0 : i32, i32, i32
  }
  func.func @transform_1(%arg0: i32) -> (i32, i32, i32) {
    %c0_i32 = arith.constant 0 : i32
    %c0_i32_0 = arith.constant 0 : i32
    %c0_i32_1 = arith.constant 0 : i32
    %c0_i32_2 = arith.constant 0 : i32
    return %c0_i32, %c0_i32_0, %c0_i32_1 : i32, i32, i32
  }
  func.func @transform_2(%arg0: i32) -> (i32, i32) {
    %c0_i32 = arith.constant 0 : i32
    %c0_i32_0 = arith.constant 0 : i32
    %c0_i32_1 = arith.constant 0 : i32
    return %c0_i32, %c0_i32_0 : i32, i32
  }
  func.func @transform_3(%arg0: i32) -> (i32, i32) {
    %c0_i32 = arith.constant 0 : i32
    %c0_i32_0 = arith.constant 0 : i32
    %c0_i32_1 = arith.constant 0 : i32
    return %c0_i32, %c0_i32_0 : i32, i32
  }
  func.func @transform_4(%arg0: i32) -> (i32, i32) {
    %c0_i32 = arith.constant 0 : i32
    %c0_i32_0 = arith.constant 0 : i32
    %c0_i32_1 = arith.constant 0 : i32
    return %c0_i32, %c0_i32_0 : i32, i32
  }
  func.func @transform_5(%arg0: i32) -> (i32, i32) {
    %c0_i32 = arith.constant 0 : i32
    %c0_i32_0 = arith.constant 0 : i32
    return %arg0, %c0_i32 : i32, i32
  }
}

module attributes {stable_mosaic.version = 11 : i64} {
  func.func @_fused_matmul_kernel(%arg0: i32, %arg1: memref<1x16x16xbf16, #tpu.memory_space<vmem>>, %arg2: memref<1x16x64xbf16, #tpu.memory_space<vmem>>, %arg3: memref<1x64xf32, #tpu.memory_space<vmem>>, %arg4: memref<1x64xf32, #tpu.memory_space<vmem>>, %arg5: memref<1x64xf32, #tpu.memory_space<vmem>>, %arg6: memref<16x64xbf16, #tpu.memory_space<vmem>>, %arg7: memref<16x64xbf16, #tpu.memory_space<vmem>>) attributes {dimension_semantics = [#tpu.dimension_semantics<parallel>], iteration_bounds = array<i64: 1>, scalar_prefetch = 0 : i64, scratch_operands = 0 : i64, tpu.core_type = #tpu.core_type<tc>, window_params = [{transform_indices = @transform_0, window_bounds = array<i64: 1, 16, 16>}, {pipeline_mode = #tpu.pipeline_mode<synchronous>, transform_indices = @transform_1, window_bounds = array<i64: 1, 16, 64>}, {pipeline_mode = #tpu.pipeline_mode<synchronous>, transform_indices = @transform_2, window_bounds = array<i64: 1, 64>}, {pipeline_mode = #tpu.pipeline_mode<synchronous>, transform_indices = @transform_3, window_bounds = array<i64: 1, 64>}, {pipeline_mode = #tpu.pipeline_mode<synchronous>, transform_indices = @transform_4, window_bounds = array<i64: 1, 64>}, {transform_indices = @transform_5, window_bounds = array<i64: 16, 64>}, {transform_indices = @transform_6, window_bounds = array<i64: 16, 64>}]} {
    %c0 = arith.constant 0 : index
    %c0_0 = arith.constant 0 : index
    %c0_1 = arith.constant 0 : index
    %0 = vector.load %arg1[%c0, %c0_0, %c0_1] : memref<1x16x16xbf16, #tpu.memory_space<vmem>>, vector<1x16x16xbf16>
    %1 = vector.shape_cast %0 : vector<1x16x16xbf16> to vector<16x16xbf16>
    %c0_2 = arith.constant 0 : index
    %c0_3 = arith.constant 0 : index
    %c0_4 = arith.constant 0 : index
    %2 = vector.load %arg2[%c0_2, %c0_3, %c0_4] : memref<1x16x64xbf16, #tpu.memory_space<vmem>>, vector<1x16x64xbf16>
    %3 = vector.shape_cast %2 : vector<1x16x64xbf16> to vector<16x64xbf16>
    %cst = arith.constant dense<0.000000e+00> : vector<16x64xf32>
    %4 = tpu.matmul %1, %3, %cst {dimension_numbers = #tpu.dot_dimension_numbers<[1], [0], [0], [1], [0, 0, 1, 1], [], []>} : vector<16x16xbf16>, vector<16x64xbf16>, vector<16x64xf32> -> vector<16x64xf32>
    %c0_5 = arith.constant 0 : index
    %c0_6 = arith.constant 0 : index
    %5 = vector.load %arg3[%c0_5, %c0_6] : memref<1x64xf32, #tpu.memory_space<vmem>>, vector<1x64xf32>
    %6 = vector.broadcast %5 : vector<1x64xf32> to vector<16x64xf32>
    %7 = arith.mulf %4, %6 : vector<16x64xf32>
    %c0_7 = arith.constant 0 : index
    %c0_8 = arith.constant 0 : index
    %8 = vector.load %arg4[%c0_7, %c0_8] : memref<1x64xf32, #tpu.memory_space<vmem>>, vector<1x64xf32>
    %9 = vector.broadcast %8 : vector<1x64xf32> to vector<16x64xf32>
    %10 = arith.addf %7, %9 : vector<16x64xf32>
    %c0_9 = arith.constant 0 : index
    %c0_10 = arith.constant 0 : index
    %11 = vector.load %arg6[%c0_9, %c0_10] : memref<16x64xbf16, #tpu.memory_space<vmem>>, vector<16x64xbf16>
    %12 = arith.extf %11 : vector<16x64xbf16> to vector<16x64xf32>
    %13 = arith.addf %10, %12 : vector<16x64xf32>
    %cst_11 = arith.constant 0.000000e+00 : f32
    %14 = vector.broadcast %cst_11 : f32 to vector<16x64xf32>
    %15 = arith.cmpf oge, %13, %14 : vector<16x64xf32>
    %c0_12 = arith.constant 0 : index
    %c0_13 = arith.constant 0 : index
    %16 = vector.load %arg5[%c0_12, %c0_13] : memref<1x64xf32, #tpu.memory_space<vmem>>, vector<1x64xf32>
    %17 = vector.broadcast %16 : vector<1x64xf32> to vector<16x64xf32>
    %18 = arith.mulf %13, %17 : vector<16x64xf32>
    %19 = arith.select %15, %13, %18 : vector<16x64xi1>, vector<16x64xf32>
    %20 = arith.truncf %19 : vector<16x64xf32> to vector<16x64xbf16>
    %c0_14 = arith.constant 0 : index
    %c0_15 = arith.constant 0 : index
    %21 = vector.load %arg7[%c0_14, %c0_15] : memref<16x64xbf16, #tpu.memory_space<vmem>>, vector<16x64xbf16>
    tpu.vector_store %arg7[%c0_14, %c0_15], %20 {strides = array<i32>} : memref<16x64xbf16, #tpu.memory_space<vmem>>, vector<16x64xbf16>,
    return
  }
  func.func @transform_0(%arg0: i32) -> (i32, i32, i32) {
    %c0_i32 = arith.constant 0 : i32
    %c0_i32_0 = arith.constant 0 : i32
    %c0_i32_1 = arith.constant 0 : i32
    return %c0_i32, %arg0, %c0_i32_0 : i32, i32, i32
  }
  func.func @transform_1(%arg0: i32) -> (i32, i32, i32) {
    %c0_i32 = arith.constant 0 : i32
    %c0_i32_0 = arith.constant 0 : i32
    %c0_i32_1 = arith.constant 0 : i32
    %c0_i32_2 = arith.constant 0 : i32
    return %c0_i32, %c0_i32_0, %c0_i32_1 : i32, i32, i32
  }
  func.func @transform_2(%arg0: i32) -> (i32, i32) {
    %c0_i32 = arith.constant 0 : i32
    %c0_i32_0 = arith.constant 0 : i32
    %c0_i32_1 = arith.constant 0 : i32
    return %c0_i32, %c0_i32_0 : i32, i32
  }
  func.func @transform_3(%arg0: i32) -> (i32, i32) {
    %c0_i32 = arith.constant 0 : i32
    %c0_i32_0 = arith.constant 0 : i32
    %c0_i32_1 = arith.constant 0 : i32
    return %c0_i32, %c0_i32_0 : i32, i32
  }
  func.func @transform_4(%arg0: i32) -> (i32, i32) {
    %c0_i32 = arith.constant 0 : i32
    %c0_i32_0 = arith.constant 0 : i32
    %c0_i32_1 = arith.constant 0 : i32
    return %c0_i32, %c0_i32_0 : i32, i32
  }
  func.func @transform_5(%arg0: i32) -> (i32, i32) {
    %c0_i32 = arith.constant 0 : i32
    %c0_i32_0 = arith.constant 0 : i32
    return %arg0, %c0_i32 : i32, i32
  }
  func.func @transform_6(%arg0: i32) -> (i32, i32) {
    %c0_i32 = arith.constant 0 : i32
    %c0_i32_0 = arith.constant 0 : i32
    return %arg0, %c0_i32 : i32, i32
  }
}

module attributes {stable_mosaic.version = 11 : i64} {
  func.func @_fused_matmul_kernel(%arg0: i32, %arg1: memref<1x16x64xbf16, #tpu.memory_space<vmem>>, %arg2: memref<1x64x16xbf16, #tpu.memory_space<vmem>>, %arg3: memref<1x16xf32, #tpu.memory_space<vmem>>, %arg4: memref<1x16xf32, #tpu.memory_space<vmem>>, %arg5: memref<1x16xf32, #tpu.memory_space<vmem>>, %arg6: memref<16x16xbf16, #tpu.memory_space<vmem>>) attributes {dimension_semantics = [#tpu.dimension_semantics<parallel>], iteration_bounds = array<i64: 1>, scalar_prefetch = 0 : i64, scratch_operands = 0 : i64, tpu.core_type = #tpu.core_type<tc>, window_params = [{transform_indices = @transform_0, window_bounds = array<i64: 1, 16, 64>}, {pipeline_mode = #tpu.pipeline_mode<synchronous>, transform_indices = @transform_1, window_bounds = array<i64: 1, 64, 16>}, {pipeline_mode = #tpu.pipeline_mode<synchronous>, transform_indices = @transform_2, window_bounds = array<i64: 1, 16>}, {pipeline_mode = #tpu.pipeline_mode<synchronous>, transform_indices = @transform_3, window_bounds = array<i64: 1, 16>}, {pipeline_mode = #tpu.pipeline_mode<synchronous>, transform_indices = @transform_4, window_bounds = array<i64: 1, 16>}, {transform_indices = @transform_5, window_bounds = array<i64: 16, 16>}]} {
    %c0 = arith.constant 0 : index
    %c0_0 = arith.constant 0 : index
    %c0_1 = arith.constant 0 : index
    %0 = vector.load %arg1[%c0, %c0_0, %c0_1] : memref<1x16x64xbf16, #tpu.memory_space<vmem>>, vector<1x16x64xbf16>
    %1 = vector.shape_cast %0 : vector<1x16x64xbf16> to vector<16x64xbf16>
    %c0_2 = arith.constant 0 : index
    %c0_3 = arith.constant 0 : index
    %c0_4 = arith.constant 0 : index
    %2 = vector.load %arg2[%c0_2, %c0_3, %c0_4] : memref<1x64x16xbf16, #tpu.memory_space<vmem>>, vector<1x64x16xbf16>
    %3 = vector.shape_cast %2 : vector<1x64x16xbf16> to vector<64x16xbf16>
    %cst = arith.constant dense<0.000000e+00> : vector<16x16xf32>
    %4 = tpu.matmul %1, %3, %cst {dimension_numbers = #tpu.dot_dimension_numbers<[1], [0], [0], [1], [0, 0, 1, 1], [], []>} : vector<16x64xbf16>, vector<64x16xbf16>, vector<16x16xf32> -> vector<16x16xf32>
    %c0_5 = arith.constant 0 : index
    %c0_6 = arith.constant 0 : index
    %5 = vector.load %arg3[%c0_5, %c0_6] : memref<1x16xf32, #tpu.memory_space<vmem>>, vector<1x16xf32>
    %6 = vector.broadcast %5 : vector<1x16xf32> to vector<16x16xf32>
    %7 = arith.mulf %4, %6 : vector<16x16xf32>
    %c0_7 = arith.constant 0 : index
    %c0_8 = arith.constant 0 : index
    %8 = vector.load %arg4[%c0_7, %c0_8] : memref<1x16xf32, #tpu.memory_space<vmem>>, vector<1x16xf32>
    %9 = vector.broadcast %8 : vector<1x16xf32> to vector<16x16xf32>
    %10 = arith.addf %7, %9 : vector<16x16xf32>
    %cst_9 = arith.constant 0.000000e+00 : f32
    %11 = vector.broadcast %cst_9 : f32 to vector<16x16xf32>
    %12 = arith.cmpf oge, %10, %11 : vector<16x16xf32>
    %c0_10 = arith.constant 0 : index
    %c0_11 = arith.constant 0 : index
    %13 = vector.load %arg5[%c0_10, %c0_11] : memref<1x16xf32, #tpu.memory_space<vmem>>, vector<1x16xf32>
    %14 = vector.broadcast %13 : vector<1x16xf32> to vector<16x16xf32>
    %15 = arith.mulf %10, %14 : vector<16x16xf32>
    %16 = arith.select %12, %10, %15 : vector<16x16xi1>, vector<16x16xf32>
    %17 = arith.truncf %16 : vector<16x16xf32> to vector<16x16xbf16>
    %c0_12 = arith.constant 0 : index
    %c0_13 = arith.constant 0 : index
    %18 = vector.load %arg6[%c0_12, %c0_13] : memref<16x16xbf16, #tpu.memory_space<vmem>>, vector<16x16xbf16>
    tpu.vector_store %arg6[%c0_12, %c0_13], %17 {strides = array<i32>} : memref<16x16xbf16, #tpu.memory_space<vmem>>, vector<16x16xbf16>,
    return
  }
  func.func @transform_0(%arg0: i32) -> (i32, i32, i32) {
    %c0_i32 = arith.constant 0 : i32
    %c0_i32_0 = arith.constant 0 : i32
    %c0_i32_1 = arith.constant 0 : i32
    return %c0_i32, %arg0, %c0_i32_0 : i32, i32, i32
  }
  func.func @transform_1(%arg0: i32) -> (i32, i32, i32) {
    %c0_i32 = arith.constant 0 : i32
    %c0_i32_0 = arith.constant 0 : i32
    %c0_i32_1 = arith.constant 0 : i32
    %c0_i32_2 = arith.constant 0 : i32
    return %c0_i32, %c0_i32_0, %c0_i32_1 : i32, i32, i32
  }
  func.func @transform_2(%arg0: i32) -> (i32, i32) {
    %c0_i32 = arith.constant 0 : i32
    %c0_i32_0 = arith.constant 0 : i32
    %c0_i32_1 = arith.constant 0 : i32
    return %c0_i32, %c0_i32_0 : i32, i32
  }
  func.func @transform_3(%arg0: i32) -> (i32, i32) {
    %c0_i32 = arith.constant 0 : i32
    %c0_i32_0 = arith.constant 0 : i32
    %c0_i32_1 = arith.constant 0 : i32
    return %c0_i32, %c0_i32_0 : i32, i32
  }
  func.func @transform_4(%arg0: i32) -> (i32, i32) {
    %c0_i32 = arith.constant 0 : i32
    %c0_i32_0 = arith.constant 0 : i32
    %c0_i32_1 = arith.constant 0 : i32
    return %c0_i32, %c0_i32_0 : i32, i32
  }
  func.func @transform_5(%arg0: i32) -> (i32, i32) {
    %c0_i32 = arith.constant 0 : i32
    %c0_i32_0 = arith.constant 0 : i32
    return %arg0, %c0_i32 : i32, i32
  }
}

module attributes {stable_mosaic.version = 11 : i64} {
  func.func @_fused_matmul_kernel(%arg0: i32, %arg1: memref<9x16x16xbf16, #tpu.memory_space<vmem>>, %arg2: memref<9x16x16xbf16, #tpu.memory_space<vmem>>, %arg3: memref<1x16xf32, #tpu.memory_space<vmem>>, %arg4: memref<1x16xf32, #tpu.memory_space<vmem>>, %arg5: memref<1x16xf32, #tpu.memory_space<vmem>>, %arg6: memref<16x16xbf16, #tpu.memory_space<vmem>>) attributes {dimension_semantics = [#tpu.dimension_semantics<parallel>], iteration_bounds = array<i64: 1>, scalar_prefetch = 0 : i64, scratch_operands = 0 : i64, tpu.core_type = #tpu.core_type<tc>, window_params = [{transform_indices = @transform_0, window_bounds = array<i64: 9, 16, 16>}, {pipeline_mode = #tpu.pipeline_mode<synchronous>, transform_indices = @transform_1, window_bounds = array<i64: 9, 16, 16>}, {pipeline_mode = #tpu.pipeline_mode<synchronous>, transform_indices = @transform_2, window_bounds = array<i64: 1, 16>}, {pipeline_mode = #tpu.pipeline_mode<synchronous>, transform_indices = @transform_3, window_bounds = array<i64: 1, 16>}, {pipeline_mode = #tpu.pipeline_mode<synchronous>, transform_indices = @transform_4, window_bounds = array<i64: 1, 16>}, {transform_indices = @transform_5, window_bounds = array<i64: 16, 16>}]} {
    %c0 = arith.constant 0 : index
    %c0_0 = arith.constant 0 : index
    %c0_1 = arith.constant 0 : index
    %0 = vector.load %arg1[%c0, %c0_0, %c0_1] : memref<9x16x16xbf16, #tpu.memory_space<vmem>>, vector<1x16x16xbf16>
    %1 = vector.shape_cast %0 : vector<1x16x16xbf16> to vector<16x16xbf16>
    %c0_2 = arith.constant 0 : index
    %c0_3 = arith.constant 0 : index
    %c0_4 = arith.constant 0 : index
    %2 = vector.load %arg2[%c0_2, %c0_3, %c0_4] : memref<9x16x16xbf16, #tpu.memory_space<vmem>>, vector<1x16x16xbf16>
    %3 = vector.shape_cast %2 : vector<1x16x16xbf16> to vector<16x16xbf16>
    %cst = arith.constant dense<0.000000e+00> : vector<16x16xf32>
    %4 = tpu.matmul %1, %3, %cst {dimension_numbers = #tpu.dot_dimension_numbers<[1], [0], [0], [1], [0, 0, 1, 1], [], []>} : vector<16x16xbf16>, vector<16x16xbf16>, vector<16x16xf32> -> vector<16x16xf32>
    %c1 = arith.constant 1 : index
    %c0_5 = arith.constant 0 : index
    %c0_6 = arith.constant 0 : index
    %5 = vector.load %arg1[%c1, %c0_5, %c0_6] : memref<9x16x16xbf16, #tpu.memory_space<vmem>>, vector<1x16x16xbf16>
    %6 = vector.shape_cast %5 : vector<1x16x16xbf16> to vector<16x16xbf16>
    %c1_7 = arith.constant 1 : index
    %c0_8 = arith.constant 0 : index
    %c0_9 = arith.constant 0 : index
    %7 = vector.load %arg2[%c1_7, %c0_8, %c0_9] : memref<9x16x16xbf16, #tpu.memory_space<vmem>>, vector<1x16x16xbf16>
    %8 = vector.shape_cast %7 : vector<1x16x16xbf16> to vector<16x16xbf16>
    %cst_10 = arith.constant dense<0.000000e+00> : vector<16x16xf32>
    %9 = tpu.matmul %6, %8, %cst_10 {dimension_numbers = #tpu.dot_dimension_numbers<[1], [0], [0], [1], [0, 0, 1, 1], [], []>} : vector<16x16xbf16>, vector<16x16xbf16>, vector<16x16xf32> -> vector<16x16xf32>
    %10 = arith.addf %4, %9 : vector<16x16xf32>
    %c2 = arith.constant 2 : index
    %c0_11 = arith.constant 0 : index
    %c0_12 = arith.constant 0 : index
    %11 = vector.load %arg1[%c2, %c0_11, %c0_12] : memref<9x16x16xbf16, #tpu.memory_space<vmem>>, vector<1x16x16xbf16>
    %12 = vector.shape_cast %11 : vector<1x16x16xbf16> to vector<16x16xbf16>
    %c2_13 = arith.constant 2 : index
    %c0_14 = arith.constant 0 : index
    %c0_15 = arith.constant 0 : index
    %13 = vector.load %arg2[%c2_13, %c0_14, %c0_15] : memref<9x16x16xbf16, #tpu.memory_space<vmem>>, vector<1x16x16xbf16>
    %14 = vector.shape_cast %13 : vector<1x16x16xbf16> to vector<16x16xbf16>
    %cst_16 = arith.constant dense<0.000000e+00> : vector<16x16xf32>
    %15 = tpu.matmul %12, %14, %cst_16 {dimension_numbers = #tpu.dot_dimension_numbers<[1], [0], [0], [1], [0, 0, 1, 1], [], []>} : vector<16x16xbf16>, vector<16x16xbf16>, vector<16x16xf32> -> vector<16x16xf32>
    %16 = arith.addf %10, %15 : vector<16x16xf32>
    %c3 = arith.constant 3 : index
    %c0_17 = arith.constant 0 : index
    %c0_18 = arith.constant 0 : index
    %17 = vector.load %arg1[%c3, %c0_17, %c0_18] : memref<9x16x16xbf16, #tpu.memory_space<vmem>>, vector<1x16x16xbf16>
    %18 = vector.shape_cast %17 : vector<1x16x16xbf16> to vector<16x16xbf16>
    %c3_19 = arith.constant 3 : index
    %c0_20 = arith.constant 0 : index
    %c0_21 = arith.constant 0 : index
    %19 = vector.load %arg2[%c3_19, %c0_20, %c0_21] : memref<9x16x16xbf16, #tpu.memory_space<vmem>>, vector<1x16x16xbf16>
    %20 = vector.shape_cast %19 : vector<1x16x16xbf16> to vector<16x16xbf16>
    %cst_22 = arith.constant dense<0.000000e+00> : vector<16x16xf32>
    %21 = tpu.matmul %18, %20, %cst_22 {dimension_numbers = #tpu.dot_dimension_numbers<[1], [0], [0], [1], [0, 0, 1, 1], [], []>} : vector<16x16xbf16>, vector<16x16xbf16>, vector<16x16xf32> -> vector<16x16xf32>
    %22 = arith.addf %16, %21 : vector<16x16xf32>
    %c4 = arith.constant 4 : index
    %c0_23 = arith.constant 0 : index
    %c0_24 = arith.constant 0 : index
    %23 = vector.load %arg1[%c4, %c0_23, %c0_24] : memref<9x16x16xbf16, #tpu.memory_space<vmem>>, vector<1x16x16xbf16>
    %24 = vector.shape_cast %23 : vector<1x16x16xbf16> to vector<16x16xbf16>
    %c4_25 = arith.constant 4 : index
    %c0_26 = arith.constant 0 : index
    %c0_27 = arith.constant 0 : index
    %25 = vector.load %arg2[%c4_25, %c0_26, %c0_27] : memref<9x16x16xbf16, #tpu.memory_space<vmem>>, vector<1x16x16xbf16>
    %26 = vector.shape_cast %25 : vector<1x16x16xbf16> to vector<16x16xbf16>
    %cst_28 = arith.constant dense<0.000000e+00> : vector<16x16xf32>
    %27 = tpu.matmul %24, %26, %cst_28 {dimension_numbers = #tpu.dot_dimension_numbers<[1], [0], [0], [1], [0, 0, 1, 1], [], []>} : vector<16x16xbf16>, vector<16x16xbf16>, vector<16x16xf32> -> vector<16x16xf32>
    %28 = arith.addf %22, %27 : vector<16x16xf32>
    %c5 = arith.constant 5 : index
    %c0_29 = arith.constant 0 : index
    %c0_30 = arith.constant 0 : index
    %29 = vector.load %arg1[%c5, %c0_29, %c0_30] : memref<9x16x16xbf16, #tpu.memory_space<vmem>>, vector<1x16x16xbf16>
    %30 = vector.shape_cast %29 : vector<1x16x16xbf16> to vector<16x16xbf16>
    %c5_31 = arith.constant 5 : index
    %c0_32 = arith.constant 0 : index
    %c0_33 = arith.constant 0 : index
    %31 = vector.load %arg2[%c5_31, %c0_32, %c0_33] : memref<9x16x16xbf16, #tpu.memory_space<vmem>>, vector<1x16x16xbf16>
    %32 = vector.shape_cast %31 : vector<1x16x16xbf16> to vector<16x16xbf16>
    %cst_34 = arith.constant dense<0.000000e+00> : vector<16x16xf32>
    %33 = tpu.matmul %30, %32, %cst_34 {dimension_numbers = #tpu.dot_dimension_numbers<[1], [0], [0], [1], [0, 0, 1, 1], [], []>} : vector<16x16xbf16>, vector<16x16xbf16>, vector<16x16xf32> -> vector<16x16xf32>
    %34 = arith.addf %28, %33 : vector<16x16xf32>
    %c6 = arith.constant 6 : index
    %c0_35 = arith.constant 0 : index
    %c0_36 = arith.constant 0 : index
    %35 = vector.load %arg1[%c6, %c0_35, %c0_36] : memref<9x16x16xbf16, #tpu.memory_space<vmem>>, vector<1x16x16xbf16>
    %36 = vector.shape_cast %35 : vector<1x16x16xbf16> to vector<16x16xbf16>
    %c6_37 = arith.constant 6 : index
    %c0_38 = arith.constant 0 : index
    %c0_39 = arith.constant 0 : index
    %37 = vector.load %arg2[%c6_37, %c0_38, %c0_39] : memref<9x16x16xbf16, #tpu.memory_space<vmem>>, vector<1x16x16xbf16>
    %38 = vector.shape_cast %37 : vector<1x16x16xbf16> to vector<16x16xbf16>
    %cst_40 = arith.constant dense<0.000000e+00> : vector<16x16xf32>
    %39 = tpu.matmul %36, %38, %cst_40 {dimension_numbers = #tpu.dot_dimension_numbers<[1], [0], [0], [1], [0, 0, 1, 1], [], []>} : vector<16x16xbf16>, vector<16x16xbf16>, vector<16x16xf32> -> vector<16x16xf32>
    %40 = arith.addf %34, %39 : vector<16x16xf32>
    %c7 = arith.constant 7 : index
    %c0_41 = arith.constant 0 : index
    %c0_42 = arith.constant 0 : index
    %41 = vector.load %arg1[%c7, %c0_41, %c0_42] : memref<9x16x16xbf16, #tpu.memory_space<vmem>>, vector<1x16x16xbf16>
    %42 = vector.shape_cast %41 : vector<1x16x16xbf16> to vector<16x16xbf16>
    %c7_43 = arith.constant 7 : index
    %c0_44 = arith.constant 0 : index
    %c0_45 = arith.constant 0 : index
    %43 = vector.load %arg2[%c7_43, %c0_44, %c0_45] : memref<9x16x16xbf16, #tpu.memory_space<vmem>>, vector<1x16x16xbf16>
    %44 = vector.shape_cast %43 : vector<1x16x16xbf16> to vector<16x16xbf16>
    %cst_46 = arith.constant dense<0.000000e+00> : vector<16x16xf32>
    %45 = tpu.matmul %42, %44, %cst_46 {dimension_numbers = #tpu.dot_dimension_numbers<[1], [0], [0], [1], [0, 0, 1, 1], [], []>} : vector<16x16xbf16>, vector<16x16xbf16>, vector<16x16xf32> -> vector<16x16xf32>
    %46 = arith.addf %40, %45 : vector<16x16xf32>
    %c8 = arith.constant 8 : index
    %c0_47 = arith.constant 0 : index
    %c0_48 = arith.constant 0 : index
    %47 = vector.load %arg1[%c8, %c0_47, %c0_48] : memref<9x16x16xbf16, #tpu.memory_space<vmem>>, vector<1x16x16xbf16>
    %48 = vector.shape_cast %47 : vector<1x16x16xbf16> to vector<16x16xbf16>
    %c8_49 = arith.constant 8 : index
    %c0_50 = arith.constant 0 : index
    %c0_51 = arith.constant 0 : index
    %49 = vector.load %arg2[%c8_49, %c0_50, %c0_51] : memref<9x16x16xbf16, #tpu.memory_space<vmem>>, vector<1x16x16xbf16>
    %50 = vector.shape_cast %49 : vector<1x16x16xbf16> to vector<16x16xbf16>
    %cst_52 = arith.constant dense<0.000000e+00> : vector<16x16xf32>
    %51 = tpu.matmul %48, %50, %cst_52 {dimension_numbers = #tpu.dot_dimension_numbers<[1], [0], [0], [1], [0, 0, 1, 1], [], []>} : vector<16x16xbf16>, vector<16x16xbf16>, vector<16x16xf32> -> vector<16x16xf32>
    %52 = arith.addf %46, %51 : vector<16x16xf32>
    %c0_53 = arith.constant 0 : index
    %c0_54 = arith.constant 0 : index
    %53 = vector.load %arg3[%c0_53, %c0_54] : memref<1x16xf32, #tpu.memory_space<vmem>>, vector<1x16xf32>
    %54 = vector.broadcast %53 : vector<1x16xf32> to vector<16x16xf32>
    %55 = arith.mulf %52, %54 : vector<16x16xf32>
    %c0_55 = arith.constant 0 : index
    %c0_56 = arith.constant 0 : index
    %56 = vector.load %arg4[%c0_55, %c0_56] : memref<1x16xf32, #tpu.memory_space<vmem>>, vector<1x16xf32>
    %57 = vector.broadcast %56 : vector<1x16xf32> to vector<16x16xf32>
    %58 = arith.addf %55, %57 : vector<16x16xf32>
    %cst_57 = arith.constant 0.000000e+00 : f32
    %59 = vector.broadcast %cst_57 : f32 to vector<16x16xf32>
    %60 = arith.cmpf oge, %58, %59 : vector<16x16xf32>
    %c0_58 = arith.constant 0 : index
    %c0_59 = arith.constant 0 : index
    %61 = vector.load %arg5[%c0_58, %c0_59] : memref<1x16xf32, #tpu.memory_space<vmem>>, vector<1x16xf32>
    %62 = vector.broadcast %61 : vector<1x16xf32> to vector<16x16xf32>
    %63 = arith.mulf %58, %62 : vector<16x16xf32>
    %64 = arith.select %60, %58, %63 : vector<16x16xi1>, vector<16x16xf32>
    %65 = arith.truncf %64 : vector<16x16xf32> to vector<16x16xbf16>
    %c0_60 = arith.constant 0 : index
    %c0_61 = arith.constant 0 : index
    %66 = vector.load %arg6[%c0_60, %c0_61] : memref<16x16xbf16, #tpu.memory_space<vmem>>, vector<16x16xbf16>
    tpu.vector_store %arg6[%c0_60, %c0_61], %65 {strides = array<i32>} : memref<16x16xbf16, #tpu.memory_space<vmem>>, vector<16x16xbf16>,
    return
  }
  func.func @transform_0(%arg0: i32) -> (i32, i32, i32) {
    %c0_i32 = arith.constant 0 : i32
    %c0_i32_0 = arith.constant 0 : i32
    %c0_i32_1 = arith.constant 0 : i32
    return %c0_i32, %arg0, %c0_i32_0 : i32, i32, i32
  }
  func.func @transform_1(%arg0: i32) -> (i32, i32, i32) {
    %c0_i32 = arith.constant 0 : i32
    %c0_i32_0 = arith.constant 0 : i32
    %c0_i32_1 = arith.constant 0 : i32
    %c0_i32_2 = arith.constant 0 : i32
    return %c0_i32, %c0_i32_0, %c0_i32_1 : i32, i32, i32
  }
  func.func @transform_2(%arg0: i32) -> (i32, i32) {
    %c0_i32 = arith.constant 0 : i32
    %c0_i32_0 = arith.constant 0 : i32
    %c0_i32_1 = arith.constant 0 : i32
    return %c0_i32, %c0_i32_0 : i32, i32
  }
  func.func @transform_3(%arg0: i32) -> (i32, i32) {
    %c0_i32 = arith.constant 0 : i32
    %c0_i32_0 = arith.constant 0 : i32
    %c0_i32_1 = arith.constant 0 : i32
    return %c0_i32, %c0_i32_0 : i32, i32
  }
  func.func @transform_4(%arg0: i32) -> (i32, i32) {
    %c0_i32 = arith.constant 0 : i32
    %c0_i32_0 = arith.constant 0 : i32
    %c0_i32_1 = arith.constant 0 : i32
    return %c0_i32, %c0_i32_0 : i32, i32
  }
  func.func @transform_5(%arg0: i32) -> (i32, i32) {
    %c0_i32 = arith.constant 0 : i32
    %c0_i32_0 = arith.constant 0 : i32
    return %arg0, %c0_i32 : i32, i32
  }
}

module attributes {stable_mosaic.version = 11 : i64} {
  func.func @_fused_matmul_kernel(%arg0: i32, %arg1: memref<1x16x32xbf16, #tpu.memory_space<vmem>>, %arg2: memref<1x32x8xbf16, #tpu.memory_space<vmem>>, %arg3: memref<1x8xf32, #tpu.memory_space<vmem>>, %arg4: memref<1x8xf32, #tpu.memory_space<vmem>>, %arg5: memref<1x8xf32, #tpu.memory_space<vmem>>, %arg6: memref<16x8xbf16, #tpu.memory_space<vmem>>) attributes {dimension_semantics = [#tpu.dimension_semantics<parallel>], iteration_bounds = array<i64: 1>, scalar_prefetch = 0 : i64, scratch_operands = 0 : i64, tpu.core_type = #tpu.core_type<tc>, window_params = [{transform_indices = @transform_0, window_bounds = array<i64: 1, 16, 32>}, {pipeline_mode = #tpu.pipeline_mode<synchronous>, transform_indices = @transform_1, window_bounds = array<i64: 1, 32, 8>}, {pipeline_mode = #tpu.pipeline_mode<synchronous>, transform_indices = @transform_2, window_bounds = array<i64: 1, 8>}, {pipeline_mode = #tpu.pipeline_mode<synchronous>, transform_indices = @transform_3, window_bounds = array<i64: 1, 8>}, {pipeline_mode = #tpu.pipeline_mode<synchronous>, transform_indices = @transform_4, window_bounds = array<i64: 1, 8>}, {transform_indices = @transform_5, window_bounds = array<i64: 16, 8>}]} {
    %c0 = arith.constant 0 : index
    %c0_0 = arith.constant 0 : index
    %c0_1 = arith.constant 0 : index
    %0 = vector.load %arg1[%c0, %c0_0, %c0_1] : memref<1x16x32xbf16, #tpu.memory_space<vmem>>, vector<1x16x32xbf16>
    %1 = vector.shape_cast %0 : vector<1x16x32xbf16> to vector<16x32xbf16>
    %c0_2 = arith.constant 0 : index
    %c0_3 = arith.constant 0 : index
    %c0_4 = arith.constant 0 : index
    %2 = vector.load %arg2[%c0_2, %c0_3, %c0_4] : memref<1x32x8xbf16, #tpu.memory_space<vmem>>, vector<1x32x8xbf16>
    %3 = vector.shape_cast %2 : vector<1x32x8xbf16> to vector<32x8xbf16>
    %cst = arith.constant dense<0.000000e+00> : vector<16x8xf32>
    %4 = tpu.matmul %1, %3, %cst {dimension_numbers = #tpu.dot_dimension_numbers<[1], [0], [0], [1], [0, 0, 1, 1], [], []>} : vector<16x32xbf16>, vector<32x8xbf16>, vector<16x8xf32> -> vector<16x8xf32>
    %c0_5 = arith.constant 0 : index
    %c0_6 = arith.constant 0 : index
    %5 = vector.load %arg3[%c0_5, %c0_6] : memref<1x8xf32, #tpu.memory_space<vmem>>, vector<1x8xf32>
    %6 = vector.broadcast %5 : vector<1x8xf32> to vector<16x8xf32>
    %7 = arith.mulf %4, %6 : vector<16x8xf32>
    %c0_7 = arith.constant 0 : index
    %c0_8 = arith.constant 0 : index
    %8 = vector.load %arg4[%c0_7, %c0_8] : memref<1x8xf32, #tpu.memory_space<vmem>>, vector<1x8xf32>
    %9 = vector.broadcast %8 : vector<1x8xf32> to vector<16x8xf32>
    %10 = arith.addf %7, %9 : vector<16x8xf32>
    %cst_9 = arith.constant 0.000000e+00 : f32
    %11 = vector.broadcast %cst_9 : f32 to vector<16x8xf32>
    %12 = arith.cmpf oge, %10, %11 : vector<16x8xf32>
    %c0_10 = arith.constant 0 : index
    %c0_11 = arith.constant 0 : index
    %13 = vector.load %arg5[%c0_10, %c0_11] : memref<1x8xf32, #tpu.memory_space<vmem>>, vector<1x8xf32>
    %14 = vector.broadcast %13 : vector<1x8xf32> to vector<16x8xf32>
    %15 = arith.mulf %10, %14 : vector<16x8xf32>
    %16 = arith.select %12, %10, %15 : vector<16x8xi1>, vector<16x8xf32>
    %17 = arith.truncf %16 : vector<16x8xf32> to vector<16x8xbf16>
    %c0_12 = arith.constant 0 : index
    %c0_13 = arith.constant 0 : index
    %18 = vector.load %arg6[%c0_12, %c0_13] : memref<16x8xbf16, #tpu.memory_space<vmem>>, vector<16x8xbf16>
    tpu.vector_store %arg6[%c0_12, %c0_13], %17 {strides = array<i32>} : memref<16x8xbf16, #tpu.memory_space<vmem>>, vector<16x8xbf16>,
    return
  }
  func.func @transform_0(%arg0: i32) -> (i32, i32, i32) {
    %c0_i32 = arith.constant 0 : i32
    %c0_i32_0 = arith.constant 0 : i32
    %c0_i32_1 = arith.constant 0 : i32
    return %c0_i32, %arg0, %c0_i32_0 : i32, i32, i32
  }
  func.func @transform_1(%arg0: i32) -> (i32, i32, i32) {
    %c0_i32 = arith.constant 0 : i32
    %c0_i32_0 = arith.constant 0 : i32
    %c0_i32_1 = arith.constant 0 : i32
    %c0_i32_2 = arith.constant 0 : i32
    return %c0_i32, %c0_i32_0, %c0_i32_1 : i32, i32, i32
  }
  func.func @transform_2(%arg0: i32) -> (i32, i32) {
    %c0_i32 = arith.constant 0 : i32
    %c0_i32_0 = arith.constant 0 : i32
    %c0_i32_1 = arith.constant 0 : i32
    return %c0_i32, %c0_i32_0 : i32, i32
  }
  func.func @transform_3(%arg0: i32) -> (i32, i32) {
    %c0_i32 = arith.constant 0 : i32
    %c0_i32_0 = arith.constant 0 : i32
    %c0_i32_1 = arith.constant 0 : i32
    return %c0_i32, %c0_i32_0 : i32, i32
  }
  func.func @transform_4(%arg0: i32) -> (i32, i32) {
    %c0_i32 = arith.constant 0 : i32
    %c0_i32_0 = arith.constant 0 : i32
    %c0_i32_1 = arith.constant 0 : i32
    return %c0_i32, %c0_i32_0 : i32, i32
  }
  func.func @transform_5(%arg0: i32) -> (i32, i32) {
    %c0_i32 = arith.constant 0 : i32
    %c0_i32_0 = arith.constant 0 : i32
    return %arg0, %c0_i32 : i32, i32
  }
}

module attributes {stable_mosaic.version = 11 : i64} {
  func.func @_fused_matmul_kernel(%arg0: i32, %arg1: memref<1x16x16xbf16, #tpu.memory_space<vmem>>, %arg2: memref<1x16x32xbf16, #tpu.memory_space<vmem>>, %arg3: memref<1x32xf32, #tpu.memory_space<vmem>>, %arg4: memref<1x32xf32, #tpu.memory_space<vmem>>, %arg5: memref<1x32xf32, #tpu.memory_space<vmem>>, %arg6: memref<16x32xbf16, #tpu.memory_space<vmem>>, %arg7: memref<16x32xbf16, #tpu.memory_space<vmem>>) attributes {dimension_semantics = [#tpu.dimension_semantics<parallel>], iteration_bounds = array<i64: 1>, scalar_prefetch = 0 : i64, scratch_operands = 0 : i64, tpu.core_type = #tpu.core_type<tc>, window_params = [{transform_indices = @transform_0, window_bounds = array<i64: 1, 16, 16>}, {pipeline_mode = #tpu.pipeline_mode<synchronous>, transform_indices = @transform_1, window_bounds = array<i64: 1, 16, 32>}, {pipeline_mode = #tpu.pipeline_mode<synchronous>, transform_indices = @transform_2, window_bounds = array<i64: 1, 32>}, {pipeline_mode = #tpu.pipeline_mode<synchronous>, transform_indices = @transform_3, window_bounds = array<i64: 1, 32>}, {pipeline_mode = #tpu.pipeline_mode<synchronous>, transform_indices = @transform_4, window_bounds = array<i64: 1, 32>}, {transform_indices = @transform_5, window_bounds = array<i64: 16, 32>}, {transform_indices = @transform_6, window_bounds = array<i64: 16, 32>}]} {
    %c0 = arith.constant 0 : index
    %c0_0 = arith.constant 0 : index
    %c0_1 = arith.constant 0 : index
    %0 = vector.load %arg1[%c0, %c0_0, %c0_1] : memref<1x16x16xbf16, #tpu.memory_space<vmem>>, vector<1x16x16xbf16>
    %1 = vector.shape_cast %0 : vector<1x16x16xbf16> to vector<16x16xbf16>
    %c0_2 = arith.constant 0 : index
    %c0_3 = arith.constant 0 : index
    %c0_4 = arith.constant 0 : index
    %2 = vector.load %arg2[%c0_2, %c0_3, %c0_4] : memref<1x16x32xbf16, #tpu.memory_space<vmem>>, vector<1x16x32xbf16>
    %3 = vector.shape_cast %2 : vector<1x16x32xbf16> to vector<16x32xbf16>
    %cst = arith.constant dense<0.000000e+00> : vector<16x32xf32>
    %4 = tpu.matmul %1, %3, %cst {dimension_numbers = #tpu.dot_dimension_numbers<[1], [0], [0], [1], [0, 0, 1, 1], [], []>} : vector<16x16xbf16>, vector<16x32xbf16>, vector<16x32xf32> -> vector<16x32xf32>
    %c0_5 = arith.constant 0 : index
    %c0_6 = arith.constant 0 : index
    %5 = vector.load %arg3[%c0_5, %c0_6] : memref<1x32xf32, #tpu.memory_space<vmem>>, vector<1x32xf32>
    %6 = vector.broadcast %5 : vector<1x32xf32> to vector<16x32xf32>
    %7 = arith.mulf %4, %6 : vector<16x32xf32>
    %c0_7 = arith.constant 0 : index
    %c0_8 = arith.constant 0 : index
    %8 = vector.load %arg4[%c0_7, %c0_8] : memref<1x32xf32, #tpu.memory_space<vmem>>, vector<1x32xf32>
    %9 = vector.broadcast %8 : vector<1x32xf32> to vector<16x32xf32>
    %10 = arith.addf %7, %9 : vector<16x32xf32>
    %c0_9 = arith.constant 0 : index
    %c0_10 = arith.constant 0 : index
    %11 = vector.load %arg6[%c0_9, %c0_10] : memref<16x32xbf16, #tpu.memory_space<vmem>>, vector<16x32xbf16>
    %12 = arith.extf %11 : vector<16x32xbf16> to vector<16x32xf32>
    %13 = arith.addf %10, %12 : vector<16x32xf32>
    %cst_11 = arith.constant 0.000000e+00 : f32
    %14 = vector.broadcast %cst_11 : f32 to vector<16x32xf32>
    %15 = arith.cmpf oge, %13, %14 : vector<16x32xf32>
    %c0_12 = arith.constant 0 : index
    %c0_13 = arith.constant 0 : index
    %16 = vector.load %arg5[%c0_12, %c0_13] : memref<1x32xf32, #tpu.memory_space<vmem>>, vector<1x32xf32>
    %17 = vector.broadcast %16 : vector<1x32xf32> to vector<16x32xf32>
    %18 = arith.mulf %13, %17 : vector<16x32xf32>
    %19 = arith.select %15, %13, %18 : vector<16x32xi1>, vector<16x32xf32>
    %20 = arith.truncf %19 : vector<16x32xf32> to vector<16x32xbf16>
    %c0_14 = arith.constant 0 : index
    %c0_15 = arith.constant 0 : index
    %21 = vector.load %arg7[%c0_14, %c0_15] : memref<16x32xbf16, #tpu.memory_space<vmem>>, vector<16x32xbf16>
    tpu.vector_store %arg7[%c0_14, %c0_15], %20 {strides = array<i32>} : memref<16x32xbf16, #tpu.memory_space<vmem>>, vector<16x32xbf16>,
    return
  }
  func.func @transform_0(%arg0: i32) -> (i32, i32, i32) {
    %c0_i32 = arith.constant 0 : i32
    %c0_i32_0 = arith.constant 0 : i32
    %c0_i32_1 = arith.constant 0 : i32
    return %c0_i32, %arg0, %c0_i32_0 : i32, i32, i32
  }
  func.func @transform_1(%arg0: i32) -> (i32, i32, i32) {
    %c0_i32 = arith.constant 0 : i32
    %c0_i32_0 = arith.constant 0 : i32
    %c0_i32_1 = arith.constant 0 : i32
    %c0_i32_2 = arith.constant 0 : i32
    return %c0_i32, %c0_i32_0, %c0_i32_1 : i32, i32, i32
  }
  func.func @transform_2(%arg0: i32) -> (i32, i32) {
    %c0_i32 = arith.constant 0 : i32
    %c0_i32_0 = arith.constant 0 : i32
    %c0_i32_1 = arith.constant 0 : i32
    return %c0_i32, %c0_i32_0 : i32, i32
  }
  func.func @transform_3(%arg0: i32) -> (i32, i32) {
    %c0_i32 = arith.constant 0 : i32
    %c0_i32_0 = arith.constant 0 : i32
    %c0_i32_1 = arith.constant 0 : i32
    return %c0_i32, %c0_i32_0 : i32, i32
  }
  func.func @transform_4(%arg0: i32) -> (i32, i32) {
    %c0_i32 = arith.constant 0 : i32
    %c0_i32_0 = arith.constant 0 : i32
    %c0_i32_1 = arith.constant 0 : i32
    return %c0_i32, %c0_i32_0 : i32, i32
  }
  func.func @transform_5(%arg0: i32) -> (i32, i32) {
    %c0_i32 = arith.constant 0 : i32
    %c0_i32_0 = arith.constant 0 : i32
    return %arg0, %c0_i32 : i32, i32
  }
  func.func @transform_6(%arg0: i32) -> (i32, i32) {
    %c0_i32 = arith.constant 0 : i32
    %c0_i32_0 = arith.constant 0 : i32
    return %arg0, %c0_i32 : i32, i32
  }
}

module attributes {stable_mosaic.version = 11 : i64} {
  func.func @_fused_matmul_kernel(%arg0: i32, %arg1: memref<5x16x16xbf16, #tpu.memory_space<vmem>>, %arg2: memref<5x16x8xbf16, #tpu.memory_space<vmem>>, %arg3: memref<1x8xf32, #tpu.memory_space<vmem>>, %arg4: memref<1x8xf32, #tpu.memory_space<vmem>>, %arg5: memref<16x8xbf16, #tpu.memory_space<vmem>>) attributes {dimension_semantics = [#tpu.dimension_semantics<parallel>], iteration_bounds = array<i64: 1>, scalar_prefetch = 0 : i64, scratch_operands = 0 : i64, tpu.core_type = #tpu.core_type<tc>, window_params = [{transform_indices = @transform_0, window_bounds = array<i64: 5, 16, 16>}, {pipeline_mode = #tpu.pipeline_mode<synchronous>, transform_indices = @transform_1, window_bounds = array<i64: 5, 16, 8>}, {pipeline_mode = #tpu.pipeline_mode<synchronous>, transform_indices = @transform_2, window_bounds = array<i64: 1, 8>}, {pipeline_mode = #tpu.pipeline_mode<synchronous>, transform_indices = @transform_3, window_bounds = array<i64: 1, 8>}, {transform_indices = @transform_4, window_bounds = array<i64: 16, 8>}]} {
    %c0 = arith.constant 0 : index
    %c0_0 = arith.constant 0 : index
    %c0_1 = arith.constant 0 : index
    %0 = vector.load %arg1[%c0, %c0_0, %c0_1] : memref<5x16x16xbf16, #tpu.memory_space<vmem>>, vector<1x16x16xbf16>
    %1 = vector.shape_cast %0 : vector<1x16x16xbf16> to vector<16x16xbf16>
    %c0_2 = arith.constant 0 : index
    %c0_3 = arith.constant 0 : index
    %c0_4 = arith.constant 0 : index
    %2 = vector.load %arg2[%c0_2, %c0_3, %c0_4] : memref<5x16x8xbf16, #tpu.memory_space<vmem>>, vector<1x16x8xbf16>
    %3 = vector.shape_cast %2 : vector<1x16x8xbf16> to vector<16x8xbf16>
    %cst = arith.constant dense<0.000000e+00> : vector<16x8xf32>
    %4 = tpu.matmul %1, %3, %cst {dimension_numbers = #tpu.dot_dimension_numbers<[1], [0], [0], [1], [0, 0, 1, 1], [], []>} : vector<16x16xbf16>, vector<16x8xbf16>, vector<16x8xf32> -> vector<16x8xf32>
    %c1 = arith.constant 1 : index
    %c0_5 = arith.constant 0 : index
    %c0_6 = arith.constant 0 : index
    %5 = vector.load %arg1[%c1, %c0_5, %c0_6] : memref<5x16x16xbf16, #tpu.memory_space<vmem>>, vector<1x16x16xbf16>
    %6 = vector.shape_cast %5 : vector<1x16x16xbf16> to vector<16x16xbf16>
    %c1_7 = arith.constant 1 : index
    %c0_8 = arith.constant 0 : index
    %c0_9 = arith.constant 0 : index
    %7 = vector.load %arg2[%c1_7, %c0_8, %c0_9] : memref<5x16x8xbf16, #tpu.memory_space<vmem>>, vector<1x16x8xbf16>
    %8 = vector.shape_cast %7 : vector<1x16x8xbf16> to vector<16x8xbf16>
    %cst_10 = arith.constant dense<0.000000e+00> : vector<16x8xf32>
    %9 = tpu.matmul %6, %8, %cst_10 {dimension_numbers = #tpu.dot_dimension_numbers<[1], [0], [0], [1], [0, 0, 1, 1], [], []>} : vector<16x16xbf16>, vector<16x8xbf16>, vector<16x8xf32> -> vector<16x8xf32>
    %10 = arith.addf %4, %9 : vector<16x8xf32>
    %c2 = arith.constant 2 : index
    %c0_11 = arith.constant 0 : index
    %c0_12 = arith.constant 0 : index
    %11 = vector.load %arg1[%c2, %c0_11, %c0_12] : memref<5x16x16xbf16, #tpu.memory_space<vmem>>, vector<1x16x16xbf16>
    %12 = vector.shape_cast %11 : vector<1x16x16xbf16> to vector<16x16xbf16>
    %c2_13 = arith.constant 2 : index
    %c0_14 = arith.constant 0 : index
    %c0_15 = arith.constant 0 : index
    %13 = vector.load %arg2[%c2_13, %c0_14, %c0_15] : memref<5x16x8xbf16, #tpu.memory_space<vmem>>, vector<1x16x8xbf16>
    %14 = vector.shape_cast %13 : vector<1x16x8xbf16> to vector<16x8xbf16>
    %cst_16 = arith.constant dense<0.000000e+00> : vector<16x8xf32>
    %15 = tpu.matmul %12, %14, %cst_16 {dimension_numbers = #tpu.dot_dimension_numbers<[1], [0], [0], [1], [0, 0, 1, 1], [], []>} : vector<16x16xbf16>, vector<16x8xbf16>, vector<16x8xf32> -> vector<16x8xf32>
    %16 = arith.addf %10, %15 : vector<16x8xf32>
    %c3 = arith.constant 3 : index
    %c0_17 = arith.constant 0 : index
    %c0_18 = arith.constant 0 : index
    %17 = vector.load %arg1[%c3, %c0_17, %c0_18] : memref<5x16x16xbf16, #tpu.memory_space<vmem>>, vector<1x16x16xbf16>
    %18 = vector.shape_cast %17 : vector<1x16x16xbf16> to vector<16x16xbf16>
    %c3_19 = arith.constant 3 : index
    %c0_20 = arith.constant 0 : index
    %c0_21 = arith.constant 0 : index
    %19 = vector.load %arg2[%c3_19, %c0_20, %c0_21] : memref<5x16x8xbf16, #tpu.memory_space<vmem>>, vector<1x16x8xbf16>
    %20 = vector.shape_cast %19 : vector<1x16x8xbf16> to vector<16x8xbf16>
    %cst_22 = arith.constant dense<0.000000e+00> : vector<16x8xf32>
    %21 = tpu.matmul %18, %20, %cst_22 {dimension_numbers = #tpu.dot_dimension_numbers<[1], [0], [0], [1], [0, 0, 1, 1], [], []>} : vector<16x16xbf16>, vector<16x8xbf16>, vector<16x8xf32> -> vector<16x8xf32>
    %22 = arith.addf %16, %21 : vector<16x8xf32>
    %c4 = arith.constant 4 : index
    %c0_23 = arith.constant 0 : index
    %c0_24 = arith.constant 0 : index
    %23 = vector.load %arg1[%c4, %c0_23, %c0_24] : memref<5x16x16xbf16, #tpu.memory_space<vmem>>, vector<1x16x16xbf16>
    %24 = vector.shape_cast %23 : vector<1x16x16xbf16> to vector<16x16xbf16>
    %c4_25 = arith.constant 4 : index
    %c0_26 = arith.constant 0 : index
    %c0_27 = arith.constant 0 : index
    %25 = vector.load %arg2[%c4_25, %c0_26, %c0_27] : memref<5x16x8xbf16, #tpu.memory_space<vmem>>, vector<1x16x8xbf16>
    %26 = vector.shape_cast %25 : vector<1x16x8xbf16> to vector<16x8xbf16>
    %cst_28 = arith.constant dense<0.000000e+00> : vector<16x8xf32>
    %27 = tpu.matmul %24, %26, %cst_28 {dimension_numbers = #tpu.dot_dimension_numbers<[1], [0], [0], [1], [0, 0, 1, 1], [], []>} : vector<16x16xbf16>, vector<16x8xbf16>, vector<16x8xf32> -> vector<16x8xf32>
    %28 = arith.addf %22, %27 : vector<16x8xf32>
    %c0_29 = arith.constant 0 : index
    %c0_30 = arith.constant 0 : index
    %29 = vector.load %arg3[%c0_29, %c0_30] : memref<1x8xf32, #tpu.memory_space<vmem>>, vector<1x8xf32>
    %30 = vector.broadcast %29 : vector<1x8xf32> to vector<16x8xf32>
    %31 = arith.mulf %28, %30 : vector<16x8xf32>
    %c0_31 = arith.constant 0 : index
    %c0_32 = arith.constant 0 : index
    %32 = vector.load %arg4[%c0_31, %c0_32] : memref<1x8xf32, #tpu.memory_space<vmem>>, vector<1x8xf32>
    %33 = vector.broadcast %32 : vector<1x8xf32> to vector<16x8xf32>
    %34 = arith.addf %31, %33 : vector<16x8xf32>
    %35 = arith.truncf %34 : vector<16x8xf32> to vector<16x8xbf16>
    %c0_33 = arith.constant 0 : index
    %c0_34 = arith.constant 0 : index
    %36 = vector.load %arg5[%c0_33, %c0_34] : memref<16x8xbf16, #tpu.memory_space<vmem>>, vector<16x8xbf16>
    tpu.vector_store %arg5[%c0_33, %c0_34], %35 {strides = array<i32>} : memref<16x8xbf16, #tpu.memory_space<vmem>>, vector<16x8xbf16>,
    return
  }
  func.func @transform_0(%arg0: i32) -> (i32, i32, i32) {
    %c0_i32 = arith.constant 0 : i32
    %c0_i32_0 = arith.constant 0 : i32
    %c0_i32_1 = arith.constant 0 : i32
    return %c0_i32, %arg0, %c0_i32_0 : i32, i32, i32
  }
  func.func @transform_1(%arg0: i32) -> (i32, i32, i32) {
    %c0_i32 = arith.constant 0 : i32
    %c0_i32_0 = arith.constant 0 : i32
    %c0_i32_1 = arith.constant 0 : i32
    %c0_i32_2 = arith.constant 0 : i32
    return %c0_i32, %c0_i32_0, %c0_i32_1 : i32, i32, i32
  }
  func.func @transform_2(%arg0: i32) -> (i32, i32) {
    %c0_i32 = arith.constant 0 : i32
    %c0_i32_0 = arith.constant 0 : i32
    %c0_i32_1 = arith.constant 0 : i32
    return %c0_i32, %c0_i32_0 : i32, i32
  }
  func.func @transform_3(%arg0: i32) -> (i32, i32) {
    %c0_i32 = arith.constant 0 : i32
    %c0_i32_0 = arith.constant 0 : i32
    %c0_i32_1 = arith.constant 0 : i32
    return %c0_i32, %c0_i32_0 : i32, i32
  }
  func.func @transform_4(%arg0: i32) -> (i32, i32) {
    %c0_i32 = arith.constant 0 : i32
    %c0_i32_0 = arith.constant 0 : i32
    return %arg0, %c0_i32 : i32, i32
  }
}

module attributes {stable_mosaic.version = 11 : i64} {
  func.func @_fused_matmul_kernel(%arg0: i32, %arg1: memref<1x16x32xbf16, #tpu.memory_space<vmem>>, %arg2: memref<1x32x16xbf16, #tpu.memory_space<vmem>>, %arg3: memref<1x16xf32, #tpu.memory_space<vmem>>, %arg4: memref<1x16xf32, #tpu.memory_space<vmem>>, %arg5: memref<16x16xbf16, #tpu.memory_space<vmem>>) attributes {dimension_semantics = [#tpu.dimension_semantics<parallel>], iteration_bounds = array<i64: 1>, scalar_prefetch = 0 : i64, scratch_operands = 0 : i64, tpu.core_type = #tpu.core_type<tc>, window_params = [{transform_indices = @transform_0, window_bounds = array<i64: 1, 16, 32>}, {pipeline_mode = #tpu.pipeline_mode<synchronous>, transform_indices = @transform_1, window_bounds = array<i64: 1, 32, 16>}, {pipeline_mode = #tpu.pipeline_mode<synchronous>, transform_indices = @transform_2, window_bounds = array<i64: 1, 16>}, {pipeline_mode = #tpu.pipeline_mode<synchronous>, transform_indices = @transform_3, window_bounds = array<i64: 1, 16>}, {transform_indices = @transform_4, window_bounds = array<i64: 16, 16>}]} {
    %c0 = arith.constant 0 : index
    %c0_0 = arith.constant 0 : index
    %c0_1 = arith.constant 0 : index
    %0 = vector.load %arg1[%c0, %c0_0, %c0_1] : memref<1x16x32xbf16, #tpu.memory_space<vmem>>, vector<1x16x32xbf16>
    %1 = vector.shape_cast %0 : vector<1x16x32xbf16> to vector<16x32xbf16>
    %c0_2 = arith.constant 0 : index
    %c0_3 = arith.constant 0 : index
    %c0_4 = arith.constant 0 : index
    %2 = vector.load %arg2[%c0_2, %c0_3, %c0_4] : memref<1x32x16xbf16, #tpu.memory_space<vmem>>, vector<1x32x16xbf16>
    %3 = vector.shape_cast %2 : vector<1x32x16xbf16> to vector<32x16xbf16>
    %cst = arith.constant dense<0.000000e+00> : vector<16x16xf32>
    %4 = tpu.matmul %1, %3, %cst {dimension_numbers = #tpu.dot_dimension_numbers<[1], [0], [0], [1], [0, 0, 1, 1], [], []>} : vector<16x32xbf16>, vector<32x16xbf16>, vector<16x16xf32> -> vector<16x16xf32>
    %c0_5 = arith.constant 0 : index
    %c0_6 = arith.constant 0 : index
    %5 = vector.load %arg3[%c0_5, %c0_6] : memref<1x16xf32, #tpu.memory_space<vmem>>, vector<1x16xf32>
    %6 = vector.broadcast %5 : vector<1x16xf32> to vector<16x16xf32>
    %7 = arith.mulf %4, %6 : vector<16x16xf32>
    %c0_7 = arith.constant 0 : index
    %c0_8 = arith.constant 0 : index
    %8 = vector.load %arg4[%c0_7, %c0_8] : memref<1x16xf32, #tpu.memory_space<vmem>>, vector<1x16xf32>
    %9 = vector.broadcast %8 : vector<1x16xf32> to vector<16x16xf32>
    %10 = arith.addf %7, %9 : vector<16x16xf32>
    %11 = arith.truncf %10 : vector<16x16xf32> to vector<16x16xbf16>
    %c0_9 = arith.constant 0 : index
    %c0_10 = arith.constant 0 : index
    %12 = vector.load %arg5[%c0_9, %c0_10] : memref<16x16xbf16, #tpu.memory_space<vmem>>, vector<16x16xbf16>
    tpu.vector_store %arg5[%c0_9, %c0_10], %11 {strides = array<i32>} : memref<16x16xbf16, #tpu.memory_space<vmem>>, vector<16x16xbf16>,
    return
  }
  func.func @transform_0(%arg0: i32) -> (i32, i32, i32) {
    %c0_i32 = arith.constant 0 : i32
    %c0_i32_0 = arith.constant 0 : i32
    %c0_i32_1 = arith.constant 0 : i32
    return %c0_i32, %arg0, %c0_i32_0 : i32, i32, i32
  }
  func.func @transform_1(%arg0: i32) -> (i32, i32, i32) {
    %c0_i32 = arith.constant 0 : i32
    %c0_i32_0 = arith.constant 0 : i32
    %c0_i32_1 = arith.constant 0 : i32
    %c0_i32_2 = arith.constant 0 : i32
    return %c0_i32, %c0_i32_0, %c0_i32_1 : i32, i32, i32
  }
  func.func @transform_2(%arg0: i32) -> (i32, i32) {
    %c0_i32 = arith.constant 0 : i32
    %c0_i32_0 = arith.constant 0 : i32
    %c0_i32_1 = arith.constant 0 : i32
    return %c0_i32, %c0_i32_0 : i32, i32
  }
  func.func @transform_3(%arg0: i32) -> (i32, i32) {
    %c0_i32 = arith.constant 0 : i32
    %c0_i32_0 = arith.constant 0 : i32
    %c0_i32_1 = arith.constant 0 : i32
    return %c0_i32, %c0_i32_0 : i32, i32
  }
  func.func @transform_4(%arg0: i32) -> (i32, i32) {
    %c0_i32 = arith.constant 0 : i32
    %c0_i32_0 = arith.constant 0 : i32
    return %arg0, %c0_i32 : i32, i32
  }
}

module attributes {stable_mosaic.version = 11 : i64} {
  func.func @_fused_matmul_kernel(%arg0: i32, %arg1: memref<5x16x16xbf16, #tpu.memory_space<vmem>>, %arg2: memref<5x16x8xbf16, #tpu.memory_space<vmem>>, %arg3: memref<1x8xf32, #tpu.memory_space<vmem>>, %arg4: memref<1x8xf32, #tpu.memory_space<vmem>>, %arg5: memref<1x8xf32, #tpu.memory_space<vmem>>, %arg6: memref<16x8xbf16, #tpu.memory_space<vmem>>) attributes {dimension_semantics = [#tpu.dimension_semantics<parallel>], iteration_bounds = array<i64: 1>, scalar_prefetch = 0 : i64, scratch_operands = 0 : i64, tpu.core_type = #tpu.core_type<tc>, window_params = [{transform_indices = @transform_0, window_bounds = array<i64: 5, 16, 16>}, {pipeline_mode = #tpu.pipeline_mode<synchronous>, transform_indices = @transform_1, window_bounds = array<i64: 5, 16, 8>}, {pipeline_mode = #tpu.pipeline_mode<synchronous>, transform_indices = @transform_2, window_bounds = array<i64: 1, 8>}, {pipeline_mode = #tpu.pipeline_mode<synchronous>, transform_indices = @transform_3, window_bounds = array<i64: 1, 8>}, {pipeline_mode = #tpu.pipeline_mode<synchronous>, transform_indices = @transform_4, window_bounds = array<i64: 1, 8>}, {transform_indices = @transform_5, window_bounds = array<i64: 16, 8>}]} {
    %c0 = arith.constant 0 : index
    %c0_0 = arith.constant 0 : index
    %c0_1 = arith.constant 0 : index
    %0 = vector.load %arg1[%c0, %c0_0, %c0_1] : memref<5x16x16xbf16, #tpu.memory_space<vmem>>, vector<1x16x16xbf16>
    %1 = vector.shape_cast %0 : vector<1x16x16xbf16> to vector<16x16xbf16>
    %c0_2 = arith.constant 0 : index
    %c0_3 = arith.constant 0 : index
    %c0_4 = arith.constant 0 : index
    %2 = vector.load %arg2[%c0_2, %c0_3, %c0_4] : memref<5x16x8xbf16, #tpu.memory_space<vmem>>, vector<1x16x8xbf16>
    %3 = vector.shape_cast %2 : vector<1x16x8xbf16> to vector<16x8xbf16>
    %cst = arith.constant dense<0.000000e+00> : vector<16x8xf32>
    %4 = tpu.matmul %1, %3, %cst {dimension_numbers = #tpu.dot_dimension_numbers<[1], [0], [0], [1], [0, 0, 1, 1], [], []>} : vector<16x16xbf16>, vector<16x8xbf16>, vector<16x8xf32> -> vector<16x8xf32>
    %c1 = arith.constant 1 : index
    %c0_5 = arith.constant 0 : index
    %c0_6 = arith.constant 0 : index
    %5 = vector.load %arg1[%c1, %c0_5, %c0_6] : memref<5x16x16xbf16, #tpu.memory_space<vmem>>, vector<1x16x16xbf16>
    %6 = vector.shape_cast %5 : vector<1x16x16xbf16> to vector<16x16xbf16>
    %c1_7 = arith.constant 1 : index
    %c0_8 = arith.constant 0 : index
    %c0_9 = arith.constant 0 : index
    %7 = vector.load %arg2[%c1_7, %c0_8, %c0_9] : memref<5x16x8xbf16, #tpu.memory_space<vmem>>, vector<1x16x8xbf16>
    %8 = vector.shape_cast %7 : vector<1x16x8xbf16> to vector<16x8xbf16>
    %cst_10 = arith.constant dense<0.000000e+00> : vector<16x8xf32>
    %9 = tpu.matmul %6, %8, %cst_10 {dimension_numbers = #tpu.dot_dimension_numbers<[1], [0], [0], [1], [0, 0, 1, 1], [], []>} : vector<16x16xbf16>, vector<16x8xbf16>, vector<16x8xf32> -> vector<16x8xf32>
    %10 = arith.addf %4, %9 : vector<16x8xf32>
    %c2 = arith.constant 2 : index
    %c0_11 = arith.constant 0 : index
    %c0_12 = arith.constant 0 : index
    %11 = vector.load %arg1[%c2, %c0_11, %c0_12] : memref<5x16x16xbf16, #tpu.memory_space<vmem>>, vector<1x16x16xbf16>
    %12 = vector.shape_cast %11 : vector<1x16x16xbf16> to vector<16x16xbf16>
    %c2_13 = arith.constant 2 : index
    %c0_14 = arith.constant 0 : index
    %c0_15 = arith.constant 0 : index
    %13 = vector.load %arg2[%c2_13, %c0_14, %c0_15] : memref<5x16x8xbf16, #tpu.memory_space<vmem>>, vector<1x16x8xbf16>
    %14 = vector.shape_cast %13 : vector<1x16x8xbf16> to vector<16x8xbf16>
    %cst_16 = arith.constant dense<0.000000e+00> : vector<16x8xf32>
    %15 = tpu.matmul %12, %14, %cst_16 {dimension_numbers = #tpu.dot_dimension_numbers<[1], [0], [0], [1], [0, 0, 1, 1], [], []>} : vector<16x16xbf16>, vector<16x8xbf16>, vector<16x8xf32> -> vector<16x8xf32>
    %16 = arith.addf %10, %15 : vector<16x8xf32>
    %c3 = arith.constant 3 : index
    %c0_17 = arith.constant 0 : index
    %c0_18 = arith.constant 0 : index
    %17 = vector.load %arg1[%c3, %c0_17, %c0_18] : memref<5x16x16xbf16, #tpu.memory_space<vmem>>, vector<1x16x16xbf16>
    %18 = vector.shape_cast %17 : vector<1x16x16xbf16> to vector<16x16xbf16>
    %c3_19 = arith.constant 3 : index
    %c0_20 = arith.constant 0 : index
    %c0_21 = arith.constant 0 : index
    %19 = vector.load %arg2[%c3_19, %c0_20, %c0_21] : memref<5x16x8xbf16, #tpu.memory_space<vmem>>, vector<1x16x8xbf16>
    %20 = vector.shape_cast %19 : vector<1x16x8xbf16> to vector<16x8xbf16>
    %cst_22 = arith.constant dense<0.000000e+00> : vector<16x8xf32>
    %21 = tpu.matmul %18, %20, %cst_22 {dimension_numbers = #tpu.dot_dimension_numbers<[1], [0], [0], [1], [0, 0, 1, 1], [], []>} : vector<16x16xbf16>, vector<16x8xbf16>, vector<16x8xf32> -> vector<16x8xf32>
    %22 = arith.addf %16, %21 : vector<16x8xf32>
    %c4 = arith.constant 4 : index
    %c0_23 = arith.constant 0 : index
    %c0_24 = arith.constant 0 : index
    %23 = vector.load %arg1[%c4, %c0_23, %c0_24] : memref<5x16x16xbf16, #tpu.memory_space<vmem>>, vector<1x16x16xbf16>
    %24 = vector.shape_cast %23 : vector<1x16x16xbf16> to vector<16x16xbf16>
    %c4_25 = arith.constant 4 : index
    %c0_26 = arith.constant 0 : index
    %c0_27 = arith.constant 0 : index
    %25 = vector.load %arg2[%c4_25, %c0_26, %c0_27] : memref<5x16x8xbf16, #tpu.memory_space<vmem>>, vector<1x16x8xbf16>
    %26 = vector.shape_cast %25 : vector<1x16x8xbf16> to vector<16x8xbf16>
    %cst_28 = arith.constant dense<0.000000e+00> : vector<16x8xf32>
    %27 = tpu.matmul %24, %26, %cst_28 {dimension_numbers = #tpu.dot_dimension_numbers<[1], [0], [0], [1], [0, 0, 1, 1], [], []>} : vector<16x16xbf16>, vector<16x8xbf16>, vector<16x8xf32> -> vector<16x8xf32>
    %28 = arith.addf %22, %27 : vector<16x8xf32>
    %c0_29 = arith.constant 0 : index
    %c0_30 = arith.constant 0 : index
    %29 = vector.load %arg3[%c0_29, %c0_30] : memref<1x8xf32, #tpu.memory_space<vmem>>, vector<1x8xf32>
    %30 = vector.broadcast %29 : vector<1x8xf32> to vector<16x8xf32>
    %31 = arith.mulf %28, %30 : vector<16x8xf32>
    %c0_31 = arith.constant 0 : index
    %c0_32 = arith.constant 0 : index
    %32 = vector.load %arg4[%c0_31, %c0_32] : memref<1x8xf32, #tpu.memory_space<vmem>>, vector<1x8xf32>
    %33 = vector.broadcast %32 : vector<1x8xf32> to vector<16x8xf32>
    %34 = arith.addf %31, %33 : vector<16x8xf32>
    %cst_33 = arith.constant 0.000000e+00 : f32
    %35 = vector.broadcast %cst_33 : f32 to vector<16x8xf32>
    %36 = arith.cmpf oge, %34, %35 : vector<16x8xf32>
    %c0_34 = arith.constant 0 : index
    %c0_35 = arith.constant 0 : index
    %37 = vector.load %arg5[%c0_34, %c0_35] : memref<1x8xf32, #tpu.memory_space<vmem>>, vector<1x8xf32>
    %38 = vector.broadcast %37 : vector<1x8xf32> to vector<16x8xf32>
    %39 = arith.mulf %34, %38 : vector<16x8xf32>
    %40 = arith.select %36, %34, %39 : vector<16x8xi1>, vector<16x8xf32>
    %41 = arith.truncf %40 : vector<16x8xf32> to vector<16x8xbf16>
    %c0_36 = arith.constant 0 : index
    %c0_37 = arith.constant 0 : index
    %42 = vector.load %arg6[%c0_36, %c0_37] : memref<16x8xbf16, #tpu.memory_space<vmem>>, vector<16x8xbf16>
    tpu.vector_store %arg6[%c0_36, %c0_37], %41 {strides = array<i32>} : memref<16x8xbf16, #tpu.memory_space<vmem>>, vector<16x8xbf16>,
    return
  }
  func.func @transform_0(%arg0: i32) -> (i32, i32, i32) {
    %c0_i32 = arith.constant 0 : i32
    %c0_i32_0 = arith.constant 0 : i32
    %c0_i32_1 = arith.constant 0 : i32
    return %c0_i32, %arg0, %c0_i32_0 : i32, i32, i32
  }
  func.func @transform_1(%arg0: i32) -> (i32, i32, i32) {
    %c0_i32 = arith.constant 0 : i32
    %c0_i32_0 = arith.constant 0 : i32
    %c0_i32_1 = arith.constant 0 : i32
    %c0_i32_2 = arith.constant 0 : i32
    return %c0_i32, %c0_i32_0, %c0_i32_1 : i32, i32, i32
  }
  func.func @transform_2(%arg0: i32) -> (i32, i32) {
    %c0_i32 = arith.constant 0 : i32
    %c0_i32_0 = arith.constant 0 : i32
    %c0_i32_1 = arith.constant 0 : i32
    return %c0_i32, %c0_i32_0 : i32, i32
  }
  func.func @transform_3(%arg0: i32) -> (i32, i32) {
    %c0_i32 = arith.constant 0 : i32
    %c0_i32_0 = arith.constant 0 : i32
    %c0_i32_1 = arith.constant 0 : i32
    return %c0_i32, %c0_i32_0 : i32, i32
  }
  func.func @transform_4(%arg0: i32) -> (i32, i32) {
    %c0_i32 = arith.constant 0 : i32
    %c0_i32_0 = arith.constant 0 : i32
    %c0_i32_1 = arith.constant 0 : i32
    return %c0_i32, %c0_i32_0 : i32, i32
  }
  func.func @transform_5(%arg0: i32) -> (i32, i32) {
    %c0_i32 = arith.constant 0 : i32
    %c0_i32_0 = arith.constant 0 : i32
    return %arg0, %c0_i32 : i32, i32
  }
}

module attributes {stable_mosaic.version = 11 : i64} {
  func.func @_fused_matmul_kernel(%arg0: i32, %arg1: memref<1x16x32xbf16, #tpu.memory_space<vmem>>, %arg2: memref<1x32x8xbf16, #tpu.memory_space<vmem>>, %arg3: memref<1x8xf32, #tpu.memory_space<vmem>>, %arg4: memref<1x8xf32, #tpu.memory_space<vmem>>, %arg5: memref<16x8xbf16, #tpu.memory_space<vmem>>) attributes {dimension_semantics = [#tpu.dimension_semantics<parallel>], iteration_bounds = array<i64: 1>, scalar_prefetch = 0 : i64, scratch_operands = 0 : i64, tpu.core_type = #tpu.core_type<tc>, window_params = [{transform_indices = @transform_0, window_bounds = array<i64: 1, 16, 32>}, {pipeline_mode = #tpu.pipeline_mode<synchronous>, transform_indices = @transform_1, window_bounds = array<i64: 1, 32, 8>}, {pipeline_mode = #tpu.pipeline_mode<synchronous>, transform_indices = @transform_2, window_bounds = array<i64: 1, 8>}, {pipeline_mode = #tpu.pipeline_mode<synchronous>, transform_indices = @transform_3, window_bounds = array<i64: 1, 8>}, {transform_indices = @transform_4, window_bounds = array<i64: 16, 8>}]} {
    %c0 = arith.constant 0 : index
    %c0_0 = arith.constant 0 : index
    %c0_1 = arith.constant 0 : index
    %0 = vector.load %arg1[%c0, %c0_0, %c0_1] : memref<1x16x32xbf16, #tpu.memory_space<vmem>>, vector<1x16x32xbf16>
    %1 = vector.shape_cast %0 : vector<1x16x32xbf16> to vector<16x32xbf16>
    %c0_2 = arith.constant 0 : index
    %c0_3 = arith.constant 0 : index
    %c0_4 = arith.constant 0 : index
    %2 = vector.load %arg2[%c0_2, %c0_3, %c0_4] : memref<1x32x8xbf16, #tpu.memory_space<vmem>>, vector<1x32x8xbf16>
    %3 = vector.shape_cast %2 : vector<1x32x8xbf16> to vector<32x8xbf16>
    %cst = arith.constant dense<0.000000e+00> : vector<16x8xf32>
    %4 = tpu.matmul %1, %3, %cst {dimension_numbers = #tpu.dot_dimension_numbers<[1], [0], [0], [1], [0, 0, 1, 1], [], []>} : vector<16x32xbf16>, vector<32x8xbf16>, vector<16x8xf32> -> vector<16x8xf32>
    %c0_5 = arith.constant 0 : index
    %c0_6 = arith.constant 0 : index
    %5 = vector.load %arg3[%c0_5, %c0_6] : memref<1x8xf32, #tpu.memory_space<vmem>>, vector<1x8xf32>
    %6 = vector.broadcast %5 : vector<1x8xf32> to vector<16x8xf32>
    %7 = arith.mulf %4, %6 : vector<16x8xf32>
    %c0_7 = arith.constant 0 : index
    %c0_8 = arith.constant 0 : index
    %8 = vector.load %arg4[%c0_7, %c0_8] : memref<1x8xf32, #tpu.memory_space<vmem>>, vector<1x8xf32>
    %9 = vector.broadcast %8 : vector<1x8xf32> to vector<16x8xf32>
    %10 = arith.addf %7, %9 : vector<16x8xf32>
    %cst_9 = arith.constant 0.000000e+00 : f32
    %11 = vector.broadcast %cst_9 : f32 to vector<16x8xf32>
    %12 = arith.maximumf %10, %11 : vector<16x8xf32>
    %13 = arith.truncf %12 : vector<16x8xf32> to vector<16x8xbf16>
    %c0_10 = arith.constant 0 : index
    %c0_11 = arith.constant 0 : index
    %14 = vector.load %arg5[%c0_10, %c0_11] : memref<16x8xbf16, #tpu.memory_space<vmem>>, vector<16x8xbf16>
    tpu.vector_store %arg5[%c0_10, %c0_11], %13 {strides = array<i32>} : memref<16x8xbf16, #tpu.memory_space<vmem>>, vector<16x8xbf16>,
    return
  }
  func.func @transform_0(%arg0: i32) -> (i32, i32, i32) {
    %c0_i32 = arith.constant 0 : i32
    %c0_i32_0 = arith.constant 0 : i32
    %c0_i32_1 = arith.constant 0 : i32
    return %c0_i32, %arg0, %c0_i32_0 : i32, i32, i32
  }
  func.func @transform_1(%arg0: i32) -> (i32, i32, i32) {
    %c0_i32 = arith.constant 0 : i32
    %c0_i32_0 = arith.constant 0 : i32
    %c0_i32_1 = arith.constant 0 : i32
    %c0_i32_2 = arith.constant 0 : i32
    return %c0_i32, %c0_i32_0, %c0_i32_1 : i32, i32, i32
  }
  func.func @transform_2(%arg0: i32) -> (i32, i32) {
    %c0_i32 = arith.constant 0 : i32
    %c0_i32_0 = arith.constant 0 : i32
    %c0_i32_1 = arith.constant 0 : i32
    return %c0_i32, %c0_i32_0 : i32, i32
  }
  func.func @transform_3(%arg0: i32) -> (i32, i32) {
    %c0_i32 = arith.constant 0 : i32
    %c0_i32_0 = arith.constant 0 : i32
    %c0_i32_1 = arith.constant 0 : i32
    return %c0_i32, %c0_i32_0 : i32, i32
  }
  func.func @transform_4(%arg0: i32) -> (i32, i32) {
    %c0_i32 = arith.constant 0 : i32
    %c0_i32_0 = arith.constant 0 : i32
    return %arg0, %c0_i32 : i32, i32
  }
}

module attributes {stable_mosaic.version = 11 : i64} {
  func.func @_fused_matmul_kernel(%arg0: i32, %arg1: memref<4x16x16xbf16, #tpu.memory_space<vmem>>, %arg2: memref<4x16x32xbf16, #tpu.memory_space<vmem>>, %arg3: memref<1x32xf32, #tpu.memory_space<vmem>>, %arg4: memref<1x32xf32, #tpu.memory_space<vmem>>, %arg5: memref<16x32xbf16, #tpu.memory_space<vmem>>) attributes {dimension_semantics = [#tpu.dimension_semantics<parallel>], iteration_bounds = array<i64: 1>, scalar_prefetch = 0 : i64, scratch_operands = 0 : i64, tpu.core_type = #tpu.core_type<tc>, window_params = [{transform_indices = @transform_0, window_bounds = array<i64: 4, 16, 16>}, {pipeline_mode = #tpu.pipeline_mode<synchronous>, transform_indices = @transform_1, window_bounds = array<i64: 4, 16, 32>}, {pipeline_mode = #tpu.pipeline_mode<synchronous>, transform_indices = @transform_2, window_bounds = array<i64: 1, 32>}, {pipeline_mode = #tpu.pipeline_mode<synchronous>, transform_indices = @transform_3, window_bounds = array<i64: 1, 32>}, {transform_indices = @transform_4, window_bounds = array<i64: 16, 32>}]} {
    %c0 = arith.constant 0 : index
    %c0_0 = arith.constant 0 : index
    %c0_1 = arith.constant 0 : index
    %0 = vector.load %arg1[%c0, %c0_0, %c0_1] : memref<4x16x16xbf16, #tpu.memory_space<vmem>>, vector<1x16x16xbf16>
    %1 = vector.shape_cast %0 : vector<1x16x16xbf16> to vector<16x16xbf16>
    %c0_2 = arith.constant 0 : index
    %c0_3 = arith.constant 0 : index
    %c0_4 = arith.constant 0 : index
    %2 = vector.load %arg2[%c0_2, %c0_3, %c0_4] : memref<4x16x32xbf16, #tpu.memory_space<vmem>>, vector<1x16x32xbf16>
    %3 = vector.shape_cast %2 : vector<1x16x32xbf16> to vector<16x32xbf16>
    %cst = arith.constant dense<0.000000e+00> : vector<16x32xf32>
    %4 = tpu.matmul %1, %3, %cst {dimension_numbers = #tpu.dot_dimension_numbers<[1], [0], [0], [1], [0, 0, 1, 1], [], []>} : vector<16x16xbf16>, vector<16x32xbf16>, vector<16x32xf32> -> vector<16x32xf32>
    %c1 = arith.constant 1 : index
    %c0_5 = arith.constant 0 : index
    %c0_6 = arith.constant 0 : index
    %5 = vector.load %arg1[%c1, %c0_5, %c0_6] : memref<4x16x16xbf16, #tpu.memory_space<vmem>>, vector<1x16x16xbf16>
    %6 = vector.shape_cast %5 : vector<1x16x16xbf16> to vector<16x16xbf16>
    %c1_7 = arith.constant 1 : index
    %c0_8 = arith.constant 0 : index
    %c0_9 = arith.constant 0 : index
    %7 = vector.load %arg2[%c1_7, %c0_8, %c0_9] : memref<4x16x32xbf16, #tpu.memory_space<vmem>>, vector<1x16x32xbf16>
    %8 = vector.shape_cast %7 : vector<1x16x32xbf16> to vector<16x32xbf16>
    %cst_10 = arith.constant dense<0.000000e+00> : vector<16x32xf32>
    %9 = tpu.matmul %6, %8, %cst_10 {dimension_numbers = #tpu.dot_dimension_numbers<[1], [0], [0], [1], [0, 0, 1, 1], [], []>} : vector<16x16xbf16>, vector<16x32xbf16>, vector<16x32xf32> -> vector<16x32xf32>
    %10 = arith.addf %4, %9 : vector<16x32xf32>
    %c2 = arith.constant 2 : index
    %c0_11 = arith.constant 0 : index
    %c0_12 = arith.constant 0 : index
    %11 = vector.load %arg1[%c2, %c0_11, %c0_12] : memref<4x16x16xbf16, #tpu.memory_space<vmem>>, vector<1x16x16xbf16>
    %12 = vector.shape_cast %11 : vector<1x16x16xbf16> to vector<16x16xbf16>
    %c2_13 = arith.constant 2 : index
    %c0_14 = arith.constant 0 : index
    %c0_15 = arith.constant 0 : index
    %13 = vector.load %arg2[%c2_13, %c0_14, %c0_15] : memref<4x16x32xbf16, #tpu.memory_space<vmem>>, vector<1x16x32xbf16>
    %14 = vector.shape_cast %13 : vector<1x16x32xbf16> to vector<16x32xbf16>
    %cst_16 = arith.constant dense<0.000000e+00> : vector<16x32xf32>
    %15 = tpu.matmul %12, %14, %cst_16 {dimension_numbers = #tpu.dot_dimension_numbers<[1], [0], [0], [1], [0, 0, 1, 1], [], []>} : vector<16x16xbf16>, vector<16x32xbf16>, vector<16x32xf32> -> vector<16x32xf32>
    %16 = arith.addf %10, %15 : vector<16x32xf32>
    %c3 = arith.constant 3 : index
    %c0_17 = arith.constant 0 : index
    %c0_18 = arith.constant 0 : index
    %17 = vector.load %arg1[%c3, %c0_17, %c0_18] : memref<4x16x16xbf16, #tpu.memory_space<vmem>>, vector<1x16x16xbf16>
    %18 = vector.shape_cast %17 : vector<1x16x16xbf16> to vector<16x16xbf16>
    %c3_19 = arith.constant 3 : index
    %c0_20 = arith.constant 0 : index
    %c0_21 = arith.constant 0 : index
    %19 = vector.load %arg2[%c3_19, %c0_20, %c0_21] : memref<4x16x32xbf16, #tpu.memory_space<vmem>>, vector<1x16x32xbf16>
    %20 = vector.shape_cast %19 : vector<1x16x32xbf16> to vector<16x32xbf16>
    %cst_22 = arith.constant dense<0.000000e+00> : vector<16x32xf32>
    %21 = tpu.matmul %18, %20, %cst_22 {dimension_numbers = #tpu.dot_dimension_numbers<[1], [0], [0], [1], [0, 0, 1, 1], [], []>} : vector<16x16xbf16>, vector<16x32xbf16>, vector<16x32xf32> -> vector<16x32xf32>
    %22 = arith.addf %16, %21 : vector<16x32xf32>
    %c0_23 = arith.constant 0 : index
    %c0_24 = arith.constant 0 : index
    %23 = vector.load %arg3[%c0_23, %c0_24] : memref<1x32xf32, #tpu.memory_space<vmem>>, vector<1x32xf32>
    %24 = vector.broadcast %23 : vector<1x32xf32> to vector<16x32xf32>
    %25 = arith.mulf %22, %24 : vector<16x32xf32>
    %c0_25 = arith.constant 0 : index
    %c0_26 = arith.constant 0 : index
    %26 = vector.load %arg4[%c0_25, %c0_26] : memref<1x32xf32, #tpu.memory_space<vmem>>, vector<1x32xf32>
    %27 = vector.broadcast %26 : vector<1x32xf32> to vector<16x32xf32>
    %28 = arith.addf %25, %27 : vector<16x32xf32>
    %cst_27 = arith.constant 0.000000e+00 : f32
    %29 = vector.broadcast %cst_27 : f32 to vector<16x32xf32>
    %30 = arith.maximumf %28, %29 : vector<16x32xf32>
    %31 = arith.truncf %30 : vector<16x32xf32> to vector<16x32xbf16>
    %c0_28 = arith.constant 0 : index
    %c0_29 = arith.constant 0 : index
    %32 = vector.load %arg5[%c0_28, %c0_29] : memref<16x32xbf16, #tpu.memory_space<vmem>>, vector<16x32xbf16>
    tpu.vector_store %arg5[%c0_28, %c0_29], %31 {strides = array<i32>} : memref<16x32xbf16, #tpu.memory_space<vmem>>, vector<16x32xbf16>,
    return
  }
  func.func @transform_0(%arg0: i32) -> (i32, i32, i32) {
    %c0_i32 = arith.constant 0 : i32
    %c0_i32_0 = arith.constant 0 : i32
    %c0_i32_1 = arith.constant 0 : i32
    return %c0_i32, %arg0, %c0_i32_0 : i32, i32, i32
  }
  func.func @transform_1(%arg0: i32) -> (i32, i32, i32) {
    %c0_i32 = arith.constant 0 : i32
    %c0_i32_0 = arith.constant 0 : i32
    %c0_i32_1 = arith.constant 0 : i32
    %c0_i32_2 = arith.constant 0 : i32
    return %c0_i32, %c0_i32_0, %c0_i32_1 : i32, i32, i32
  }
  func.func @transform_2(%arg0: i32) -> (i32, i32) {
    %c0_i32 = arith.constant 0 : i32
    %c0_i32_0 = arith.constant 0 : i32
    %c0_i32_1 = arith.constant 0 : i32
    return %c0_i32, %c0_i32_0 : i32, i32
  }
  func.func @transform_3(%arg0: i32) -> (i32, i32) {
    %c0_i32 = arith.constant 0 : i32
    %c0_i32_0 = arith.constant 0 : i32
    %c0_i32_1 = arith.constant 0 : i32
    return %c0_i32, %c0_i32_0 : i32, i32
  }
  func.func @transform_4(%arg0: i32) -> (i32, i32) {
    %c0_i32 = arith.constant 0 : i32
    %c0_i32_0 = arith.constant 0 : i32
    return %arg0, %c0_i32 : i32, i32
  }
}

module attributes {stable_mosaic.version = 11 : i64} {
  func.func @_fused_matmul_kernel(%arg0: i32, %arg1: memref<1x16x32xbf16, #tpu.memory_space<vmem>>, %arg2: memref<1x32x64xbf16, #tpu.memory_space<vmem>>, %arg3: memref<1x64xf32, #tpu.memory_space<vmem>>, %arg4: memref<1x64xf32, #tpu.memory_space<vmem>>, %arg5: memref<16x64xbf16, #tpu.memory_space<vmem>>, %arg6: memref<16x64xbf16, #tpu.memory_space<vmem>>) attributes {dimension_semantics = [#tpu.dimension_semantics<parallel>], iteration_bounds = array<i64: 1>, scalar_prefetch = 0 : i64, scratch_operands = 0 : i64, tpu.core_type = #tpu.core_type<tc>, window_params = [{transform_indices = @transform_0, window_bounds = array<i64: 1, 16, 32>}, {pipeline_mode = #tpu.pipeline_mode<synchronous>, transform_indices = @transform_1, window_bounds = array<i64: 1, 32, 64>}, {pipeline_mode = #tpu.pipeline_mode<synchronous>, transform_indices = @transform_2, window_bounds = array<i64: 1, 64>}, {pipeline_mode = #tpu.pipeline_mode<synchronous>, transform_indices = @transform_3, window_bounds = array<i64: 1, 64>}, {transform_indices = @transform_4, window_bounds = array<i64: 16, 64>}, {transform_indices = @transform_5, window_bounds = array<i64: 16, 64>}]} {
    %c0 = arith.constant 0 : index
    %c0_0 = arith.constant 0 : index
    %c0_1 = arith.constant 0 : index
    %0 = vector.load %arg1[%c0, %c0_0, %c0_1] : memref<1x16x32xbf16, #tpu.memory_space<vmem>>, vector<1x16x32xbf16>
    %1 = vector.shape_cast %0 : vector<1x16x32xbf16> to vector<16x32xbf16>
    %c0_2 = arith.constant 0 : index
    %c0_3 = arith.constant 0 : index
    %c0_4 = arith.constant 0 : index
    %2 = vector.load %arg2[%c0_2, %c0_3, %c0_4] : memref<1x32x64xbf16, #tpu.memory_space<vmem>>, vector<1x32x64xbf16>
    %3 = vector.shape_cast %2 : vector<1x32x64xbf16> to vector<32x64xbf16>
    %cst = arith.constant dense<0.000000e+00> : vector<16x64xf32>
    %4 = tpu.matmul %1, %3, %cst {dimension_numbers = #tpu.dot_dimension_numbers<[1], [0], [0], [1], [0, 0, 1, 1], [], []>} : vector<16x32xbf16>, vector<32x64xbf16>, vector<16x64xf32> -> vector<16x64xf32>
    %c0_5 = arith.constant 0 : index
    %c0_6 = arith.constant 0 : index
    %5 = vector.load %arg3[%c0_5, %c0_6] : memref<1x64xf32, #tpu.memory_space<vmem>>, vector<1x64xf32>
    %6 = vector.broadcast %5 : vector<1x64xf32> to vector<16x64xf32>
    %7 = arith.mulf %4, %6 : vector<16x64xf32>
    %c0_7 = arith.constant 0 : index
    %c0_8 = arith.constant 0 : index
    %8 = vector.load %arg4[%c0_7, %c0_8] : memref<1x64xf32, #tpu.memory_space<vmem>>, vector<1x64xf32>
    %9 = vector.broadcast %8 : vector<1x64xf32> to vector<16x64xf32>
    %10 = arith.addf %7, %9 : vector<16x64xf32>
    %c0_9 = arith.constant 0 : index
    %c0_10 = arith.constant 0 : index
    %11 = vector.load %arg5[%c0_9, %c0_10] : memref<16x64xbf16, #tpu.memory_space<vmem>>, vector<16x64xbf16>
    %12 = arith.extf %11 : vector<16x64xbf16> to vector<16x64xf32>
    %13 = arith.addf %10, %12 : vector<16x64xf32>
    %cst_11 = arith.constant 0.000000e+00 : f32
    %14 = vector.broadcast %cst_11 : f32 to vector<16x64xf32>
    %15 = arith.maximumf %13, %14 : vector<16x64xf32>
    %16 = arith.truncf %15 : vector<16x64xf32> to vector<16x64xbf16>
    %c0_12 = arith.constant 0 : index
    %c0_13 = arith.constant 0 : index
    %17 = vector.load %arg6[%c0_12, %c0_13] : memref<16x64xbf16, #tpu.memory_space<vmem>>, vector<16x64xbf16>
    tpu.vector_store %arg6[%c0_12, %c0_13], %16 {strides = array<i32>} : memref<16x64xbf16, #tpu.memory_space<vmem>>, vector<16x64xbf16>,
    return
  }
  func.func @transform_0(%arg0: i32) -> (i32, i32, i32) {
    %c0_i32 = arith.constant 0 : i32
    %c0_i32_0 = arith.constant 0 : i32
    %c0_i32_1 = arith.constant 0 : i32
    return %c0_i32, %arg0, %c0_i32_0 : i32, i32, i32
  }
  func.func @transform_1(%arg0: i32) -> (i32, i32, i32) {
    %c0_i32 = arith.constant 0 : i32
    %c0_i32_0 = arith.constant 0 : i32
    %c0_i32_1 = arith.constant 0 : i32
    %c0_i32_2 = arith.constant 0 : i32
    return %c0_i32, %c0_i32_0, %c0_i32_1 : i32, i32, i32
  }
  func.func @transform_2(%arg0: i32) -> (i32, i32) {
    %c0_i32 = arith.constant 0 : i32
    %c0_i32_0 = arith.constant 0 : i32
    %c0_i32_1 = arith.constant 0 : i32
    return %c0_i32, %c0_i32_0 : i32, i32
  }
  func.func @transform_3(%arg0: i32) -> (i32, i32) {
    %c0_i32 = arith.constant 0 : i32
    %c0_i32_0 = arith.constant 0 : i32
    %c0_i32_1 = arith.constant 0 : i32
    return %c0_i32, %c0_i32_0 : i32, i32
  }
  func.func @transform_4(%arg0: i32) -> (i32, i32) {
    %c0_i32 = arith.constant 0 : i32
    %c0_i32_0 = arith.constant 0 : i32
    return %arg0, %c0_i32 : i32, i32
  }
  func.func @transform_5(%arg0: i32) -> (i32, i32) {
    %c0_i32 = arith.constant 0 : i32
    %c0_i32_0 = arith.constant 0 : i32
    return %arg0, %c0_i32 : i32, i32
  }
}

module attributes {stable_mosaic.version = 11 : i64} {
  func.func @_fused_matmul_kernel(%arg0: i32, %arg1: memref<1x16x64xbf16, #tpu.memory_space<vmem>>, %arg2: memref<1x64x16xbf16, #tpu.memory_space<vmem>>, %arg3: memref<1x16xf32, #tpu.memory_space<vmem>>, %arg4: memref<1x16xf32, #tpu.memory_space<vmem>>, %arg5: memref<16x16xbf16, #tpu.memory_space<vmem>>) attributes {dimension_semantics = [#tpu.dimension_semantics<parallel>], iteration_bounds = array<i64: 1>, scalar_prefetch = 0 : i64, scratch_operands = 0 : i64, tpu.core_type = #tpu.core_type<tc>, window_params = [{transform_indices = @transform_0, window_bounds = array<i64: 1, 16, 64>}, {pipeline_mode = #tpu.pipeline_mode<synchronous>, transform_indices = @transform_1, window_bounds = array<i64: 1, 64, 16>}, {pipeline_mode = #tpu.pipeline_mode<synchronous>, transform_indices = @transform_2, window_bounds = array<i64: 1, 16>}, {pipeline_mode = #tpu.pipeline_mode<synchronous>, transform_indices = @transform_3, window_bounds = array<i64: 1, 16>}, {transform_indices = @transform_4, window_bounds = array<i64: 16, 16>}]} {
    %c0 = arith.constant 0 : index
    %c0_0 = arith.constant 0 : index
    %c0_1 = arith.constant 0 : index
    %0 = vector.load %arg1[%c0, %c0_0, %c0_1] : memref<1x16x64xbf16, #tpu.memory_space<vmem>>, vector<1x16x64xbf16>
    %1 = vector.shape_cast %0 : vector<1x16x64xbf16> to vector<16x64xbf16>
    %c0_2 = arith.constant 0 : index
    %c0_3 = arith.constant 0 : index
    %c0_4 = arith.constant 0 : index
    %2 = vector.load %arg2[%c0_2, %c0_3, %c0_4] : memref<1x64x16xbf16, #tpu.memory_space<vmem>>, vector<1x64x16xbf16>
    %3 = vector.shape_cast %2 : vector<1x64x16xbf16> to vector<64x16xbf16>
    %cst = arith.constant dense<0.000000e+00> : vector<16x16xf32>
    %4 = tpu.matmul %1, %3, %cst {dimension_numbers = #tpu.dot_dimension_numbers<[1], [0], [0], [1], [0, 0, 1, 1], [], []>} : vector<16x64xbf16>, vector<64x16xbf16>, vector<16x16xf32> -> vector<16x16xf32>
    %c0_5 = arith.constant 0 : index
    %c0_6 = arith.constant 0 : index
    %5 = vector.load %arg3[%c0_5, %c0_6] : memref<1x16xf32, #tpu.memory_space<vmem>>, vector<1x16xf32>
    %6 = vector.broadcast %5 : vector<1x16xf32> to vector<16x16xf32>
    %7 = arith.mulf %4, %6 : vector<16x16xf32>
    %c0_7 = arith.constant 0 : index
    %c0_8 = arith.constant 0 : index
    %8 = vector.load %arg4[%c0_7, %c0_8] : memref<1x16xf32, #tpu.memory_space<vmem>>, vector<1x16xf32>
    %9 = vector.broadcast %8 : vector<1x16xf32> to vector<16x16xf32>
    %10 = arith.addf %7, %9 : vector<16x16xf32>
    %11 = arith.truncf %10 : vector<16x16xf32> to vector<16x16xbf16>
    %c0_9 = arith.constant 0 : index
    %c0_10 = arith.constant 0 : index
    %12 = vector.load %arg5[%c0_9, %c0_10] : memref<16x16xbf16, #tpu.memory_space<vmem>>, vector<16x16xbf16>
    tpu.vector_store %arg5[%c0_9, %c0_10], %11 {strides = array<i32>} : memref<16x16xbf16, #tpu.memory_space<vmem>>, vector<16x16xbf16>,
    return
  }
  func.func @transform_0(%arg0: i32) -> (i32, i32, i32) {
    %c0_i32 = arith.constant 0 : i32
    %c0_i32_0 = arith.constant 0 : i32
    %c0_i32_1 = arith.constant 0 : i32
    return %c0_i32, %arg0, %c0_i32_0 : i32, i32, i32
  }
  func.func @transform_1(%arg0: i32) -> (i32, i32, i32) {
    %c0_i32 = arith.constant 0 : i32
    %c0_i32_0 = arith.constant 0 : i32
    %c0_i32_1 = arith.constant 0 : i32
    %c0_i32_2 = arith.constant 0 : i32
    return %c0_i32, %c0_i32_0, %c0_i32_1 : i32, i32, i32
  }
  func.func @transform_2(%arg0: i32) -> (i32, i32) {
    %c0_i32 = arith.constant 0 : i32
    %c0_i32_0 = arith.constant 0 : i32
    %c0_i32_1 = arith.constant 0 : i32
    return %c0_i32, %c0_i32_0 : i32, i32
  }
  func.func @transform_3(%arg0: i32) -> (i32, i32) {
    %c0_i32 = arith.constant 0 : i32
    %c0_i32_0 = arith.constant 0 : i32
    %c0_i32_1 = arith.constant 0 : i32
    return %c0_i32, %c0_i32_0 : i32, i32
  }
  func.func @transform_4(%arg0: i32) -> (i32, i32) {
    %c0_i32 = arith.constant 0 : i32
    %c0_i32_0 = arith.constant 0 : i32
    return %arg0, %c0_i32 : i32, i32
  }
}

module attributes {stable_mosaic.version = 11 : i64} {
  func.func @_fused_matmul_kernel(%arg0: i32, %arg1: memref<1x16x64xbf16, #tpu.memory_space<vmem>>, %arg2: memref<1x64x16xbf16, #tpu.memory_space<vmem>>, %arg3: memref<1x16xf32, #tpu.memory_space<vmem>>, %arg4: memref<1x16xf32, #tpu.memory_space<vmem>>, %arg5: memref<16x16xbf16, #tpu.memory_space<vmem>>) attributes {dimension_semantics = [#tpu.dimension_semantics<parallel>], iteration_bounds = array<i64: 1>, scalar_prefetch = 0 : i64, scratch_operands = 0 : i64, tpu.core_type = #tpu.core_type<tc>, window_params = [{transform_indices = @transform_0, window_bounds = array<i64: 1, 16, 64>}, {pipeline_mode = #tpu.pipeline_mode<synchronous>, transform_indices = @transform_1, window_bounds = array<i64: 1, 64, 16>}, {pipeline_mode = #tpu.pipeline_mode<synchronous>, transform_indices = @transform_2, window_bounds = array<i64: 1, 16>}, {pipeline_mode = #tpu.pipeline_mode<synchronous>, transform_indices = @transform_3, window_bounds = array<i64: 1, 16>}, {transform_indices = @transform_4, window_bounds = array<i64: 16, 16>}]} {
    %c0 = arith.constant 0 : index
    %c0_0 = arith.constant 0 : index
    %c0_1 = arith.constant 0 : index
    %0 = vector.load %arg1[%c0, %c0_0, %c0_1] : memref<1x16x64xbf16, #tpu.memory_space<vmem>>, vector<1x16x64xbf16>
    %1 = vector.shape_cast %0 : vector<1x16x64xbf16> to vector<16x64xbf16>
    %c0_2 = arith.constant 0 : index
    %c0_3 = arith.constant 0 : index
    %c0_4 = arith.constant 0 : index
    %2 = vector.load %arg2[%c0_2, %c0_3, %c0_4] : memref<1x64x16xbf16, #tpu.memory_space<vmem>>, vector<1x64x16xbf16>
    %3 = vector.shape_cast %2 : vector<1x64x16xbf16> to vector<64x16xbf16>
    %cst = arith.constant dense<0.000000e+00> : vector<16x16xf32>
    %4 = tpu.matmul %1, %3, %cst {dimension_numbers = #tpu.dot_dimension_numbers<[1], [0], [0], [1], [0, 0, 1, 1], [], []>} : vector<16x64xbf16>, vector<64x16xbf16>, vector<16x16xf32> -> vector<16x16xf32>
    %c0_5 = arith.constant 0 : index
    %c0_6 = arith.constant 0 : index
    %5 = vector.load %arg3[%c0_5, %c0_6] : memref<1x16xf32, #tpu.memory_space<vmem>>, vector<1x16xf32>
    %6 = vector.broadcast %5 : vector<1x16xf32> to vector<16x16xf32>
    %7 = arith.mulf %4, %6 : vector<16x16xf32>
    %c0_7 = arith.constant 0 : index
    %c0_8 = arith.constant 0 : index
    %8 = vector.load %arg4[%c0_7, %c0_8] : memref<1x16xf32, #tpu.memory_space<vmem>>, vector<1x16xf32>
    %9 = vector.broadcast %8 : vector<1x16xf32> to vector<16x16xf32>
    %10 = arith.addf %7, %9 : vector<16x16xf32>
    %cst_9 = arith.constant 0.000000e+00 : f32
    %11 = vector.broadcast %cst_9 : f32 to vector<16x16xf32>
    %12 = arith.maximumf %10, %11 : vector<16x16xf32>
    %13 = arith.truncf %12 : vector<16x16xf32> to vector<16x16xbf16>
    %c0_10 = arith.constant 0 : index
    %c0_11 = arith.constant 0 : index
    %14 = vector.load %arg5[%c0_10, %c0_11] : memref<16x16xbf16, #tpu.memory_space<vmem>>, vector<16x16xbf16>
    tpu.vector_store %arg5[%c0_10, %c0_11], %13 {strides = array<i32>} : memref<16x16xbf16, #tpu.memory_space<vmem>>, vector<16x16xbf16>,
    return
  }
  func.func @transform_0(%arg0: i32) -> (i32, i32, i32) {
    %c0_i32 = arith.constant 0 : i32
    %c0_i32_0 = arith.constant 0 : i32
    %c0_i32_1 = arith.constant 0 : i32
    return %c0_i32, %arg0, %c0_i32_0 : i32, i32, i32
  }
  func.func @transform_1(%arg0: i32) -> (i32, i32, i32) {
    %c0_i32 = arith.constant 0 : i32
    %c0_i32_0 = arith.constant 0 : i32
    %c0_i32_1 = arith.constant 0 : i32
    %c0_i32_2 = arith.constant 0 : i32
    return %c0_i32, %c0_i32_0, %c0_i32_1 : i32, i32, i32
  }
  func.func @transform_2(%arg0: i32) -> (i32, i32) {
    %c0_i32 = arith.constant 0 : i32
    %c0_i32_0 = arith.constant 0 : i32
    %c0_i32_1 = arith.constant 0 : i32
    return %c0_i32, %c0_i32_0 : i32, i32
  }
  func.func @transform_3(%arg0: i32) -> (i32, i32) {
    %c0_i32 = arith.constant 0 : i32
    %c0_i32_0 = arith.constant 0 : i32
    %c0_i32_1 = arith.constant 0 : i32
    return %c0_i32, %c0_i32_0 : i32, i32
  }
  func.func @transform_4(%arg0: i32) -> (i32, i32) {
    %c0_i32 = arith.constant 0 : i32
    %c0_i32_0 = arith.constant 0 : i32
    return %arg0, %c0_i32 : i32, i32
  }
}

module attributes {stable_mosaic.version = 11 : i64} {
  func.func @_fused_matmul_kernel(%arg0: i32, %arg1: memref<4x16x16xbf16, #tpu.memory_space<vmem>>, %arg2: memref<4x16x64xbf16, #tpu.memory_space<vmem>>, %arg3: memref<1x64xf32, #tpu.memory_space<vmem>>, %arg4: memref<1x64xf32, #tpu.memory_space<vmem>>, %arg5: memref<16x64xbf16, #tpu.memory_space<vmem>>) attributes {dimension_semantics = [#tpu.dimension_semantics<parallel>], iteration_bounds = array<i64: 1>, scalar_prefetch = 0 : i64, scratch_operands = 0 : i64, tpu.core_type = #tpu.core_type<tc>, window_params = [{transform_indices = @transform_0, window_bounds = array<i64: 4, 16, 16>}, {pipeline_mode = #tpu.pipeline_mode<synchronous>, transform_indices = @transform_1, window_bounds = array<i64: 4, 16, 64>}, {pipeline_mode = #tpu.pipeline_mode<synchronous>, transform_indices = @transform_2, window_bounds = array<i64: 1, 64>}, {pipeline_mode = #tpu.pipeline_mode<synchronous>, transform_indices = @transform_3, window_bounds = array<i64: 1, 64>}, {transform_indices = @transform_4, window_bounds = array<i64: 16, 64>}]} {
    %c0 = arith.constant 0 : index
    %c0_0 = arith.constant 0 : index
    %c0_1 = arith.constant 0 : index
    %0 = vector.load %arg1[%c0, %c0_0, %c0_1] : memref<4x16x16xbf16, #tpu.memory_space<vmem>>, vector<1x16x16xbf16>
    %1 = vector.shape_cast %0 : vector<1x16x16xbf16> to vector<16x16xbf16>
    %c0_2 = arith.constant 0 : index
    %c0_3 = arith.constant 0 : index
    %c0_4 = arith.constant 0 : index
    %2 = vector.load %arg2[%c0_2, %c0_3, %c0_4] : memref<4x16x64xbf16, #tpu.memory_space<vmem>>, vector<1x16x64xbf16>
    %3 = vector.shape_cast %2 : vector<1x16x64xbf16> to vector<16x64xbf16>
    %cst = arith.constant dense<0.000000e+00> : vector<16x64xf32>
    %4 = tpu.matmul %1, %3, %cst {dimension_numbers = #tpu.dot_dimension_numbers<[1], [0], [0], [1], [0, 0, 1, 1], [], []>} : vector<16x16xbf16>, vector<16x64xbf16>, vector<16x64xf32> -> vector<16x64xf32>
    %c1 = arith.constant 1 : index
    %c0_5 = arith.constant 0 : index
    %c0_6 = arith.constant 0 : index
    %5 = vector.load %arg1[%c1, %c0_5, %c0_6] : memref<4x16x16xbf16, #tpu.memory_space<vmem>>, vector<1x16x16xbf16>
    %6 = vector.shape_cast %5 : vector<1x16x16xbf16> to vector<16x16xbf16>
    %c1_7 = arith.constant 1 : index
    %c0_8 = arith.constant 0 : index
    %c0_9 = arith.constant 0 : index
    %7 = vector.load %arg2[%c1_7, %c0_8, %c0_9] : memref<4x16x64xbf16, #tpu.memory_space<vmem>>, vector<1x16x64xbf16>
    %8 = vector.shape_cast %7 : vector<1x16x64xbf16> to vector<16x64xbf16>
    %cst_10 = arith.constant dense<0.000000e+00> : vector<16x64xf32>
    %9 = tpu.matmul %6, %8, %cst_10 {dimension_numbers = #tpu.dot_dimension_numbers<[1], [0], [0], [1], [0, 0, 1, 1], [], []>} : vector<16x16xbf16>, vector<16x64xbf16>, vector<16x64xf32> -> vector<16x64xf32>
    %10 = arith.addf %4, %9 : vector<16x64xf32>
    %c2 = arith.constant 2 : index
    %c0_11 = arith.constant 0 : index
    %c0_12 = arith.constant 0 : index
    %11 = vector.load %arg1[%c2, %c0_11, %c0_12] : memref<4x16x16xbf16, #tpu.memory_space<vmem>>, vector<1x16x16xbf16>
    %12 = vector.shape_cast %11 : vector<1x16x16xbf16> to vector<16x16xbf16>
    %c2_13 = arith.constant 2 : index
    %c0_14 = arith.constant 0 : index
    %c0_15 = arith.constant 0 : index
    %13 = vector.load %arg2[%c2_13, %c0_14, %c0_15] : memref<4x16x64xbf16, #tpu.memory_space<vmem>>, vector<1x16x64xbf16>
    %14 = vector.shape_cast %13 : vector<1x16x64xbf16> to vector<16x64xbf16>
    %cst_16 = arith.constant dense<0.000000e+00> : vector<16x64xf32>
    %15 = tpu.matmul %12, %14, %cst_16 {dimension_numbers = #tpu.dot_dimension_numbers<[1], [0], [0], [1], [0, 0, 1, 1], [], []>} : vector<16x16xbf16>, vector<16x64xbf16>, vector<16x64xf32> -> vector<16x64xf32>
    %16 = arith.addf %10, %15 : vector<16x64xf32>
    %c3 = arith.constant 3 : index
    %c0_17 = arith.constant 0 : index
    %c0_18 = arith.constant 0 : index
    %17 = vector.load %arg1[%c3, %c0_17, %c0_18] : memref<4x16x16xbf16, #tpu.memory_space<vmem>>, vector<1x16x16xbf16>
    %18 = vector.shape_cast %17 : vector<1x16x16xbf16> to vector<16x16xbf16>
    %c3_19 = arith.constant 3 : index
    %c0_20 = arith.constant 0 : index
    %c0_21 = arith.constant 0 : index
    %19 = vector.load %arg2[%c3_19, %c0_20, %c0_21] : memref<4x16x64xbf16, #tpu.memory_space<vmem>>, vector<1x16x64xbf16>
    %20 = vector.shape_cast %19 : vector<1x16x64xbf16> to vector<16x64xbf16>
    %cst_22 = arith.constant dense<0.000000e+00> : vector<16x64xf32>
    %21 = tpu.matmul %18, %20, %cst_22 {dimension_numbers = #tpu.dot_dimension_numbers<[1], [0], [0], [1], [0, 0, 1, 1], [], []>} : vector<16x16xbf16>, vector<16x64xbf16>, vector<16x64xf32> -> vector<16x64xf32>
    %22 = arith.addf %16, %21 : vector<16x64xf32>
    %c0_23 = arith.constant 0 : index
    %c0_24 = arith.constant 0 : index
    %23 = vector.load %arg3[%c0_23, %c0_24] : memref<1x64xf32, #tpu.memory_space<vmem>>, vector<1x64xf32>
    %24 = vector.broadcast %23 : vector<1x64xf32> to vector<16x64xf32>
    %25 = arith.mulf %22, %24 : vector<16x64xf32>
    %c0_25 = arith.constant 0 : index
    %c0_26 = arith.constant 0 : index
    %26 = vector.load %arg4[%c0_25, %c0_26] : memref<1x64xf32, #tpu.memory_space<vmem>>, vector<1x64xf32>
    %27 = vector.broadcast %26 : vector<1x64xf32> to vector<16x64xf32>
    %28 = arith.addf %25, %27 : vector<16x64xf32>
    %cst_27 = arith.constant 0.000000e+00 : f32
    %29 = vector.broadcast %cst_27 : f32 to vector<16x64xf32>
    %30 = arith.maximumf %28, %29 : vector<16x64xf32>
    %31 = arith.truncf %30 : vector<16x64xf32> to vector<16x64xbf16>
    %c0_28 = arith.constant 0 : index
    %c0_29 = arith.constant 0 : index
    %32 = vector.load %arg5[%c0_28, %c0_29] : memref<16x64xbf16, #tpu.memory_space<vmem>>, vector<16x64xbf16>
    tpu.vector_store %arg5[%c0_28, %c0_29], %31 {strides = array<i32>} : memref<16x64xbf16, #tpu.memory_space<vmem>>, vector<16x64xbf16>,
    return
  }
  func.func @transform_0(%arg0: i32) -> (i32, i32, i32) {
    %c0_i32 = arith.constant 0 : i32
    %c0_i32_0 = arith.constant 0 : i32
    %c0_i32_1 = arith.constant 0 : i32
    return %c0_i32, %arg0, %c0_i32_0 : i32, i32, i32
  }
  func.func @transform_1(%arg0: i32) -> (i32, i32, i32) {
    %c0_i32 = arith.constant 0 : i32
    %c0_i32_0 = arith.constant 0 : i32
    %c0_i32_1 = arith.constant 0 : i32
    %c0_i32_2 = arith.constant 0 : i32
    return %c0_i32, %c0_i32_0, %c0_i32_1 : i32, i32, i32
  }
  func.func @transform_2(%arg0: i32) -> (i32, i32) {
    %c0_i32 = arith.constant 0 : i32
    %c0_i32_0 = arith.constant 0 : i32
    %c0_i32_1 = arith.constant 0 : i32
    return %c0_i32, %c0_i32_0 : i32, i32
  }
  func.func @transform_3(%arg0: i32) -> (i32, i32) {
    %c0_i32 = arith.constant 0 : i32
    %c0_i32_0 = arith.constant 0 : i32
    %c0_i32_1 = arith.constant 0 : i32
    return %c0_i32, %c0_i32_0 : i32, i32
  }
  func.func @transform_4(%arg0: i32) -> (i32, i32) {
    %c0_i32 = arith.constant 0 : i32
    %c0_i32_0 = arith.constant 0 : i32
    return %arg0, %c0_i32 : i32, i32
  }
}

module attributes {stable_mosaic.version = 11 : i64} {
  func.func @_fused_matmul_kernel(%arg0: i32, %arg1: memref<1x16x64xbf16, #tpu.memory_space<vmem>>, %arg2: memref<1x64x64xbf16, #tpu.memory_space<vmem>>, %arg3: memref<1x64xf32, #tpu.memory_space<vmem>>, %arg4: memref<1x64xf32, #tpu.memory_space<vmem>>, %arg5: memref<16x64xbf16, #tpu.memory_space<vmem>>, %arg6: memref<16x64xbf16, #tpu.memory_space<vmem>>) attributes {dimension_semantics = [#tpu.dimension_semantics<parallel>], iteration_bounds = array<i64: 1>, scalar_prefetch = 0 : i64, scratch_operands = 0 : i64, tpu.core_type = #tpu.core_type<tc>, window_params = [{transform_indices = @transform_0, window_bounds = array<i64: 1, 16, 64>}, {pipeline_mode = #tpu.pipeline_mode<synchronous>, transform_indices = @transform_1, window_bounds = array<i64: 1, 64, 64>}, {pipeline_mode = #tpu.pipeline_mode<synchronous>, transform_indices = @transform_2, window_bounds = array<i64: 1, 64>}, {pipeline_mode = #tpu.pipeline_mode<synchronous>, transform_indices = @transform_3, window_bounds = array<i64: 1, 64>}, {transform_indices = @transform_4, window_bounds = array<i64: 16, 64>}, {transform_indices = @transform_5, window_bounds = array<i64: 16, 64>}]} {
    %c0 = arith.constant 0 : index
    %c0_0 = arith.constant 0 : index
    %c0_1 = arith.constant 0 : index
    %0 = vector.load %arg1[%c0, %c0_0, %c0_1] : memref<1x16x64xbf16, #tpu.memory_space<vmem>>, vector<1x16x64xbf16>
    %1 = vector.shape_cast %0 : vector<1x16x64xbf16> to vector<16x64xbf16>
    %c0_2 = arith.constant 0 : index
    %c0_3 = arith.constant 0 : index
    %c0_4 = arith.constant 0 : index
    %2 = vector.load %arg2[%c0_2, %c0_3, %c0_4] : memref<1x64x64xbf16, #tpu.memory_space<vmem>>, vector<1x64x64xbf16>
    %3 = vector.shape_cast %2 : vector<1x64x64xbf16> to vector<64x64xbf16>
    %cst = arith.constant dense<0.000000e+00> : vector<16x64xf32>
    %4 = tpu.matmul %1, %3, %cst {dimension_numbers = #tpu.dot_dimension_numbers<[1], [0], [0], [1], [0, 0, 1, 1], [], []>} : vector<16x64xbf16>, vector<64x64xbf16>, vector<16x64xf32> -> vector<16x64xf32>
    %c0_5 = arith.constant 0 : index
    %c0_6 = arith.constant 0 : index
    %5 = vector.load %arg3[%c0_5, %c0_6] : memref<1x64xf32, #tpu.memory_space<vmem>>, vector<1x64xf32>
    %6 = vector.broadcast %5 : vector<1x64xf32> to vector<16x64xf32>
    %7 = arith.mulf %4, %6 : vector<16x64xf32>
    %c0_7 = arith.constant 0 : index
    %c0_8 = arith.constant 0 : index
    %8 = vector.load %arg4[%c0_7, %c0_8] : memref<1x64xf32, #tpu.memory_space<vmem>>, vector<1x64xf32>
    %9 = vector.broadcast %8 : vector<1x64xf32> to vector<16x64xf32>
    %10 = arith.addf %7, %9 : vector<16x64xf32>
    %c0_9 = arith.constant 0 : index
    %c0_10 = arith.constant 0 : index
    %11 = vector.load %arg5[%c0_9, %c0_10] : memref<16x64xbf16, #tpu.memory_space<vmem>>, vector<16x64xbf16>
    %12 = arith.extf %11 : vector<16x64xbf16> to vector<16x64xf32>
    %13 = arith.addf %10, %12 : vector<16x64xf32>
    %cst_11 = arith.constant 0.000000e+00 : f32
    %14 = vector.broadcast %cst_11 : f32 to vector<16x64xf32>
    %15 = arith.maximumf %13, %14 : vector<16x64xf32>
    %16 = arith.truncf %15 : vector<16x64xf32> to vector<16x64xbf16>
    %c0_12 = arith.constant 0 : index
    %c0_13 = arith.constant 0 : index
    %17 = vector.load %arg6[%c0_12, %c0_13] : memref<16x64xbf16, #tpu.memory_space<vmem>>, vector<16x64xbf16>
    tpu.vector_store %arg6[%c0_12, %c0_13], %16 {strides = array<i32>} : memref<16x64xbf16, #tpu.memory_space<vmem>>, vector<16x64xbf16>,
    return
  }
  func.func @transform_0(%arg0: i32) -> (i32, i32, i32) {
    %c0_i32 = arith.constant 0 : i32
    %c0_i32_0 = arith.constant 0 : i32
    %c0_i32_1 = arith.constant 0 : i32
    return %c0_i32, %arg0, %c0_i32_0 : i32, i32, i32
  }
  func.func @transform_1(%arg0: i32) -> (i32, i32, i32) {
    %c0_i32 = arith.constant 0 : i32
    %c0_i32_0 = arith.constant 0 : i32
    %c0_i32_1 = arith.constant 0 : i32
    %c0_i32_2 = arith.constant 0 : i32
    return %c0_i32, %c0_i32_0, %c0_i32_1 : i32, i32, i32
  }
  func.func @transform_2(%arg0: i32) -> (i32, i32) {
    %c0_i32 = arith.constant 0 : i32
    %c0_i32_0 = arith.constant 0 : i32
    %c0_i32_1 = arith.constant 0 : i32
    return %c0_i32, %c0_i32_0 : i32, i32
  }
  func.func @transform_3(%arg0: i32) -> (i32, i32) {
    %c0_i32 = arith.constant 0 : i32
    %c0_i32_0 = arith.constant 0 : i32
    %c0_i32_1 = arith.constant 0 : i32
    return %c0_i32, %c0_i32_0 : i32, i32
  }
  func.func @transform_4(%arg0: i32) -> (i32, i32) {
    %c0_i32 = arith.constant 0 : i32
    %c0_i32_0 = arith.constant 0 : i32
    return %arg0, %c0_i32 : i32, i32
  }
  func.func @transform_5(%arg0: i32) -> (i32, i32) {
    %c0_i32 = arith.constant 0 : i32
    %c0_i32_0 = arith.constant 0 : i32
    return %arg0, %c0_i32 : i32, i32
  }
}

module attributes {stable_mosaic.version = 11 : i64} {
  func.func @_fused_matmul_kernel(%arg0: i32, %arg1: memref<1x16x64xbf16, #tpu.memory_space<vmem>>, %arg2: memref<1x64x64xbf16, #tpu.memory_space<vmem>>, %arg3: memref<1x64xf32, #tpu.memory_space<vmem>>, %arg4: memref<1x64xf32, #tpu.memory_space<vmem>>, %arg5: memref<16x64xf32, #tpu.memory_space<vmem>>) attributes {dimension_semantics = [#tpu.dimension_semantics<parallel>], iteration_bounds = array<i64: 1>, scalar_prefetch = 0 : i64, scratch_operands = 0 : i64, tpu.core_type = #tpu.core_type<tc>, window_params = [{transform_indices = @transform_0, window_bounds = array<i64: 1, 16, 64>}, {pipeline_mode = #tpu.pipeline_mode<synchronous>, transform_indices = @transform_1, window_bounds = array<i64: 1, 64, 64>}, {pipeline_mode = #tpu.pipeline_mode<synchronous>, transform_indices = @transform_2, window_bounds = array<i64: 1, 64>}, {pipeline_mode = #tpu.pipeline_mode<synchronous>, transform_indices = @transform_3, window_bounds = array<i64: 1, 64>}, {transform_indices = @transform_4, window_bounds = array<i64: 16, 64>}]} {
    %c0 = arith.constant 0 : index
    %c0_0 = arith.constant 0 : index
    %c0_1 = arith.constant 0 : index
    %0 = vector.load %arg1[%c0, %c0_0, %c0_1] : memref<1x16x64xbf16, #tpu.memory_space<vmem>>, vector<1x16x64xbf16>
    %1 = vector.shape_cast %0 : vector<1x16x64xbf16> to vector<16x64xbf16>
    %c0_2 = arith.constant 0 : index
    %c0_3 = arith.constant 0 : index
    %c0_4 = arith.constant 0 : index
    %2 = vector.load %arg2[%c0_2, %c0_3, %c0_4] : memref<1x64x64xbf16, #tpu.memory_space<vmem>>, vector<1x64x64xbf16>
    %3 = vector.shape_cast %2 : vector<1x64x64xbf16> to vector<64x64xbf16>
    %cst = arith.constant dense<0.000000e+00> : vector<16x64xf32>
    %4 = tpu.matmul %1, %3, %cst {dimension_numbers = #tpu.dot_dimension_numbers<[1], [0], [0], [1], [0, 0, 1, 1], [], []>} : vector<16x64xbf16>, vector<64x64xbf16>, vector<16x64xf32> -> vector<16x64xf32>
    %c0_5 = arith.constant 0 : index
    %c0_6 = arith.constant 0 : index
    %5 = vector.load %arg3[%c0_5, %c0_6] : memref<1x64xf32, #tpu.memory_space<vmem>>, vector<1x64xf32>
    %6 = vector.broadcast %5 : vector<1x64xf32> to vector<16x64xf32>
    %7 = arith.mulf %4, %6 : vector<16x64xf32>
    %c0_7 = arith.constant 0 : index
    %c0_8 = arith.constant 0 : index
    %8 = vector.load %arg4[%c0_7, %c0_8] : memref<1x64xf32, #tpu.memory_space<vmem>>, vector<1x64xf32>
    %9 = vector.broadcast %8 : vector<1x64xf32> to vector<16x64xf32>
    %10 = arith.addf %7, %9 : vector<16x64xf32>
    %c0_9 = arith.constant 0 : index
    %c0_10 = arith.constant 0 : index
    %11 = vector.load %arg5[%c0_9, %c0_10] : memref<16x64xf32, #tpu.memory_space<vmem>>, vector<16x64xf32>
    tpu.vector_store %arg5[%c0_9, %c0_10], %10 {strides = array<i32>} : memref<16x64xf32, #tpu.memory_space<vmem>>, vector<16x64xf32>,
    return
  }
  func.func @transform_0(%arg0: i32) -> (i32, i32, i32) {
    %c0_i32 = arith.constant 0 : i32
    %c0_i32_0 = arith.constant 0 : i32
    %c0_i32_1 = arith.constant 0 : i32
    return %c0_i32, %arg0, %c0_i32_0 : i32, i32, i32
  }
  func.func @transform_1(%arg0: i32) -> (i32, i32, i32) {
    %c0_i32 = arith.constant 0 : i32
    %c0_i32_0 = arith.constant 0 : i32
    %c0_i32_1 = arith.constant 0 : i32
    %c0_i32_2 = arith.constant 0 : i32
    return %c0_i32, %c0_i32_0, %c0_i32_1 : i32, i32, i32
  }
  func.func @transform_2(%arg0: i32) -> (i32, i32) {
    %c0_i32 = arith.constant 0 : i32
    %c0_i32_0 = arith.constant 0 : i32
    %c0_i32_1 = arith.constant 0 : i32
    return %c0_i32, %c0_i32_0 : i32, i32
  }
  func.func @transform_3(%arg0: i32) -> (i32, i32) {
    %c0_i32 = arith.constant 0 : i32
    %c0_i32_0 = arith.constant 0 : i32
    %c0_i32_1 = arith.constant 0 : i32
    return %c0_i32, %c0_i32_0 : i32, i32
  }
  func.func @transform_4(%arg0: i32) -> (i32, i32) {
    %c0_i32 = arith.constant 0 : i32
    %c0_i32_0 = arith.constant 0 : i32
    return %arg0, %c0_i32 : i32, i32
  }
}

</mosaic_0001>

<llo_original>
// kernel: tile.635
$region0: #{tile.635}
  #allocation0 [shape = 's32[1]{0}', space=sflag, size = 0x4, scoped, tag = 'scoped memory for tile.635']
  %s0 = inlined_call_operand.vmem [shape: f32[4], index: 0, kind: input, shape index: {}]
  %s1 = inlined_call_operand.vmem [shape: f32[16,4], index: 1, kind: output, shape index: {}]
  // Predicated region
  $region2: #{tile.635} parent=0 // pred_check
    _
  $region3: #{tile.635} parent=0 // pred_check_branch
    %3 = sbr.rel (0) target = $region5
  $region4: #{tile.635} parent=0 // pred_region
    _
  $region5: #{tile.635} parent=0 // pred_fallthru
    _
  %v4 = vld [vmem:[%s0] ss:$0 sm:$0xff]
  %5 = vst [vmem:[%s1] sm:$0xff] %v4
  %s6 = scalar_lea.vmem %s1, 8
  %7 = vst [vmem:[%s6] sm:$0xff] %v4

// kernel: tile.636
$region0: #{tile.636}
  %s0 = inlined_call_operand.vmem [shape: f32[16,4], index: 0, kind: input, shape index: {}]
  %s1 = inlined_call_operand.vmem [shape: f32[1,64], index: 1, kind: output, shape index: {}]
  $region1: #{tile.636} parent=0
    #allocation0 [shape = 'u8[4096]{0}', space=vmem, size = 0x1000, scoped, tag = 'scoped mem for output reshape']
    %v2 = vld [vmem:[%s0] sm:$0x1]
    %vm3 = vcmask 31744
    %4 = vst.msk [vmem:[#allocation0] sm:$0x1] %vm3, %v2
    %s5 = scalar_lea.vmem %s0, 15
    %v6 = vld [vmem:[%s5] sm:$0x1]
    %7 = vrot.lane.b32.xlu0 %v6, 60
    %v8 = vpop.permute.xlu0 %7
    %vm9 = vcmask 523744
    %10 = vst.msk [vmem:[#allocation0] sm:$0x1] %vm9, %v8
    %s11 = scalar_lea.vmem %s0, 14
    %v12 = vld [vmem:[%s11] sm:$0x1]
    %13 = vrot.lane.b32.xlu0 %v12, 56
    %v14 = vpop.permute.xlu0 %13
    %vm15 = vcmask 490944
    %16 = vst.msk [vmem:[#allocation0] sm:$0x1] %vm15, %v14
    %s17 = scalar_lea.vmem %s0, 13
    %v18 = vld [vmem:[%s17] sm:$0x1]
    %19 = vrot.lane.b32.xlu0 %v18, 52
    %v20 = vpop.permute.xlu0 %19
    %vm21 = vcmask 458144
    %22 = vst.msk [vmem:[#allocation0] sm:$0x1] %vm21, %v20
    %s23 = scalar_lea.vmem %s0, 12
    %v24 = vld [vmem:[%s23] sm:$0x1]
    %25 = vrot.lane.b32.xlu0 %v24, 48
    %v26 = vpop.permute.xlu0 %25
    %vm27 = vcmask 425344
    %28 = vst.msk [vmem:[#allocation0] sm:$0x1] %vm27, %v26
    %s29 = scalar_lea.vmem %s0, 11
    %v30 = vld [vmem:[%s29] sm:$0x1]
    %31 = vrot.lane.b32.xlu0 %v30, 44
    %v32 = vpop.permute.xlu0 %31
    %vm33 = vcmask 392544
    %34 = vst.msk [vmem:[#allocation0] sm:$0x1] %vm33, %v32
    %s35 = scalar_lea.vmem %s0, 10
    %v36 = vld [vmem:[%s35] sm:$0x1]
    %37 = vrot.lane.b32.xlu0 %v36, 40
    %v38 = vpop.permute.xlu0 %37
    %vm39 = vcmask 359744
    %40 = vst.msk [vmem:[#allocation0] sm:$0x1] %vm39, %v38
    %s41 = scalar_lea.vmem %s0, 9
    %v42 = vld [vmem:[%s41] sm:$0x1]
    %43 = vrot.lane.b32.xlu0 %v42, 36
    %v44 = vpop.permute.xlu0 %43
    %vm45 = vcmask 326944
    %46 = vst.msk [vmem:[#allocation0] sm:$0x1] %vm45, %v44
    %s47 = scalar_lea.vmem %s0, 8
    %v48 = vld [vmem:[%s47] sm:$0x1]
    %49 = vrot.lane.b32.xlu0 %v48, 32
    %v50 = vpop.permute.xlu0 %49
    %vm51 = vcmask 294144
    %52 = vst.msk [vmem:[#allocation0] sm:$0x1] %vm51, %v50
    %s53 = scalar_lea.vmem %s0, 7
    %v54 = vld [vmem:[%s53] sm:$0x1]
    %55 = vrot.lane.b32.xlu0 %v54, 28
    %v56 = vpop.permute.xlu0 %55
    %vm57 = vcmask 261344
    %58 = vst.msk [vmem:[#allocation0] sm:$0x1] %vm57, %v56
    %s59 = scalar_lea.vmem %s0, 6
    %v60 = vld [vmem:[%s59] sm:$0x1]
    %61 = vrot.lane.b32.xlu0 %v60, 24
    %v62 = vpop.permute.xlu0 %61
    %vm63 = vcmask 228544
    %64 = vst.msk [vmem:[#allocation0] sm:$0x1] %vm63, %v62
    %s65 = scalar_lea.vmem %s0, 5
    %v66 = vld [vmem:[%s65] sm:$0x1]
    %67 = vrot.lane.b32.xlu0 %v66, 20
    %v68 = vpop.permute.xlu0 %67
    %vm69 = vcmask 195744
    %70 = vst.msk [vmem:[#allocation0] sm:$0x1] %vm69, %v68
    %s71 = scalar_lea.vmem %s0, 4
    %v72 = vld [vmem:[%s71] sm:$0x1]
    %73 = vrot.lane.b32.xlu0 %v72, 16
    %v74 = vpop.permute.xlu0 %73
    %vm75 = vcmask 162944
    %76 = vst.msk [vmem:[#allocation0] sm:$0x1] %vm75, %v74
    %s77 = scalar_lea.vmem %s0, 3
    %v78 = vld [vmem:[%s77] sm:$0x1]
    %79 = vrot.lane.b32.xlu0 %v78, 12
    %v80 = vpop.permute.xlu0 %79
    %vm81 = vcmask 130144
    %82 = vst.msk [vmem:[#allocation0] sm:$0x1] %vm81, %v80
    %s83 = scalar_lea.vmem %s0, 2
    %v84 = vld [vmem:[%s83] sm:$0x1]
    %85 = vrot.lane.b32.xlu0 %v84, 8
    %v86 = vpop.permute.xlu0 %85
    %vm87 = vcmask 97344
    %88 = vst.msk [vmem:[#allocation0] sm:$0x1] %vm87, %v86
    %s89 = scalar_lea.vmem %s0, 1
    %v90 = vld [vmem:[%s89] sm:$0x1]
    %91 = vrot.lane.b32.xlu0 %v90, 4
    %v92 = vpop.permute.xlu0 %91
    %vm93 = vcmask 64544
    %94 = vst.msk [vmem:[#allocation0] sm:$0x1] %vm93, %v92
    %s96 = sshllo.u32 0, 1
    %v98 = vld [vmem:[#allocation0] sm:%s96]
    %s99 = sshllo.u32 0, 1
    %100 = vst [vmem:[%s1] sm:%s99] %v98

// kernel: tile.629
$region0: #{tile.629}
  #allocation0 [shape = 's32[1]{0}', space=sflag, size = 0x4, scoped, tag = 'scoped memory for tile.629']
  %s0 = inlined_call_operand.<no memory space> [shape: f32[], index: 0, kind: input, shape index: {}]
  %s1 = inlined_call_operand.vmem [shape: f32[1,128], index: 1, kind: output, shape index: {}]
  %v2 = vstv %s0
  %3 = vst [vmem:[%s1] sm:$0x1] %v2

// kernel: _lambda_.91
$region0: #{_lambda_.91}
  #allocation0 [shape = 'u32[]', space=smem, size = 0x4, offset = 0x4, fixed_abs, tag = 'smem constant byte address 0x4 - core index']
  #allocation1 [shape = 'u32[144,128]{1,0:T(1,128)}', space=vmem, size = 0x12000, scoped, tag = 'internal scratch']
  %s0 = inlined_call_operand.vmem [shape: f32[8,128], index: 0, kind: input, shape index: {}]
  %s1 = inlined_call_operand.vmem [shape: f32[1,128], index: 1, kind: input, shape index: {}]
  %s2 = inlined_call_operand.vmem [shape: f32[1,128], index: 2, kind: input, shape index: {}]
  %s3 = inlined_call_operand.vmem [shape: f32[1,128], index: 3, kind: input, shape index: {}]
  %s4 = inlined_call_operand.vmem [shape: bf16[8,128], index: 4, kind: output, shape index: {}]
  %s5 = sld [smem:[#allocation0]]
  $region26: #{_lambda_.91} parent=0
    _
  %s7 = ssub.s32 1, %s5
  %s8 = scalar_select 0, %s7, %s5
  // Predicated region
  $region2: #{_lambda_.91} parent=0 // pred_check
    _
  $region3: #{_lambda_.91} parent=0 // pred_check_branch
    %10 = sbr.rel (0) target = $region5
  $region4: #{_lambda_.91} parent=0 // pred_region
    _
  $region5: #{_lambda_.91} parent=0 // pred_fallthru
    _
  // Predicated region
  $region6: #{_lambda_.91} parent=0 // pred_check
    _
  $region7: #{_lambda_.91} parent=0 // pred_check_branch
    %12 = sbr.rel (0) target = $region9
  $region8: #{_lambda_.91} parent=0 // pred_region
    _
  $region9: #{_lambda_.91} parent=0 // pred_fallthru
    _
  // Predicated region
  $region10: #{_lambda_.91} parent=0 // pred_check
    _
  $region11: #{_lambda_.91} parent=0 // pred_check_branch
    %14 = sbr.rel (0) target = $region13
  $region12: #{_lambda_.91} parent=0 // pred_region
    _
  $region13: #{_lambda_.91} parent=0 // pred_fallthru
    _
  // Predicated region
  $region14: #{_lambda_.91} parent=0 // pred_check
    _
  $region15: #{_lambda_.91} parent=0 // pred_check_branch
    %16 = sbr.rel (0) target = $region17
  $region16: #{_lambda_.91} parent=0 // pred_region
    _
  $region17: #{_lambda_.91} parent=0 // pred_fallthru
    _
  %v17 = vld [vmem:[%s0] sm:$0xff]
  %v18 = vld [vmem:[%s1] sm:$0x1]
  %v20 = vlaneseq
  %v21 = vshrl.u32 %v20, 7
  %v22 = vsub.s32 0, %v21
  %v23 = vrot.slane %v18, %v22
  %v25 = vmul.f32 %v17, %v23
  %v26 = vld [vmem:[%s2] sm:$0x1]
  %v28 = vlaneseq
  %v29 = vshrl.u32 %v28, 7
  %v30 = vsub.s32 0, %v29
  %v31 = vrot.slane %v26, %v30
  %v33 = vadd.f32 %v25, %v31
  %vm34 = vcmp.ge.f32.partialorder %v33, 0.0
  %v35 = vld [vmem:[%s3] sm:$0x1]
  %v37 = vlaneseq
  %v38 = vshrl.u32 %v37, 7
  %v39 = vsub.s32 0, %v38
  %v40 = vrot.slane %v35, %v39
  %v42 = vmul.f32 %v33, %v40
  %v43 = vsel %vm34, %v33, %v42
  %v44 = vpack.c.bf16 %v43, %v43
  %45 = vst [vmem:[%s4] sm:$0xf] %v44
  // Predicated region
  $region18: #{_lambda_.91} parent=0 // pred_check
    _
  $region19: #{_lambda_.91} parent=0 // pred_check_branch
    %47 = sbr.rel (0) target = $region21
  $region20: #{_lambda_.91} parent=0 // pred_region
    _
  $region21: #{_lambda_.91} parent=0 // pred_fallthru
    _
  // Predicated region
  $region22: #{_lambda_.91} parent=0 // pred_check
    _
  $region23: #{_lambda_.91} parent=0 // pred_check_branch
    %49 = sbr.rel (0) target = $region25
  $region24: #{_lambda_.91} parent=0 // pred_region
    _
  $region25: #{_lambda_.91} parent=0 // pred_fallthru
    _

// kernel: _lambda_.90
$region0: #{_lambda_.90}
  #allocation0 [shape = 'u32[]', space=smem, size = 0x4, offset = 0x4, fixed_abs, tag = 'smem constant byte address 0x4 - core index']
  #allocation1 [shape = 'u32[144,128]{1,0:T(1,128)}', space=vmem, size = 0x12000, scoped, tag = 'internal scratch']
  %s0 = inlined_call_operand.vmem [shape: bf16[9,16,16], index: 0, kind: input, shape index: {}]
  %s1 = inlined_call_operand.vmem [shape: bf16[9,16,64], index: 1, kind: input, shape index: {}]
  %s2 = inlined_call_operand.vmem [shape: f32[1,64], index: 2, kind: input, shape index: {}]
  %s3 = inlined_call_operand.vmem [shape: f32[1,64], index: 3, kind: input, shape index: {}]
  %s4 = inlined_call_operand.vmem [shape: f32[1,64], index: 4, kind: input, shape index: {}]
  %s5 = inlined_call_operand.vmem [shape: bf16[16,64], index: 5, kind: output, shape index: {}]
  %s6 = sld [smem:[#allocation0]]
  $region30: #{_lambda_.90} parent=0
    _
  %s8 = ssub.s32 1, %s6
  %s9 = scalar_select 0, %s8, %s6
  // Predicated region
  $region2: #{_lambda_.90} parent=0 // pred_check
    _
  $region3: #{_lambda_.90} parent=0 // pred_check_branch
    %11 = sbr.rel (0) target = $region5
  $region4: #{_lambda_.90} parent=0 // pred_region
    _
  $region5: #{_lambda_.90} parent=0 // pred_fallthru
    _
  // Predicated region
  $region6: #{_lambda_.90} parent=0 // pred_check
    _
  $region7: #{_lambda_.90} parent=0 // pred_check_branch
    %13 = sbr.rel (0) target = $region9
  $region8: #{_lambda_.90} parent=0 // pred_region
    _
  $region9: #{_lambda_.90} parent=0 // pred_fallthru
    _
  // Predicated region
  $region10: #{_lambda_.90} parent=0 // pred_check
    _
  $region11: #{_lambda_.90} parent=0 // pred_check_branch
    %15 = sbr.rel (0) target = $region13
  $region12: #{_lambda_.90} parent=0 // pred_region
    _
  $region13: #{_lambda_.90} parent=0 // pred_fallthru
    _
  // Predicated region
  $region14: #{_lambda_.90} parent=0 // pred_check
    _
  $region15: #{_lambda_.90} parent=0 // pred_check_branch
    %17 = sbr.rel (0) target = $region17
  $region16: #{_lambda_.90} parent=0 // pred_region
    _
  $region17: #{_lambda_.90} parent=0 // pred_fallthru
    _
  // Predicated region
  $region18: #{_lambda_.90} parent=0 // pred_check
    _
  $region19: #{_lambda_.90} parent=0 // pred_check_branch
    %19 = sbr.rel (0) target = $region21
  $region20: #{_lambda_.90} parent=0 // pred_region
    _
  $region21: #{_lambda_.90} parent=0 // pred_fallthru
    _
  %v21 = vld [vmem:[%s0] sm:$0xf]
  %v22 = vld [vmem:[%s0 + $0x4] sm:$0xf]
  %v23 = vld [vmem:[%s1] sm:$0xf]
  %v24 = vld [vmem:[%s1 + $0x4] sm:$0xf]
  %s25 = scalar_lea.vmem %s0, 8
  %v26 = vld [vmem:[%s25] sm:$0xf]
  %v27 = vld [vmem:[%s25 + $0x4] sm:$0xf]
  %s28 = scalar_lea.vmem %s1, 8
  %v29 = vld [vmem:[%s28] sm:$0xf]
  %v30 = vld [vmem:[%s28 + $0x4] sm:$0xf]
  %v33 = vunpack.c.l.b16 %v26
  %v34 = vunpack.c.l.b16 %v27
  %v35 = vpack.c.b16 %v34, %v33
  %v38 = vunpack.c.l.b16 %v29
  %v39 = vunpack.c.l.b16 %v30
  %v40 = vpack.c.b16 %v39, %v38
  %vm42 = vcmask 130048
  %v44 = vsel %vm42, %v35, 0
  %46 = vmatprep.subr.bf16.mxu0 0
  %47 = vmatpush1.bf16.msra.mxu0 %v40
  %48 = vmatprep.subr.bf16.mxu0 0
  %49 = vmatpush1.bf16.msra.mxu0 0
  %50 = vmatprep.subr.bf16.mxu0 0
  %51 = vmatpush1.bf16.msra.mxu0 0
  %52 = vmatprep.subr.bf16.mxu0 0
  %53 = vmatpush1.bf16.msra.mxu0 0
  %54 = vmatprep.subr.bf16.mxu0 0
  %55 = vmatpush1.bf16.msra.mxu0 0
  %56 = vmatprep.subr.bf16.mxu0 0
  %57 = vmatpush1.bf16.msra.mxu0 0
  %58 = vmatprep.subr.bf16.mxu0 0
  %59 = vmatpush1.bf16.msra.mxu0 0
  %60 = vmatprep.subr.bf16.mxu0 0
  %61 = vmatpush1.bf16.msra.mxu0 0
  %62 = vmatprep.subr.bf16.mxu0 0
  %63 = vmatpush1.bf16.msra.mxu0 0
  %64 = vmatprep.subr.bf16.mxu0 0
  %65 = vmatpush1.bf16.msra.mxu0 0
  %66 = vmatprep.subr.bf16.mxu0 0
  %67 = vmatpush1.bf16.msra.mxu0 0
  %68 = vmatprep.subr.bf16.mxu0 0
  %69 = vmatpush1.bf16.msra.mxu0 0
  %70 = vmatprep.subr.bf16.mxu0 0
  %71 = vmatpush1.bf16.msra.mxu0 0
  %72 = vmatprep.subr.bf16.mxu0 0
  %73 = vmatpush1.bf16.msra.mxu0 0
  %74 = vmatprep.subr.bf16.mxu0 0
  %75 = vmatpush1.bf16.msra.mxu0 0
  %76 = vmatprep.subr.bf16.mxu0 0
  %77 = vmatpush1.bf16.msra.mxu0 0
  %78 = vmatprep.mubr.bf16.mxu0 0
  %79 = vmatmul.mubr.bf16.gmra.mrb[0].mxu0 %v44
  %v80 = vpop.f32.mrb[0].mxu0
  %v81 = vadd.f32 0.0, %v80
  %v82 = vpop.f32.mrb[0].mxu0
  %v83 = vpop.f32.mrb[0].mxu0
  %v84 = vadd.f32 0.0, %v83
  %v85 = vpop.f32.mrb[0].mxu0
  %86 = vdwg.mxu0
  %v89 = vunpack.c.l.b16 %v21
  %v90 = vunpack.c.l.b16 %v22
  %v91 = vpack.c.b16 %v90, %v89
  %v94 = vunpack.c.l.b16 %v23
  %v95 = vunpack.c.l.b16 %v24
  %v96 = vpack.c.b16 %v95, %v94
  %v99 = vsel %vm42, %v91, 0
  %101 = vmatprep.subr.bf16.mxu0 0
  %102 = vmatpush1.bf16.msra.mxu0 %v96
  %103 = vmatprep.subr.bf16.mxu0 0
  %104 = vmatpush1.bf16.msra.mxu0 0
  %105 = vmatprep.subr.bf16.mxu0 0
  %106 = vmatpush1.bf16.msra.mxu0 0
  %107 = vmatprep.subr.bf16.mxu0 0
  %108 = vmatpush1.bf16.msra.mxu0 0
  %109 = vmatprep.subr.bf16.mxu0 0
  %110 = vmatpush1.bf16.msra.mxu0 0
  %111 = vmatprep.subr.bf16.mxu0 0
  %112 = vmatpush1.bf16.msra.mxu0 0
  %113 = vmatprep.subr.bf16.mxu0 0
  %114 = vmatpush1.bf16.msra.mxu0 0
  %115 = vmatprep.subr.bf16.mxu0 0
  %116 = vmatpush1.bf16.msra.mxu0 0
  %117 = vmatprep.subr.bf16.mxu0 0
  %118 = vmatpush1.bf16.msra.mxu0 0
  %119 = vmatprep.subr.bf16.mxu0 0
  %120 = vmatpush1.bf16.msra.mxu0 0
  %121 = vmatprep.subr.bf16.mxu0 0
  %122 = vmatpush1.bf16.msra.mxu0 0
  %123 = vmatprep.subr.bf16.mxu0 0
  %124 = vmatpush1.bf16.msra.mxu0 0
  %125 = vmatprep.subr.bf16.mxu0 0
  %126 = vmatpush1.bf16.msra.mxu0 0
  %127 = vmatprep.subr.bf16.mxu0 0
  %128 = vmatpush1.bf16.msra.mxu0 0
  %129 = vmatprep.subr.bf16.mxu0 0
  %130 = vmatpush1.bf16.msra.mxu0 0
  %131 = vmatprep.subr.bf16.mxu0 0
  %132 = vmatpush1.bf16.msra.mxu0 0
  %133 = vmatprep.mubr.bf16.mxu0 0
  %134 = vmatmul.mubr.bf16.gmra.mrb[0].mxu0 %v99
  %v135 = vpop.f32.mrb[0].mxu0
  %v136 = vadd.f32 %v81, %v135
  %v137 = vpop.f32.mrb[0].mxu0
  %v138 = vpop.f32.mrb[0].mxu0
  %v139 = vadd.f32 %v84, %v138
  %v140 = vpop.f32.mrb[0].mxu0
  %141 = vdwg.mxu0
  %s142 = scalar_lea.vmem %s0, 16
  %v143 = vld [vmem:[%s142] sm:$0xf]
  %v144 = vld [vmem:[%s142 + $0x4] sm:$0xf]
  %s145 = scalar_lea.vmem %s1, 16
  %v146 = vld [vmem:[%s145] sm:$0xf]
  %v147 = vld [vmem:[%s145 + $0x4] sm:$0xf]
  %v150 = vunpack.c.l.b16 %v143
  %v151 = vunpack.c.l.b16 %v144
  %v152 = vpack.c.b16 %v151, %v150
  %v155 = vunpack.c.l.b16 %v146
  %v156 = vunpack.c.l.b16 %v147
  %v157 = vpack.c.b16 %v156, %v155
  %v160 = vsel %vm42, %v152, 0
  %162 = vmatprep.subr.bf16.mxu0 0
  %163 = vmatpush1.bf16.msra.mxu0 %v157
  %164 = vmatprep.subr.bf16.mxu0 0
  %165 = vmatpush1.bf16.msra.mxu0 0
  %166 = vmatprep.subr.bf16.mxu0 0
  %167 = vmatpush1.bf16.msra.mxu0 0
  %168 = vmatprep.subr.bf16.mxu0 0
  %169 = vmatpush1.bf16.msra.mxu0 0
  %170 = vmatprep.subr.bf16.mxu0 0
  %171 = vmatpush1.bf16.msra.mxu0 0
  %172 = vmatprep.subr.bf16.mxu0 0
  %173 = vmatpush1.bf16.msra.mxu0 0
  %174 = vmatprep.subr.bf16.mxu0 0
  %175 = vmatpush1.bf16.msra.mxu0 0
  %176 = vmatprep.subr.bf16.mxu0 0
  %177 = vmatpush1.bf16.msra.mxu0 0
  %178 = vmatprep.subr.bf16.mxu0 0
  %179 = vmatpush1.bf16.msra.mxu0 0
  %180 = vmatprep.subr.bf16.mxu0 0
  %181 = vmatpush1.bf16.msra.mxu0 0
  %182 = vmatprep.subr.bf16.mxu0 0
  %183 = vmatpush1.bf16.msra.mxu0 0
  %184 = vmatprep.subr.bf16.mxu0 0
  %185 = vmatpush1.bf16.msra.mxu0 0
  %186 = vmatprep.subr.bf16.mxu0 0
  %187 = vmatpush1.bf16.msra.mxu0 0
  %188 = vmatprep.subr.bf16.mxu0 0
  %189 = vmatpush1.bf16.msra.mxu0 0
  %190 = vmatprep.subr.bf16.mxu0 0
  %191 = vmatpush1.bf16.msra.mxu0 0
  %192 = vmatprep.subr.bf16.mxu0 0
  %193 = vmatpush1.bf16.msra.mxu0 0
  %194 = vmatprep.mubr.bf16.mxu0 0
  %195 = vmatmul.mubr.bf16.gmra.mrb[0].mxu0 %v160
  %v196 = vpop.f32.mrb[0].mxu0
  %v197 = vadd.f32 0.0, %v196
  %v198 = vpop.f32.mrb[0].mxu0
  %v199 = vpop.f32.mrb[0].mxu0
  %v200 = vadd.f32 0.0, %v199
  %v201 = vpop.f32.mrb[0].mxu0
  %202 = vdwg.mxu0
  %v203 = vadd.f32 %v136, %v197
  %v204 = vadd.f32 %v139, %v200
  %s205 = scalar_lea.vmem %s0, 24
  %v206 = vld [vmem:[%s205] sm:$0xf]
  %v207 = vld [vmem:[%s205 + $0x4] sm:$0xf]
  %s208 = scalar_lea.vmem %s1, 24
  %v209 = vld [vmem:[%s208] sm:$0xf]
  %v210 = vld [vmem:[%s208 + $0x4] sm:$0xf]
  %v213 = vunpack.c.l.b16 %v206
  %v214 = vunpack.c.l.b16 %v207
  %v215 = vpack.c.b16 %v214, %v213
  %v218 = vunpack.c.l.b16 %v209
  %v219 = vunpack.c.l.b16 %v210
  %v220 = vpack.c.b16 %v219, %v218
  %v223 = vsel %vm42, %v215, 0
  %225 = vmatprep.subr.bf16.mxu0 0
  %226 = vmatpush1.bf16.msra.mxu0 %v220
  %227 = vmatprep.subr.bf16.mxu0 0
  %228 = vmatpush1.bf16.msra.mxu0 0
  %229 = vmatprep.subr.bf16.mxu0 0
  %230 = vmatpush1.bf16.msra.mxu0 0
  %231 = vmatprep.subr.bf16.mxu0 0
  %232 = vmatpush1.bf16.msra.mxu0 0
  %233 = vmatprep.subr.bf16.mxu0 0
  %234 = vmatpush1.bf16.msra.mxu0 0
  %235 = vmatprep.subr.bf16.mxu0 0
  %236 = vmatpush1.bf16.msra.mxu0 0
  %237 = vmatprep.subr.bf16.mxu0 0
  %238 = vmatpush1.bf16.msra.mxu0 0
  %239 = vmatprep.subr.bf16.mxu0 0
  %240 = vmatpush1.bf16.msra.mxu0 0
  %241 = vmatprep.subr.bf16.mxu0 0
  %242 = vmatpush1.bf16.msra.mxu0 0
  %243 = vmatprep.subr.bf16.mxu0 0
  %244 = vmatpush1.bf16.msra.mxu0 0
  %245 = vmatprep.subr.bf16.mxu0 0
  %246 = vmatpush1.bf16.msra.mxu0 0
  %247 = vmatprep.subr.bf16.mxu0 0
  %248 = vmatpush1.bf16.msra.mxu0 0
  %249 = vmatprep.subr.bf16.mxu0 0
  %250 = vmatpush1.bf16.msra.mxu0 0
  %251 = vmatprep.subr.bf16.mxu0 0
  %252 = vmatpush1.bf16.msra.mxu0 0
  %253 = vmatprep.subr.bf16.mxu0 0
  %254 = vmatpush1.bf16.msra.mxu0 0
  %255 = vmatprep.subr.bf16.mxu0 0
  %256 = vmatpush1.bf16.msra.mxu0 0
  %257 = vmatprep.mubr.bf16.mxu0 0
  %258 = vmatmul.mubr.bf16.gmra.mrb[0].mxu0 %v223
  %v259 = vpop.f32.mrb[0].mxu0
  %v260 = vadd.f32 0.0, %v259
  %v261 = vpop.f32.mrb[0].mxu0
  %v262 = vpop.f32.mrb[0].mxu0
  %v263 = vadd.f32 0.0, %v262
  %v264 = vpop.f32.mrb[0].mxu0
  %265 = vdwg.mxu0
  %v266 = vadd.f32 %v203, %v260
  %v267 = vadd.f32 %v204, %v263
  %s268 = scalar_lea.vmem %s0, 32
  %v269 = vld [vmem:[%s268] sm:$0xf]
  %v270 = vld [vmem:[%s268 + $0x4] sm:$0xf]
  %s271 = scalar_lea.vmem %s1, 32
  %v272 = vld [vmem:[%s271] sm:$0xf]
  %v273 = vld [vmem:[%s271 + $0x4] sm:$0xf]
  %v276 = vunpack.c.l.b16 %v269
  %v277 = vunpack.c.l.b16 %v270
  %v278 = vpack.c.b16 %v277, %v276
  %v281 = vunpack.c.l.b16 %v272
  %v282 = vunpack.c.l.b16 %v273
  %v283 = vpack.c.b16 %v282, %v281
  %v286 = vsel %vm42, %v278, 0
  %288 = vmatprep.subr.bf16.mxu0 0
  %289 = vmatpush1.bf16.msra.mxu0 %v283
  %290 = vmatprep.subr.bf16.mxu0 0
  %291 = vmatpush1.bf16.msra.mxu0 0
  %292 = vmatprep.subr.bf16.mxu0 0
  %293 = vmatpush1.bf16.msra.mxu0 0
  %294 = vmatprep.subr.bf16.mxu0 0
  %295 = vmatpush1.bf16.msra.mxu0 0
  %296 = vmatprep.subr.bf16.mxu0 0
  %297 = vmatpush1.bf16.msra.mxu0 0
  %298 = vmatprep.subr.bf16.mxu0 0
  %299 = vmatpush1.bf16.msra.mxu0 0
  %300 = vmatprep.subr.bf16.mxu0 0
  %301 = vmatpush1.bf16.msra.mxu0 0
  %302 = vmatprep.subr.bf16.mxu0 0
  %303 = vmatpush1.bf16.msra.mxu0 0
  %304 = vmatprep.subr.bf16.mxu0 0
  %305 = vmatpush1.bf16.msra.mxu0 0
  %306 = vmatprep.subr.bf16.mxu0 0
  %307 = vmatpush1.bf16.msra.mxu0 0
  %308 = vmatprep.subr.bf16.mxu0 0
  %309 = vmatpush1.bf16.msra.mxu0 0
  %310 = vmatprep.subr.bf16.mxu0 0
  %311 = vmatpush1.bf16.msra.mxu0 0
  %312 = vmatprep.subr.bf16.mxu0 0
  %313 = vmatpush1.bf16.msra.mxu0 0
  %314 = vmatprep.subr.bf16.mxu0 0
  %315 = vmatpush1.bf16.msra.mxu0 0
  %316 = vmatprep.subr.bf16.mxu0 0
  %317 = vmatpush1.bf16.msra.mxu0 0
  %318 = vmatprep.subr.bf16.mxu0 0
  %319 = vmatpush1.bf16.msra.mxu0 0
  %320 = vmatprep.mubr.bf16.mxu0 0
  %321 = vmatmul.mubr.bf16.gmra.mrb[0].mxu0 %v286
  %v322 = vpop.f32.mrb[0].mxu0
  %v323 = vadd.f32 0.0, %v322
  %v324 = vpop.f32.mrb[0].mxu0
  %v325 = vpop.f32.mrb[0].mxu0
  %v326 = vadd.f32 0.0, %v325
  %v327 = vpop.f32.mrb[0].mxu0
  %328 = vdwg.mxu0
  %v329 = vadd.f32 %v266, %v323
  %v330 = vadd.f32 %v267, %v326
  %s331 = scalar_lea.vmem %s0, 40
  %v332 = vld [vmem:[%s331] sm:$0xf]
  %v333 = vld [vmem:[%s331 + $0x4] sm:$0xf]
  %s334 = scalar_lea.vmem %s1, 40
  %v335 = vld [vmem:[%s334] sm:$0xf]
  %v336 = vld [vmem:[%s334 + $0x4] sm:$0xf]
  %v339 = vunpack.c.l.b16 %v332
  %v340 = vunpack.c.l.b16 %v333
  %v341 = vpack.c.b16 %v340, %v339
  %v344 = vunpack.c.l.b16 %v335
  %v345 = vunpack.c.l.b16 %v336
  %v346 = vpack.c.b16 %v345, %v344
  %v349 = vsel %vm42, %v341, 0
  %351 = vmatprep.subr.bf16.mxu0 0
  %352 = vmatpush1.bf16.msra.mxu0 %v346
  %353 = vmatprep.subr.bf16.mxu0 0
  %354 = vmatpush1.bf16.msra.mxu0 0
  %355 = vmatprep.subr.bf16.mxu0 0
  %356 = vmatpush1.bf16.msra.mxu0 0
  %357 = vmatprep.subr.bf16.mxu0 0
  %358 = vmatpush1.bf16.msra.mxu0 0
  %359 = vmatprep.subr.bf16.mxu0 0
  %360 = vmatpush1.bf16.msra.mxu0 0
  %361 = vmatprep.subr.bf16.mxu0 0
  %362 = vmatpush1.bf16.msra.mxu0 0
  %363 = vmatprep.subr.bf16.mxu0 0
  %364 = vmatpush1.bf16.msra.mxu0 0
  %365 = vmatprep.subr.bf16.mxu0 0
  %366 = vmatpush1.bf16.msra.mxu0 0
  %367 = vmatprep.subr.bf16.mxu0 0
  %368 = vmatpush1.bf16.msra.mxu0 0
  %369 = vmatprep.subr.bf16.mxu0 0
  %370 = vmatpush1.bf16.msra.mxu0 0
  %371 = vmatprep.subr.bf16.mxu0 0
  %372 = vmatpush1.bf16.msra.mxu0 0
  %373 = vmatprep.subr.bf16.mxu0 0
  %374 = vmatpush1.bf16.msra.mxu0 0
  %375 = vmatprep.subr.bf16.mxu0 0
  %376 = vmatpush1.bf16.msra.mxu0 0
  %377 = vmatprep.subr.bf16.mxu0 0
  %378 = vmatpush1.bf16.msra.mxu0 0
  %379 = vmatprep.subr.bf16.mxu0 0
  %380 = vmatpush1.bf16.msra.mxu0 0
  %381 = vmatprep.subr.bf16.mxu0 0
  %382 = vmatpush1.bf16.msra.mxu0 0
  %383 = vmatprep.mubr.bf16.mxu0 0
  %384 = vmatmul.mubr.bf16.gmra.mrb[0].mxu0 %v349
  %v385 = vpop.f32.mrb[0].mxu0
  %v386 = vadd.f32 0.0, %v385
  %v387 = vpop.f32.mrb[0].mxu0
  %v388 = vpop.f32.mrb[0].mxu0
  %v389 = vadd.f32 0.0, %v388
  %v390 = vpop.f32.mrb[0].mxu0
  %391 = vdwg.mxu0
  %v392 = vadd.f32 %v329, %v386
  %v393 = vadd.f32 %v330, %v389
  %s394 = scalar_lea.vmem %s0, 48
  %v395 = vld [vmem:[%s394] sm:$0xf]
  %v396 = vld [vmem:[%s394 + $0x4] sm:$0xf]
  %s397 = scalar_lea.vmem %s1, 48
  %v398 = vld [vmem:[%s397] sm:$0xf]
  %v399 = vld [vmem:[%s397 + $0x4] sm:$0xf]
  %v402 = vunpack.c.l.b16 %v395
  %v403 = vunpack.c.l.b16 %v396
  %v404 = vpack.c.b16 %v403, %v402
  %v407 = vunpack.c.l.b16 %v398
  %v408 = vunpack.c.l.b16 %v399
  %v409 = vpack.c.b16 %v408, %v407
  %v412 = vsel %vm42, %v404, 0
  %414 = vmatprep.subr.bf16.mxu0 0
  %415 = vmatpush1.bf16.msra.mxu0 %v409
  %416 = vmatprep.subr.bf16.mxu0 0
  %417 = vmatpush1.bf16.msra.mxu0 0
  %418 = vmatprep.subr.bf16.mxu0 0
  %419 = vmatpush1.bf16.msra.mxu0 0
  %420 = vmatprep.subr.bf16.mxu0 0
  %421 = vmatpush1.bf16.msra.mxu0 0
  %422 = vmatprep.subr.bf16.mxu0 0
  %423 = vmatpush1.bf16.msra.mxu0 0
  %424 = vmatprep.subr.bf16.mxu0 0
  %425 = vmatpush1.bf16.msra.mxu0 0
  %426 = vmatprep.subr.bf16.mxu0 0
  %427 = vmatpush1.bf16.msra.mxu0 0
  %428 = vmatprep.subr.bf16.mxu0 0
  %429 = vmatpush1.bf16.msra.mxu0 0
  %430 = vmatprep.subr.bf16.mxu0 0
  %431 = vmatpush1.bf16.msra.mxu0 0
  %432 = vmatprep.subr.bf16.mxu0 0
  %433 = vmatpush1.bf16.msra.mxu0 0
  %434 = vmatprep.subr.bf16.mxu0 0
  %435 = vmatpush1.bf16.msra.mxu0 0
  %436 = vmatprep.subr.bf16.mxu0 0
  %437 = vmatpush1.bf16.msra.mxu0 0
  %438 = vmatprep.subr.bf16.mxu0 0
  %439 = vmatpush1.bf16.msra.mxu0 0
  %440 = vmatprep.subr.bf16.mxu0 0
  %441 = vmatpush1.bf16.msra.mxu0 0
  %442 = vmatprep.subr.bf16.mxu0 0
  %443 = vmatpush1.bf16.msra.mxu0 0
  %444 = vmatprep.subr.bf16.mxu0 0
  %445 = vmatpush1.bf16.msra.mxu0 0
  %446 = vmatprep.mubr.bf16.mxu0 0
  %447 = vmatmul.mubr.bf16.gmra.mrb[0].mxu0 %v412
  %v448 = vpop.f32.mrb[0].mxu0
  %v449 = vadd.f32 0.0, %v448
  %v450 = vpop.f32.mrb[0].mxu0
  %v451 = vpop.f32.mrb[0].mxu0
  %v452 = vadd.f32 0.0, %v451
  %v453 = vpop.f32.mrb[0].mxu0
  %454 = vdwg.mxu0
  %v455 = vadd.f32 %v392, %v449
  %v456 = vadd.f32 %v393, %v452
  %s457 = scalar_lea.vmem %s0, 56
  %v458 = vld [vmem:[%s457] sm:$0xf]
  %v459 = vld [vmem:[%s457 + $0x4] sm:$0xf]
  %s460 = scalar_lea.vmem %s1, 56
  %v461 = vld [vmem:[%s460] sm:$0xf]
  %v462 = vld [vmem:[%s460 + $0x4] sm:$0xf]
  %v465 = vunpack.c.l.b16 %v458
  %v466 = vunpack.c.l.b16 %v459
  %v467 = vpack.c.b16 %v466, %v465
  %v470 = vunpack.c.l.b16 %v461
  %v471 = vunpack.c.l.b16 %v462
  %v472 = vpack.c.b16 %v471, %v470
  %v475 = vsel %vm42, %v467, 0
  %477 = vmatprep.subr.bf16.mxu0 0
  %478 = vmatpush1.bf16.msra.mxu0 %v472
  %479 = vmatprep.subr.bf16.mxu0 0
  %480 = vmatpush1.bf16.msra.mxu0 0
  %481 = vmatprep.subr.bf16.mxu0 0
  %482 = vmatpush1.bf16.msra.mxu0 0
  %483 = vmatprep.subr.bf16.mxu0 0
  %484 = vmatpush1.bf16.msra.mxu0 0
  %485 = vmatprep.subr.bf16.mxu0 0
  %486 = vmatpush1.bf16.msra.mxu0 0
  %487 = vmatprep.subr.bf16.mxu0 0
  %488 = vmatpush1.bf16.msra.mxu0 0
  %489 = vmatprep.subr.bf16.mxu0 0
  %490 = vmatpush1.bf16.msra.mxu0 0
  %491 = vmatprep.subr.bf16.mxu0 0
  %492 = vmatpush1.bf16.msra.mxu0 0
  %493 = vmatprep.subr.bf16.mxu0 0
  %494 = vmatpush1.bf16.msra.mxu0 0
  %495 = vmatprep.subr.bf16.mxu0 0
  %496 = vmatpush1.bf16.msra.mxu0 0
  %497 = vmatprep.subr.bf16.mxu0 0
  %498 = vmatpush1.bf16.msra.mxu0 0
  %499 = vmatprep.subr.bf16.mxu0 0
  %500 = vmatpush1.bf16.msra.mxu0 0
  %501 = vmatprep.subr.bf16.mxu0 0
  %502 = vmatpush1.bf16.msra.mxu0 0
  %503 = vmatprep.subr.bf16.mxu0 0
  %504 = vmatpush1.bf16.msra.mxu0 0
  %505 = vmatprep.subr.bf16.mxu0 0
  %506 = vmatpush1.bf16.msra.mxu0 0
  %507 = vmatprep.subr.bf16.mxu0 0
  %508 = vmatpush1.bf16.msra.mxu0 0
  %509 = vmatprep.mubr.bf16.mxu0 0
  %510 = vmatmul.mubr.bf16.gmra.mrb[0].mxu0 %v475
  %v511 = vpop.f32.mrb[0].mxu0
  %v512 = vadd.f32 0.0, %v511
  %v513 = vpop.f32.mrb[0].mxu0
  %v514 = vpop.f32.mrb[0].mxu0
  %v515 = vadd.f32 0.0, %v514
  %v516 = vpop.f32.mrb[0].mxu0
  %517 = vdwg.mxu0
  %v518 = vadd.f32 %v455, %v512
  %v519 = vadd.f32 %v456, %v515
  %s520 = scalar_lea.vmem %s0, 64
  %v521 = vld [vmem:[%s520] sm:$0xf]
  %v522 = vld [vmem:[%s520 + $0x4] sm:$0xf]
  %s523 = scalar_lea.vmem %s1, 64
  %v524 = vld [vmem:[%s523] sm:$0xf]
  %v525 = vld [vmem:[%s523 + $0x4] sm:$0xf]
  %v528 = vunpack.c.l.b16 %v521
  %v529 = vunpack.c.l.b16 %v522
  %v530 = vpack.c.b16 %v529, %v528
  %v533 = vunpack.c.l.b16 %v524
  %v534 = vunpack.c.l.b16 %v525
  %v535 = vpack.c.b16 %v534, %v533
  %v538 = vsel %vm42, %v530, 0
  %540 = vmatprep.subr.bf16.mxu0 0
  %541 = vmatpush1.bf16.msra.mxu0 %v535
  %542 = vmatprep.subr.bf16.mxu0 0
  %543 = vmatpush1.bf16.msra.mxu0 0
  %544 = vmatprep.subr.bf16.mxu0 0
  %545 = vmatpush1.bf16.msra.mxu0 0
  %546 = vmatprep.subr.bf16.mxu0 0
  %547 = vmatpush1.bf16.msra.mxu0 0
  %548 = vmatprep.subr.bf16.mxu0 0
  %549 = vmatpush1.bf16.msra.mxu0 0
  %550 = vmatprep.subr.bf16.mxu0 0
  %551 = vmatpush1.bf16.msra.mxu0 0
  %552 = vmatprep.subr.bf16.mxu0 0
  %553 = vmatpush1.bf16.msra.mxu0 0
  %554 = vmatprep.subr.bf16.mxu0 0
  %555 = vmatpush1.bf16.msra.mxu0 0
  %556 = vmatprep.subr.bf16.mxu0 0
  %557 = vmatpush1.bf16.msra.mxu0 0
  %558 = vmatprep.subr.bf16.mxu0 0
  %559 = vmatpush1.bf16.msra.mxu0 0
  %560 = vmatprep.subr.bf16.mxu0 0
  %561 = vmatpush1.bf16.msra.mxu0 0
  %562 = vmatprep.subr.bf16.mxu0 0
  %563 = vmatpush1.bf16.msra.mxu0 0
  %564 = vmatprep.subr.bf16.mxu0 0
  %565 = vmatpush1.bf16.msra.mxu0 0
  %566 = vmatprep.subr.bf16.mxu0 0
  %567 = vmatpush1.bf16.msra.mxu0 0
  %568 = vmatprep.subr.bf16.mxu0 0
  %569 = vmatpush1.bf16.msra.mxu0 0
  %570 = vmatprep.subr.bf16.mxu0 0
  %571 = vmatpush1.bf16.msra.mxu0 0
  %572 = vmatprep.mubr.bf16.mxu0 0
  %573 = vmatmul.mubr.bf16.gmra.mrb[0].mxu0 %v538
  %v574 = vpop.f32.mrb[0].mxu0
  %v575 = vadd.f32 0.0, %v574
  %v576 = vpop.f32.mrb[0].mxu0
  %v577 = vpop.f32.mrb[0].mxu0
  %v578 = vadd.f32 0.0, %v577
  %v579 = vpop.f32.mrb[0].mxu0
  %580 = vdwg.mxu0
  %v581 = vadd.f32 %v518, %v575
  %v582 = vadd.f32 %v519, %v578
  %v583 = vld [vmem:[%s2] sm:$0x1]
  %v585 = vlaneseq
  %v586 = vshrl.u32 %v585, 7
  %v587 = vsub.s32 0, %v586
  %v588 = vrot.slane %v583, %v587
  %v590 = vmul.f32 %v581, %v588
  %v591 = vmul.f32 %v582, %v588
  %v592 = vld [vmem:[%s3] sm:$0x1]
  %v594 = vlaneseq
  %v595 = vshrl.u32 %v594, 7
  %v596 = vsub.s32 0, %v595
  %v597 = vrot.slane %v592, %v596
  %v599 = vadd.f32 %v590, %v597
  %v600 = vadd.f32 %v591, %v597
  %vm601 = vcmp.ge.f32.partialorder %v599, 0.0
  %vm602 = vcmp.ge.f32.partialorder %v600, 0.0
  %v603 = vld [vmem:[%s4] sm:$0x1]
  %v605 = vlaneseq
  %v606 = vshrl.u32 %v605, 7
  %v607 = vsub.s32 0, %v606
  %v608 = vrot.slane %v603, %v607
  %v610 = vmul.f32 %v599, %v608
  %v611 = vmul.f32 %v600, %v608
  %v612 = vsel %vm601, %v599, %v610
  %v613 = vsel %vm602, %v600, %v611
  %v614 = vpack.c.bf16 %v613, %v612
  %v616 = vunpack.c.l.b16 %v614
  %v617 = vunpack.c.h.b16 %v614
  %v618 = vpack.c.b16 %v616, %v616
  %v619 = vpack.c.b16 %v617, %v617
  %vm622 = vcmask 519168
  %623 = vst.msk [vmem:[%s5] sm:$0xf] %vm622, %v618
  %624 = vst.msk [vmem:[%s5 + $0x4] sm:$0xf] %vm622, %v619
  // Predicated region
  $region22: #{_lambda_.90} parent=0 // pred_check
    _
  $region23: #{_lambda_.90} parent=0 // pred_check_branch
    %626 = sbr.rel (0) target = $region25
  $region24: #{_lambda_.90} parent=0 // pred_region
    _
  $region25: #{_lambda_.90} parent=0 // pred_fallthru
    _
  // Predicated region
  $region26: #{_lambda_.90} parent=0 // pred_check
    _
  $region27: #{_lambda_.90} parent=0 // pred_check_branch
    %628 = sbr.rel (0) target = $region29
  $region28: #{_lambda_.90} parent=0 // pred_region
    _
  $region29: #{_lambda_.90} parent=0 // pred_fallthru
    _

// kernel: _lambda_.92
$region0: #{_lambda_.92}
  #allocation0 [shape = 'u32[]', space=smem, size = 0x4, offset = 0x4, fixed_abs, tag = 'smem constant byte address 0x4 - core index']
  #allocation1 [shape = 'u32[144,128]{1,0:T(1,128)}', space=vmem, size = 0x12000, scoped, tag = 'internal scratch']
  %s0 = inlined_call_operand.vmem [shape: bf16[4,16,32], index: 0, kind: input, shape index: {}]
  %s1 = inlined_call_operand.vmem [shape: bf16[4,32,8], index: 1, kind: input, shape index: {}]
  %s2 = inlined_call_operand.vmem [shape: f32[1,8], index: 2, kind: input, shape index: {}]
  %s3 = inlined_call_operand.vmem [shape: f32[1,8], index: 3, kind: input, shape index: {}]
  %s4 = inlined_call_operand.vmem [shape: f32[1,8], index: 4, kind: input, shape index: {}]
  %s5 = inlined_call_operand.vmem [shape: bf16[16,8], index: 5, kind: output, shape index: {}]
  %s6 = sld [smem:[#allocation0]]
  $region30: #{_lambda_.92} parent=0
    _
  %s8 = ssub.s32 1, %s6
  %s9 = scalar_select 0, %s8, %s6
  // Predicated region
  $region2: #{_lambda_.92} parent=0 // pred_check
    _
  $region3: #{_lambda_.92} parent=0 // pred_check_branch
    %11 = sbr.rel (0) target = $region5
  $region4: #{_lambda_.92} parent=0 // pred_region
    _
  $region5: #{_lambda_.92} parent=0 // pred_fallthru
    _
  // Predicated region
  $region6: #{_lambda_.92} parent=0 // pred_check
    _
  $region7: #{_lambda_.92} parent=0 // pred_check_branch
    %13 = sbr.rel (0) target = $region9
  $region8: #{_lambda_.92} parent=0 // pred_region
    _
  $region9: #{_lambda_.92} parent=0 // pred_fallthru
    _
  // Predicated region
  $region10: #{_lambda_.92} parent=0 // pred_check
    _
  $region11: #{_lambda_.92} parent=0 // pred_check_branch
    %15 = sbr.rel (0) target = $region13
  $region12: #{_lambda_.92} parent=0 // pred_region
    _
  $region13: #{_lambda_.92} parent=0 // pred_fallthru
    _
  // Predicated region
  $region14: #{_lambda_.92} parent=0 // pred_check
    _
  $region15: #{_lambda_.92} parent=0 // pred_check_branch
    %17 = sbr.rel (0) target = $region17
  $region16: #{_lambda_.92} parent=0 // pred_region
    _
  $region17: #{_lambda_.92} parent=0 // pred_fallthru
    _
  // Predicated region
  $region18: #{_lambda_.92} parent=0 // pred_check
    _
  $region19: #{_lambda_.92} parent=0 // pred_check_branch
    %19 = sbr.rel (0) target = $region21
  $region20: #{_lambda_.92} parent=0 // pred_region
    _
  $region21: #{_lambda_.92} parent=0 // pred_fallthru
    _
  %v21 = vld [vmem:[%s0] sm:$0xf]
  %v22 = vld [vmem:[%s0 + $0x4] sm:$0xf]
  %v23 = vld [vmem:[%s1] sm:$0xf]
  %v24 = vld [vmem:[%s1 + $0x4] sm:$0xf]
  %v25 = vld [vmem:[%s1 + $0x8] sm:$0xf]
  %v26 = vld [vmem:[%s1 + $0xc] sm:$0xf]
  %s27 = scalar_lea.vmem %s0, 8
  %v28 = vld [vmem:[%s27] sm:$0xf]
  %v29 = vld [vmem:[%s27 + $0x4] sm:$0xf]
  %s30 = scalar_lea.vmem %s1, 16
  %v31 = vld [vmem:[%s30] sm:$0xf]
  %v32 = vld [vmem:[%s30 + $0x4] sm:$0xf]
  %v33 = vld [vmem:[%s30 + $0x8] sm:$0xf]
  %v34 = vld [vmem:[%s30 + $0xc] sm:$0xf]
  %v37 = vunpack.c.l.b16 %v28
  %v38 = vunpack.c.l.b16 %v29
  %v39 = vpack.c.b16 %v38, %v37
  %v44 = vunpack.c.l.b16 %v31
  %v45 = vunpack.c.l.b16 %v32
  %v46 = vunpack.c.l.b16 %v33
  %v47 = vunpack.c.l.b16 %v34
  %v48 = vpack.c.b16 %v45, %v44
  %v49 = vpack.c.b16 %v47, %v46
  %vm52 = vcmask 261120
  %v54 = vsel %vm52, %v39, 0
  %56 = vmatprep.subr.bf16.mxu0 0
  %57 = vmatpush1.bf16.msra.mxu0 %v48
  %58 = vmatprep.subr.bf16.mxu0 0
  %59 = vmatpush1.bf16.msra.mxu0 %v49
  %60 = vmatprep.subr.bf16.mxu0 0
  %61 = vmatpush1.bf16.msra.mxu0 0
  %62 = vmatprep.subr.bf16.mxu0 0
  %63 = vmatpush1.bf16.msra.mxu0 0
  %64 = vmatprep.subr.bf16.mxu0 0
  %65 = vmatpush1.bf16.msra.mxu0 0
  %66 = vmatprep.subr.bf16.mxu0 0
  %67 = vmatpush1.bf16.msra.mxu0 0
  %68 = vmatprep.subr.bf16.mxu0 0
  %69 = vmatpush1.bf16.msra.mxu0 0
  %70 = vmatprep.subr.bf16.mxu0 0
  %71 = vmatpush1.bf16.msra.mxu0 0
  %72 = vmatprep.subr.bf16.mxu0 0
  %73 = vmatpush1.bf16.msra.mxu0 0
  %74 = vmatprep.subr.bf16.mxu0 0
  %75 = vmatpush1.bf16.msra.mxu0 0
  %76 = vmatprep.subr.bf16.mxu0 0
  %77 = vmatpush1.bf16.msra.mxu0 0
  %78 = vmatprep.subr.bf16.mxu0 0
  %79 = vmatpush1.bf16.msra.mxu0 0
  %80 = vmatprep.subr.bf16.mxu0 0
  %81 = vmatpush1.bf16.msra.mxu0 0
  %82 = vmatprep.subr.bf16.mxu0 0
  %83 = vmatpush1.bf16.msra.mxu0 0
  %84 = vmatprep.subr.bf16.mxu0 0
  %85 = vmatpush1.bf16.msra.mxu0 0
  %86 = vmatprep.subr.bf16.mxu0 0
  %87 = vmatpush1.bf16.msra.mxu0 0
  %88 = vmatprep.mubr.bf16.mxu0 0
  %89 = vmatmul.mubr.bf16.gmra.mrb[0].mxu0 %v54
  %v90 = vpop.f32.mrb[0].mxu0
  %v91 = vadd.f32 0.0, %v90
  %v92 = vpop.f32.mrb[0].mxu0
  %v93 = vpop.f32.mrb[0].mxu0
  %v94 = vadd.f32 0.0, %v93
  %v95 = vpop.f32.mrb[0].mxu0
  %96 = vdwg.mxu0
  %v99 = vunpack.c.l.b16 %v21
  %v100 = vunpack.c.l.b16 %v22
  %v101 = vpack.c.b16 %v100, %v99
  %v106 = vunpack.c.l.b16 %v23
  %v107 = vunpack.c.l.b16 %v24
  %v108 = vunpack.c.l.b16 %v25
  %v109 = vunpack.c.l.b16 %v26
  %v110 = vpack.c.b16 %v107, %v106
  %v111 = vpack.c.b16 %v109, %v108
  %v115 = vsel %vm52, %v101, 0
  %117 = vmatprep.subr.bf16.mxu0 0
  %118 = vmatpush1.bf16.msra.mxu0 %v110
  %119 = vmatprep.subr.bf16.mxu0 0
  %120 = vmatpush1.bf16.msra.mxu0 %v111
  %121 = vmatprep.subr.bf16.mxu0 0
  %122 = vmatpush1.bf16.msra.mxu0 0
  %123 = vmatprep.subr.bf16.mxu0 0
  %124 = vmatpush1.bf16.msra.mxu0 0
  %125 = vmatprep.subr.bf16.mxu0 0
  %126 = vmatpush1.bf16.msra.mxu0 0
  %127 = vmatprep.subr.bf16.mxu0 0
  %128 = vmatpush1.bf16.msra.mxu0 0
  %129 = vmatprep.subr.bf16.mxu0 0
  %130 = vmatpush1.bf16.msra.mxu0 0
  %131 = vmatprep.subr.bf16.mxu0 0
  %132 = vmatpush1.bf16.msra.mxu0 0
  %133 = vmatprep.subr.bf16.mxu0 0
  %134 = vmatpush1.bf16.msra.mxu0 0
  %135 = vmatprep.subr.bf16.mxu0 0
  %136 = vmatpush1.bf16.msra.mxu0 0
  %137 = vmatprep.subr.bf16.mxu0 0
  %138 = vmatpush1.bf16.msra.mxu0 0
  %139 = vmatprep.subr.bf16.mxu0 0
  %140 = vmatpush1.bf16.msra.mxu0 0
  %141 = vmatprep.subr.bf16.mxu0 0
  %142 = vmatpush1.bf16.msra.mxu0 0
  %143 = vmatprep.subr.bf16.mxu0 0
  %144 = vmatpush1.bf16.msra.mxu0 0
  %145 = vmatprep.subr.bf16.mxu0 0
  %146 = vmatpush1.bf16.msra.mxu0 0
  %147 = vmatprep.subr.bf16.mxu0 0
  %148 = vmatpush1.bf16.msra.mxu0 0
  %149 = vmatprep.mubr.bf16.mxu0 0
  %150 = vmatmul.mubr.bf16.gmra.mrb[0].mxu0 %v115
  %v151 = vpop.f32.mrb[0].mxu0
  %v152 = vadd.f32 %v91, %v151
  %v153 = vpop.f32.mrb[0].mxu0
  %v154 = vpop.f32.mrb[0].mxu0
  %v155 = vadd.f32 %v94, %v154
  %v156 = vpop.f32.mrb[0].mxu0
  %157 = vdwg.mxu0
  %s158 = scalar_lea.vmem %s0, 16
  %v159 = vld [vmem:[%s158] sm:$0xf]
  %v160 = vld [vmem:[%s158 + $0x4] sm:$0xf]
  %s161 = scalar_lea.vmem %s1, 32
  %v162 = vld [vmem:[%s161] sm:$0xf]
  %v163 = vld [vmem:[%s161 + $0x4] sm:$0xf]
  %v164 = vld [vmem:[%s161 + $0x8] sm:$0xf]
  %v165 = vld [vmem:[%s161 + $0xc] sm:$0xf]
  %v168 = vunpack.c.l.b16 %v159
  %v169 = vunpack.c.l.b16 %v160
  %v170 = vpack.c.b16 %v169, %v168
  %v175 = vunpack.c.l.b16 %v162
  %v176 = vunpack.c.l.b16 %v163
  %v177 = vunpack.c.l.b16 %v164
  %v178 = vunpack.c.l.b16 %v165
  %v179 = vpack.c.b16 %v176, %v175
  %v180 = vpack.c.b16 %v178, %v177
  %v184 = vsel %vm52, %v170, 0
  %186 = vmatprep.subr.bf16.mxu0 0
  %187 = vmatpush1.bf16.msra.mxu0 %v179
  %188 = vmatprep.subr.bf16.mxu0 0
  %189 = vmatpush1.bf16.msra.mxu0 %v180
  %190 = vmatprep.subr.bf16.mxu0 0
  %191 = vmatpush1.bf16.msra.mxu0 0
  %192 = vmatprep.subr.bf16.mxu0 0
  %193 = vmatpush1.bf16.msra.mxu0 0
  %194 = vmatprep.subr.bf16.mxu0 0
  %195 = vmatpush1.bf16.msra.mxu0 0
  %196 = vmatprep.subr.bf16.mxu0 0
  %197 = vmatpush1.bf16.msra.mxu0 0
  %198 = vmatprep.subr.bf16.mxu0 0
  %199 = vmatpush1.bf16.msra.mxu0 0
  %200 = vmatprep.subr.bf16.mxu0 0
  %201 = vmatpush1.bf16.msra.mxu0 0
  %202 = vmatprep.subr.bf16.mxu0 0
  %203 = vmatpush1.bf16.msra.mxu0 0
  %204 = vmatprep.subr.bf16.mxu0 0
  %205 = vmatpush1.bf16.msra.mxu0 0
  %206 = vmatprep.subr.bf16.mxu0 0
  %207 = vmatpush1.bf16.msra.mxu0 0
  %208 = vmatprep.subr.bf16.mxu0 0
  %209 = vmatpush1.bf16.msra.mxu0 0
  %210 = vmatprep.subr.bf16.mxu0 0
  %211 = vmatpush1.bf16.msra.mxu0 0
  %212 = vmatprep.subr.bf16.mxu0 0
  %213 = vmatpush1.bf16.msra.mxu0 0
  %214 = vmatprep.subr.bf16.mxu0 0
  %215 = vmatpush1.bf16.msra.mxu0 0
  %216 = vmatprep.subr.bf16.mxu0 0
  %217 = vmatpush1.bf16.msra.mxu0 0
  %218 = vmatprep.mubr.bf16.mxu0 0
  %219 = vmatmul.mubr.bf16.gmra.mrb[0].mxu0 %v184
  %v220 = vpop.f32.mrb[0].mxu0
  %v221 = vadd.f32 0.0, %v220
  %v222 = vpop.f32.mrb[0].mxu0
  %v223 = vpop.f32.mrb[0].mxu0
  %v224 = vadd.f32 0.0, %v223
  %v225 = vpop.f32.mrb[0].mxu0
  %226 = vdwg.mxu0
  %v227 = vadd.f32 %v152, %v221
  %v228 = vadd.f32 %v155, %v224
  %s229 = scalar_lea.vmem %s0, 24
  %v230 = vld [vmem:[%s229] sm:$0xf]
  %v231 = vld [vmem:[%s229 + $0x4] sm:$0xf]
  %s232 = scalar_lea.vmem %s1, 48
  %v233 = vld [vmem:[%s232] sm:$0xf]
  %v234 = vld [vmem:[%s232 + $0x4] sm:$0xf]
  %v235 = vld [vmem:[%s232 + $0x8] sm:$0xf]
  %v236 = vld [vmem:[%s232 + $0xc] sm:$0xf]
  %v239 = vunpack.c.l.b16 %v230
  %v240 = vunpack.c.l.b16 %v231
  %v241 = vpack.c.b16 %v240, %v239
  %v246 = vunpack.c.l.b16 %v233
  %v247 = vunpack.c.l.b16 %v234
  %v248 = vunpack.c.l.b16 %v235
  %v249 = vunpack.c.l.b16 %v236
  %v250 = vpack.c.b16 %v247, %v246
  %v251 = vpack.c.b16 %v249, %v248
  %v255 = vsel %vm52, %v241, 0
  %257 = vmatprep.subr.bf16.mxu0 0
  %258 = vmatpush1.bf16.msra.mxu0 %v250
  %259 = vmatprep.subr.bf16.mxu0 0
  %260 = vmatpush1.bf16.msra.mxu0 %v251
  %261 = vmatprep.subr.bf16.mxu0 0
  %262 = vmatpush1.bf16.msra.mxu0 0
  %263 = vmatprep.subr.bf16.mxu0 0
  %264 = vmatpush1.bf16.msra.mxu0 0
  %265 = vmatprep.subr.bf16.mxu0 0
  %266 = vmatpush1.bf16.msra.mxu0 0
  %267 = vmatprep.subr.bf16.mxu0 0
  %268 = vmatpush1.bf16.msra.mxu0 0
  %269 = vmatprep.subr.bf16.mxu0 0
  %270 = vmatpush1.bf16.msra.mxu0 0
  %271 = vmatprep.subr.bf16.mxu0 0
  %272 = vmatpush1.bf16.msra.mxu0 0
  %273 = vmatprep.subr.bf16.mxu0 0
  %274 = vmatpush1.bf16.msra.mxu0 0
  %275 = vmatprep.subr.bf16.mxu0 0
  %276 = vmatpush1.bf16.msra.mxu0 0
  %277 = vmatprep.subr.bf16.mxu0 0
  %278 = vmatpush1.bf16.msra.mxu0 0
  %279 = vmatprep.subr.bf16.mxu0 0
  %280 = vmatpush1.bf16.msra.mxu0 0
  %281 = vmatprep.subr.bf16.mxu0 0
  %282 = vmatpush1.bf16.msra.mxu0 0
  %283 = vmatprep.subr.bf16.mxu0 0
  %284 = vmatpush1.bf16.msra.mxu0 0
  %285 = vmatprep.subr.bf16.mxu0 0
  %286 = vmatpush1.bf16.msra.mxu0 0
  %287 = vmatprep.subr.bf16.mxu0 0
  %288 = vmatpush1.bf16.msra.mxu0 0
  %289 = vmatprep.mubr.bf16.mxu0 0
  %290 = vmatmul.mubr.bf16.gmra.mrb[0].mxu0 %v255
  %v291 = vpop.f32.mrb[0].mxu0
  %v292 = vadd.f32 0.0, %v291
  %v293 = vpop.f32.mrb[0].mxu0
  %v294 = vpop.f32.mrb[0].mxu0
  %v295 = vadd.f32 0.0, %v294
  %v296 = vpop.f32.mrb[0].mxu0
  %297 = vdwg.mxu0
  %v298 = vadd.f32 %v227, %v292
  %v299 = vadd.f32 %v228, %v295
  %v300 = vld [vmem:[%s2] sm:$0x1]
  %v302 = vlaneseq
  %v303 = vshrl.u32 %v302, 7
  %v304 = vsub.s32 0, %v303
  %v305 = vrot.slane %v300, %v304
  %v307 = vmul.f32 %v298, %v305
  %v308 = vmul.f32 %v299, %v305
  %v309 = vld [vmem:[%s3] sm:$0x1]
  %v311 = vlaneseq
  %v312 = vshrl.u32 %v311, 7
  %v313 = vsub.s32 0, %v312
  %v314 = vrot.slane %v309, %v313
  %v316 = vadd.f32 %v307, %v314
  %v317 = vadd.f32 %v308, %v314
  %vm318 = vcmp.ge.f32.partialorder %v316, 0.0
  %vm319 = vcmp.ge.f32.partialorder %v317, 0.0
  %v320 = vld [vmem:[%s4] sm:$0x1]
  %v322 = vlaneseq
  %v323 = vshrl.u32 %v322, 7
  %v324 = vsub.s32 0, %v323
  %v325 = vrot.slane %v320, %v324
  %v327 = vmul.f32 %v316, %v325
  %v328 = vmul.f32 %v317, %v325
  %v329 = vsel %vm318, %v316, %v327
  %v330 = vsel %vm319, %v317, %v328
  %v331 = vpack.c.bf16 %v330, %v329
  %v333 = vunpack.c.l.b16 %v331
  %v334 = vunpack.c.h.b16 %v331
  %v335 = vpack.c.b16 %v333, %v333
  %v336 = vpack.c.b16 %v334, %v334
  %vm339 = vcmask 60416
  %340 = vst.msk [vmem:[%s5] sm:$0xf] %vm339, %v335
  %341 = vst.msk [vmem:[%s5 + $0x4] sm:$0xf] %vm339, %v336
  // Predicated region
  $region22: #{_lambda_.92} parent=0 // pred_check
    _
  $region23: #{_lambda_.92} parent=0 // pred_check_branch
    %343 = sbr.rel (0) target = $region25
  $region24: #{_lambda_.92} parent=0 // pred_region
    _
  $region25: #{_lambda_.92} parent=0 // pred_fallthru
    _
  // Predicated region
  $region26: #{_lambda_.92} parent=0 // pred_check
    _
  $region27: #{_lambda_.92} parent=0 // pred_check_branch
    %345 = sbr.rel (0) target = $region29
  $region28: #{_lambda_.92} parent=0 // pred_region
    _
  $region29: #{_lambda_.92} parent=0 // pred_fallthru
    _

// kernel: _lambda_.93
$region0: #{_lambda_.93}
  #allocation0 [shape = 'u32[]', space=smem, size = 0x4, offset = 0x4, fixed_abs, tag = 'smem constant byte address 0x4 - core index']
  #allocation1 [shape = 'u32[144,128]{1,0:T(1,128)}', space=vmem, size = 0x12000, scoped, tag = 'internal scratch']
  %s0 = inlined_call_operand.vmem [shape: bf16[9,16,16], index: 0, kind: input, shape index: {}]
  %s1 = inlined_call_operand.vmem [shape: bf16[9,16,8], index: 1, kind: input, shape index: {}]
  %s2 = inlined_call_operand.vmem [shape: f32[1,8], index: 2, kind: input, shape index: {}]
  %s3 = inlined_call_operand.vmem [shape: f32[1,8], index: 3, kind: input, shape index: {}]
  %s4 = inlined_call_operand.vmem [shape: f32[1,8], index: 4, kind: input, shape index: {}]
  %s5 = inlined_call_operand.vmem [shape: bf16[16,8], index: 5, kind: output, shape index: {}]
  %s6 = sld [smem:[#allocation0]]
  $region30: #{_lambda_.93} parent=0
    _
  %s8 = ssub.s32 1, %s6
  %s9 = scalar_select 0, %s8, %s6
  // Predicated region
  $region2: #{_lambda_.93} parent=0 // pred_check
    _
  $region3: #{_lambda_.93} parent=0 // pred_check_branch
    %11 = sbr.rel (0) target = $region5
  $region4: #{_lambda_.93} parent=0 // pred_region
    _
  $region5: #{_lambda_.93} parent=0 // pred_fallthru
    _
  // Predicated region
  $region6: #{_lambda_.93} parent=0 // pred_check
    _
  $region7: #{_lambda_.93} parent=0 // pred_check_branch
    %13 = sbr.rel (0) target = $region9
  $region8: #{_lambda_.93} parent=0 // pred_region
    _
  $region9: #{_lambda_.93} parent=0 // pred_fallthru
    _
  // Predicated region
  $region10: #{_lambda_.93} parent=0 // pred_check
    _
  $region11: #{_lambda_.93} parent=0 // pred_check_branch
    %15 = sbr.rel (0) target = $region13
  $region12: #{_lambda_.93} parent=0 // pred_region
    _
  $region13: #{_lambda_.93} parent=0 // pred_fallthru
    _
  // Predicated region
  $region14: #{_lambda_.93} parent=0 // pred_check
    _
  $region15: #{_lambda_.93} parent=0 // pred_check_branch
    %17 = sbr.rel (0) target = $region17
  $region16: #{_lambda_.93} parent=0 // pred_region
    _
  $region17: #{_lambda_.93} parent=0 // pred_fallthru
    _
  // Predicated region
  $region18: #{_lambda_.93} parent=0 // pred_check
    _
  $region19: #{_lambda_.93} parent=0 // pred_check_branch
    %19 = sbr.rel (0) target = $region21
  $region20: #{_lambda_.93} parent=0 // pred_region
    _
  $region21: #{_lambda_.93} parent=0 // pred_fallthru
    _
  %v21 = vld [vmem:[%s0] sm:$0xf]
  %v22 = vld [vmem:[%s0 + $0x4] sm:$0xf]
  %v23 = vld [vmem:[%s1] sm:$0xf]
  %v24 = vld [vmem:[%s1 + $0x4] sm:$0xf]
  %s25 = scalar_lea.vmem %s0, 8
  %v26 = vld [vmem:[%s25] sm:$0xf]
  %v27 = vld [vmem:[%s25 + $0x4] sm:$0xf]
  %s28 = scalar_lea.vmem %s1, 8
  %v29 = vld [vmem:[%s28] sm:$0xf]
  %v30 = vld [vmem:[%s28 + $0x4] sm:$0xf]
  %v33 = vunpack.c.l.b16 %v26
  %v34 = vunpack.c.l.b16 %v27
  %v35 = vpack.c.b16 %v34, %v33
  %v38 = vunpack.c.l.b16 %v29
  %v39 = vunpack.c.l.b16 %v30
  %v40 = vpack.c.b16 %v39, %v38
  %vm42 = vcmask 130048
  %v44 = vsel %vm42, %v35, 0
  %46 = vmatprep.subr.bf16.mxu0 0
  %47 = vmatpush1.bf16.msra.mxu0 %v40
  %48 = vmatprep.subr.bf16.mxu0 0
  %49 = vmatpush1.bf16.msra.mxu0 0
  %50 = vmatprep.subr.bf16.mxu0 0
  %51 = vmatpush1.bf16.msra.mxu0 0
  %52 = vmatprep.subr.bf16.mxu0 0
  %53 = vmatpush1.bf16.msra.mxu0 0
  %54 = vmatprep.subr.bf16.mxu0 0
  %55 = vmatpush1.bf16.msra.mxu0 0
  %56 = vmatprep.subr.bf16.mxu0 0
  %57 = vmatpush1.bf16.msra.mxu0 0
  %58 = vmatprep.subr.bf16.mxu0 0
  %59 = vmatpush1.bf16.msra.mxu0 0
  %60 = vmatprep.subr.bf16.mxu0 0
  %61 = vmatpush1.bf16.msra.mxu0 0
  %62 = vmatprep.subr.bf16.mxu0 0
  %63 = vmatpush1.bf16.msra.mxu0 0
  %64 = vmatprep.subr.bf16.mxu0 0
  %65 = vmatpush1.bf16.msra.mxu0 0
  %66 = vmatprep.subr.bf16.mxu0 0
  %67 = vmatpush1.bf16.msra.mxu0 0
  %68 = vmatprep.subr.bf16.mxu0 0
  %69 = vmatpush1.bf16.msra.mxu0 0
  %70 = vmatprep.subr.bf16.mxu0 0
  %71 = vmatpush1.bf16.msra.mxu0 0
  %72 = vmatprep.subr.bf16.mxu0 0
  %73 = vmatpush1.bf16.msra.mxu0 0
  %74 = vmatprep.subr.bf16.mxu0 0
  %75 = vmatpush1.bf16.msra.mxu0 0
  %76 = vmatprep.subr.bf16.mxu0 0
  %77 = vmatpush1.bf16.msra.mxu0 0
  %78 = vmatprep.mubr.bf16.mxu0 0
  %79 = vmatmul.mubr.bf16.gmra.mrb[0].mxu0 %v44
  %v80 = vpop.f32.mrb[0].mxu0
  %v81 = vadd.f32 0.0, %v80
  %v82 = vpop.f32.mrb[0].mxu0
  %v83 = vpop.f32.mrb[0].mxu0
  %v84 = vadd.f32 0.0, %v83
  %v85 = vpop.f32.mrb[0].mxu0
  %86 = vdwg.mxu0
  %v89 = vunpack.c.l.b16 %v21
  %v90 = vunpack.c.l.b16 %v22
  %v91 = vpack.c.b16 %v90, %v89
  %v94 = vunpack.c.l.b16 %v23
  %v95 = vunpack.c.l.b16 %v24
  %v96 = vpack.c.b16 %v95, %v94
  %v99 = vsel %vm42, %v91, 0
  %101 = vmatprep.subr.bf16.mxu0 0
  %102 = vmatpush1.bf16.msra.mxu0 %v96
  %103 = vmatprep.subr.bf16.mxu0 0
  %104 = vmatpush1.bf16.msra.mxu0 0
  %105 = vmatprep.subr.bf16.mxu0 0
  %106 = vmatpush1.bf16.msra.mxu0 0
  %107 = vmatprep.subr.bf16.mxu0 0
  %108 = vmatpush1.bf16.msra.mxu0 0
  %109 = vmatprep.subr.bf16.mxu0 0
  %110 = vmatpush1.bf16.msra.mxu0 0
  %111 = vmatprep.subr.bf16.mxu0 0
  %112 = vmatpush1.bf16.msra.mxu0 0
  %113 = vmatprep.subr.bf16.mxu0 0
  %114 = vmatpush1.bf16.msra.mxu0 0
  %115 = vmatprep.subr.bf16.mxu0 0
  %116 = vmatpush1.bf16.msra.mxu0 0
  %117 = vmatprep.subr.bf16.mxu0 0
  %118 = vmatpush1.bf16.msra.mxu0 0
  %119 = vmatprep.subr.bf16.mxu0 0
  %120 = vmatpush1.bf16.msra.mxu0 0
  %121 = vmatprep.subr.bf16.mxu0 0
  %122 = vmatpush1.bf16.msra.mxu0 0
  %123 = vmatprep.subr.bf16.mxu0 0
  %124 = vmatpush1.bf16.msra.mxu0 0
  %125 = vmatprep.subr.bf16.mxu0 0
  %126 = vmatpush1.bf16.msra.mxu0 0
  %127 = vmatprep.subr.bf16.mxu0 0
  %128 = vmatpush1.bf16.msra.mxu0 0
  %129 = vmatprep.subr.bf16.mxu0 0
  %130 = vmatpush1.bf16.msra.mxu0 0
  %131 = vmatprep.subr.bf16.mxu0 0
  %132 = vmatpush1.bf16.msra.mxu0 0
  %133 = vmatprep.mubr.bf16.mxu0 0
  %134 = vmatmul.mubr.bf16.gmra.mrb[0].mxu0 %v99
  %v135 = vpop.f32.mrb[0].mxu0
  %v136 = vadd.f32 %v81, %v135
  %v137 = vpop.f32.mrb[0].mxu0
  %v138 = vpop.f32.mrb[0].mxu0
  %v139 = vadd.f32 %v84, %v138
  %v140 = vpop.f32.mrb[0].mxu0
  %141 = vdwg.mxu0
  %s142 = scalar_lea.vmem %s0, 16
  %v143 = vld [vmem:[%s142] sm:$0xf]
  %v144 = vld [vmem:[%s142 + $0x4] sm:$0xf]
  %s145 = scalar_lea.vmem %s1, 16
  %v146 = vld [vmem:[%s145] sm:$0xf]
  %v147 = vld [vmem:[%s145 + $0x4] sm:$0xf]
  %v150 = vunpack.c.l.b16 %v143
  %v151 = vunpack.c.l.b16 %v144
  %v152 = vpack.c.b16 %v151, %v150
  %v155 = vunpack.c.l.b16 %v146
  %v156 = vunpack.c.l.b16 %v147
  %v157 = vpack.c.b16 %v156, %v155
  %v160 = vsel %vm42, %v152, 0
  %162 = vmatprep.subr.bf16.mxu0 0
  %163 = vmatpush1.bf16.msra.mxu0 %v157
  %164 = vmatprep.subr.bf16.mxu0 0
  %165 = vmatpush1.bf16.msra.mxu0 0
  %166 = vmatprep.subr.bf16.mxu0 0
  %167 = vmatpush1.bf16.msra.mxu0 0
  %168 = vmatprep.subr.bf16.mxu0 0
  %169 = vmatpush1.bf16.msra.mxu0 0
  %170 = vmatprep.subr.bf16.mxu0 0
  %171 = vmatpush1.bf16.msra.mxu0 0
  %172 = vmatprep.subr.bf16.mxu0 0
  %173 = vmatpush1.bf16.msra.mxu0 0
  %174 = vmatprep.subr.bf16.mxu0 0
  %175 = vmatpush1.bf16.msra.mxu0 0
  %176 = vmatprep.subr.bf16.mxu0 0
  %177 = vmatpush1.bf16.msra.mxu0 0
  %178 = vmatprep.subr.bf16.mxu0 0
  %179 = vmatpush1.bf16.msra.mxu0 0
  %180 = vmatprep.subr.bf16.mxu0 0
  %181 = vmatpush1.bf16.msra.mxu0 0
  %182 = vmatprep.subr.bf16.mxu0 0
  %183 = vmatpush1.bf16.msra.mxu0 0
  %184 = vmatprep.subr.bf16.mxu0 0
  %185 = vmatpush1.bf16.msra.mxu0 0
  %186 = vmatprep.subr.bf16.mxu0 0
  %187 = vmatpush1.bf16.msra.mxu0 0
  %188 = vmatprep.subr.bf16.mxu0 0
  %189 = vmatpush1.bf16.msra.mxu0 0
  %190 = vmatprep.subr.bf16.mxu0 0
  %191 = vmatpush1.bf16.msra.mxu0 0
  %192 = vmatprep.subr.bf16.mxu0 0
  %193 = vmatpush1.bf16.msra.mxu0 0
  %194 = vmatprep.mubr.bf16.mxu0 0
  %195 = vmatmul.mubr.bf16.gmra.mrb[0].mxu0 %v160
  %v196 = vpop.f32.mrb[0].mxu0
  %v197 = vadd.f32 0.0, %v196
  %v198 = vpop.f32.mrb[0].mxu0
  %v199 = vpop.f32.mrb[0].mxu0
  %v200 = vadd.f32 0.0, %v199
  %v201 = vpop.f32.mrb[0].mxu0
  %202 = vdwg.mxu0
  %v203 = vadd.f32 %v136, %v197
  %v204 = vadd.f32 %v139, %v200
  %s205 = scalar_lea.vmem %s0, 24
  %v206 = vld [vmem:[%s205] sm:$0xf]
  %v207 = vld [vmem:[%s205 + $0x4] sm:$0xf]
  %s208 = scalar_lea.vmem %s1, 24
  %v209 = vld [vmem:[%s208] sm:$0xf]
  %v210 = vld [vmem:[%s208 + $0x4] sm:$0xf]
  %v213 = vunpack.c.l.b16 %v206
  %v214 = vunpack.c.l.b16 %v207
  %v215 = vpack.c.b16 %v214, %v213
  %v218 = vunpack.c.l.b16 %v209
  %v219 = vunpack.c.l.b16 %v210
  %v220 = vpack.c.b16 %v219, %v218
  %v223 = vsel %vm42, %v215, 0
  %225 = vmatprep.subr.bf16.mxu0 0
  %226 = vmatpush1.bf16.msra.mxu0 %v220
  %227 = vmatprep.subr.bf16.mxu0 0
  %228 = vmatpush1.bf16.msra.mxu0 0
  %229 = vmatprep.subr.bf16.mxu0 0
  %230 = vmatpush1.bf16.msra.mxu0 0
  %231 = vmatprep.subr.bf16.mxu0 0
  %232 = vmatpush1.bf16.msra.mxu0 0
  %233 = vmatprep.subr.bf16.mxu0 0
  %234 = vmatpush1.bf16.msra.mxu0 0
  %235 = vmatprep.subr.bf16.mxu0 0
  %236 = vmatpush1.bf16.msra.mxu0 0
  %237 = vmatprep.subr.bf16.mxu0 0
  %238 = vmatpush1.bf16.msra.mxu0 0
  %239 = vmatprep.subr.bf16.mxu0 0
  %240 = vmatpush1.bf16.msra.mxu0 0
  %241 = vmatprep.subr.bf16.mxu0 0
  %242 = vmatpush1.bf16.msra.mxu0 0
  %243 = vmatprep.subr.bf16.mxu0 0
  %244 = vmatpush1.bf16.msra.mxu0 0
  %245 = vmatprep.subr.bf16.mxu0 0
  %246 = vmatpush1.bf16.msra.mxu0 0
  %247 = vmatprep.subr.bf16.mxu0 0
  %248 = vmatpush1.bf16.msra.mxu0 0
  %249 = vmatprep.subr.bf16.mxu0 0
  %250 = vmatpush1.bf16.msra.mxu0 0
  %251 = vmatprep.subr.bf16.mxu0 0
  %252 = vmatpush1.bf16.msra.mxu0 0
  %253 = vmatprep.subr.bf16.mxu0 0
  %254 = vmatpush1.bf16.msra.mxu0 0
  %255 = vmatprep.subr.bf16.mxu0 0
  %256 = vmatpush1.bf16.msra.mxu0 0
  %257 = vmatprep.mubr.bf16.mxu0 0
  %258 = vmatmul.mubr.bf16.gmra.mrb[0].mxu0 %v223
  %v259 = vpop.f32.mrb[0].mxu0
  %v260 = vadd.f32 0.0, %v259
  %v261 = vpop.f32.mrb[0].mxu0
  %v262 = vpop.f32.mrb[0].mxu0
  %v263 = vadd.f32 0.0, %v262
  %v264 = vpop.f32.mrb[0].mxu0
  %265 = vdwg.mxu0
  %v266 = vadd.f32 %v203, %v260
  %v267 = vadd.f32 %v204, %v263
  %s268 = scalar_lea.vmem %s0, 32
  %v269 = vld [vmem:[%s268] sm:$0xf]
  %v270 = vld [vmem:[%s268 + $0x4] sm:$0xf]
  %s271 = scalar_lea.vmem %s1, 32
  %v272 = vld [vmem:[%s271] sm:$0xf]
  %v273 = vld [vmem:[%s271 + $0x4] sm:$0xf]
  %v276 = vunpack.c.l.b16 %v269
  %v277 = vunpack.c.l.b16 %v270
  %v278 = vpack.c.b16 %v277, %v276
  %v281 = vunpack.c.l.b16 %v272
  %v282 = vunpack.c.l.b16 %v273
  %v283 = vpack.c.b16 %v282, %v281
  %v286 = vsel %vm42, %v278, 0
  %288 = vmatprep.subr.bf16.mxu0 0
  %289 = vmatpush1.bf16.msra.mxu0 %v283
  %290 = vmatprep.subr.bf16.mxu0 0
  %291 = vmatpush1.bf16.msra.mxu0 0
  %292 = vmatprep.subr.bf16.mxu0 0
  %293 = vmatpush1.bf16.msra.mxu0 0
  %294 = vmatprep.subr.bf16.mxu0 0
  %295 = vmatpush1.bf16.msra.mxu0 0
  %296 = vmatprep.subr.bf16.mxu0 0
  %297 = vmatpush1.bf16.msra.mxu0 0
  %298 = vmatprep.subr.bf16.mxu0 0
  %299 = vmatpush1.bf16.msra.mxu0 0
  %300 = vmatprep.subr.bf16.mxu0 0
  %301 = vmatpush1.bf16.msra.mxu0 0
  %302 = vmatprep.subr.bf16.mxu0 0
  %303 = vmatpush1.bf16.msra.mxu0 0
  %304 = vmatprep.subr.bf16.mxu0 0
  %305 = vmatpush1.bf16.msra.mxu0 0
  %306 = vmatprep.subr.bf16.mxu0 0
  %307 = vmatpush1.bf16.msra.mxu0 0
  %308 = vmatprep.subr.bf16.mxu0 0
  %309 = vmatpush1.bf16.msra.mxu0 0
  %310 = vmatprep.subr.bf16.mxu0 0
  %311 = vmatpush1.bf16.msra.mxu0 0
  %312 = vmatprep.subr.bf16.mxu0 0
  %313 = vmatpush1.bf16.msra.mxu0 0
  %314 = vmatprep.subr.bf16.mxu0 0
  %315 = vmatpush1.bf16.msra.mxu0 0
  %316 = vmatprep.subr.bf16.mxu0 0
  %317 = vmatpush1.bf16.msra.mxu0 0
  %318 = vmatprep.subr.bf16.mxu0 0
  %319 = vmatpush1.bf16.msra.mxu0 0
  %320 = vmatprep.mubr.bf16.mxu0 0
  %321 = vmatmul.mubr.bf16.gmra.mrb[0].mxu0 %v286
  %v322 = vpop.f32.mrb[0].mxu0
  %v323 = vadd.f32 0.0, %v322
  %v324 = vpop.f32.mrb[0].mxu0
  %v325 = vpop.f32.mrb[0].mxu0
  %v326 = vadd.f32 0.0, %v325
  %v327 = vpop.f32.mrb[0].mxu0
  %328 = vdwg.mxu0
  %v329 = vadd.f32 %v266, %v323
  %v330 = vadd.f32 %v267, %v326
  %s331 = scalar_lea.vmem %s0, 40
  %v332 = vld [vmem:[%s331] sm:$0xf]
  %v333 = vld [vmem:[%s331 + $0x4] sm:$0xf]
  %s334 = scalar_lea.vmem %s1, 40
  %v335 = vld [vmem:[%s334] sm:$0xf]
  %v336 = vld [vmem:[%s334 + $0x4] sm:$0xf]
  %v339 = vunpack.c.l.b16 %v332
  %v340 = vunpack.c.l.b16 %v333
  %v341 = vpack.c.b16 %v340, %v339
  %v344 = vunpack.c.l.b16 %v335
  %v345 = vunpack.c.l.b16 %v336
  %v346 = vpack.c.b16 %v345, %v344
  %v349 = vsel %vm42, %v341, 0
  %351 = vmatprep.subr.bf16.mxu0 0
  %352 = vmatpush1.bf16.msra.mxu0 %v346
  %353 = vmatprep.subr.bf16.mxu0 0
  %354 = vmatpush1.bf16.msra.mxu0 0
  %355 = vmatprep.subr.bf16.mxu0 0
  %356 = vmatpush1.bf16.msra.mxu0 0
  %357 = vmatprep.subr.bf16.mxu0 0
  %358 = vmatpush1.bf16.msra.mxu0 0
  %359 = vmatprep.subr.bf16.mxu0 0
  %360 = vmatpush1.bf16.msra.mxu0 0
  %361 = vmatprep.subr.bf16.mxu0 0
  %362 = vmatpush1.bf16.msra.mxu0 0
  %363 = vmatprep.subr.bf16.mxu0 0
  %364 = vmatpush1.bf16.msra.mxu0 0
  %365 = vmatprep.subr.bf16.mxu0 0
  %366 = vmatpush1.bf16.msra.mxu0 0
  %367 = vmatprep.subr.bf16.mxu0 0
  %368 = vmatpush1.bf16.msra.mxu0 0
  %369 = vmatprep.subr.bf16.mxu0 0
  %370 = vmatpush1.bf16.msra.mxu0 0
  %371 = vmatprep.subr.bf16.mxu0 0
  %372 = vmatpush1.bf16.msra.mxu0 0
  %373 = vmatprep.subr.bf16.mxu0 0
  %374 = vmatpush1.bf16.msra.mxu0 0
  %375 = vmatprep.subr.bf16.mxu0 0
  %376 = vmatpush1.bf16.msra.mxu0 0
  %377 = vmatprep.subr.bf16.mxu0 0
  %378 = vmatpush1.bf16.msra.mxu0 0
  %379 = vmatprep.subr.bf16.mxu0 0
  %380 = vmatpush1.bf16.msra.mxu0 0
  %381 = vmatprep.subr.bf16.mxu0 0
  %382 = vmatpush1.bf16.msra.mxu0 0
  %383 = vmatprep.mubr.bf16.mxu0 0
  %384 = vmatmul.mubr.bf16.gmra.mrb[0].mxu0 %v349
  %v385 = vpop.f32.mrb[0].mxu0
  %v386 = vadd.f32 0.0, %v385
  %v387 = vpop.f32.mrb[0].mxu0
  %v388 = vpop.f32.mrb[0].mxu0
  %v389 = vadd.f32 0.0, %v388
  %v390 = vpop.f32.mrb[0].mxu0
  %391 = vdwg.mxu0
  %v392 = vadd.f32 %v329, %v386
  %v393 = vadd.f32 %v330, %v389
  %s394 = scalar_lea.vmem %s0, 48
  %v395 = vld [vmem:[%s394] sm:$0xf]
  %v396 = vld [vmem:[%s394 + $0x4] sm:$0xf]
  %s397 = scalar_lea.vmem %s1, 48
  %v398 = vld [vmem:[%s397] sm:$0xf]
  %v399 = vld [vmem:[%s397 + $0x4] sm:$0xf]
  %v402 = vunpack.c.l.b16 %v395
  %v403 = vunpack.c.l.b16 %v396
  %v404 = vpack.c.b16 %v403, %v402
  %v407 = vunpack.c.l.b16 %v398
  %v408 = vunpack.c.l.b16 %v399
  %v409 = vpack.c.b16 %v408, %v407
  %v412 = vsel %vm42, %v404, 0
  %414 = vmatprep.subr.bf16.mxu0 0
  %415 = vmatpush1.bf16.msra.mxu0 %v409
  %416 = vmatprep.subr.bf16.mxu0 0
  %417 = vmatpush1.bf16.msra.mxu0 0
  %418 = vmatprep.subr.bf16.mxu0 0
  %419 = vmatpush1.bf16.msra.mxu0 0
  %420 = vmatprep.subr.bf16.mxu0 0
  %421 = vmatpush1.bf16.msra.mxu0 0
  %422 = vmatprep.subr.bf16.mxu0 0
  %423 = vmatpush1.bf16.msra.mxu0 0
  %424 = vmatprep.subr.bf16.mxu0 0
  %425 = vmatpush1.bf16.msra.mxu0 0
  %426 = vmatprep.subr.bf16.mxu0 0
  %427 = vmatpush1.bf16.msra.mxu0 0
  %428 = vmatprep.subr.bf16.mxu0 0
  %429 = vmatpush1.bf16.msra.mxu0 0
  %430 = vmatprep.subr.bf16.mxu0 0
  %431 = vmatpush1.bf16.msra.mxu0 0
  %432 = vmatprep.subr.bf16.mxu0 0
  %433 = vmatpush1.bf16.msra.mxu0 0
  %434 = vmatprep.subr.bf16.mxu0 0
  %435 = vmatpush1.bf16.msra.mxu0 0
  %436 = vmatprep.subr.bf16.mxu0 0
  %437 = vmatpush1.bf16.msra.mxu0 0
  %438 = vmatprep.subr.bf16.mxu0 0
  %439 = vmatpush1.bf16.msra.mxu0 0
  %440 = vmatprep.subr.bf16.mxu0 0
  %441 = vmatpush1.bf16.msra.mxu0 0
  %442 = vmatprep.subr.bf16.mxu0 0
  %443 = vmatpush1.bf16.msra.mxu0 0
  %444 = vmatprep.subr.bf16.mxu0 0
  %445 = vmatpush1.bf16.msra.mxu0 0
  %446 = vmatprep.mubr.bf16.mxu0 0
  %447 = vmatmul.mubr.bf16.gmra.mrb[0].mxu0 %v412
  %v448 = vpop.f32.mrb[0].mxu0
  %v449 = vadd.f32 0.0, %v448
  %v450 = vpop.f32.mrb[0].mxu0
  %v451 = vpop.f32.mrb[0].mxu0
  %v452 = vadd.f32 0.0, %v451
  %v453 = vpop.f32.mrb[0].mxu0
  %454 = vdwg.mxu0
  %v455 = vadd.f32 %v392, %v449
  %v456 = vadd.f32 %v393, %v452
  %s457 = scalar_lea.vmem %s0, 56
  %v458 = vld [vmem:[%s457] sm:$0xf]
  %v459 = vld [vmem:[%s457 + $0x4] sm:$0xf]
  %s460 = scalar_lea.vmem %s1, 56
  %v461 = vld [vmem:[%s460] sm:$0xf]
  %v462 = vld [vmem:[%s460 + $0x4] sm:$0xf]
  %v465 = vunpack.c.l.b16 %v458
  %v466 = vunpack.c.l.b16 %v459
  %v467 = vpack.c.b16 %v466, %v465
  %v470 = vunpack.c.l.b16 %v461
  %v471 = vunpack.c.l.b16 %v462
  %v472 = vpack.c.b16 %v471, %v470
  %v475 = vsel %vm42, %v467, 0
  %477 = vmatprep.subr.bf16.mxu0 0
  %478 = vmatpush1.bf16.msra.mxu0 %v472
  %479 = vmatprep.subr.bf16.mxu0 0
  %480 = vmatpush1.bf16.msra.mxu0 0
  %481 = vmatprep.subr.bf16.mxu0 0
  %482 = vmatpush1.bf16.msra.mxu0 0
  %483 = vmatprep.subr.bf16.mxu0 0
  %484 = vmatpush1.bf16.msra.mxu0 0
  %485 = vmatprep.subr.bf16.mxu0 0
  %486 = vmatpush1.bf16.msra.mxu0 0
  %487 = vmatprep.subr.bf16.mxu0 0
  %488 = vmatpush1.bf16.msra.mxu0 0
  %489 = vmatprep.subr.bf16.mxu0 0
  %490 = vmatpush1.bf16.msra.mxu0 0
  %491 = vmatprep.subr.bf16.mxu0 0
  %492 = vmatpush1.bf16.msra.mxu0 0
  %493 = vmatprep.subr.bf16.mxu0 0
  %494 = vmatpush1.bf16.msra.mxu0 0
  %495 = vmatprep.subr.bf16.mxu0 0
  %496 = vmatpush1.bf16.msra.mxu0 0
  %497 = vmatprep.subr.bf16.mxu0 0
  %498 = vmatpush1.bf16.msra.mxu0 0
  %499 = vmatprep.subr.bf16.mxu0 0
  %500 = vmatpush1.bf16.msra.mxu0 0
  %501 = vmatprep.subr.bf16.mxu0 0
  %502 = vmatpush1.bf16.msra.mxu0 0
  %503 = vmatprep.subr.bf16.mxu0 0
  %504 = vmatpush1.bf16.msra.mxu0 0
  %505 = vmatprep.subr.bf16.mxu0 0
  %506 = vmatpush1.bf16.msra.mxu0 0
  %507 = vmatprep.subr.bf16.mxu0 0
  %508 = vmatpush1.bf16.msra.mxu0 0
  %509 = vmatprep.mubr.bf16.mxu0 0
  %510 = vmatmul.mubr.bf16.gmra.mrb[0].mxu0 %v475
  %v511 = vpop.f32.mrb[0].mxu0
  %v512 = vadd.f32 0.0, %v511
  %v513 = vpop.f32.mrb[0].mxu0
  %v514 = vpop.f32.mrb[0].mxu0
  %v515 = vadd.f32 0.0, %v514
  %v516 = vpop.f32.mrb[0].mxu0
  %517 = vdwg.mxu0
  %v518 = vadd.f32 %v455, %v512
  %v519 = vadd.f32 %v456, %v515
  %s520 = scalar_lea.vmem %s0, 64
  %v521 = vld [vmem:[%s520] sm:$0xf]
  %v522 = vld [vmem:[%s520 + $0x4] sm:$0xf]
  %s523 = scalar_lea.vmem %s1, 64
  %v524 = vld [vmem:[%s523] sm:$0xf]
  %v525 = vld [vmem:[%s523 + $0x4] sm:$0xf]
  %v528 = vunpack.c.l.b16 %v521
  %v529 = vunpack.c.l.b16 %v522
  %v530 = vpack.c.b16 %v529, %v528
  %v533 = vunpack.c.l.b16 %v524
  %v534 = vunpack.c.l.b16 %v525
  %v535 = vpack.c.b16 %v534, %v533
  %v538 = vsel %vm42, %v530, 0
  %540 = vmatprep.subr.bf16.mxu0 0
  %541 = vmatpush1.bf16.msra.mxu0 %v535
  %542 = vmatprep.subr.bf16.mxu0 0
  %543 = vmatpush1.bf16.msra.mxu0 0
  %544 = vmatprep.subr.bf16.mxu0 0
  %545 = vmatpush1.bf16.msra.mxu0 0
  %546 = vmatprep.subr.bf16.mxu0 0
  %547 = vmatpush1.bf16.msra.mxu0 0
  %548 = vmatprep.subr.bf16.mxu0 0
  %549 = vmatpush1.bf16.msra.mxu0 0
  %550 = vmatprep.subr.bf16.mxu0 0
  %551 = vmatpush1.bf16.msra.mxu0 0
  %552 = vmatprep.subr.bf16.mxu0 0
  %553 = vmatpush1.bf16.msra.mxu0 0
  %554 = vmatprep.subr.bf16.mxu0 0
  %555 = vmatpush1.bf16.msra.mxu0 0
  %556 = vmatprep.subr.bf16.mxu0 0
  %557 = vmatpush1.bf16.msra.mxu0 0
  %558 = vmatprep.subr.bf16.mxu0 0
  %559 = vmatpush1.bf16.msra.mxu0 0
  %560 = vmatprep.subr.bf16.mxu0 0
  %561 = vmatpush1.bf16.msra.mxu0 0
  %562 = vmatprep.subr.bf16.mxu0 0
  %563 = vmatpush1.bf16.msra.mxu0 0
  %564 = vmatprep.subr.bf16.mxu0 0
  %565 = vmatpush1.bf16.msra.mxu0 0
  %566 = vmatprep.subr.bf16.mxu0 0
  %567 = vmatpush1.bf16.msra.mxu0 0
  %568 = vmatprep.subr.bf16.mxu0 0
  %569 = vmatpush1.bf16.msra.mxu0 0
  %570 = vmatprep.subr.bf16.mxu0 0
  %571 = vmatpush1.bf16.msra.mxu0 0
  %572 = vmatprep.mubr.bf16.mxu0 0
  %573 = vmatmul.mubr.bf16.gmra.mrb[0].mxu0 %v538
  %v574 = vpop.f32.mrb[0].mxu0
  %v575 = vadd.f32 0.0, %v574
  %v576 = vpop.f32.mrb[0].mxu0
  %v577 = vpop.f32.mrb[0].mxu0
  %v578 = vadd.f32 0.0, %v577
  %v579 = vpop.f32.mrb[0].mxu0
  %580 = vdwg.mxu0
  %v581 = vadd.f32 %v518, %v575
  %v582 = vadd.f32 %v519, %v578
  %v583 = vld [vmem:[%s2] sm:$0x1]
  %v585 = vlaneseq
  %v586 = vshrl.u32 %v585, 7
  %v587 = vsub.s32 0, %v586
  %v588 = vrot.slane %v583, %v587
  %v590 = vmul.f32 %v581, %v588
  %v591 = vmul.f32 %v582, %v588
  %v592 = vld [vmem:[%s3] sm:$0x1]
  %v594 = vlaneseq
  %v595 = vshrl.u32 %v594, 7
  %v596 = vsub.s32 0, %v595
  %v597 = vrot.slane %v592, %v596
  %v599 = vadd.f32 %v590, %v597
  %v600 = vadd.f32 %v591, %v597
  %vm601 = vcmp.ge.f32.partialorder %v599, 0.0
  %vm602 = vcmp.ge.f32.partialorder %v600, 0.0
  %v603 = vld [vmem:[%s4] sm:$0x1]
  %v605 = vlaneseq
  %v606 = vshrl.u32 %v605, 7
  %v607 = vsub.s32 0, %v606
  %v608 = vrot.slane %v603, %v607
  %v610 = vmul.f32 %v599, %v608
  %v611 = vmul.f32 %v600, %v608
  %v612 = vsel %vm601, %v599, %v610
  %v613 = vsel %vm602, %v600, %v611
  %v614 = vpack.c.bf16 %v613, %v612
  %v616 = vunpack.c.l.b16 %v614
  %v617 = vunpack.c.h.b16 %v614
  %v618 = vpack.c.b16 %v616, %v616
  %v619 = vpack.c.b16 %v617, %v617
  %vm622 = vcmask 60416
  %623 = vst.msk [vmem:[%s5] sm:$0xf] %vm622, %v618
  %624 = vst.msk [vmem:[%s5 + $0x4] sm:$0xf] %vm622, %v619
  // Predicated region
  $region22: #{_lambda_.93} parent=0 // pred_check
    _
  $region23: #{_lambda_.93} parent=0 // pred_check_branch
    %626 = sbr.rel (0) target = $region25
  $region24: #{_lambda_.93} parent=0 // pred_region
    _
  $region25: #{_lambda_.93} parent=0 // pred_fallthru
    _
  // Predicated region
  $region26: #{_lambda_.93} parent=0 // pred_check
    _
  $region27: #{_lambda_.93} parent=0 // pred_check_branch
    %628 = sbr.rel (0) target = $region29
  $region28: #{_lambda_.93} parent=0 // pred_region
    _
  $region29: #{_lambda_.93} parent=0 // pred_fallthru
    _

// kernel: _lambda_.94
$region0: #{_lambda_.94}
  #allocation0 [shape = 'u32[]', space=smem, size = 0x4, offset = 0x4, fixed_abs, tag = 'smem constant byte address 0x4 - core index']
  #allocation1 [shape = 'u32[144,128]{1,0:T(1,128)}', space=vmem, size = 0x12000, scoped, tag = 'internal scratch']
  %s0 = inlined_call_operand.vmem [shape: bf16[1,16,16], index: 0, kind: input, shape index: {}]
  %s1 = inlined_call_operand.vmem [shape: bf16[1,16,64], index: 1, kind: input, shape index: {}]
  %s2 = inlined_call_operand.vmem [shape: f32[1,64], index: 2, kind: input, shape index: {}]
  %s3 = inlined_call_operand.vmem [shape: f32[1,64], index: 3, kind: input, shape index: {}]
  %s4 = inlined_call_operand.vmem [shape: f32[1,64], index: 4, kind: input, shape index: {}]
  %s5 = inlined_call_operand.vmem [shape: bf16[16,64], index: 5, kind: input, shape index: {}]
  %s6 = inlined_call_operand.vmem [shape: bf16[16,64], index: 6, kind: output, shape index: {}]
  %s7 = sld [smem:[#allocation0]]
  $region34: #{_lambda_.94} parent=0
    _
  %s9 = ssub.s32 1, %s7
  %s10 = scalar_select 0, %s9, %s7
  // Predicated region
  $region2: #{_lambda_.94} parent=0 // pred_check
    _
  $region3: #{_lambda_.94} parent=0 // pred_check_branch
    %12 = sbr.rel (0) target = $region5
  $region4: #{_lambda_.94} parent=0 // pred_region
    _
  $region5: #{_lambda_.94} parent=0 // pred_fallthru
    _
  // Predicated region
  $region6: #{_lambda_.94} parent=0 // pred_check
    _
  $region7: #{_lambda_.94} parent=0 // pred_check_branch
    %14 = sbr.rel (0) target = $region9
  $region8: #{_lambda_.94} parent=0 // pred_region
    _
  $region9: #{_lambda_.94} parent=0 // pred_fallthru
    _
  // Predicated region
  $region10: #{_lambda_.94} parent=0 // pred_check
    _
  $region11: #{_lambda_.94} parent=0 // pred_check_branch
    %16 = sbr.rel (0) target = $region13
  $region12: #{_lambda_.94} parent=0 // pred_region
    _
  $region13: #{_lambda_.94} parent=0 // pred_fallthru
    _
  // Predicated region
  $region14: #{_lambda_.94} parent=0 // pred_check
    _
  $region15: #{_lambda_.94} parent=0 // pred_check_branch
    %18 = sbr.rel (0) target = $region17
  $region16: #{_lambda_.94} parent=0 // pred_region
    _
  $region17: #{_lambda_.94} parent=0 // pred_fallthru
    _
  // Predicated region
  $region18: #{_lambda_.94} parent=0 // pred_check
    _
  $region19: #{_lambda_.94} parent=0 // pred_check_branch
    %20 = sbr.rel (0) target = $region21
  $region20: #{_lambda_.94} parent=0 // pred_region
    _
  $region21: #{_lambda_.94} parent=0 // pred_fallthru
    _
  // Predicated region
  $region22: #{_lambda_.94} parent=0 // pred_check
    _
  $region23: #{_lambda_.94} parent=0 // pred_check_branch
    %22 = sbr.rel (0) target = $region25
  $region24: #{_lambda_.94} parent=0 // pred_region
    _
  $region25: #{_lambda_.94} parent=0 // pred_fallthru
    _
  %v24 = vld [vmem:[%s0] sm:$0xf]
  %v25 = vld [vmem:[%s0 + $0x4] sm:$0xf]
  %v26 = vld [vmem:[%s1] sm:$0xf]
  %v27 = vld [vmem:[%s1 + $0x4] sm:$0xf]
  %v30 = vunpack.c.l.b16 %v24
  %v31 = vunpack.c.l.b16 %v25
  %v32 = vpack.c.b16 %v31, %v30
  %v35 = vunpack.c.l.b16 %v26
  %v36 = vunpack.c.l.b16 %v27
  %v37 = vpack.c.b16 %v36, %v35
  %vm39 = vcmask 130048
  %v41 = vsel %vm39, %v32, 0
  %43 = vmatprep.subr.bf16.mxu0 0
  %44 = vmatpush1.bf16.msra.mxu0 %v37
  %45 = vmatprep.subr.bf16.mxu0 0
  %46 = vmatpush1.bf16.msra.mxu0 0
  %47 = vmatprep.subr.bf16.mxu0 0
  %48 = vmatpush1.bf16.msra.mxu0 0
  %49 = vmatprep.subr.bf16.mxu0 0
  %50 = vmatpush1.bf16.msra.mxu0 0
  %51 = vmatprep.subr.bf16.mxu0 0
  %52 = vmatpush1.bf16.msra.mxu0 0
  %53 = vmatprep.subr.bf16.mxu0 0
  %54 = vmatpush1.bf16.msra.mxu0 0
  %55 = vmatprep.subr.bf16.mxu0 0
  %56 = vmatpush1.bf16.msra.mxu0 0
  %57 = vmatprep.subr.bf16.mxu0 0
  %58 = vmatpush1.bf16.msra.mxu0 0
  %59 = vmatprep.subr.bf16.mxu0 0
  %60 = vmatpush1.bf16.msra.mxu0 0
  %61 = vmatprep.subr.bf16.mxu0 0
  %62 = vmatpush1.bf16.msra.mxu0 0
  %63 = vmatprep.subr.bf16.mxu0 0
  %64 = vmatpush1.bf16.msra.mxu0 0
  %65 = vmatprep.subr.bf16.mxu0 0
  %66 = vmatpush1.bf16.msra.mxu0 0
  %67 = vmatprep.subr.bf16.mxu0 0
  %68 = vmatpush1.bf16.msra.mxu0 0
  %69 = vmatprep.subr.bf16.mxu0 0
  %70 = vmatpush1.bf16.msra.mxu0 0
  %71 = vmatprep.subr.bf16.mxu0 0
  %72 = vmatpush1.bf16.msra.mxu0 0
  %73 = vmatprep.subr.bf16.mxu0 0
  %74 = vmatpush1.bf16.msra.mxu0 0
  %75 = vmatprep.mubr.bf16.mxu0 0
  %76 = vmatmul.mubr.bf16.gmra.mrb[0].mxu0 %v41
  %v77 = vpop.f32.mrb[0].mxu0
  %v78 = vadd.f32 0.0, %v77
  %v79 = vpop.f32.mrb[0].mxu0
  %v80 = vpop.f32.mrb[0].mxu0
  %v81 = vadd.f32 0.0, %v80
  %v82 = vpop.f32.mrb[0].mxu0
  %83 = vdwg.mxu0
  %v84 = vld [vmem:[%s2] sm:$0x1]
  %v86 = vlaneseq
  %v87 = vshrl.u32 %v86, 7
  %v88 = vsub.s32 0, %v87
  %v89 = vrot.slane %v84, %v88
  %v91 = vmul.f32 %v78, %v89
  %v92 = vmul.f32 %v81, %v89
  %v93 = vld [vmem:[%s3] sm:$0x1]
  %v95 = vlaneseq
  %v96 = vshrl.u32 %v95, 7
  %v97 = vsub.s32 0, %v96
  %v98 = vrot.slane %v93, %v97
  %v100 = vadd.f32 %v91, %v98
  %v101 = vadd.f32 %v92, %v98
  %v102 = vld [vmem:[%s5] sm:$0xf]
  %v103 = vld [vmem:[%s5 + $0x4] sm:$0xf]
  %v104 = vunpack.c.l.bf16 %v102
  %v105 = vunpack.c.l.bf16 %v103
  %v106 = vadd.f32 %v100, %v104
  %v107 = vadd.f32 %v101, %v105
  %vm108 = vcmp.ge.f32.partialorder %v106, 0.0
  %vm109 = vcmp.ge.f32.partialorder %v107, 0.0
  %v110 = vld [vmem:[%s4] sm:$0x1]
  %v112 = vlaneseq
  %v113 = vshrl.u32 %v112, 7
  %v114 = vsub.s32 0, %v113
  %v115 = vrot.slane %v110, %v114
  %v117 = vmul.f32 %v106, %v115
  %v118 = vmul.f32 %v107, %v115
  %v119 = vsel %vm108, %v106, %v117
  %v120 = vsel %vm109, %v107, %v118
  %v121 = vpack.c.bf16 %v120, %v119
  %v123 = vunpack.c.l.b16 %v121
  %v124 = vunpack.c.h.b16 %v121
  %v125 = vpack.c.b16 %v123, %v123
  %v126 = vpack.c.b16 %v124, %v124
  %vm129 = vcmask 519168
  %130 = vst.msk [vmem:[%s6] sm:$0xf] %vm129, %v125
  %131 = vst.msk [vmem:[%s6 + $0x4] sm:$0xf] %vm129, %v126
  // Predicated region
  $region26: #{_lambda_.94} parent=0 // pred_check
    _
  $region27: #{_lambda_.94} parent=0 // pred_check_branch
    %133 = sbr.rel (0) target = $region29
  $region28: #{_lambda_.94} parent=0 // pred_region
    _
  $region29: #{_lambda_.94} parent=0 // pred_fallthru
    _
  // Predicated region
  $region30: #{_lambda_.94} parent=0 // pred_check
    _
  $region31: #{_lambda_.94} parent=0 // pred_check_branch
    %135 = sbr.rel (0) target = $region33
  $region32: #{_lambda_.94} parent=0 // pred_region
    _
  $region33: #{_lambda_.94} parent=0 // pred_fallthru
    _

// kernel: tile.715
$region0: #{tile.715}
  #allocation0 [shape = 's32[1]{0}', space=sflag, size = 0x4, scoped, tag = 'scoped memory for tile.715']
  %s0 = inlined_call_operand.vmem [shape: f32[4], index: 0, kind: input, shape index: {}]
  %s1 = inlined_call_operand.vmem [shape: f32[4,4], index: 1, kind: output, shape index: {}]
  // Predicated region
  $region2: #{tile.715} parent=0 // pred_check
    _
  $region3: #{tile.715} parent=0 // pred_check_branch
    %3 = sbr.rel (0) target = $region5
  $region4: #{tile.715} parent=0 // pred_region
    _
  $region5: #{tile.715} parent=0 // pred_fallthru
    _
  %v4 = vld [vmem:[%s0] ss:$0 sm:$0xff]
  %5 = vst [vmem:[%s1] sm:$0xf] %v4

// kernel: tile.716
$region0: #{tile.716}
  %s0 = inlined_call_operand.vmem [shape: f32[4,4], index: 0, kind: input, shape index: {}]
  %s1 = inlined_call_operand.vmem [shape: f32[1,16], index: 1, kind: output, shape index: {}]
  $region1: #{tile.716} parent=0
    #allocation0 [shape = 'u8[4096]{0}', space=vmem, size = 0x1000, scoped, tag = 'scoped mem for output reshape']
    #allocation1 [shape = 'u8[4096]{0}', space=vmem, size = 0x1000, scoped, tag = 'scoped mem for input reshape']
    %s3 = sshllo.u32 0, 4
    %v4 = vld [vmem:[%s0] sm:%s3]
    %5 = vst [vmem:[#allocation1] sm:%s3] %v4
    %v6 = vld [vmem:[#allocation1] sm:$0x1]
    %vm7 = vcmask 31744
    %8 = vst.msk [vmem:[#allocation0] sm:$0x1] %vm7, %v6
    %s9 = scalar_lea.vmem [#allocation1], 3
    %v10 = vld [vmem:[%s9] sm:$0x1]
    %11 = vrot.lane.b32.xlu0 %v10, 12
    %v12 = vpop.permute.xlu0 %11
    %vm13 = vcmask 130144
    %14 = vst.msk [vmem:[#allocation0] sm:$0x1] %vm13, %v12
    %s15 = scalar_lea.vmem [#allocation1], 2
    %v16 = vld [vmem:[%s15] sm:$0x1]
    %17 = vrot.lane.b32.xlu0 %v16, 8
    %v18 = vpop.permute.xlu0 %17
    %vm19 = vcmask 97344
    %20 = vst.msk [vmem:[#allocation0] sm:$0x1] %vm19, %v18
    %s21 = scalar_lea.vmem [#allocation1], 1
    %v22 = vld [vmem:[%s21] sm:$0x1]
    %23 = vrot.lane.b32.xlu0 %v22, 4
    %v24 = vpop.permute.xlu0 %23
    %vm25 = vcmask 64544
    %26 = vst.msk [vmem:[#allocation0] sm:$0x1] %vm25, %v24
    %s28 = sshllo.u32 0, 1
    %v30 = vld [vmem:[#allocation0] sm:%s28]
    %s31 = sshllo.u32 0, 1
    %32 = vst [vmem:[%s1] sm:%s31] %v30

// kernel: _lambda_.95
$region0: #{_lambda_.95}
  #allocation0 [shape = 'u32[]', space=smem, size = 0x4, offset = 0x4, fixed_abs, tag = 'smem constant byte address 0x4 - core index']
  #allocation1 [shape = 'u32[144,128]{1,0:T(1,128)}', space=vmem, size = 0x12000, scoped, tag = 'internal scratch']
  %s0 = inlined_call_operand.vmem [shape: bf16[1,16,64], index: 0, kind: input, shape index: {}]
  %s1 = inlined_call_operand.vmem [shape: bf16[1,64,16], index: 1, kind: input, shape index: {}]
  %s2 = inlined_call_operand.vmem [shape: f32[1,16], index: 2, kind: input, shape index: {}]
  %s3 = inlined_call_operand.vmem [shape: f32[1,16], index: 3, kind: input, shape index: {}]
  %s4 = inlined_call_operand.vmem [shape: f32[1,16], index: 4, kind: input, shape index: {}]
  %s5 = inlined_call_operand.vmem [shape: bf16[16,16], index: 5, kind: output, shape index: {}]
  %s6 = sld [smem:[#allocation0]]
  $region30: #{_lambda_.95} parent=0
    _
  %s8 = ssub.s32 1, %s6
  %s9 = scalar_select 0, %s8, %s6
  // Predicated region
  $region2: #{_lambda_.95} parent=0 // pred_check
    _
  $region3: #{_lambda_.95} parent=0 // pred_check_branch
    %11 = sbr.rel (0) target = $region5
  $region4: #{_lambda_.95} parent=0 // pred_region
    _
  $region5: #{_lambda_.95} parent=0 // pred_fallthru
    _
  // Predicated region
  $region6: #{_lambda_.95} parent=0 // pred_check
    _
  $region7: #{_lambda_.95} parent=0 // pred_check_branch
    %13 = sbr.rel (0) target = $region9
  $region8: #{_lambda_.95} parent=0 // pred_region
    _
  $region9: #{_lambda_.95} parent=0 // pred_fallthru
    _
  // Predicated region
  $region10: #{_lambda_.95} parent=0 // pred_check
    _
  $region11: #{_lambda_.95} parent=0 // pred_check_branch
    %15 = sbr.rel (0) target = $region13
  $region12: #{_lambda_.95} parent=0 // pred_region
    _
  $region13: #{_lambda_.95} parent=0 // pred_fallthru
    _
  // Predicated region
  $region14: #{_lambda_.95} parent=0 // pred_check
    _
  $region15: #{_lambda_.95} parent=0 // pred_check_branch
    %17 = sbr.rel (0) target = $region17
  $region16: #{_lambda_.95} parent=0 // pred_region
    _
  $region17: #{_lambda_.95} parent=0 // pred_fallthru
    _
  // Predicated region
  $region18: #{_lambda_.95} parent=0 // pred_check
    _
  $region19: #{_lambda_.95} parent=0 // pred_check_branch
    %19 = sbr.rel (0) target = $region21
  $region20: #{_lambda_.95} parent=0 // pred_region
    _
  $region21: #{_lambda_.95} parent=0 // pred_fallthru
    _
  %v21 = vld [vmem:[%s0] sm:$0xf]
  %v22 = vld [vmem:[%s0 + $0x4] sm:$0xf]
  %v23 = vld [vmem:[%s1] sm:$0xf]
  %v24 = vld [vmem:[%s1 + $0x4] sm:$0xf]
  %v25 = vld [vmem:[%s1 + $0x8] sm:$0xf]
  %v26 = vld [vmem:[%s1 + $0xc] sm:$0xf]
  %v27 = vld [vmem:[%s1 + $0x10] sm:$0xf]
  %v28 = vld [vmem:[%s1 + $0x14] sm:$0xf]
  %v29 = vld [vmem:[%s1 + $0x18] sm:$0xf]
  %v30 = vld [vmem:[%s1 + $0x1c] sm:$0xf]
  %v33 = vunpack.c.l.b16 %v21
  %v34 = vunpack.c.l.b16 %v22
  %v35 = vpack.c.b16 %v34, %v33
  %v44 = vunpack.c.l.b16 %v23
  %v45 = vunpack.c.l.b16 %v24
  %v46 = vunpack.c.l.b16 %v25
  %v47 = vunpack.c.l.b16 %v26
  %v48 = vunpack.c.l.b16 %v27
  %v49 = vunpack.c.l.b16 %v28
  %v50 = vunpack.c.l.b16 %v29
  %v51 = vunpack.c.l.b16 %v30
  %v52 = vpack.c.b16 %v45, %v44
  %v53 = vpack.c.b16 %v47, %v46
  %v54 = vpack.c.b16 %v49, %v48
  %v55 = vpack.c.b16 %v51, %v50
  %vm60 = vcmask 523264
  %v62 = vsel %vm60, %v35, 0
  %64 = vmatprep.subr.bf16.mxu0 0
  %65 = vmatpush1.bf16.msra.mxu0 %v52
  %66 = vmatprep.subr.bf16.mxu0 0
  %67 = vmatpush1.bf16.msra.mxu0 %v53
  %68 = vmatprep.subr.bf16.mxu0 0
  %69 = vmatpush1.bf16.msra.mxu0 %v54
  %70 = vmatprep.subr.bf16.mxu0 0
  %71 = vmatpush1.bf16.msra.mxu0 %v55
  %72 = vmatprep.subr.bf16.mxu0 0
  %73 = vmatpush1.bf16.msra.mxu0 0
  %74 = vmatprep.subr.bf16.mxu0 0
  %75 = vmatpush1.bf16.msra.mxu0 0
  %76 = vmatprep.subr.bf16.mxu0 0
  %77 = vmatpush1.bf16.msra.mxu0 0
  %78 = vmatprep.subr.bf16.mxu0 0
  %79 = vmatpush1.bf16.msra.mxu0 0
  %80 = vmatprep.subr.bf16.mxu0 0
  %81 = vmatpush1.bf16.msra.mxu0 0
  %82 = vmatprep.subr.bf16.mxu0 0
  %83 = vmatpush1.bf16.msra.mxu0 0
  %84 = vmatprep.subr.bf16.mxu0 0
  %85 = vmatpush1.bf16.msra.mxu0 0
  %86 = vmatprep.subr.bf16.mxu0 0
  %87 = vmatpush1.bf16.msra.mxu0 0
  %88 = vmatprep.subr.bf16.mxu0 0
  %89 = vmatpush1.bf16.msra.mxu0 0
  %90 = vmatprep.subr.bf16.mxu0 0
  %91 = vmatpush1.bf16.msra.mxu0 0
  %92 = vmatprep.subr.bf16.mxu0 0
  %93 = vmatpush1.bf16.msra.mxu0 0
  %94 = vmatprep.subr.bf16.mxu0 0
  %95 = vmatpush1.bf16.msra.mxu0 0
  %96 = vmatprep.mubr.bf16.mxu0 0
  %97 = vmatmul.mubr.bf16.gmra.mrb[0].mxu0 %v62
  %v98 = vpop.f32.mrb[0].mxu0
  %v99 = vadd.f32 0.0, %v98
  %v100 = vpop.f32.mrb[0].mxu0
  %v101 = vpop.f32.mrb[0].mxu0
  %v102 = vadd.f32 0.0, %v101
  %v103 = vpop.f32.mrb[0].mxu0
  %104 = vdwg.mxu0
  %v105 = vld [vmem:[%s2] sm:$0x1]
  %v107 = vlaneseq
  %v108 = vshrl.u32 %v107, 7
  %v109 = vsub.s32 0, %v108
  %v110 = vrot.slane %v105, %v109
  %v112 = vmul.f32 %v99, %v110
  %v113 = vmul.f32 %v102, %v110
  %v114 = vld [vmem:[%s3] sm:$0x1]
  %v116 = vlaneseq
  %v117 = vshrl.u32 %v116, 7
  %v118 = vsub.s32 0, %v117
  %v119 = vrot.slane %v114, %v118
  %v121 = vadd.f32 %v112, %v119
  %v122 = vadd.f32 %v113, %v119
  %vm123 = vcmp.ge.f32.partialorder %v121, 0.0
  %vm124 = vcmp.ge.f32.partialorder %v122, 0.0
  %v125 = vld [vmem:[%s4] sm:$0x1]
  %v127 = vlaneseq
  %v128 = vshrl.u32 %v127, 7
  %v129 = vsub.s32 0, %v128
  %v130 = vrot.slane %v125, %v129
  %v132 = vmul.f32 %v121, %v130
  %v133 = vmul.f32 %v122, %v130
  %v134 = vsel %vm123, %v121, %v132
  %v135 = vsel %vm124, %v122, %v133
  %v136 = vpack.c.bf16 %v135, %v134
  %v138 = vunpack.c.l.b16 %v136
  %v139 = vunpack.c.h.b16 %v136
  %v140 = vpack.c.b16 %v138, %v138
  %v141 = vpack.c.b16 %v139, %v139
  %vm144 = vcmask 125952
  %145 = vst.msk [vmem:[%s5] sm:$0xf] %vm144, %v140
  %146 = vst.msk [vmem:[%s5 + $0x4] sm:$0xf] %vm144, %v141
  // Predicated region
  $region22: #{_lambda_.95} parent=0 // pred_check
    _
  $region23: #{_lambda_.95} parent=0 // pred_check_branch
    %148 = sbr.rel (0) target = $region25
  $region24: #{_lambda_.95} parent=0 // pred_region
    _
  $region25: #{_lambda_.95} parent=0 // pred_fallthru
    _
  // Predicated region
  $region26: #{_lambda_.95} parent=0 // pred_check
    _
  $region27: #{_lambda_.95} parent=0 // pred_check_branch
    %150 = sbr.rel (0) target = $region29
  $region28: #{_lambda_.95} parent=0 // pred_region
    _
  $region29: #{_lambda_.95} parent=0 // pred_fallthru
    _

// kernel: _lambda_.96
$region0: #{_lambda_.96}
  #allocation0 [shape = 'u32[]', space=smem, size = 0x4, offset = 0x4, fixed_abs, tag = 'smem constant byte address 0x4 - core index']
  #allocation1 [shape = 'u32[144,128]{1,0:T(1,128)}', space=vmem, size = 0x12000, scoped, tag = 'internal scratch']
  %s0 = inlined_call_operand.vmem [shape: bf16[9,16,16], index: 0, kind: input, shape index: {}]
  %s1 = inlined_call_operand.vmem [shape: bf16[9,16,16], index: 1, kind: input, shape index: {}]
  %s2 = inlined_call_operand.vmem [shape: f32[1,16], index: 2, kind: input, shape index: {}]
  %s3 = inlined_call_operand.vmem [shape: f32[1,16], index: 3, kind: input, shape index: {}]
  %s4 = inlined_call_operand.vmem [shape: f32[1,16], index: 4, kind: input, shape index: {}]
  %s5 = inlined_call_operand.vmem [shape: bf16[16,16], index: 5, kind: output, shape index: {}]
  %s6 = sld [smem:[#allocation0]]
  $region30: #{_lambda_.96} parent=0
    _
  %s8 = ssub.s32 1, %s6
  %s9 = scalar_select 0, %s8, %s6
  // Predicated region
  $region2: #{_lambda_.96} parent=0 // pred_check
    _
  $region3: #{_lambda_.96} parent=0 // pred_check_branch
    %11 = sbr.rel (0) target = $region5
  $region4: #{_lambda_.96} parent=0 // pred_region
    _
  $region5: #{_lambda_.96} parent=0 // pred_fallthru
    _
  // Predicated region
  $region6: #{_lambda_.96} parent=0 // pred_check
    _
  $region7: #{_lambda_.96} parent=0 // pred_check_branch
    %13 = sbr.rel (0) target = $region9
  $region8: #{_lambda_.96} parent=0 // pred_region
    _
  $region9: #{_lambda_.96} parent=0 // pred_fallthru
    _
  // Predicated region
  $region10: #{_lambda_.96} parent=0 // pred_check
    _
  $region11: #{_lambda_.96} parent=0 // pred_check_branch
    %15 = sbr.rel (0) target = $region13
  $region12: #{_lambda_.96} parent=0 // pred_region
    _
  $region13: #{_lambda_.96} parent=0 // pred_fallthru
    _
  // Predicated region
  $region14: #{_lambda_.96} parent=0 // pred_check
    _
  $region15: #{_lambda_.96} parent=0 // pred_check_branch
    %17 = sbr.rel (0) target = $region17
  $region16: #{_lambda_.96} parent=0 // pred_region
    _
  $region17: #{_lambda_.96} parent=0 // pred_fallthru
    _
  // Predicated region
  $region18: #{_lambda_.96} parent=0 // pred_check
    _
  $region19: #{_lambda_.96} parent=0 // pred_check_branch
    %19 = sbr.rel (0) target = $region21
  $region20: #{_lambda_.96} parent=0 // pred_region
    _
  $region21: #{_lambda_.96} parent=0 // pred_fallthru
    _
  %v21 = vld [vmem:[%s0] sm:$0xf]
  %v22 = vld [vmem:[%s0 + $0x4] sm:$0xf]
  %v23 = vld [vmem:[%s1] sm:$0xf]
  %v24 = vld [vmem:[%s1 + $0x4] sm:$0xf]
  %s25 = scalar_lea.vmem %s0, 8
  %v26 = vld [vmem:[%s25] sm:$0xf]
  %v27 = vld [vmem:[%s25 + $0x4] sm:$0xf]
  %s28 = scalar_lea.vmem %s1, 8
  %v29 = vld [vmem:[%s28] sm:$0xf]
  %v30 = vld [vmem:[%s28 + $0x4] sm:$0xf]
  %v33 = vunpack.c.l.b16 %v26
  %v34 = vunpack.c.l.b16 %v27
  %v35 = vpack.c.b16 %v34, %v33
  %v38 = vunpack.c.l.b16 %v29
  %v39 = vunpack.c.l.b16 %v30
  %v40 = vpack.c.b16 %v39, %v38
  %vm42 = vcmask 130048
  %v44 = vsel %vm42, %v35, 0
  %46 = vmatprep.subr.bf16.mxu0 0
  %47 = vmatpush1.bf16.msra.mxu0 %v40
  %48 = vmatprep.subr.bf16.mxu0 0
  %49 = vmatpush1.bf16.msra.mxu0 0
  %50 = vmatprep.subr.bf16.mxu0 0
  %51 = vmatpush1.bf16.msra.mxu0 0
  %52 = vmatprep.subr.bf16.mxu0 0
  %53 = vmatpush1.bf16.msra.mxu0 0
  %54 = vmatprep.subr.bf16.mxu0 0
  %55 = vmatpush1.bf16.msra.mxu0 0
  %56 = vmatprep.subr.bf16.mxu0 0
  %57 = vmatpush1.bf16.msra.mxu0 0
  %58 = vmatprep.subr.bf16.mxu0 0
  %59 = vmatpush1.bf16.msra.mxu0 0
  %60 = vmatprep.subr.bf16.mxu0 0
  %61 = vmatpush1.bf16.msra.mxu0 0
  %62 = vmatprep.subr.bf16.mxu0 0
  %63 = vmatpush1.bf16.msra.mxu0 0
  %64 = vmatprep.subr.bf16.mxu0 0
  %65 = vmatpush1.bf16.msra.mxu0 0
  %66 = vmatprep.subr.bf16.mxu0 0
  %67 = vmatpush1.bf16.msra.mxu0 0
  %68 = vmatprep.subr.bf16.mxu0 0
  %69 = vmatpush1.bf16.msra.mxu0 0
  %70 = vmatprep.subr.bf16.mxu0 0
  %71 = vmatpush1.bf16.msra.mxu0 0
  %72 = vmatprep.subr.bf16.mxu0 0
  %73 = vmatpush1.bf16.msra.mxu0 0
  %74 = vmatprep.subr.bf16.mxu0 0
  %75 = vmatpush1.bf16.msra.mxu0 0
  %76 = vmatprep.subr.bf16.mxu0 0
  %77 = vmatpush1.bf16.msra.mxu0 0
  %78 = vmatprep.mubr.bf16.mxu0 0
  %79 = vmatmul.mubr.bf16.gmra.mrb[0].mxu0 %v44
  %v80 = vpop.f32.mrb[0].mxu0
  %v81 = vadd.f32 0.0, %v80
  %v82 = vpop.f32.mrb[0].mxu0
  %v83 = vpop.f32.mrb[0].mxu0
  %v84 = vadd.f32 0.0, %v83
  %v85 = vpop.f32.mrb[0].mxu0
  %86 = vdwg.mxu0
  %v89 = vunpack.c.l.b16 %v21
  %v90 = vunpack.c.l.b16 %v22
  %v91 = vpack.c.b16 %v90, %v89
  %v94 = vunpack.c.l.b16 %v23
  %v95 = vunpack.c.l.b16 %v24
  %v96 = vpack.c.b16 %v95, %v94
  %v99 = vsel %vm42, %v91, 0
  %101 = vmatprep.subr.bf16.mxu0 0
  %102 = vmatpush1.bf16.msra.mxu0 %v96
  %103 = vmatprep.subr.bf16.mxu0 0
  %104 = vmatpush1.bf16.msra.mxu0 0
  %105 = vmatprep.subr.bf16.mxu0 0
  %106 = vmatpush1.bf16.msra.mxu0 0
  %107 = vmatprep.subr.bf16.mxu0 0
  %108 = vmatpush1.bf16.msra.mxu0 0
  %109 = vmatprep.subr.bf16.mxu0 0
  %110 = vmatpush1.bf16.msra.mxu0 0
  %111 = vmatprep.subr.bf16.mxu0 0
  %112 = vmatpush1.bf16.msra.mxu0 0
  %113 = vmatprep.subr.bf16.mxu0 0
  %114 = vmatpush1.bf16.msra.mxu0 0
  %115 = vmatprep.subr.bf16.mxu0 0
  %116 = vmatpush1.bf16.msra.mxu0 0
  %117 = vmatprep.subr.bf16.mxu0 0
  %118 = vmatpush1.bf16.msra.mxu0 0
  %119 = vmatprep.subr.bf16.mxu0 0
  %120 = vmatpush1.bf16.msra.mxu0 0
  %121 = vmatprep.subr.bf16.mxu0 0
  %122 = vmatpush1.bf16.msra.mxu0 0
  %123 = vmatprep.subr.bf16.mxu0 0
  %124 = vmatpush1.bf16.msra.mxu0 0
  %125 = vmatprep.subr.bf16.mxu0 0
  %126 = vmatpush1.bf16.msra.mxu0 0
  %127 = vmatprep.subr.bf16.mxu0 0
  %128 = vmatpush1.bf16.msra.mxu0 0
  %129 = vmatprep.subr.bf16.mxu0 0
  %130 = vmatpush1.bf16.msra.mxu0 0
  %131 = vmatprep.subr.bf16.mxu0 0
  %132 = vmatpush1.bf16.msra.mxu0 0
  %133 = vmatprep.mubr.bf16.mxu0 0
  %134 = vmatmul.mubr.bf16.gmra.mrb[0].mxu0 %v99
  %v135 = vpop.f32.mrb[0].mxu0
  %v136 = vadd.f32 %v81, %v135
  %v137 = vpop.f32.mrb[0].mxu0
  %v138 = vpop.f32.mrb[0].mxu0
  %v139 = vadd.f32 %v84, %v138
  %v140 = vpop.f32.mrb[0].mxu0
  %141 = vdwg.mxu0
  %s142 = scalar_lea.vmem %s0, 16
  %v143 = vld [vmem:[%s142] sm:$0xf]
  %v144 = vld [vmem:[%s142 + $0x4] sm:$0xf]
  %s145 = scalar_lea.vmem %s1, 16
  %v146 = vld [vmem:[%s145] sm:$0xf]
  %v147 = vld [vmem:[%s145 + $0x4] sm:$0xf]
  %v150 = vunpack.c.l.b16 %v143
  %v151 = vunpack.c.l.b16 %v144
  %v152 = vpack.c.b16 %v151, %v150
  %v155 = vunpack.c.l.b16 %v146
  %v156 = vunpack.c.l.b16 %v147
  %v157 = vpack.c.b16 %v156, %v155
  %v160 = vsel %vm42, %v152, 0
  %162 = vmatprep.subr.bf16.mxu0 0
  %163 = vmatpush1.bf16.msra.mxu0 %v157
  %164 = vmatprep.subr.bf16.mxu0 0
  %165 = vmatpush1.bf16.msra.mxu0 0
  %166 = vmatprep.subr.bf16.mxu0 0
  %167 = vmatpush1.bf16.msra.mxu0 0
  %168 = vmatprep.subr.bf16.mxu0 0
  %169 = vmatpush1.bf16.msra.mxu0 0
  %170 = vmatprep.subr.bf16.mxu0 0
  %171 = vmatpush1.bf16.msra.mxu0 0
  %172 = vmatprep.subr.bf16.mxu0 0
  %173 = vmatpush1.bf16.msra.mxu0 0
  %174 = vmatprep.subr.bf16.mxu0 0
  %175 = vmatpush1.bf16.msra.mxu0 0
  %176 = vmatprep.subr.bf16.mxu0 0
  %177 = vmatpush1.bf16.msra.mxu0 0
  %178 = vmatprep.subr.bf16.mxu0 0
  %179 = vmatpush1.bf16.msra.mxu0 0
  %180 = vmatprep.subr.bf16.mxu0 0
  %181 = vmatpush1.bf16.msra.mxu0 0
  %182 = vmatprep.subr.bf16.mxu0 0
  %183 = vmatpush1.bf16.msra.mxu0 0
  %184 = vmatprep.subr.bf16.mxu0 0
  %185 = vmatpush1.bf16.msra.mxu0 0
  %186 = vmatprep.subr.bf16.mxu0 0
  %187 = vmatpush1.bf16.msra.mxu0 0
  %188 = vmatprep.subr.bf16.mxu0 0
  %189 = vmatpush1.bf16.msra.mxu0 0
  %190 = vmatprep.subr.bf16.mxu0 0
  %191 = vmatpush1.bf16.msra.mxu0 0
  %192 = vmatprep.subr.bf16.mxu0 0
  %193 = vmatpush1.bf16.msra.mxu0 0
  %194 = vmatprep.mubr.bf16.mxu0 0
  %195 = vmatmul.mubr.bf16.gmra.mrb[0].mxu0 %v160
  %v196 = vpop.f32.mrb[0].mxu0
  %v197 = vadd.f32 0.0, %v196
  %v198 = vpop.f32.mrb[0].mxu0
  %v199 = vpop.f32.mrb[0].mxu0
  %v200 = vadd.f32 0.0, %v199
  %v201 = vpop.f32.mrb[0].mxu0
  %202 = vdwg.mxu0
  %v203 = vadd.f32 %v136, %v197
  %v204 = vadd.f32 %v139, %v200
  %s205 = scalar_lea.vmem %s0, 24
  %v206 = vld [vmem:[%s205] sm:$0xf]
  %v207 = vld [vmem:[%s205 + $0x4] sm:$0xf]
  %s208 = scalar_lea.vmem %s1, 24
  %v209 = vld [vmem:[%s208] sm:$0xf]
  %v210 = vld [vmem:[%s208 + $0x4] sm:$0xf]
  %v213 = vunpack.c.l.b16 %v206
  %v214 = vunpack.c.l.b16 %v207
  %v215 = vpack.c.b16 %v214, %v213
  %v218 = vunpack.c.l.b16 %v209
  %v219 = vunpack.c.l.b16 %v210
  %v220 = vpack.c.b16 %v219, %v218
  %v223 = vsel %vm42, %v215, 0
  %225 = vmatprep.subr.bf16.mxu0 0
  %226 = vmatpush1.bf16.msra.mxu0 %v220
  %227 = vmatprep.subr.bf16.mxu0 0
  %228 = vmatpush1.bf16.msra.mxu0 0
  %229 = vmatprep.subr.bf16.mxu0 0
  %230 = vmatpush1.bf16.msra.mxu0 0
  %231 = vmatprep.subr.bf16.mxu0 0
  %232 = vmatpush1.bf16.msra.mxu0 0
  %233 = vmatprep.subr.bf16.mxu0 0
  %234 = vmatpush1.bf16.msra.mxu0 0
  %235 = vmatprep.subr.bf16.mxu0 0
  %236 = vmatpush1.bf16.msra.mxu0 0
  %237 = vmatprep.subr.bf16.mxu0 0
  %238 = vmatpush1.bf16.msra.mxu0 0
  %239 = vmatprep.subr.bf16.mxu0 0
  %240 = vmatpush1.bf16.msra.mxu0 0
  %241 = vmatprep.subr.bf16.mxu0 0
  %242 = vmatpush1.bf16.msra.mxu0 0
  %243 = vmatprep.subr.bf16.mxu0 0
  %244 = vmatpush1.bf16.msra.mxu0 0
  %245 = vmatprep.subr.bf16.mxu0 0
  %246 = vmatpush1.bf16.msra.mxu0 0
  %247 = vmatprep.subr.bf16.mxu0 0
  %248 = vmatpush1.bf16.msra.mxu0 0
  %249 = vmatprep.subr.bf16.mxu0 0
  %250 = vmatpush1.bf16.msra.mxu0 0
  %251 = vmatprep.subr.bf16.mxu0 0
  %252 = vmatpush1.bf16.msra.mxu0 0
  %253 = vmatprep.subr.bf16.mxu0 0
  %254 = vmatpush1.bf16.msra.mxu0 0
  %255 = vmatprep.subr.bf16.mxu0 0
  %256 = vmatpush1.bf16.msra.mxu0 0
  %257 = vmatprep.mubr.bf16.mxu0 0
  %258 = vmatmul.mubr.bf16.gmra.mrb[0].mxu0 %v223
  %v259 = vpop.f32.mrb[0].mxu0
  %v260 = vadd.f32 0.0, %v259
  %v261 = vpop.f32.mrb[0].mxu0
  %v262 = vpop.f32.mrb[0].mxu0
  %v263 = vadd.f32 0.0, %v262
  %v264 = vpop.f32.mrb[0].mxu0
  %265 = vdwg.mxu0
  %v266 = vadd.f32 %v203, %v260
  %v267 = vadd.f32 %v204, %v263
  %s268 = scalar_lea.vmem %s0, 32
  %v269 = vld [vmem:[%s268] sm:$0xf]
  %v270 = vld [vmem:[%s268 + $0x4] sm:$0xf]
  %s271 = scalar_lea.vmem %s1, 32
  %v272 = vld [vmem:[%s271] sm:$0xf]
  %v273 = vld [vmem:[%s271 + $0x4] sm:$0xf]
  %v276 = vunpack.c.l.b16 %v269
  %v277 = vunpack.c.l.b16 %v270
  %v278 = vpack.c.b16 %v277, %v276
  %v281 = vunpack.c.l.b16 %v272
  %v282 = vunpack.c.l.b16 %v273
  %v283 = vpack.c.b16 %v282, %v281
  %v286 = vsel %vm42, %v278, 0
  %288 = vmatprep.subr.bf16.mxu0 0
  %289 = vmatpush1.bf16.msra.mxu0 %v283
  %290 = vmatprep.subr.bf16.mxu0 0
  %291 = vmatpush1.bf16.msra.mxu0 0
  %292 = vmatprep.subr.bf16.mxu0 0
  %293 = vmatpush1.bf16.msra.mxu0 0
  %294 = vmatprep.subr.bf16.mxu0 0
  %295 = vmatpush1.bf16.msra.mxu0 0
  %296 = vmatprep.subr.bf16.mxu0 0
  %297 = vmatpush1.bf16.msra.mxu0 0
  %298 = vmatprep.subr.bf16.mxu0 0
  %299 = vmatpush1.bf16.msra.mxu0 0
  %300 = vmatprep.subr.bf16.mxu0 0
  %301 = vmatpush1.bf16.msra.mxu0 0
  %302 = vmatprep.subr.bf16.mxu0 0
  %303 = vmatpush1.bf16.msra.mxu0 0
  %304 = vmatprep.subr.bf16.mxu0 0
  %305 = vmatpush1.bf16.msra.mxu0 0
  %306 = vmatprep.subr.bf16.mxu0 0
  %307 = vmatpush1.bf16.msra.mxu0 0
  %308 = vmatprep.subr.bf16.mxu0 0
  %309 = vmatpush1.bf16.msra.mxu0 0
  %310 = vmatprep.subr.bf16.mxu0 0
  %311 = vmatpush1.bf16.msra.mxu0 0
  %312 = vmatprep.subr.bf16.mxu0 0
  %313 = vmatpush1.bf16.msra.mxu0 0
  %314 = vmatprep.subr.bf16.mxu0 0
  %315 = vmatpush1.bf16.msra.mxu0 0
  %316 = vmatprep.subr.bf16.mxu0 0
  %317 = vmatpush1.bf16.msra.mxu0 0
  %318 = vmatprep.subr.bf16.mxu0 0
  %319 = vmatpush1.bf16.msra.mxu0 0
  %320 = vmatprep.mubr.bf16.mxu0 0
  %321 = vmatmul.mubr.bf16.gmra.mrb[0].mxu0 %v286
  %v322 = vpop.f32.mrb[0].mxu0
  %v323 = vadd.f32 0.0, %v322
  %v324 = vpop.f32.mrb[0].mxu0
  %v325 = vpop.f32.mrb[0].mxu0
  %v326 = vadd.f32 0.0, %v325
  %v327 = vpop.f32.mrb[0].mxu0
  %328 = vdwg.mxu0
  %v329 = vadd.f32 %v266, %v323
  %v330 = vadd.f32 %v267, %v326
  %s331 = scalar_lea.vmem %s0, 40
  %v332 = vld [vmem:[%s331] sm:$0xf]
  %v333 = vld [vmem:[%s331 + $0x4] sm:$0xf]
  %s334 = scalar_lea.vmem %s1, 40
  %v335 = vld [vmem:[%s334] sm:$0xf]
  %v336 = vld [vmem:[%s334 + $0x4] sm:$0xf]
  %v339 = vunpack.c.l.b16 %v332
  %v340 = vunpack.c.l.b16 %v333
  %v341 = vpack.c.b16 %v340, %v339
  %v344 = vunpack.c.l.b16 %v335
  %v345 = vunpack.c.l.b16 %v336
  %v346 = vpack.c.b16 %v345, %v344
  %v349 = vsel %vm42, %v341, 0
  %351 = vmatprep.subr.bf16.mxu0 0
  %352 = vmatpush1.bf16.msra.mxu0 %v346
  %353 = vmatprep.subr.bf16.mxu0 0
  %354 = vmatpush1.bf16.msra.mxu0 0
  %355 = vmatprep.subr.bf16.mxu0 0
  %356 = vmatpush1.bf16.msra.mxu0 0
  %357 = vmatprep.subr.bf16.mxu0 0
  %358 = vmatpush1.bf16.msra.mxu0 0
  %359 = vmatprep.subr.bf16.mxu0 0
  %360 = vmatpush1.bf16.msra.mxu0 0
  %361 = vmatprep.subr.bf16.mxu0 0
  %362 = vmatpush1.bf16.msra.mxu0 0
  %363 = vmatprep.subr.bf16.mxu0 0
  %364 = vmatpush1.bf16.msra.mxu0 0
  %365 = vmatprep.subr.bf16.mxu0 0
  %366 = vmatpush1.bf16.msra.mxu0 0
  %367 = vmatprep.subr.bf16.mxu0 0
  %368 = vmatpush1.bf16.msra.mxu0 0
  %369 = vmatprep.subr.bf16.mxu0 0
  %370 = vmatpush1.bf16.msra.mxu0 0
  %371 = vmatprep.subr.bf16.mxu0 0
  %372 = vmatpush1.bf16.msra.mxu0 0
  %373 = vmatprep.subr.bf16.mxu0 0
  %374 = vmatpush1.bf16.msra.mxu0 0
  %375 = vmatprep.subr.bf16.mxu0 0
  %376 = vmatpush1.bf16.msra.mxu0 0
  %377 = vmatprep.subr.bf16.mxu0 0
  %378 = vmatpush1.bf16.msra.mxu0 0
  %379 = vmatprep.subr.bf16.mxu0 0
  %380 = vmatpush1.bf16.msra.mxu0 0
  %381 = vmatprep.subr.bf16.mxu0 0
  %382 = vmatpush1.bf16.msra.mxu0 0
  %383 = vmatprep.mubr.bf16.mxu0 0
  %384 = vmatmul.mubr.bf16.gmra.mrb[0].mxu0 %v349
  %v385 = vpop.f32.mrb[0].mxu0
  %v386 = vadd.f32 0.0, %v385
  %v387 = vpop.f32.mrb[0].mxu0
  %v388 = vpop.f32.mrb[0].mxu0
  %v389 = vadd.f32 0.0, %v388
  %v390 = vpop.f32.mrb[0].mxu0
  %391 = vdwg.mxu0
  %v392 = vadd.f32 %v329, %v386
  %v393 = vadd.f32 %v330, %v389
  %s394 = scalar_lea.vmem %s0, 48
  %v395 = vld [vmem:[%s394] sm:$0xf]
  %v396 = vld [vmem:[%s394 + $0x4] sm:$0xf]
  %s397 = scalar_lea.vmem %s1, 48
  %v398 = vld [vmem:[%s397] sm:$0xf]
  %v399 = vld [vmem:[%s397 + $0x4] sm:$0xf]
  %v402 = vunpack.c.l.b16 %v395
  %v403 = vunpack.c.l.b16 %v396
  %v404 = vpack.c.b16 %v403, %v402
  %v407 = vunpack.c.l.b16 %v398
  %v408 = vunpack.c.l.b16 %v399
  %v409 = vpack.c.b16 %v408, %v407
  %v412 = vsel %vm42, %v404, 0
  %414 = vmatprep.subr.bf16.mxu0 0
  %415 = vmatpush1.bf16.msra.mxu0 %v409
  %416 = vmatprep.subr.bf16.mxu0 0
  %417 = vmatpush1.bf16.msra.mxu0 0
  %418 = vmatprep.subr.bf16.mxu0 0
  %419 = vmatpush1.bf16.msra.mxu0 0
  %420 = vmatprep.subr.bf16.mxu0 0
  %421 = vmatpush1.bf16.msra.mxu0 0
  %422 = vmatprep.subr.bf16.mxu0 0
  %423 = vmatpush1.bf16.msra.mxu0 0
  %424 = vmatprep.subr.bf16.mxu0 0
  %425 = vmatpush1.bf16.msra.mxu0 0
  %426 = vmatprep.subr.bf16.mxu0 0
  %427 = vmatpush1.bf16.msra.mxu0 0
  %428 = vmatprep.subr.bf16.mxu0 0
  %429 = vmatpush1.bf16.msra.mxu0 0
  %430 = vmatprep.subr.bf16.mxu0 0
  %431 = vmatpush1.bf16.msra.mxu0 0
  %432 = vmatprep.subr.bf16.mxu0 0
  %433 = vmatpush1.bf16.msra.mxu0 0
  %434 = vmatprep.subr.bf16.mxu0 0
  %435 = vmatpush1.bf16.msra.mxu0 0
  %436 = vmatprep.subr.bf16.mxu0 0
  %437 = vmatpush1.bf16.msra.mxu0 0
  %438 = vmatprep.subr.bf16.mxu0 0
  %439 = vmatpush1.bf16.msra.mxu0 0
  %440 = vmatprep.subr.bf16.mxu0 0
  %441 = vmatpush1.bf16.msra.mxu0 0
  %442 = vmatprep.subr.bf16.mxu0 0
  %443 = vmatpush1.bf16.msra.mxu0 0
  %444 = vmatprep.subr.bf16.mxu0 0
  %445 = vmatpush1.bf16.msra.mxu0 0
  %446 = vmatprep.mubr.bf16.mxu0 0
  %447 = vmatmul.mubr.bf16.gmra.mrb[0].mxu0 %v412
  %v448 = vpop.f32.mrb[0].mxu0
  %v449 = vadd.f32 0.0, %v448
  %v450 = vpop.f32.mrb[0].mxu0
  %v451 = vpop.f32.mrb[0].mxu0
  %v452 = vadd.f32 0.0, %v451
  %v453 = vpop.f32.mrb[0].mxu0
  %454 = vdwg.mxu0
  %v455 = vadd.f32 %v392, %v449
  %v456 = vadd.f32 %v393, %v452
  %s457 = scalar_lea.vmem %s0, 56
  %v458 = vld [vmem:[%s457] sm:$0xf]
  %v459 = vld [vmem:[%s457 + $0x4] sm:$0xf]
  %s460 = scalar_lea.vmem %s1, 56
  %v461 = vld [vmem:[%s460] sm:$0xf]
  %v462 = vld [vmem:[%s460 + $0x4] sm:$0xf]
  %v465 = vunpack.c.l.b16 %v458
  %v466 = vunpack.c.l.b16 %v459
  %v467 = vpack.c.b16 %v466, %v465
  %v470 = vunpack.c.l.b16 %v461
  %v471 = vunpack.c.l.b16 %v462
  %v472 = vpack.c.b16 %v471, %v470
  %v475 = vsel %vm42, %v467, 0
  %477 = vmatprep.subr.bf16.mxu0 0
  %478 = vmatpush1.bf16.msra.mxu0 %v472
  %479 = vmatprep.subr.bf16.mxu0 0
  %480 = vmatpush1.bf16.msra.mxu0 0
  %481 = vmatprep.subr.bf16.mxu0 0
  %482 = vmatpush1.bf16.msra.mxu0 0
  %483 = vmatprep.subr.bf16.mxu0 0
  %484 = vmatpush1.bf16.msra.mxu0 0
  %485 = vmatprep.subr.bf16.mxu0 0
  %486 = vmatpush1.bf16.msra.mxu0 0
  %487 = vmatprep.subr.bf16.mxu0 0
  %488 = vmatpush1.bf16.msra.mxu0 0
  %489 = vmatprep.subr.bf16.mxu0 0
  %490 = vmatpush1.bf16.msra.mxu0 0
  %491 = vmatprep.subr.bf16.mxu0 0
  %492 = vmatpush1.bf16.msra.mxu0 0
  %493 = vmatprep.subr.bf16.mxu0 0
  %494 = vmatpush1.bf16.msra.mxu0 0
  %495 = vmatprep.subr.bf16.mxu0 0
  %496 = vmatpush1.bf16.msra.mxu0 0
  %497 = vmatprep.subr.bf16.mxu0 0
  %498 = vmatpush1.bf16.msra.mxu0 0
  %499 = vmatprep.subr.bf16.mxu0 0
  %500 = vmatpush1.bf16.msra.mxu0 0
  %501 = vmatprep.subr.bf16.mxu0 0
  %502 = vmatpush1.bf16.msra.mxu0 0
  %503 = vmatprep.subr.bf16.mxu0 0
  %504 = vmatpush1.bf16.msra.mxu0 0
  %505 = vmatprep.subr.bf16.mxu0 0
  %506 = vmatpush1.bf16.msra.mxu0 0
  %507 = vmatprep.subr.bf16.mxu0 0
  %508 = vmatpush1.bf16.msra.mxu0 0
  %509 = vmatprep.mubr.bf16.mxu0 0
  %510 = vmatmul.mubr.bf16.gmra.mrb[0].mxu0 %v475
  %v511 = vpop.f32.mrb[0].mxu0
  %v512 = vadd.f32 0.0, %v511
  %v513 = vpop.f32.mrb[0].mxu0
  %v514 = vpop.f32.mrb[0].mxu0
  %v515 = vadd.f32 0.0, %v514
  %v516 = vpop.f32.mrb[0].mxu0
  %517 = vdwg.mxu0
  %v518 = vadd.f32 %v455, %v512
  %v519 = vadd.f32 %v456, %v515
  %s520 = scalar_lea.vmem %s0, 64
  %v521 = vld [vmem:[%s520] sm:$0xf]
  %v522 = vld [vmem:[%s520 + $0x4] sm:$0xf]
  %s523 = scalar_lea.vmem %s1, 64
  %v524 = vld [vmem:[%s523] sm:$0xf]
  %v525 = vld [vmem:[%s523 + $0x4] sm:$0xf]
  %v528 = vunpack.c.l.b16 %v521
  %v529 = vunpack.c.l.b16 %v522
  %v530 = vpack.c.b16 %v529, %v528
  %v533 = vunpack.c.l.b16 %v524
  %v534 = vunpack.c.l.b16 %v525
  %v535 = vpack.c.b16 %v534, %v533
  %v538 = vsel %vm42, %v530, 0
  %540 = vmatprep.subr.bf16.mxu0 0
  %541 = vmatpush1.bf16.msra.mxu0 %v535
  %542 = vmatprep.subr.bf16.mxu0 0
  %543 = vmatpush1.bf16.msra.mxu0 0
  %544 = vmatprep.subr.bf16.mxu0 0
  %545 = vmatpush1.bf16.msra.mxu0 0
  %546 = vmatprep.subr.bf16.mxu0 0
  %547 = vmatpush1.bf16.msra.mxu0 0
  %548 = vmatprep.subr.bf16.mxu0 0
  %549 = vmatpush1.bf16.msra.mxu0 0
  %550 = vmatprep.subr.bf16.mxu0 0
  %551 = vmatpush1.bf16.msra.mxu0 0
  %552 = vmatprep.subr.bf16.mxu0 0
  %553 = vmatpush1.bf16.msra.mxu0 0
  %554 = vmatprep.subr.bf16.mxu0 0
  %555 = vmatpush1.bf16.msra.mxu0 0
  %556 = vmatprep.subr.bf16.mxu0 0
  %557 = vmatpush1.bf16.msra.mxu0 0
  %558 = vmatprep.subr.bf16.mxu0 0
  %559 = vmatpush1.bf16.msra.mxu0 0
  %560 = vmatprep.subr.bf16.mxu0 0
  %561 = vmatpush1.bf16.msra.mxu0 0
  %562 = vmatprep.subr.bf16.mxu0 0
  %563 = vmatpush1.bf16.msra.mxu0 0
  %564 = vmatprep.subr.bf16.mxu0 0
  %565 = vmatpush1.bf16.msra.mxu0 0
  %566 = vmatprep.subr.bf16.mxu0 0
  %567 = vmatpush1.bf16.msra.mxu0 0
  %568 = vmatprep.subr.bf16.mxu0 0
  %569 = vmatpush1.bf16.msra.mxu0 0
  %570 = vmatprep.subr.bf16.mxu0 0
  %571 = vmatpush1.bf16.msra.mxu0 0
  %572 = vmatprep.mubr.bf16.mxu0 0
  %573 = vmatmul.mubr.bf16.gmra.mrb[0].mxu0 %v538
  %v574 = vpop.f32.mrb[0].mxu0
  %v575 = vadd.f32 0.0, %v574
  %v576 = vpop.f32.mrb[0].mxu0
  %v577 = vpop.f32.mrb[0].mxu0
  %v578 = vadd.f32 0.0, %v577
  %v579 = vpop.f32.mrb[0].mxu0
  %580 = vdwg.mxu0
  %v581 = vadd.f32 %v518, %v575
  %v582 = vadd.f32 %v519, %v578
  %v583 = vld [vmem:[%s2] sm:$0x1]
  %v585 = vlaneseq
  %v586 = vshrl.u32 %v585, 7
  %v587 = vsub.s32 0, %v586
  %v588 = vrot.slane %v583, %v587
  %v590 = vmul.f32 %v581, %v588
  %v591 = vmul.f32 %v582, %v588
  %v592 = vld [vmem:[%s3] sm:$0x1]
  %v594 = vlaneseq
  %v595 = vshrl.u32 %v594, 7
  %v596 = vsub.s32 0, %v595
  %v597 = vrot.slane %v592, %v596
  %v599 = vadd.f32 %v590, %v597
  %v600 = vadd.f32 %v591, %v597
  %vm601 = vcmp.ge.f32.partialorder %v599, 0.0
  %vm602 = vcmp.ge.f32.partialorder %v600, 0.0
  %v603 = vld [vmem:[%s4] sm:$0x1]
  %v605 = vlaneseq
  %v606 = vshrl.u32 %v605, 7
  %v607 = vsub.s32 0, %v606
  %v608 = vrot.slane %v603, %v607
  %v610 = vmul.f32 %v599, %v608
  %v611 = vmul.f32 %v600, %v608
  %v612 = vsel %vm601, %v599, %v610
  %v613 = vsel %vm602, %v600, %v611
  %v614 = vpack.c.bf16 %v613, %v612
  %v616 = vunpack.c.l.b16 %v614
  %v617 = vunpack.c.h.b16 %v614
  %v618 = vpack.c.b16 %v616, %v616
  %v619 = vpack.c.b16 %v617, %v617
  %vm622 = vcmask 125952
  %623 = vst.msk [vmem:[%s5] sm:$0xf] %vm622, %v618
  %624 = vst.msk [vmem:[%s5 + $0x4] sm:$0xf] %vm622, %v619
  // Predicated region
  $region22: #{_lambda_.96} parent=0 // pred_check
    _
  $region23: #{_lambda_.96} parent=0 // pred_check_branch
    %626 = sbr.rel (0) target = $region25
  $region24: #{_lambda_.96} parent=0 // pred_region
    _
  $region25: #{_lambda_.96} parent=0 // pred_fallthru
    _
  // Predicated region
  $region26: #{_lambda_.96} parent=0 // pred_check
    _
  $region27: #{_lambda_.96} parent=0 // pred_check_branch
    %628 = sbr.rel (0) target = $region29
  $region28: #{_lambda_.96} parent=0 // pred_region
    _
  $region29: #{_lambda_.96} parent=0 // pred_fallthru
    _

// kernel: tile.895
$region0: #{tile.895}
  #allocation0 [shape = 's32[1]{0}', space=sflag, size = 0x4, scoped, tag = 'scoped memory for tile.895']
  %s0 = inlined_call_operand.vmem [shape: f32[4], index: 0, kind: input, shape index: {}]
  %s1 = inlined_call_operand.vmem [shape: f32[2,4], index: 1, kind: output, shape index: {}]
  // Predicated region
  $region2: #{tile.895} parent=0 // pred_check
    _
  $region3: #{tile.895} parent=0 // pred_check_branch
    %3 = sbr.rel (0) target = $region5
  $region4: #{tile.895} parent=0 // pred_region
    _
  $region5: #{tile.895} parent=0 // pred_fallthru
    _
  %v4 = vld [vmem:[%s0] ss:$0 sm:$0xff]
  %5 = vst [vmem:[%s1] sm:$0x3] %v4

// kernel: tile.896
$region0: #{tile.896}
  %s0 = inlined_call_operand.vmem [shape: f32[2,4], index: 0, kind: input, shape index: {}]
  %s1 = inlined_call_operand.vmem [shape: f32[1,8], index: 1, kind: output, shape index: {}]
  $region1: #{tile.896} parent=0
    #allocation0 [shape = 'u8[4096]{0}', space=vmem, size = 0x1000, scoped, tag = 'scoped mem for output reshape']
    #allocation1 [shape = 'u8[4096]{0}', space=vmem, size = 0x1000, scoped, tag = 'scoped mem for input reshape']
    %s3 = sshllo.u32 0, 2
    %v4 = vld [vmem:[%s0] sm:%s3]
    %5 = vst [vmem:[#allocation1] sm:%s3] %v4
    %v6 = vld [vmem:[#allocation1] sm:$0x1]
    %vm7 = vcmask 31744
    %8 = vst.msk [vmem:[#allocation0] sm:$0x1] %vm7, %v6
    %s9 = scalar_lea.vmem [#allocation1], 1
    %v10 = vld [vmem:[%s9] sm:$0x1]
    %11 = vrot.lane.b32.xlu0 %v10, 4
    %v12 = vpop.permute.xlu0 %11
    %vm13 = vcmask 64544
    %14 = vst.msk [vmem:[#allocation0] sm:$0x1] %vm13, %v12
    %s16 = sshllo.u32 0, 1
    %v18 = vld [vmem:[#allocation0] sm:%s16]
    %s19 = sshllo.u32 0, 1
    %20 = vst [vmem:[%s1] sm:%s19] %v18

// kernel: _lambda_.110
$region0: #{_lambda_.110}
  #allocation0 [shape = 'u32[]', space=smem, size = 0x4, offset = 0x4, fixed_abs, tag = 'smem constant byte address 0x4 - core index']
  #allocation1 [shape = 'u32[144,128]{1,0:T(1,128)}', space=vmem, size = 0x12000, scoped, tag = 'internal scratch']
  %s0 = inlined_call_operand.vmem [shape: bf16[1,16,32], index: 0, kind: input, shape index: {}]
  %s1 = inlined_call_operand.vmem [shape: bf16[1,32,8], index: 1, kind: input, shape index: {}]
  %s2 = inlined_call_operand.vmem [shape: f32[1,8], index: 2, kind: input, shape index: {}]
  %s3 = inlined_call_operand.vmem [shape: f32[1,8], index: 3, kind: input, shape index: {}]
  %s4 = inlined_call_operand.vmem [shape: f32[1,8], index: 4, kind: input, shape index: {}]
  %s5 = inlined_call_operand.vmem [shape: bf16[16,8], index: 5, kind: output, shape index: {}]
  %s6 = sld [smem:[#allocation0]]
  $region30: #{_lambda_.110} parent=0
    _
  %s8 = ssub.s32 1, %s6
  %s9 = scalar_select 0, %s8, %s6
  // Predicated region
  $region2: #{_lambda_.110} parent=0 // pred_check
    _
  $region3: #{_lambda_.110} parent=0 // pred_check_branch
    %11 = sbr.rel (0) target = $region5
  $region4: #{_lambda_.110} parent=0 // pred_region
    _
  $region5: #{_lambda_.110} parent=0 // pred_fallthru
    _
  // Predicated region
  $region6: #{_lambda_.110} parent=0 // pred_check
    _
  $region7: #{_lambda_.110} parent=0 // pred_check_branch
    %13 = sbr.rel (0) target = $region9
  $region8: #{_lambda_.110} parent=0 // pred_region
    _
  $region9: #{_lambda_.110} parent=0 // pred_fallthru
    _
  // Predicated region
  $region10: #{_lambda_.110} parent=0 // pred_check
    _
  $region11: #{_lambda_.110} parent=0 // pred_check_branch
    %15 = sbr.rel (0) target = $region13
  $region12: #{_lambda_.110} parent=0 // pred_region
    _
  $region13: #{_lambda_.110} parent=0 // pred_fallthru
    _
  // Predicated region
  $region14: #{_lambda_.110} parent=0 // pred_check
    _
  $region15: #{_lambda_.110} parent=0 // pred_check_branch
    %17 = sbr.rel (0) target = $region17
  $region16: #{_lambda_.110} parent=0 // pred_region
    _
  $region17: #{_lambda_.110} parent=0 // pred_fallthru
    _
  // Predicated region
  $region18: #{_lambda_.110} parent=0 // pred_check
    _
  $region19: #{_lambda_.110} parent=0 // pred_check_branch
    %19 = sbr.rel (0) target = $region21
  $region20: #{_lambda_.110} parent=0 // pred_region
    _
  $region21: #{_lambda_.110} parent=0 // pred_fallthru
    _
  %v21 = vld [vmem:[%s0] sm:$0xf]
  %v22 = vld [vmem:[%s0 + $0x4] sm:$0xf]
  %v23 = vld [vmem:[%s1] sm:$0xf]
  %v24 = vld [vmem:[%s1 + $0x4] sm:$0xf]
  %v25 = vld [vmem:[%s1 + $0x8] sm:$0xf]
  %v26 = vld [vmem:[%s1 + $0xc] sm:$0xf]
  %v29 = vunpack.c.l.b16 %v21
  %v30 = vunpack.c.l.b16 %v22
  %v31 = vpack.c.b16 %v30, %v29
  %v36 = vunpack.c.l.b16 %v23
  %v37 = vunpack.c.l.b16 %v24
  %v38 = vunpack.c.l.b16 %v25
  %v39 = vunpack.c.l.b16 %v26
  %v40 = vpack.c.b16 %v37, %v36
  %v41 = vpack.c.b16 %v39, %v38
  %vm44 = vcmask 261120
  %v46 = vsel %vm44, %v31, 0
  %48 = vmatprep.subr.bf16.mxu0 0
  %49 = vmatpush1.bf16.msra.mxu0 %v40
  %50 = vmatprep.subr.bf16.mxu0 0
  %51 = vmatpush1.bf16.msra.mxu0 %v41
  %52 = vmatprep.subr.bf16.mxu0 0
  %53 = vmatpush1.bf16.msra.mxu0 0
  %54 = vmatprep.subr.bf16.mxu0 0
  %55 = vmatpush1.bf16.msra.mxu0 0
  %56 = vmatprep.subr.bf16.mxu0 0
  %57 = vmatpush1.bf16.msra.mxu0 0
  %58 = vmatprep.subr.bf16.mxu0 0
  %59 = vmatpush1.bf16.msra.mxu0 0
  %60 = vmatprep.subr.bf16.mxu0 0
  %61 = vmatpush1.bf16.msra.mxu0 0
  %62 = vmatprep.subr.bf16.mxu0 0
  %63 = vmatpush1.bf16.msra.mxu0 0
  %64 = vmatprep.subr.bf16.mxu0 0
  %65 = vmatpush1.bf16.msra.mxu0 0
  %66 = vmatprep.subr.bf16.mxu0 0
  %67 = vmatpush1.bf16.msra.mxu0 0
  %68 = vmatprep.subr.bf16.mxu0 0
  %69 = vmatpush1.bf16.msra.mxu0 0
  %70 = vmatprep.subr.bf16.mxu0 0
  %71 = vmatpush1.bf16.msra.mxu0 0
  %72 = vmatprep.subr.bf16.mxu0 0
  %73 = vmatpush1.bf16.msra.mxu0 0
  %74 = vmatprep.subr.bf16.mxu0 0
  %75 = vmatpush1.bf16.msra.mxu0 0
  %76 = vmatprep.subr.bf16.mxu0 0
  %77 = vmatpush1.bf16.msra.mxu0 0
  %78 = vmatprep.subr.bf16.mxu0 0
  %79 = vmatpush1.bf16.msra.mxu0 0
  %80 = vmatprep.mubr.bf16.mxu0 0
  %81 = vmatmul.mubr.bf16.gmra.mrb[0].mxu0 %v46
  %v82 = vpop.f32.mrb[0].mxu0
  %v83 = vadd.f32 0.0, %v82
  %v84 = vpop.f32.mrb[0].mxu0
  %v85 = vpop.f32.mrb[0].mxu0
  %v86 = vadd.f32 0.0, %v85
  %v87 = vpop.f32.mrb[0].mxu0
  %88 = vdwg.mxu0
  %v89 = vld [vmem:[%s2] sm:$0x1]
  %v91 = vlaneseq
  %v92 = vshrl.u32 %v91, 7
  %v93 = vsub.s32 0, %v92
  %v94 = vrot.slane %v89, %v93
  %v96 = vmul.f32 %v83, %v94
  %v97 = vmul.f32 %v86, %v94
  %v98 = vld [vmem:[%s3] sm:$0x1]
  %v100 = vlaneseq
  %v101 = vshrl.u32 %v100, 7
  %v102 = vsub.s32 0, %v101
  %v103 = vrot.slane %v98, %v102
  %v105 = vadd.f32 %v96, %v103
  %v106 = vadd.f32 %v97, %v103
  %vm107 = vcmp.ge.f32.partialorder %v105, 0.0
  %vm108 = vcmp.ge.f32.partialorder %v106, 0.0
  %v109 = vld [vmem:[%s4] sm:$0x1]
  %v111 = vlaneseq
  %v112 = vshrl.u32 %v111, 7
  %v113 = vsub.s32 0, %v112
  %v114 = vrot.slane %v109, %v113
  %v116 = vmul.f32 %v105, %v114
  %v117 = vmul.f32 %v106, %v114
  %v118 = vsel %vm107, %v105, %v116
  %v119 = vsel %vm108, %v106, %v117
  %v120 = vpack.c.bf16 %v119, %v118
  %v122 = vunpack.c.l.b16 %v120
  %v123 = vunpack.c.h.b16 %v120
  %v124 = vpack.c.b16 %v122, %v122
  %v125 = vpack.c.b16 %v123, %v123
  %vm128 = vcmask 60416
  %129 = vst.msk [vmem:[%s5] sm:$0xf] %vm128, %v124
  %130 = vst.msk [vmem:[%s5 + $0x4] sm:$0xf] %vm128, %v125
  // Predicated region
  $region22: #{_lambda_.110} parent=0 // pred_check
    _
  $region23: #{_lambda_.110} parent=0 // pred_check_branch
    %132 = sbr.rel (0) target = $region25
  $region24: #{_lambda_.110} parent=0 // pred_region
    _
  $region25: #{_lambda_.110} parent=0 // pred_fallthru
    _
  // Predicated region
  $region26: #{_lambda_.110} parent=0 // pred_check
    _
  $region27: #{_lambda_.110} parent=0 // pred_check_branch
    %134 = sbr.rel (0) target = $region29
  $region28: #{_lambda_.110} parent=0 // pred_region
    _
  $region29: #{_lambda_.110} parent=0 // pred_fallthru
    _

// kernel: _lambda_.109
$region0: #{_lambda_.109}
  #allocation0 [shape = 'u32[]', space=smem, size = 0x4, offset = 0x4, fixed_abs, tag = 'smem constant byte address 0x4 - core index']
  #allocation1 [shape = 'u32[144,128]{1,0:T(1,128)}', space=vmem, size = 0x12000, scoped, tag = 'internal scratch']
  %s0 = inlined_call_operand.vmem [shape: bf16[1,16,16], index: 0, kind: input, shape index: {}]
  %s1 = inlined_call_operand.vmem [shape: bf16[1,16,32], index: 1, kind: input, shape index: {}]
  %s2 = inlined_call_operand.vmem [shape: f32[1,32], index: 2, kind: input, shape index: {}]
  %s3 = inlined_call_operand.vmem [shape: f32[1,32], index: 3, kind: input, shape index: {}]
  %s4 = inlined_call_operand.vmem [shape: f32[1,32], index: 4, kind: input, shape index: {}]
  %s5 = inlined_call_operand.vmem [shape: bf16[16,32], index: 5, kind: input, shape index: {}]
  %s6 = inlined_call_operand.vmem [shape: bf16[16,32], index: 6, kind: output, shape index: {}]
  %s7 = sld [smem:[#allocation0]]
  $region34: #{_lambda_.109} parent=0
    _
  %s9 = ssub.s32 1, %s7
  %s10 = scalar_select 0, %s9, %s7
  // Predicated region
  $region2: #{_lambda_.109} parent=0 // pred_check
    _
  $region3: #{_lambda_.109} parent=0 // pred_check_branch
    %12 = sbr.rel (0) target = $region5
  $region4: #{_lambda_.109} parent=0 // pred_region
    _
  $region5: #{_lambda_.109} parent=0 // pred_fallthru
    _
  // Predicated region
  $region6: #{_lambda_.109} parent=0 // pred_check
    _
  $region7: #{_lambda_.109} parent=0 // pred_check_branch
    %14 = sbr.rel (0) target = $region9
  $region8: #{_lambda_.109} parent=0 // pred_region
    _
  $region9: #{_lambda_.109} parent=0 // pred_fallthru
    _
  // Predicated region
  $region10: #{_lambda_.109} parent=0 // pred_check
    _
  $region11: #{_lambda_.109} parent=0 // pred_check_branch
    %16 = sbr.rel (0) target = $region13
  $region12: #{_lambda_.109} parent=0 // pred_region
    _
  $region13: #{_lambda_.109} parent=0 // pred_fallthru
    _
  // Predicated region
  $region14: #{_lambda_.109} parent=0 // pred_check
    _
  $region15: #{_lambda_.109} parent=0 // pred_check_branch
    %18 = sbr.rel (0) target = $region17
  $region16: #{_lambda_.109} parent=0 // pred_region
    _
  $region17: #{_lambda_.109} parent=0 // pred_fallthru
    _
  // Predicated region
  $region18: #{_lambda_.109} parent=0 // pred_check
    _
  $region19: #{_lambda_.109} parent=0 // pred_check_branch
    %20 = sbr.rel (0) target = $region21
  $region20: #{_lambda_.109} parent=0 // pred_region
    _
  $region21: #{_lambda_.109} parent=0 // pred_fallthru
    _
  // Predicated region
  $region22: #{_lambda_.109} parent=0 // pred_check
    _
  $region23: #{_lambda_.109} parent=0 // pred_check_branch
    %22 = sbr.rel (0) target = $region25
  $region24: #{_lambda_.109} parent=0 // pred_region
    _
  $region25: #{_lambda_.109} parent=0 // pred_fallthru
    _
  %v24 = vld [vmem:[%s0] sm:$0xf]
  %v25 = vld [vmem:[%s0 + $0x4] sm:$0xf]
  %v26 = vld [vmem:[%s1] sm:$0xf]
  %v27 = vld [vmem:[%s1 + $0x4] sm:$0xf]
  %v30 = vunpack.c.l.b16 %v24
  %v31 = vunpack.c.l.b16 %v25
  %v32 = vpack.c.b16 %v31, %v30
  %v35 = vunpack.c.l.b16 %v26
  %v36 = vunpack.c.l.b16 %v27
  %v37 = vpack.c.b16 %v36, %v35
  %vm39 = vcmask 130048
  %v41 = vsel %vm39, %v32, 0
  %43 = vmatprep.subr.bf16.mxu0 0
  %44 = vmatpush1.bf16.msra.mxu0 %v37
  %45 = vmatprep.subr.bf16.mxu0 0
  %46 = vmatpush1.bf16.msra.mxu0 0
  %47 = vmatprep.subr.bf16.mxu0 0
  %48 = vmatpush1.bf16.msra.mxu0 0
  %49 = vmatprep.subr.bf16.mxu0 0
  %50 = vmatpush1.bf16.msra.mxu0 0
  %51 = vmatprep.subr.bf16.mxu0 0
  %52 = vmatpush1.bf16.msra.mxu0 0
  %53 = vmatprep.subr.bf16.mxu0 0
  %54 = vmatpush1.bf16.msra.mxu0 0
  %55 = vmatprep.subr.bf16.mxu0 0
  %56 = vmatpush1.bf16.msra.mxu0 0
  %57 = vmatprep.subr.bf16.mxu0 0
  %58 = vmatpush1.bf16.msra.mxu0 0
  %59 = vmatprep.subr.bf16.mxu0 0
  %60 = vmatpush1.bf16.msra.mxu0 0
  %61 = vmatprep.subr.bf16.mxu0 0
  %62 = vmatpush1.bf16.msra.mxu0 0
  %63 = vmatprep.subr.bf16.mxu0 0
  %64 = vmatpush1.bf16.msra.mxu0 0
  %65 = vmatprep.subr.bf16.mxu0 0
  %66 = vmatpush1.bf16.msra.mxu0 0
  %67 = vmatprep.subr.bf16.mxu0 0
  %68 = vmatpush1.bf16.msra.mxu0 0
  %69 = vmatprep.subr.bf16.mxu0 0
  %70 = vmatpush1.bf16.msra.mxu0 0
  %71 = vmatprep.subr.bf16.mxu0 0
  %72 = vmatpush1.bf16.msra.mxu0 0
  %73 = vmatprep.subr.bf16.mxu0 0
  %74 = vmatpush1.bf16.msra.mxu0 0
  %75 = vmatprep.mubr.bf16.mxu0 0
  %76 = vmatmul.mubr.bf16.gmra.mrb[0].mxu0 %v41
  %v77 = vpop.f32.mrb[0].mxu0
  %v78 = vadd.f32 0.0, %v77
  %v79 = vpop.f32.mrb[0].mxu0
  %v80 = vpop.f32.mrb[0].mxu0
  %v81 = vadd.f32 0.0, %v80
  %v82 = vpop.f32.mrb[0].mxu0
  %83 = vdwg.mxu0
  %v84 = vld [vmem:[%s2] sm:$0x1]
  %v86 = vlaneseq
  %v87 = vshrl.u32 %v86, 7
  %v88 = vsub.s32 0, %v87
  %v89 = vrot.slane %v84, %v88
  %v91 = vmul.f32 %v78, %v89
  %v92 = vmul.f32 %v81, %v89
  %v93 = vld [vmem:[%s3] sm:$0x1]
  %v95 = vlaneseq
  %v96 = vshrl.u32 %v95, 7
  %v97 = vsub.s32 0, %v96
  %v98 = vrot.slane %v93, %v97
  %v100 = vadd.f32 %v91, %v98
  %v101 = vadd.f32 %v92, %v98
  %v102 = vld [vmem:[%s5] sm:$0xf]
  %v103 = vld [vmem:[%s5 + $0x4] sm:$0xf]
  %v104 = vunpack.c.l.bf16 %v102
  %v105 = vunpack.c.l.bf16 %v103
  %v106 = vadd.f32 %v100, %v104
  %v107 = vadd.f32 %v101, %v105
  %vm108 = vcmp.ge.f32.partialorder %v106, 0.0
  %vm109 = vcmp.ge.f32.partialorder %v107, 0.0
  %v110 = vld [vmem:[%s4] sm:$0x1]
  %v112 = vlaneseq
  %v113 = vshrl.u32 %v112, 7
  %v114 = vsub.s32 0, %v113
  %v115 = vrot.slane %v110, %v114
  %v117 = vmul.f32 %v106, %v115
  %v118 = vmul.f32 %v107, %v115
  %v119 = vsel %vm108, %v106, %v117
  %v120 = vsel %vm109, %v107, %v118
  %v121 = vpack.c.bf16 %v120, %v119
  %v123 = vunpack.c.l.b16 %v121
  %v124 = vunpack.c.h.b16 %v121
  %v125 = vpack.c.b16 %v123, %v123
  %v126 = vpack.c.b16 %v124, %v124
  %vm129 = vcmask 257024
  %130 = vst.msk [vmem:[%s6] sm:$0xf] %vm129, %v125
  %131 = vst.msk [vmem:[%s6 + $0x4] sm:$0xf] %vm129, %v126
  // Predicated region
  $region26: #{_lambda_.109} parent=0 // pred_check
    _
  $region27: #{_lambda_.109} parent=0 // pred_check_branch
    %133 = sbr.rel (0) target = $region29
  $region28: #{_lambda_.109} parent=0 // pred_region
    _
  $region29: #{_lambda_.109} parent=0 // pred_fallthru
    _
  // Predicated region
  $region30: #{_lambda_.109} parent=0 // pred_check
    _
  $region31: #{_lambda_.109} parent=0 // pred_check_branch
    %135 = sbr.rel (0) target = $region33
  $region32: #{_lambda_.109} parent=0 // pred_region
    _
  $region33: #{_lambda_.109} parent=0 // pred_fallthru
    _

// kernel: _lambda_.162
$region0: #{_lambda_.162}
  #allocation0 [shape = 'u32[]', space=smem, size = 0x4, offset = 0x4, fixed_abs, tag = 'smem constant byte address 0x4 - core index']
  #allocation1 [shape = 'u32[144,128]{1,0:T(1,128)}', space=vmem, size = 0x12000, scoped, tag = 'internal scratch']
  %s0 = inlined_call_operand.vmem [shape: bf16[1,16,32], index: 0, kind: input, shape index: {}]
  %s1 = inlined_call_operand.vmem [shape: bf16[1,32,16], index: 1, kind: input, shape index: {}]
  %s2 = inlined_call_operand.vmem [shape: f32[1,16], index: 2, kind: input, shape index: {}]
  %s3 = inlined_call_operand.vmem [shape: f32[1,16], index: 3, kind: input, shape index: {}]
  %s4 = inlined_call_operand.vmem [shape: bf16[16,16], index: 4, kind: output, shape index: {}]
  %s5 = sld [smem:[#allocation0]]
  $region26: #{_lambda_.162} parent=0
    _
  %s7 = ssub.s32 1, %s5
  %s8 = scalar_select 0, %s7, %s5
  // Predicated region
  $region2: #{_lambda_.162} parent=0 // pred_check
    _
  $region3: #{_lambda_.162} parent=0 // pred_check_branch
    %10 = sbr.rel (0) target = $region5
  $region4: #{_lambda_.162} parent=0 // pred_region
    _
  $region5: #{_lambda_.162} parent=0 // pred_fallthru
    _
  // Predicated region
  $region6: #{_lambda_.162} parent=0 // pred_check
    _
  $region7: #{_lambda_.162} parent=0 // pred_check_branch
    %12 = sbr.rel (0) target = $region9
  $region8: #{_lambda_.162} parent=0 // pred_region
    _
  $region9: #{_lambda_.162} parent=0 // pred_fallthru
    _
  // Predicated region
  $region10: #{_lambda_.162} parent=0 // pred_check
    _
  $region11: #{_lambda_.162} parent=0 // pred_check_branch
    %14 = sbr.rel (0) target = $region13
  $region12: #{_lambda_.162} parent=0 // pred_region
    _
  $region13: #{_lambda_.162} parent=0 // pred_fallthru
    _
  // Predicated region
  $region14: #{_lambda_.162} parent=0 // pred_check
    _
  $region15: #{_lambda_.162} parent=0 // pred_check_branch
    %16 = sbr.rel (0) target = $region17
  $region16: #{_lambda_.162} parent=0 // pred_region
    _
  $region17: #{_lambda_.162} parent=0 // pred_fallthru
    _
  %v18 = vld [vmem:[%s0] sm:$0xf]
  %v19 = vld [vmem:[%s0 + $0x4] sm:$0xf]
  %v20 = vld [vmem:[%s1] sm:$0xf]
  %v21 = vld [vmem:[%s1 + $0x4] sm:$0xf]
  %v22 = vld [vmem:[%s1 + $0x8] sm:$0xf]
  %v23 = vld [vmem:[%s1 + $0xc] sm:$0xf]
  %v26 = vunpack.c.l.b16 %v18
  %v27 = vunpack.c.l.b16 %v19
  %v28 = vpack.c.b16 %v27, %v26
  %v33 = vunpack.c.l.b16 %v20
  %v34 = vunpack.c.l.b16 %v21
  %v35 = vunpack.c.l.b16 %v22
  %v36 = vunpack.c.l.b16 %v23
  %v37 = vpack.c.b16 %v34, %v33
  %v38 = vpack.c.b16 %v36, %v35
  %vm41 = vcmask 261120
  %v43 = vsel %vm41, %v28, 0
  %45 = vmatprep.subr.bf16.mxu0 0
  %46 = vmatpush1.bf16.msra.mxu0 %v37
  %47 = vmatprep.subr.bf16.mxu0 0
  %48 = vmatpush1.bf16.msra.mxu0 %v38
  %49 = vmatprep.subr.bf16.mxu0 0
  %50 = vmatpush1.bf16.msra.mxu0 0
  %51 = vmatprep.subr.bf16.mxu0 0
  %52 = vmatpush1.bf16.msra.mxu0 0
  %53 = vmatprep.subr.bf16.mxu0 0
  %54 = vmatpush1.bf16.msra.mxu0 0
  %55 = vmatprep.subr.bf16.mxu0 0
  %56 = vmatpush1.bf16.msra.mxu0 0
  %57 = vmatprep.subr.bf16.mxu0 0
  %58 = vmatpush1.bf16.msra.mxu0 0
  %59 = vmatprep.subr.bf16.mxu0 0
  %60 = vmatpush1.bf16.msra.mxu0 0
  %61 = vmatprep.subr.bf16.mxu0 0
  %62 = vmatpush1.bf16.msra.mxu0 0
  %63 = vmatprep.subr.bf16.mxu0 0
  %64 = vmatpush1.bf16.msra.mxu0 0
  %65 = vmatprep.subr.bf16.mxu0 0
  %66 = vmatpush1.bf16.msra.mxu0 0
  %67 = vmatprep.subr.bf16.mxu0 0
  %68 = vmatpush1.bf16.msra.mxu0 0
  %69 = vmatprep.subr.bf16.mxu0 0
  %70 = vmatpush1.bf16.msra.mxu0 0
  %71 = vmatprep.subr.bf16.mxu0 0
  %72 = vmatpush1.bf16.msra.mxu0 0
  %73 = vmatprep.subr.bf16.mxu0 0
  %74 = vmatpush1.bf16.msra.mxu0 0
  %75 = vmatprep.subr.bf16.mxu0 0
  %76 = vmatpush1.bf16.msra.mxu0 0
  %77 = vmatprep.mubr.bf16.mxu0 0
  %78 = vmatmul.mubr.bf16.gmra.mrb[0].mxu0 %v43
  %v79 = vpop.f32.mrb[0].mxu0
  %v80 = vadd.f32 0.0, %v79
  %v81 = vpop.f32.mrb[0].mxu0
  %v82 = vpop.f32.mrb[0].mxu0
  %v83 = vadd.f32 0.0, %v82
  %v84 = vpop.f32.mrb[0].mxu0
  %85 = vdwg.mxu0
  %v86 = vld [vmem:[%s2] sm:$0x1]
  %v88 = vlaneseq
  %v89 = vshrl.u32 %v88, 7
  %v90 = vsub.s32 0, %v89
  %v91 = vrot.slane %v86, %v90
  %v93 = vmul.f32 %v80, %v91
  %v94 = vmul.f32 %v83, %v91
  %v95 = vld [vmem:[%s3] sm:$0x1]
  %v97 = vlaneseq
  %v98 = vshrl.u32 %v97, 7
  %v99 = vsub.s32 0, %v98
  %v100 = vrot.slane %v95, %v99
  %v102 = vadd.f32 %v93, %v100
  %v103 = vadd.f32 %v94, %v100
  %v104 = vpack.c.bf16 %v103, %v102
  %v106 = vunpack.c.l.b16 %v104
  %v107 = vunpack.c.h.b16 %v104
  %v108 = vpack.c.b16 %v106, %v106
  %v109 = vpack.c.b16 %v107, %v107
  %vm112 = vcmask 125952
  %113 = vst.msk [vmem:[%s4] sm:$0xf] %vm112, %v108
  %114 = vst.msk [vmem:[%s4 + $0x4] sm:$0xf] %vm112, %v109
  // Predicated region
  $region18: #{_lambda_.162} parent=0 // pred_check
    _
  $region19: #{_lambda_.162} parent=0 // pred_check_branch
    %116 = sbr.rel (0) target = $region21
  $region20: #{_lambda_.162} parent=0 // pred_region
    _
  $region21: #{_lambda_.162} parent=0 // pred_fallthru
    _
  // Predicated region
  $region22: #{_lambda_.162} parent=0 // pred_check
    _
  $region23: #{_lambda_.162} parent=0 // pred_check_branch
    %118 = sbr.rel (0) target = $region25
  $region24: #{_lambda_.162} parent=0 // pred_region
    _
  $region25: #{_lambda_.162} parent=0 // pred_fallthru
    _

// kernel: _lambda_.117
$region0: #{_lambda_.117}
  #allocation0 [shape = 'u32[]', space=smem, size = 0x4, offset = 0x4, fixed_abs, tag = 'smem constant byte address 0x4 - core index']
  #allocation1 [shape = 'u32[144,128]{1,0:T(1,128)}', space=vmem, size = 0x12000, scoped, tag = 'internal scratch']
  %s0 = inlined_call_operand.vmem [shape: bf16[5,16,16], index: 0, kind: input, shape index: {}]
  %s1 = inlined_call_operand.vmem [shape: bf16[5,16,8], index: 1, kind: input, shape index: {}]
  %s2 = inlined_call_operand.vmem [shape: f32[1,8], index: 2, kind: input, shape index: {}]
  %s3 = inlined_call_operand.vmem [shape: f32[1,8], index: 3, kind: input, shape index: {}]
  %s4 = inlined_call_operand.vmem [shape: bf16[16,8], index: 4, kind: output, shape index: {}]
  %s5 = sld [smem:[#allocation0]]
  $region26: #{_lambda_.117} parent=0
    _
  %s7 = ssub.s32 1, %s5
  %s8 = scalar_select 0, %s7, %s5
  // Predicated region
  $region2: #{_lambda_.117} parent=0 // pred_check
    _
  $region3: #{_lambda_.117} parent=0 // pred_check_branch
    %10 = sbr.rel (0) target = $region5
  $region4: #{_lambda_.117} parent=0 // pred_region
    _
  $region5: #{_lambda_.117} parent=0 // pred_fallthru
    _
  // Predicated region
  $region6: #{_lambda_.117} parent=0 // pred_check
    _
  $region7: #{_lambda_.117} parent=0 // pred_check_branch
    %12 = sbr.rel (0) target = $region9
  $region8: #{_lambda_.117} parent=0 // pred_region
    _
  $region9: #{_lambda_.117} parent=0 // pred_fallthru
    _
  // Predicated region
  $region10: #{_lambda_.117} parent=0 // pred_check
    _
  $region11: #{_lambda_.117} parent=0 // pred_check_branch
    %14 = sbr.rel (0) target = $region13
  $region12: #{_lambda_.117} parent=0 // pred_region
    _
  $region13: #{_lambda_.117} parent=0 // pred_fallthru
    _
  // Predicated region
  $region14: #{_lambda_.117} parent=0 // pred_check
    _
  $region15: #{_lambda_.117} parent=0 // pred_check_branch
    %16 = sbr.rel (0) target = $region17
  $region16: #{_lambda_.117} parent=0 // pred_region
    _
  $region17: #{_lambda_.117} parent=0 // pred_fallthru
    _
  %v18 = vld [vmem:[%s0] sm:$0xf]
  %v19 = vld [vmem:[%s0 + $0x4] sm:$0xf]
  %v20 = vld [vmem:[%s1] sm:$0xf]
  %v21 = vld [vmem:[%s1 + $0x4] sm:$0xf]
  %s22 = scalar_lea.vmem %s0, 8
  %v23 = vld [vmem:[%s22] sm:$0xf]
  %v24 = vld [vmem:[%s22 + $0x4] sm:$0xf]
  %s25 = scalar_lea.vmem %s1, 8
  %v26 = vld [vmem:[%s25] sm:$0xf]
  %v27 = vld [vmem:[%s25 + $0x4] sm:$0xf]
  %v30 = vunpack.c.l.b16 %v23
  %v31 = vunpack.c.l.b16 %v24
  %v32 = vpack.c.b16 %v31, %v30
  %v35 = vunpack.c.l.b16 %v26
  %v36 = vunpack.c.l.b16 %v27
  %v37 = vpack.c.b16 %v36, %v35
  %vm39 = vcmask 130048
  %v41 = vsel %vm39, %v32, 0
  %43 = vmatprep.subr.bf16.mxu0 0
  %44 = vmatpush1.bf16.msra.mxu0 %v37
  %45 = vmatprep.subr.bf16.mxu0 0
  %46 = vmatpush1.bf16.msra.mxu0 0
  %47 = vmatprep.subr.bf16.mxu0 0
  %48 = vmatpush1.bf16.msra.mxu0 0
  %49 = vmatprep.subr.bf16.mxu0 0
  %50 = vmatpush1.bf16.msra.mxu0 0
  %51 = vmatprep.subr.bf16.mxu0 0
  %52 = vmatpush1.bf16.msra.mxu0 0
  %53 = vmatprep.subr.bf16.mxu0 0
  %54 = vmatpush1.bf16.msra.mxu0 0
  %55 = vmatprep.subr.bf16.mxu0 0
  %56 = vmatpush1.bf16.msra.mxu0 0
  %57 = vmatprep.subr.bf16.mxu0 0
  %58 = vmatpush1.bf16.msra.mxu0 0
  %59 = vmatprep.subr.bf16.mxu0 0
  %60 = vmatpush1.bf16.msra.mxu0 0
  %61 = vmatprep.subr.bf16.mxu0 0
  %62 = vmatpush1.bf16.msra.mxu0 0
  %63 = vmatprep.subr.bf16.mxu0 0
  %64 = vmatpush1.bf16.msra.mxu0 0
  %65 = vmatprep.subr.bf16.mxu0 0
  %66 = vmatpush1.bf16.msra.mxu0 0
  %67 = vmatprep.subr.bf16.mxu0 0
  %68 = vmatpush1.bf16.msra.mxu0 0
  %69 = vmatprep.subr.bf16.mxu0 0
  %70 = vmatpush1.bf16.msra.mxu0 0
  %71 = vmatprep.subr.bf16.mxu0 0
  %72 = vmatpush1.bf16.msra.mxu0 0
  %73 = vmatprep.subr.bf16.mxu0 0
  %74 = vmatpush1.bf16.msra.mxu0 0
  %75 = vmatprep.mubr.bf16.mxu0 0
  %76 = vmatmul.mubr.bf16.gmra.mrb[0].mxu0 %v41
  %v77 = vpop.f32.mrb[0].mxu0
  %v78 = vadd.f32 0.0, %v77
  %v79 = vpop.f32.mrb[0].mxu0
  %v80 = vpop.f32.mrb[0].mxu0
  %v81 = vadd.f32 0.0, %v80
  %v82 = vpop.f32.mrb[0].mxu0
  %83 = vdwg.mxu0
  %v86 = vunpack.c.l.b16 %v18
  %v87 = vunpack.c.l.b16 %v19
  %v88 = vpack.c.b16 %v87, %v86
  %v91 = vunpack.c.l.b16 %v20
  %v92 = vunpack.c.l.b16 %v21
  %v93 = vpack.c.b16 %v92, %v91
  %v96 = vsel %vm39, %v88, 0
  %98 = vmatprep.subr.bf16.mxu0 0
  %99 = vmatpush1.bf16.msra.mxu0 %v93
  %100 = vmatprep.subr.bf16.mxu0 0
  %101 = vmatpush1.bf16.msra.mxu0 0
  %102 = vmatprep.subr.bf16.mxu0 0
  %103 = vmatpush1.bf16.msra.mxu0 0
  %104 = vmatprep.subr.bf16.mxu0 0
  %105 = vmatpush1.bf16.msra.mxu0 0
  %106 = vmatprep.subr.bf16.mxu0 0
  %107 = vmatpush1.bf16.msra.mxu0 0
  %108 = vmatprep.subr.bf16.mxu0 0
  %109 = vmatpush1.bf16.msra.mxu0 0
  %110 = vmatprep.subr.bf16.mxu0 0
  %111 = vmatpush1.bf16.msra.mxu0 0
  %112 = vmatprep.subr.bf16.mxu0 0
  %113 = vmatpush1.bf16.msra.mxu0 0
  %114 = vmatprep.subr.bf16.mxu0 0
  %115 = vmatpush1.bf16.msra.mxu0 0
  %116 = vmatprep.subr.bf16.mxu0 0
  %117 = vmatpush1.bf16.msra.mxu0 0
  %118 = vmatprep.subr.bf16.mxu0 0
  %119 = vmatpush1.bf16.msra.mxu0 0
  %120 = vmatprep.subr.bf16.mxu0 0
  %121 = vmatpush1.bf16.msra.mxu0 0
  %122 = vmatprep.subr.bf16.mxu0 0
  %123 = vmatpush1.bf16.msra.mxu0 0
  %124 = vmatprep.subr.bf16.mxu0 0
  %125 = vmatpush1.bf16.msra.mxu0 0
  %126 = vmatprep.subr.bf16.mxu0 0
  %127 = vmatpush1.bf16.msra.mxu0 0
  %128 = vmatprep.subr.bf16.mxu0 0
  %129 = vmatpush1.bf16.msra.mxu0 0
  %130 = vmatprep.mubr.bf16.mxu0 0
  %131 = vmatmul.mubr.bf16.gmra.mrb[0].mxu0 %v96
  %v132 = vpop.f32.mrb[0].mxu0
  %v133 = vadd.f32 %v78, %v132
  %v134 = vpop.f32.mrb[0].mxu0
  %v135 = vpop.f32.mrb[0].mxu0
  %v136 = vadd.f32 %v81, %v135
  %v137 = vpop.f32.mrb[0].mxu0
  %138 = vdwg.mxu0
  %s139 = scalar_lea.vmem %s0, 16
  %v140 = vld [vmem:[%s139] sm:$0xf]
  %v141 = vld [vmem:[%s139 + $0x4] sm:$0xf]
  %s142 = scalar_lea.vmem %s1, 16
  %v143 = vld [vmem:[%s142] sm:$0xf]
  %v144 = vld [vmem:[%s142 + $0x4] sm:$0xf]
  %v147 = vunpack.c.l.b16 %v140
  %v148 = vunpack.c.l.b16 %v141
  %v149 = vpack.c.b16 %v148, %v147
  %v152 = vunpack.c.l.b16 %v143
  %v153 = vunpack.c.l.b16 %v144
  %v154 = vpack.c.b16 %v153, %v152
  %v157 = vsel %vm39, %v149, 0
  %159 = vmatprep.subr.bf16.mxu0 0
  %160 = vmatpush1.bf16.msra.mxu0 %v154
  %161 = vmatprep.subr.bf16.mxu0 0
  %162 = vmatpush1.bf16.msra.mxu0 0
  %163 = vmatprep.subr.bf16.mxu0 0
  %164 = vmatpush1.bf16.msra.mxu0 0
  %165 = vmatprep.subr.bf16.mxu0 0
  %166 = vmatpush1.bf16.msra.mxu0 0
  %167 = vmatprep.subr.bf16.mxu0 0
  %168 = vmatpush1.bf16.msra.mxu0 0
  %169 = vmatprep.subr.bf16.mxu0 0
  %170 = vmatpush1.bf16.msra.mxu0 0
  %171 = vmatprep.subr.bf16.mxu0 0
  %172 = vmatpush1.bf16.msra.mxu0 0
  %173 = vmatprep.subr.bf16.mxu0 0
  %174 = vmatpush1.bf16.msra.mxu0 0
  %175 = vmatprep.subr.bf16.mxu0 0
  %176 = vmatpush1.bf16.msra.mxu0 0
  %177 = vmatprep.subr.bf16.mxu0 0
  %178 = vmatpush1.bf16.msra.mxu0 0
  %179 = vmatprep.subr.bf16.mxu0 0
  %180 = vmatpush1.bf16.msra.mxu0 0
  %181 = vmatprep.subr.bf16.mxu0 0
  %182 = vmatpush1.bf16.msra.mxu0 0
  %183 = vmatprep.subr.bf16.mxu0 0
  %184 = vmatpush1.bf16.msra.mxu0 0
  %185 = vmatprep.subr.bf16.mxu0 0
  %186 = vmatpush1.bf16.msra.mxu0 0
  %187 = vmatprep.subr.bf16.mxu0 0
  %188 = vmatpush1.bf16.msra.mxu0 0
  %189 = vmatprep.subr.bf16.mxu0 0
  %190 = vmatpush1.bf16.msra.mxu0 0
  %191 = vmatprep.mubr.bf16.mxu0 0
  %192 = vmatmul.mubr.bf16.gmra.mrb[0].mxu0 %v157
  %v193 = vpop.f32.mrb[0].mxu0
  %v194 = vadd.f32 0.0, %v193
  %v195 = vpop.f32.mrb[0].mxu0
  %v196 = vpop.f32.mrb[0].mxu0
  %v197 = vadd.f32 0.0, %v196
  %v198 = vpop.f32.mrb[0].mxu0
  %199 = vdwg.mxu0
  %v200 = vadd.f32 %v133, %v194
  %v201 = vadd.f32 %v136, %v197
  %s202 = scalar_lea.vmem %s0, 24
  %v203 = vld [vmem:[%s202] sm:$0xf]
  %v204 = vld [vmem:[%s202 + $0x4] sm:$0xf]
  %s205 = scalar_lea.vmem %s1, 24
  %v206 = vld [vmem:[%s205] sm:$0xf]
  %v207 = vld [vmem:[%s205 + $0x4] sm:$0xf]
  %v210 = vunpack.c.l.b16 %v203
  %v211 = vunpack.c.l.b16 %v204
  %v212 = vpack.c.b16 %v211, %v210
  %v215 = vunpack.c.l.b16 %v206
  %v216 = vunpack.c.l.b16 %v207
  %v217 = vpack.c.b16 %v216, %v215
  %v220 = vsel %vm39, %v212, 0
  %222 = vmatprep.subr.bf16.mxu0 0
  %223 = vmatpush1.bf16.msra.mxu0 %v217
  %224 = vmatprep.subr.bf16.mxu0 0
  %225 = vmatpush1.bf16.msra.mxu0 0
  %226 = vmatprep.subr.bf16.mxu0 0
  %227 = vmatpush1.bf16.msra.mxu0 0
  %228 = vmatprep.subr.bf16.mxu0 0
  %229 = vmatpush1.bf16.msra.mxu0 0
  %230 = vmatprep.subr.bf16.mxu0 0
  %231 = vmatpush1.bf16.msra.mxu0 0
  %232 = vmatprep.subr.bf16.mxu0 0
  %233 = vmatpush1.bf16.msra.mxu0 0
  %234 = vmatprep.subr.bf16.mxu0 0
  %235 = vmatpush1.bf16.msra.mxu0 0
  %236 = vmatprep.subr.bf16.mxu0 0
  %237 = vmatpush1.bf16.msra.mxu0 0
  %238 = vmatprep.subr.bf16.mxu0 0
  %239 = vmatpush1.bf16.msra.mxu0 0
  %240 = vmatprep.subr.bf16.mxu0 0
  %241 = vmatpush1.bf16.msra.mxu0 0
  %242 = vmatprep.subr.bf16.mxu0 0
  %243 = vmatpush1.bf16.msra.mxu0 0
  %244 = vmatprep.subr.bf16.mxu0 0
  %245 = vmatpush1.bf16.msra.mxu0 0
  %246 = vmatprep.subr.bf16.mxu0 0
  %247 = vmatpush1.bf16.msra.mxu0 0
  %248 = vmatprep.subr.bf16.mxu0 0
  %249 = vmatpush1.bf16.msra.mxu0 0
  %250 = vmatprep.subr.bf16.mxu0 0
  %251 = vmatpush1.bf16.msra.mxu0 0
  %252 = vmatprep.subr.bf16.mxu0 0
  %253 = vmatpush1.bf16.msra.mxu0 0
  %254 = vmatprep.mubr.bf16.mxu0 0
  %255 = vmatmul.mubr.bf16.gmra.mrb[0].mxu0 %v220
  %v256 = vpop.f32.mrb[0].mxu0
  %v257 = vadd.f32 0.0, %v256
  %v258 = vpop.f32.mrb[0].mxu0
  %v259 = vpop.f32.mrb[0].mxu0
  %v260 = vadd.f32 0.0, %v259
  %v261 = vpop.f32.mrb[0].mxu0
  %262 = vdwg.mxu0
  %v263 = vadd.f32 %v200, %v257
  %v264 = vadd.f32 %v201, %v260
  %s265 = scalar_lea.vmem %s0, 32
  %v266 = vld [vmem:[%s265] sm:$0xf]
  %v267 = vld [vmem:[%s265 + $0x4] sm:$0xf]
  %s268 = scalar_lea.vmem %s1, 32
  %v269 = vld [vmem:[%s268] sm:$0xf]
  %v270 = vld [vmem:[%s268 + $0x4] sm:$0xf]
  %v273 = vunpack.c.l.b16 %v266
  %v274 = vunpack.c.l.b16 %v267
  %v275 = vpack.c.b16 %v274, %v273
  %v278 = vunpack.c.l.b16 %v269
  %v279 = vunpack.c.l.b16 %v270
  %v280 = vpack.c.b16 %v279, %v278
  %v283 = vsel %vm39, %v275, 0
  %285 = vmatprep.subr.bf16.mxu0 0
  %286 = vmatpush1.bf16.msra.mxu0 %v280
  %287 = vmatprep.subr.bf16.mxu0 0
  %288 = vmatpush1.bf16.msra.mxu0 0
  %289 = vmatprep.subr.bf16.mxu0 0
  %290 = vmatpush1.bf16.msra.mxu0 0
  %291 = vmatprep.subr.bf16.mxu0 0
  %292 = vmatpush1.bf16.msra.mxu0 0
  %293 = vmatprep.subr.bf16.mxu0 0
  %294 = vmatpush1.bf16.msra.mxu0 0
  %295 = vmatprep.subr.bf16.mxu0 0
  %296 = vmatpush1.bf16.msra.mxu0 0
  %297 = vmatprep.subr.bf16.mxu0 0
  %298 = vmatpush1.bf16.msra.mxu0 0
  %299 = vmatprep.subr.bf16.mxu0 0
  %300 = vmatpush1.bf16.msra.mxu0 0
  %301 = vmatprep.subr.bf16.mxu0 0
  %302 = vmatpush1.bf16.msra.mxu0 0
  %303 = vmatprep.subr.bf16.mxu0 0
  %304 = vmatpush1.bf16.msra.mxu0 0
  %305 = vmatprep.subr.bf16.mxu0 0
  %306 = vmatpush1.bf16.msra.mxu0 0
  %307 = vmatprep.subr.bf16.mxu0 0
  %308 = vmatpush1.bf16.msra.mxu0 0
  %309 = vmatprep.subr.bf16.mxu0 0
  %310 = vmatpush1.bf16.msra.mxu0 0
  %311 = vmatprep.subr.bf16.mxu0 0
  %312 = vmatpush1.bf16.msra.mxu0 0
  %313 = vmatprep.subr.bf16.mxu0 0
  %314 = vmatpush1.bf16.msra.mxu0 0
  %315 = vmatprep.subr.bf16.mxu0 0
  %316 = vmatpush1.bf16.msra.mxu0 0
  %317 = vmatprep.mubr.bf16.mxu0 0
  %318 = vmatmul.mubr.bf16.gmra.mrb[0].mxu0 %v283
  %v319 = vpop.f32.mrb[0].mxu0
  %v320 = vadd.f32 0.0, %v319
  %v321 = vpop.f32.mrb[0].mxu0
  %v322 = vpop.f32.mrb[0].mxu0
  %v323 = vadd.f32 0.0, %v322
  %v324 = vpop.f32.mrb[0].mxu0
  %325 = vdwg.mxu0
  %v326 = vadd.f32 %v263, %v320
  %v327 = vadd.f32 %v264, %v323
  %v328 = vld [vmem:[%s2] sm:$0x1]
  %v330 = vlaneseq
  %v331 = vshrl.u32 %v330, 7
  %v332 = vsub.s32 0, %v331
  %v333 = vrot.slane %v328, %v332
  %v335 = vmul.f32 %v326, %v333
  %v336 = vmul.f32 %v327, %v333
  %v337 = vld [vmem:[%s3] sm:$0x1]
  %v339 = vlaneseq
  %v340 = vshrl.u32 %v339, 7
  %v341 = vsub.s32 0, %v340
  %v342 = vrot.slane %v337, %v341
  %v344 = vadd.f32 %v335, %v342
  %v345 = vadd.f32 %v336, %v342
  %v346 = vpack.c.bf16 %v345, %v344
  %v348 = vunpack.c.l.b16 %v346
  %v349 = vunpack.c.h.b16 %v346
  %v350 = vpack.c.b16 %v348, %v348
  %v351 = vpack.c.b16 %v349, %v349
  %vm354 = vcmask 60416
  %355 = vst.msk [vmem:[%s4] sm:$0xf] %vm354, %v350
  %356 = vst.msk [vmem:[%s4 + $0x4] sm:$0xf] %vm354, %v351
  // Predicated region
  $region18: #{_lambda_.117} parent=0 // pred_check
    _
  $region19: #{_lambda_.117} parent=0 // pred_check_branch
    %358 = sbr.rel (0) target = $region21
  $region20: #{_lambda_.117} parent=0 // pred_region
    _
  $region21: #{_lambda_.117} parent=0 // pred_fallthru
    _
  // Predicated region
  $region22: #{_lambda_.117} parent=0 // pred_check
    _
  $region23: #{_lambda_.117} parent=0 // pred_check_branch
    %360 = sbr.rel (0) target = $region25
  $region24: #{_lambda_.117} parent=0 // pred_region
    _
  $region25: #{_lambda_.117} parent=0 // pred_fallthru
    _

// kernel: _lambda_.118
$region0: #{_lambda_.118}
  #allocation0 [shape = 'u32[]', space=smem, size = 0x4, offset = 0x4, fixed_abs, tag = 'smem constant byte address 0x4 - core index']
  #allocation1 [shape = 'u32[144,128]{1,0:T(1,128)}', space=vmem, size = 0x12000, scoped, tag = 'internal scratch']
  %s0 = inlined_call_operand.vmem [shape: bf16[5,16,16], index: 0, kind: input, shape index: {}]
  %s1 = inlined_call_operand.vmem [shape: bf16[5,16,8], index: 1, kind: input, shape index: {}]
  %s2 = inlined_call_operand.vmem [shape: f32[1,8], index: 2, kind: input, shape index: {}]
  %s3 = inlined_call_operand.vmem [shape: f32[1,8], index: 3, kind: input, shape index: {}]
  %s4 = inlined_call_operand.vmem [shape: f32[1,8], index: 4, kind: input, shape index: {}]
  %s5 = inlined_call_operand.vmem [shape: bf16[16,8], index: 5, kind: output, shape index: {}]
  %s6 = sld [smem:[#allocation0]]
  $region30: #{_lambda_.118} parent=0
    _
  %s8 = ssub.s32 1, %s6
  %s9 = scalar_select 0, %s8, %s6
  // Predicated region
  $region2: #{_lambda_.118} parent=0 // pred_check
    _
  $region3: #{_lambda_.118} parent=0 // pred_check_branch
    %11 = sbr.rel (0) target = $region5
  $region4: #{_lambda_.118} parent=0 // pred_region
    _
  $region5: #{_lambda_.118} parent=0 // pred_fallthru
    _
  // Predicated region
  $region6: #{_lambda_.118} parent=0 // pred_check
    _
  $region7: #{_lambda_.118} parent=0 // pred_check_branch
    %13 = sbr.rel (0) target = $region9
  $region8: #{_lambda_.118} parent=0 // pred_region
    _
  $region9: #{_lambda_.118} parent=0 // pred_fallthru
    _
  // Predicated region
  $region10: #{_lambda_.118} parent=0 // pred_check
    _
  $region11: #{_lambda_.118} parent=0 // pred_check_branch
    %15 = sbr.rel (0) target = $region13
  $region12: #{_lambda_.118} parent=0 // pred_region
    _
  $region13: #{_lambda_.118} parent=0 // pred_fallthru
    _
  // Predicated region
  $region14: #{_lambda_.118} parent=0 // pred_check
    _
  $region15: #{_lambda_.118} parent=0 // pred_check_branch
    %17 = sbr.rel (0) target = $region17
  $region16: #{_lambda_.118} parent=0 // pred_region
    _
  $region17: #{_lambda_.118} parent=0 // pred_fallthru
    _
  // Predicated region
  $region18: #{_lambda_.118} parent=0 // pred_check
    _
  $region19: #{_lambda_.118} parent=0 // pred_check_branch
    %19 = sbr.rel (0) target = $region21
  $region20: #{_lambda_.118} parent=0 // pred_region
    _
  $region21: #{_lambda_.118} parent=0 // pred_fallthru
    _
  %v21 = vld [vmem:[%s0] sm:$0xf]
  %v22 = vld [vmem:[%s0 + $0x4] sm:$0xf]
  %v23 = vld [vmem:[%s1] sm:$0xf]
  %v24 = vld [vmem:[%s1 + $0x4] sm:$0xf]
  %s25 = scalar_lea.vmem %s0, 8
  %v26 = vld [vmem:[%s25] sm:$0xf]
  %v27 = vld [vmem:[%s25 + $0x4] sm:$0xf]
  %s28 = scalar_lea.vmem %s1, 8
  %v29 = vld [vmem:[%s28] sm:$0xf]
  %v30 = vld [vmem:[%s28 + $0x4] sm:$0xf]
  %v33 = vunpack.c.l.b16 %v26
  %v34 = vunpack.c.l.b16 %v27
  %v35 = vpack.c.b16 %v34, %v33
  %v38 = vunpack.c.l.b16 %v29
  %v39 = vunpack.c.l.b16 %v30
  %v40 = vpack.c.b16 %v39, %v38
  %vm42 = vcmask 130048
  %v44 = vsel %vm42, %v35, 0
  %46 = vmatprep.subr.bf16.mxu0 0
  %47 = vmatpush1.bf16.msra.mxu0 %v40
  %48 = vmatprep.subr.bf16.mxu0 0
  %49 = vmatpush1.bf16.msra.mxu0 0
  %50 = vmatprep.subr.bf16.mxu0 0
  %51 = vmatpush1.bf16.msra.mxu0 0
  %52 = vmatprep.subr.bf16.mxu0 0
  %53 = vmatpush1.bf16.msra.mxu0 0
  %54 = vmatprep.subr.bf16.mxu0 0
  %55 = vmatpush1.bf16.msra.mxu0 0
  %56 = vmatprep.subr.bf16.mxu0 0
  %57 = vmatpush1.bf16.msra.mxu0 0
  %58 = vmatprep.subr.bf16.mxu0 0
  %59 = vmatpush1.bf16.msra.mxu0 0
  %60 = vmatprep.subr.bf16.mxu0 0
  %61 = vmatpush1.bf16.msra.mxu0 0
  %62 = vmatprep.subr.bf16.mxu0 0
  %63 = vmatpush1.bf16.msra.mxu0 0
  %64 = vmatprep.subr.bf16.mxu0 0
  %65 = vmatpush1.bf16.msra.mxu0 0
  %66 = vmatprep.subr.bf16.mxu0 0
  %67 = vmatpush1.bf16.msra.mxu0 0
  %68 = vmatprep.subr.bf16.mxu0 0
  %69 = vmatpush1.bf16.msra.mxu0 0
  %70 = vmatprep.subr.bf16.mxu0 0
  %71 = vmatpush1.bf16.msra.mxu0 0
  %72 = vmatprep.subr.bf16.mxu0 0
  %73 = vmatpush1.bf16.msra.mxu0 0
  %74 = vmatprep.subr.bf16.mxu0 0
  %75 = vmatpush1.bf16.msra.mxu0 0
  %76 = vmatprep.subr.bf16.mxu0 0
  %77 = vmatpush1.bf16.msra.mxu0 0
  %78 = vmatprep.mubr.bf16.mxu0 0
  %79 = vmatmul.mubr.bf16.gmra.mrb[0].mxu0 %v44
  %v80 = vpop.f32.mrb[0].mxu0
  %v81 = vadd.f32 0.0, %v80
  %v82 = vpop.f32.mrb[0].mxu0
  %v83 = vpop.f32.mrb[0].mxu0
  %v84 = vadd.f32 0.0, %v83
  %v85 = vpop.f32.mrb[0].mxu0
  %86 = vdwg.mxu0
  %v89 = vunpack.c.l.b16 %v21
  %v90 = vunpack.c.l.b16 %v22
  %v91 = vpack.c.b16 %v90, %v89
  %v94 = vunpack.c.l.b16 %v23
  %v95 = vunpack.c.l.b16 %v24
  %v96 = vpack.c.b16 %v95, %v94
  %v99 = vsel %vm42, %v91, 0
  %101 = vmatprep.subr.bf16.mxu0 0
  %102 = vmatpush1.bf16.msra.mxu0 %v96
  %103 = vmatprep.subr.bf16.mxu0 0
  %104 = vmatpush1.bf16.msra.mxu0 0
  %105 = vmatprep.subr.bf16.mxu0 0
  %106 = vmatpush1.bf16.msra.mxu0 0
  %107 = vmatprep.subr.bf16.mxu0 0
  %108 = vmatpush1.bf16.msra.mxu0 0
  %109 = vmatprep.subr.bf16.mxu0 0
  %110 = vmatpush1.bf16.msra.mxu0 0
  %111 = vmatprep.subr.bf16.mxu0 0
  %112 = vmatpush1.bf16.msra.mxu0 0
  %113 = vmatprep.subr.bf16.mxu0 0
  %114 = vmatpush1.bf16.msra.mxu0 0
  %115 = vmatprep.subr.bf16.mxu0 0
  %116 = vmatpush1.bf16.msra.mxu0 0
  %117 = vmatprep.subr.bf16.mxu0 0
  %118 = vmatpush1.bf16.msra.mxu0 0
  %119 = vmatprep.subr.bf16.mxu0 0
  %120 = vmatpush1.bf16.msra.mxu0 0
  %121 = vmatprep.subr.bf16.mxu0 0
  %122 = vmatpush1.bf16.msra.mxu0 0
  %123 = vmatprep.subr.bf16.mxu0 0
  %124 = vmatpush1.bf16.msra.mxu0 0
  %125 = vmatprep.subr.bf16.mxu0 0
  %126 = vmatpush1.bf16.msra.mxu0 0
  %127 = vmatprep.subr.bf16.mxu0 0
  %128 = vmatpush1.bf16.msra.mxu0 0
  %129 = vmatprep.subr.bf16.mxu0 0
  %130 = vmatpush1.bf16.msra.mxu0 0
  %131 = vmatprep.subr.bf16.mxu0 0
  %132 = vmatpush1.bf16.msra.mxu0 0
  %133 = vmatprep.mubr.bf16.mxu0 0
  %134 = vmatmul.mubr.bf16.gmra.mrb[0].mxu0 %v99
  %v135 = vpop.f32.mrb[0].mxu0
  %v136 = vadd.f32 %v81, %v135
  %v137 = vpop.f32.mrb[0].mxu0
  %v138 = vpop.f32.mrb[0].mxu0
  %v139 = vadd.f32 %v84, %v138
  %v140 = vpop.f32.mrb[0].mxu0
  %141 = vdwg.mxu0
  %s142 = scalar_lea.vmem %s0, 16
  %v143 = vld [vmem:[%s142] sm:$0xf]
  %v144 = vld [vmem:[%s142 + $0x4] sm:$0xf]
  %s145 = scalar_lea.vmem %s1, 16
  %v146 = vld [vmem:[%s145] sm:$0xf]
  %v147 = vld [vmem:[%s145 + $0x4] sm:$0xf]
  %v150 = vunpack.c.l.b16 %v143
  %v151 = vunpack.c.l.b16 %v144
  %v152 = vpack.c.b16 %v151, %v150
  %v155 = vunpack.c.l.b16 %v146
  %v156 = vunpack.c.l.b16 %v147
  %v157 = vpack.c.b16 %v156, %v155
  %v160 = vsel %vm42, %v152, 0
  %162 = vmatprep.subr.bf16.mxu0 0
  %163 = vmatpush1.bf16.msra.mxu0 %v157
  %164 = vmatprep.subr.bf16.mxu0 0
  %165 = vmatpush1.bf16.msra.mxu0 0
  %166 = vmatprep.subr.bf16.mxu0 0
  %167 = vmatpush1.bf16.msra.mxu0 0
  %168 = vmatprep.subr.bf16.mxu0 0
  %169 = vmatpush1.bf16.msra.mxu0 0
  %170 = vmatprep.subr.bf16.mxu0 0
  %171 = vmatpush1.bf16.msra.mxu0 0
  %172 = vmatprep.subr.bf16.mxu0 0
  %173 = vmatpush1.bf16.msra.mxu0 0
  %174 = vmatprep.subr.bf16.mxu0 0
  %175 = vmatpush1.bf16.msra.mxu0 0
  %176 = vmatprep.subr.bf16.mxu0 0
  %177 = vmatpush1.bf16.msra.mxu0 0
  %178 = vmatprep.subr.bf16.mxu0 0
  %179 = vmatpush1.bf16.msra.mxu0 0
  %180 = vmatprep.subr.bf16.mxu0 0
  %181 = vmatpush1.bf16.msra.mxu0 0
  %182 = vmatprep.subr.bf16.mxu0 0
  %183 = vmatpush1.bf16.msra.mxu0 0
  %184 = vmatprep.subr.bf16.mxu0 0
  %185 = vmatpush1.bf16.msra.mxu0 0
  %186 = vmatprep.subr.bf16.mxu0 0
  %187 = vmatpush1.bf16.msra.mxu0 0
  %188 = vmatprep.subr.bf16.mxu0 0
  %189 = vmatpush1.bf16.msra.mxu0 0
  %190 = vmatprep.subr.bf16.mxu0 0
  %191 = vmatpush1.bf16.msra.mxu0 0
  %192 = vmatprep.subr.bf16.mxu0 0
  %193 = vmatpush1.bf16.msra.mxu0 0
  %194 = vmatprep.mubr.bf16.mxu0 0
  %195 = vmatmul.mubr.bf16.gmra.mrb[0].mxu0 %v160
  %v196 = vpop.f32.mrb[0].mxu0
  %v197 = vadd.f32 0.0, %v196
  %v198 = vpop.f32.mrb[0].mxu0
  %v199 = vpop.f32.mrb[0].mxu0
  %v200 = vadd.f32 0.0, %v199
  %v201 = vpop.f32.mrb[0].mxu0
  %202 = vdwg.mxu0
  %v203 = vadd.f32 %v136, %v197
  %v204 = vadd.f32 %v139, %v200
  %s205 = scalar_lea.vmem %s0, 24
  %v206 = vld [vmem:[%s205] sm:$0xf]
  %v207 = vld [vmem:[%s205 + $0x4] sm:$0xf]
  %s208 = scalar_lea.vmem %s1, 24
  %v209 = vld [vmem:[%s208] sm:$0xf]
  %v210 = vld [vmem:[%s208 + $0x4] sm:$0xf]
  %v213 = vunpack.c.l.b16 %v206
  %v214 = vunpack.c.l.b16 %v207
  %v215 = vpack.c.b16 %v214, %v213
  %v218 = vunpack.c.l.b16 %v209
  %v219 = vunpack.c.l.b16 %v210
  %v220 = vpack.c.b16 %v219, %v218
  %v223 = vsel %vm42, %v215, 0
  %225 = vmatprep.subr.bf16.mxu0 0
  %226 = vmatpush1.bf16.msra.mxu0 %v220
  %227 = vmatprep.subr.bf16.mxu0 0
  %228 = vmatpush1.bf16.msra.mxu0 0
  %229 = vmatprep.subr.bf16.mxu0 0
  %230 = vmatpush1.bf16.msra.mxu0 0
  %231 = vmatprep.subr.bf16.mxu0 0
  %232 = vmatpush1.bf16.msra.mxu0 0
  %233 = vmatprep.subr.bf16.mxu0 0
  %234 = vmatpush1.bf16.msra.mxu0 0
  %235 = vmatprep.subr.bf16.mxu0 0
  %236 = vmatpush1.bf16.msra.mxu0 0
  %237 = vmatprep.subr.bf16.mxu0 0
  %238 = vmatpush1.bf16.msra.mxu0 0
  %239 = vmatprep.subr.bf16.mxu0 0
  %240 = vmatpush1.bf16.msra.mxu0 0
  %241 = vmatprep.subr.bf16.mxu0 0
  %242 = vmatpush1.bf16.msra.mxu0 0
  %243 = vmatprep.subr.bf16.mxu0 0
  %244 = vmatpush1.bf16.msra.mxu0 0
  %245 = vmatprep.subr.bf16.mxu0 0
  %246 = vmatpush1.bf16.msra.mxu0 0
  %247 = vmatprep.subr.bf16.mxu0 0
  %248 = vmatpush1.bf16.msra.mxu0 0
  %249 = vmatprep.subr.bf16.mxu0 0
  %250 = vmatpush1.bf16.msra.mxu0 0
  %251 = vmatprep.subr.bf16.mxu0 0
  %252 = vmatpush1.bf16.msra.mxu0 0
  %253 = vmatprep.subr.bf16.mxu0 0
  %254 = vmatpush1.bf16.msra.mxu0 0
  %255 = vmatprep.subr.bf16.mxu0 0
  %256 = vmatpush1.bf16.msra.mxu0 0
  %257 = vmatprep.mubr.bf16.mxu0 0
  %258 = vmatmul.mubr.bf16.gmra.mrb[0].mxu0 %v223
  %v259 = vpop.f32.mrb[0].mxu0
  %v260 = vadd.f32 0.0, %v259
  %v261 = vpop.f32.mrb[0].mxu0
  %v262 = vpop.f32.mrb[0].mxu0
  %v263 = vadd.f32 0.0, %v262
  %v264 = vpop.f32.mrb[0].mxu0
  %265 = vdwg.mxu0
  %v266 = vadd.f32 %v203, %v260
  %v267 = vadd.f32 %v204, %v263
  %s268 = scalar_lea.vmem %s0, 32
  %v269 = vld [vmem:[%s268] sm:$0xf]
  %v270 = vld [vmem:[%s268 + $0x4] sm:$0xf]
  %s271 = scalar_lea.vmem %s1, 32
  %v272 = vld [vmem:[%s271] sm:$0xf]
  %v273 = vld [vmem:[%s271 + $0x4] sm:$0xf]
  %v276 = vunpack.c.l.b16 %v269
  %v277 = vunpack.c.l.b16 %v270
  %v278 = vpack.c.b16 %v277, %v276
  %v281 = vunpack.c.l.b16 %v272
  %v282 = vunpack.c.l.b16 %v273
  %v283 = vpack.c.b16 %v282, %v281
  %v286 = vsel %vm42, %v278, 0
  %288 = vmatprep.subr.bf16.mxu0 0
  %289 = vmatpush1.bf16.msra.mxu0 %v283
  %290 = vmatprep.subr.bf16.mxu0 0
  %291 = vmatpush1.bf16.msra.mxu0 0
  %292 = vmatprep.subr.bf16.mxu0 0
  %293 = vmatpush1.bf16.msra.mxu0 0
  %294 = vmatprep.subr.bf16.mxu0 0
  %295 = vmatpush1.bf16.msra.mxu0 0
  %296 = vmatprep.subr.bf16.mxu0 0
  %297 = vmatpush1.bf16.msra.mxu0 0
  %298 = vmatprep.subr.bf16.mxu0 0
  %299 = vmatpush1.bf16.msra.mxu0 0
  %300 = vmatprep.subr.bf16.mxu0 0
  %301 = vmatpush1.bf16.msra.mxu0 0
  %302 = vmatprep.subr.bf16.mxu0 0
  %303 = vmatpush1.bf16.msra.mxu0 0
  %304 = vmatprep.subr.bf16.mxu0 0
  %305 = vmatpush1.bf16.msra.mxu0 0
  %306 = vmatprep.subr.bf16.mxu0 0
  %307 = vmatpush1.bf16.msra.mxu0 0
  %308 = vmatprep.subr.bf16.mxu0 0
  %309 = vmatpush1.bf16.msra.mxu0 0
  %310 = vmatprep.subr.bf16.mxu0 0
  %311 = vmatpush1.bf16.msra.mxu0 0
  %312 = vmatprep.subr.bf16.mxu0 0
  %313 = vmatpush1.bf16.msra.mxu0 0
  %314 = vmatprep.subr.bf16.mxu0 0
  %315 = vmatpush1.bf16.msra.mxu0 0
  %316 = vmatprep.subr.bf16.mxu0 0
  %317 = vmatpush1.bf16.msra.mxu0 0
  %318 = vmatprep.subr.bf16.mxu0 0
  %319 = vmatpush1.bf16.msra.mxu0 0
  %320 = vmatprep.mubr.bf16.mxu0 0
  %321 = vmatmul.mubr.bf16.gmra.mrb[0].mxu0 %v286
  %v322 = vpop.f32.mrb[0].mxu0
  %v323 = vadd.f32 0.0, %v322
  %v324 = vpop.f32.mrb[0].mxu0
  %v325 = vpop.f32.mrb[0].mxu0
  %v326 = vadd.f32 0.0, %v325
  %v327 = vpop.f32.mrb[0].mxu0
  %328 = vdwg.mxu0
  %v329 = vadd.f32 %v266, %v323
  %v330 = vadd.f32 %v267, %v326
  %v331 = vld [vmem:[%s2] sm:$0x1]
  %v333 = vlaneseq
  %v334 = vshrl.u32 %v333, 7
  %v335 = vsub.s32 0, %v334
  %v336 = vrot.slane %v331, %v335
  %v338 = vmul.f32 %v329, %v336
  %v339 = vmul.f32 %v330, %v336
  %v340 = vld [vmem:[%s3] sm:$0x1]
  %v342 = vlaneseq
  %v343 = vshrl.u32 %v342, 7
  %v344 = vsub.s32 0, %v343
  %v345 = vrot.slane %v340, %v344
  %v347 = vadd.f32 %v338, %v345
  %v348 = vadd.f32 %v339, %v345
  %vm349 = vcmp.ge.f32.partialorder %v347, 0.0
  %vm350 = vcmp.ge.f32.partialorder %v348, 0.0
  %v351 = vld [vmem:[%s4] sm:$0x1]
  %v353 = vlaneseq
  %v354 = vshrl.u32 %v353, 7
  %v355 = vsub.s32 0, %v354
  %v356 = vrot.slane %v351, %v355
  %v358 = vmul.f32 %v347, %v356
  %v359 = vmul.f32 %v348, %v356
  %v360 = vsel %vm349, %v347, %v358
  %v361 = vsel %vm350, %v348, %v359
  %v362 = vpack.c.bf16 %v361, %v360
  %v364 = vunpack.c.l.b16 %v362
  %v365 = vunpack.c.h.b16 %v362
  %v366 = vpack.c.b16 %v364, %v364
  %v367 = vpack.c.b16 %v365, %v365
  %vm370 = vcmask 60416
  %371 = vst.msk [vmem:[%s5] sm:$0xf] %vm370, %v366
  %372 = vst.msk [vmem:[%s5 + $0x4] sm:$0xf] %vm370, %v367
  // Predicated region
  $region22: #{_lambda_.118} parent=0 // pred_check
    _
  $region23: #{_lambda_.118} parent=0 // pred_check_branch
    %374 = sbr.rel (0) target = $region25
  $region24: #{_lambda_.118} parent=0 // pred_region
    _
  $region25: #{_lambda_.118} parent=0 // pred_fallthru
    _
  // Predicated region
  $region26: #{_lambda_.118} parent=0 // pred_check
    _
  $region27: #{_lambda_.118} parent=0 // pred_check_branch
    %376 = sbr.rel (0) target = $region29
  $region28: #{_lambda_.118} parent=0 // pred_region
    _
  $region29: #{_lambda_.118} parent=0 // pred_fallthru
    _

// kernel: _lambda_.163
$region0: #{_lambda_.163}
  #allocation0 [shape = 'u32[]', space=smem, size = 0x4, offset = 0x4, fixed_abs, tag = 'smem constant byte address 0x4 - core index']
  #allocation1 [shape = 'u32[144,128]{1,0:T(1,128)}', space=vmem, size = 0x12000, scoped, tag = 'internal scratch']
  %s0 = inlined_call_operand.vmem [shape: bf16[1,16,32], index: 0, kind: input, shape index: {}]
  %s1 = inlined_call_operand.vmem [shape: bf16[1,32,8], index: 1, kind: input, shape index: {}]
  %s2 = inlined_call_operand.vmem [shape: f32[1,8], index: 2, kind: input, shape index: {}]
  %s3 = inlined_call_operand.vmem [shape: f32[1,8], index: 3, kind: input, shape index: {}]
  %s4 = inlined_call_operand.vmem [shape: bf16[16,8], index: 4, kind: output, shape index: {}]
  %s5 = sld [smem:[#allocation0]]
  $region26: #{_lambda_.163} parent=0
    _
  %s7 = ssub.s32 1, %s5
  %s8 = scalar_select 0, %s7, %s5
  // Predicated region
  $region2: #{_lambda_.163} parent=0 // pred_check
    _
  $region3: #{_lambda_.163} parent=0 // pred_check_branch
    %10 = sbr.rel (0) target = $region5
  $region4: #{_lambda_.163} parent=0 // pred_region
    _
  $region5: #{_lambda_.163} parent=0 // pred_fallthru
    _
  // Predicated region
  $region6: #{_lambda_.163} parent=0 // pred_check
    _
  $region7: #{_lambda_.163} parent=0 // pred_check_branch
    %12 = sbr.rel (0) target = $region9
  $region8: #{_lambda_.163} parent=0 // pred_region
    _
  $region9: #{_lambda_.163} parent=0 // pred_fallthru
    _
  // Predicated region
  $region10: #{_lambda_.163} parent=0 // pred_check
    _
  $region11: #{_lambda_.163} parent=0 // pred_check_branch
    %14 = sbr.rel (0) target = $region13
  $region12: #{_lambda_.163} parent=0 // pred_region
    _
  $region13: #{_lambda_.163} parent=0 // pred_fallthru
    _
  // Predicated region
  $region14: #{_lambda_.163} parent=0 // pred_check
    _
  $region15: #{_lambda_.163} parent=0 // pred_check_branch
    %16 = sbr.rel (0) target = $region17
  $region16: #{_lambda_.163} parent=0 // pred_region
    _
  $region17: #{_lambda_.163} parent=0 // pred_fallthru
    _
  %v18 = vld [vmem:[%s0] sm:$0xf]
  %v19 = vld [vmem:[%s0 + $0x4] sm:$0xf]
  %v20 = vld [vmem:[%s1] sm:$0xf]
  %v21 = vld [vmem:[%s1 + $0x4] sm:$0xf]
  %v22 = vld [vmem:[%s1 + $0x8] sm:$0xf]
  %v23 = vld [vmem:[%s1 + $0xc] sm:$0xf]
  %v26 = vunpack.c.l.b16 %v18
  %v27 = vunpack.c.l.b16 %v19
  %v28 = vpack.c.b16 %v27, %v26
  %v33 = vunpack.c.l.b16 %v20
  %v34 = vunpack.c.l.b16 %v21
  %v35 = vunpack.c.l.b16 %v22
  %v36 = vunpack.c.l.b16 %v23
  %v37 = vpack.c.b16 %v34, %v33
  %v38 = vpack.c.b16 %v36, %v35
  %vm41 = vcmask 261120
  %v43 = vsel %vm41, %v28, 0
  %45 = vmatprep.subr.bf16.mxu0 0
  %46 = vmatpush1.bf16.msra.mxu0 %v37
  %47 = vmatprep.subr.bf16.mxu0 0
  %48 = vmatpush1.bf16.msra.mxu0 %v38
  %49 = vmatprep.subr.bf16.mxu0 0
  %50 = vmatpush1.bf16.msra.mxu0 0
  %51 = vmatprep.subr.bf16.mxu0 0
  %52 = vmatpush1.bf16.msra.mxu0 0
  %53 = vmatprep.subr.bf16.mxu0 0
  %54 = vmatpush1.bf16.msra.mxu0 0
  %55 = vmatprep.subr.bf16.mxu0 0
  %56 = vmatpush1.bf16.msra.mxu0 0
  %57 = vmatprep.subr.bf16.mxu0 0
  %58 = vmatpush1.bf16.msra.mxu0 0
  %59 = vmatprep.subr.bf16.mxu0 0
  %60 = vmatpush1.bf16.msra.mxu0 0
  %61 = vmatprep.subr.bf16.mxu0 0
  %62 = vmatpush1.bf16.msra.mxu0 0
  %63 = vmatprep.subr.bf16.mxu0 0
  %64 = vmatpush1.bf16.msra.mxu0 0
  %65 = vmatprep.subr.bf16.mxu0 0
  %66 = vmatpush1.bf16.msra.mxu0 0
  %67 = vmatprep.subr.bf16.mxu0 0
  %68 = vmatpush1.bf16.msra.mxu0 0
  %69 = vmatprep.subr.bf16.mxu0 0
  %70 = vmatpush1.bf16.msra.mxu0 0
  %71 = vmatprep.subr.bf16.mxu0 0
  %72 = vmatpush1.bf16.msra.mxu0 0
  %73 = vmatprep.subr.bf16.mxu0 0
  %74 = vmatpush1.bf16.msra.mxu0 0
  %75 = vmatprep.subr.bf16.mxu0 0
  %76 = vmatpush1.bf16.msra.mxu0 0
  %77 = vmatprep.mubr.bf16.mxu0 0
  %78 = vmatmul.mubr.bf16.gmra.mrb[0].mxu0 %v43
  %v79 = vpop.f32.mrb[0].mxu0
  %v80 = vadd.f32 0.0, %v79
  %v81 = vpop.f32.mrb[0].mxu0
  %v82 = vpop.f32.mrb[0].mxu0
  %v83 = vadd.f32 0.0, %v82
  %v84 = vpop.f32.mrb[0].mxu0
  %85 = vdwg.mxu0
  %v86 = vld [vmem:[%s2] sm:$0x1]
  %v88 = vlaneseq
  %v89 = vshrl.u32 %v88, 7
  %v90 = vsub.s32 0, %v89
  %v91 = vrot.slane %v86, %v90
  %v93 = vmul.f32 %v80, %v91
  %v94 = vmul.f32 %v83, %v91
  %v95 = vld [vmem:[%s3] sm:$0x1]
  %v97 = vlaneseq
  %v98 = vshrl.u32 %v97, 7
  %v99 = vsub.s32 0, %v98
  %v100 = vrot.slane %v95, %v99
  %v102 = vadd.f32 %v93, %v100
  %v103 = vadd.f32 %v94, %v100
  %v104 = vmax.f32 %v102, 0.0
  %v105 = vmax.f32 %v103, 0.0
  %v106 = vpack.c.bf16 %v105, %v104
  %v108 = vunpack.c.l.b16 %v106
  %v109 = vunpack.c.h.b16 %v106
  %v110 = vpack.c.b16 %v108, %v108
  %v111 = vpack.c.b16 %v109, %v109
  %vm114 = vcmask 60416
  %115 = vst.msk [vmem:[%s4] sm:$0xf] %vm114, %v110
  %116 = vst.msk [vmem:[%s4 + $0x4] sm:$0xf] %vm114, %v111
  // Predicated region
  $region18: #{_lambda_.163} parent=0 // pred_check
    _
  $region19: #{_lambda_.163} parent=0 // pred_check_branch
    %118 = sbr.rel (0) target = $region21
  $region20: #{_lambda_.163} parent=0 // pred_region
    _
  $region21: #{_lambda_.163} parent=0 // pred_fallthru
    _
  // Predicated region
  $region22: #{_lambda_.163} parent=0 // pred_check
    _
  $region23: #{_lambda_.163} parent=0 // pred_check_branch
    %120 = sbr.rel (0) target = $region25
  $region24: #{_lambda_.163} parent=0 // pred_region
    _
  $region25: #{_lambda_.163} parent=0 // pred_fallthru
    _

// kernel: _lambda_.164
$region0: #{_lambda_.164}
  #allocation0 [shape = 'u32[]', space=smem, size = 0x4, offset = 0x4, fixed_abs, tag = 'smem constant byte address 0x4 - core index']
  #allocation1 [shape = 'u32[144,128]{1,0:T(1,128)}', space=vmem, size = 0x12000, scoped, tag = 'internal scratch']
  %s0 = inlined_call_operand.vmem [shape: bf16[4,16,16], index: 0, kind: input, shape index: {}]
  %s1 = inlined_call_operand.vmem [shape: bf16[4,16,32], index: 1, kind: input, shape index: {}]
  %s2 = inlined_call_operand.vmem [shape: f32[1,32], index: 2, kind: input, shape index: {}]
  %s3 = inlined_call_operand.vmem [shape: f32[1,32], index: 3, kind: input, shape index: {}]
  %s4 = inlined_call_operand.vmem [shape: bf16[16,32], index: 4, kind: output, shape index: {}]
  %s5 = sld [smem:[#allocation0]]
  $region26: #{_lambda_.164} parent=0
    _
  %s7 = ssub.s32 1, %s5
  %s8 = scalar_select 0, %s7, %s5
  // Predicated region
  $region2: #{_lambda_.164} parent=0 // pred_check
    _
  $region3: #{_lambda_.164} parent=0 // pred_check_branch
    %10 = sbr.rel (0) target = $region5
  $region4: #{_lambda_.164} parent=0 // pred_region
    _
  $region5: #{_lambda_.164} parent=0 // pred_fallthru
    _
  // Predicated region
  $region6: #{_lambda_.164} parent=0 // pred_check
    _
  $region7: #{_lambda_.164} parent=0 // pred_check_branch
    %12 = sbr.rel (0) target = $region9
  $region8: #{_lambda_.164} parent=0 // pred_region
    _
  $region9: #{_lambda_.164} parent=0 // pred_fallthru
    _
  // Predicated region
  $region10: #{_lambda_.164} parent=0 // pred_check
    _
  $region11: #{_lambda_.164} parent=0 // pred_check_branch
    %14 = sbr.rel (0) target = $region13
  $region12: #{_lambda_.164} parent=0 // pred_region
    _
  $region13: #{_lambda_.164} parent=0 // pred_fallthru
    _
  // Predicated region
  $region14: #{_lambda_.164} parent=0 // pred_check
    _
  $region15: #{_lambda_.164} parent=0 // pred_check_branch
    %16 = sbr.rel (0) target = $region17
  $region16: #{_lambda_.164} parent=0 // pred_region
    _
  $region17: #{_lambda_.164} parent=0 // pred_fallthru
    _
  %v18 = vld [vmem:[%s0] sm:$0xf]
  %v19 = vld [vmem:[%s0 + $0x4] sm:$0xf]
  %v20 = vld [vmem:[%s1] sm:$0xf]
  %v21 = vld [vmem:[%s1 + $0x4] sm:$0xf]
  %s22 = scalar_lea.vmem %s0, 8
  %v23 = vld [vmem:[%s22] sm:$0xf]
  %v24 = vld [vmem:[%s22 + $0x4] sm:$0xf]
  %s25 = scalar_lea.vmem %s1, 8
  %v26 = vld [vmem:[%s25] sm:$0xf]
  %v27 = vld [vmem:[%s25 + $0x4] sm:$0xf]
  %v30 = vunpack.c.l.b16 %v23
  %v31 = vunpack.c.l.b16 %v24
  %v32 = vpack.c.b16 %v31, %v30
  %v35 = vunpack.c.l.b16 %v26
  %v36 = vunpack.c.l.b16 %v27
  %v37 = vpack.c.b16 %v36, %v35
  %vm39 = vcmask 130048
  %v41 = vsel %vm39, %v32, 0
  %43 = vmatprep.subr.bf16.mxu0 0
  %44 = vmatpush1.bf16.msra.mxu0 %v37
  %45 = vmatprep.subr.bf16.mxu0 0
  %46 = vmatpush1.bf16.msra.mxu0 0
  %47 = vmatprep.subr.bf16.mxu0 0
  %48 = vmatpush1.bf16.msra.mxu0 0
  %49 = vmatprep.subr.bf16.mxu0 0
  %50 = vmatpush1.bf16.msra.mxu0 0
  %51 = vmatprep.subr.bf16.mxu0 0
  %52 = vmatpush1.bf16.msra.mxu0 0
  %53 = vmatprep.subr.bf16.mxu0 0
  %54 = vmatpush1.bf16.msra.mxu0 0
  %55 = vmatprep.subr.bf16.mxu0 0
  %56 = vmatpush1.bf16.msra.mxu0 0
  %57 = vmatprep.subr.bf16.mxu0 0
  %58 = vmatpush1.bf16.msra.mxu0 0
  %59 = vmatprep.subr.bf16.mxu0 0
  %60 = vmatpush1.bf16.msra.mxu0 0
  %61 = vmatprep.subr.bf16.mxu0 0
  %62 = vmatpush1.bf16.msra.mxu0 0
  %63 = vmatprep.subr.bf16.mxu0 0
  %64 = vmatpush1.bf16.msra.mxu0 0
  %65 = vmatprep.subr.bf16.mxu0 0
  %66 = vmatpush1.bf16.msra.mxu0 0
  %67 = vmatprep.subr.bf16.mxu0 0
  %68 = vmatpush1.bf16.msra.mxu0 0
  %69 = vmatprep.subr.bf16.mxu0 0
  %70 = vmatpush1.bf16.msra.mxu0 0
  %71 = vmatprep.subr.bf16.mxu0 0
  %72 = vmatpush1.bf16.msra.mxu0 0
  %73 = vmatprep.subr.bf16.mxu0 0
  %74 = vmatpush1.bf16.msra.mxu0 0
  %75 = vmatprep.mubr.bf16.mxu0 0
  %76 = vmatmul.mubr.bf16.gmra.mrb[0].mxu0 %v41
  %v77 = vpop.f32.mrb[0].mxu0
  %v78 = vadd.f32 0.0, %v77
  %v79 = vpop.f32.mrb[0].mxu0
  %v80 = vpop.f32.mrb[0].mxu0
  %v81 = vadd.f32 0.0, %v80
  %v82 = vpop.f32.mrb[0].mxu0
  %83 = vdwg.mxu0
  %v86 = vunpack.c.l.b16 %v18
  %v87 = vunpack.c.l.b16 %v19
  %v88 = vpack.c.b16 %v87, %v86
  %v91 = vunpack.c.l.b16 %v20
  %v92 = vunpack.c.l.b16 %v21
  %v93 = vpack.c.b16 %v92, %v91
  %v96 = vsel %vm39, %v88, 0
  %98 = vmatprep.subr.bf16.mxu0 0
  %99 = vmatpush1.bf16.msra.mxu0 %v93
  %100 = vmatprep.subr.bf16.mxu0 0
  %101 = vmatpush1.bf16.msra.mxu0 0
  %102 = vmatprep.subr.bf16.mxu0 0
  %103 = vmatpush1.bf16.msra.mxu0 0
  %104 = vmatprep.subr.bf16.mxu0 0
  %105 = vmatpush1.bf16.msra.mxu0 0
  %106 = vmatprep.subr.bf16.mxu0 0
  %107 = vmatpush1.bf16.msra.mxu0 0
  %108 = vmatprep.subr.bf16.mxu0 0
  %109 = vmatpush1.bf16.msra.mxu0 0
  %110 = vmatprep.subr.bf16.mxu0 0
  %111 = vmatpush1.bf16.msra.mxu0 0
  %112 = vmatprep.subr.bf16.mxu0 0
  %113 = vmatpush1.bf16.msra.mxu0 0
  %114 = vmatprep.subr.bf16.mxu0 0
  %115 = vmatpush1.bf16.msra.mxu0 0
  %116 = vmatprep.subr.bf16.mxu0 0
  %117 = vmatpush1.bf16.msra.mxu0 0
  %118 = vmatprep.subr.bf16.mxu0 0
  %119 = vmatpush1.bf16.msra.mxu0 0
  %120 = vmatprep.subr.bf16.mxu0 0
  %121 = vmatpush1.bf16.msra.mxu0 0
  %122 = vmatprep.subr.bf16.mxu0 0
  %123 = vmatpush1.bf16.msra.mxu0 0
  %124 = vmatprep.subr.bf16.mxu0 0
  %125 = vmatpush1.bf16.msra.mxu0 0
  %126 = vmatprep.subr.bf16.mxu0 0
  %127 = vmatpush1.bf16.msra.mxu0 0
  %128 = vmatprep.subr.bf16.mxu0 0
  %129 = vmatpush1.bf16.msra.mxu0 0
  %130 = vmatprep.mubr.bf16.mxu0 0
  %131 = vmatmul.mubr.bf16.gmra.mrb[0].mxu0 %v96
  %v132 = vpop.f32.mrb[0].mxu0
  %v133 = vadd.f32 %v78, %v132
  %v134 = vpop.f32.mrb[0].mxu0
  %v135 = vpop.f32.mrb[0].mxu0
  %v136 = vadd.f32 %v81, %v135
  %v137 = vpop.f32.mrb[0].mxu0
  %138 = vdwg.mxu0
  %s139 = scalar_lea.vmem %s0, 16
  %v140 = vld [vmem:[%s139] sm:$0xf]
  %v141 = vld [vmem:[%s139 + $0x4] sm:$0xf]
  %s142 = scalar_lea.vmem %s1, 16
  %v143 = vld [vmem:[%s142] sm:$0xf]
  %v144 = vld [vmem:[%s142 + $0x4] sm:$0xf]
  %v147 = vunpack.c.l.b16 %v140
  %v148 = vunpack.c.l.b16 %v141
  %v149 = vpack.c.b16 %v148, %v147
  %v152 = vunpack.c.l.b16 %v143
  %v153 = vunpack.c.l.b16 %v144
  %v154 = vpack.c.b16 %v153, %v152
  %v157 = vsel %vm39, %v149, 0
  %159 = vmatprep.subr.bf16.mxu0 0
  %160 = vmatpush1.bf16.msra.mxu0 %v154
  %161 = vmatprep.subr.bf16.mxu0 0
  %162 = vmatpush1.bf16.msra.mxu0 0
  %163 = vmatprep.subr.bf16.mxu0 0
  %164 = vmatpush1.bf16.msra.mxu0 0
  %165 = vmatprep.subr.bf16.mxu0 0
  %166 = vmatpush1.bf16.msra.mxu0 0
  %167 = vmatprep.subr.bf16.mxu0 0
  %168 = vmatpush1.bf16.msra.mxu0 0
  %169 = vmatprep.subr.bf16.mxu0 0
  %170 = vmatpush1.bf16.msra.mxu0 0
  %171 = vmatprep.subr.bf16.mxu0 0
  %172 = vmatpush1.bf16.msra.mxu0 0
  %173 = vmatprep.subr.bf16.mxu0 0
  %174 = vmatpush1.bf16.msra.mxu0 0
  %175 = vmatprep.subr.bf16.mxu0 0
  %176 = vmatpush1.bf16.msra.mxu0 0
  %177 = vmatprep.subr.bf16.mxu0 0
  %178 = vmatpush1.bf16.msra.mxu0 0
  %179 = vmatprep.subr.bf16.mxu0 0
  %180 = vmatpush1.bf16.msra.mxu0 0
  %181 = vmatprep.subr.bf16.mxu0 0
  %182 = vmatpush1.bf16.msra.mxu0 0
  %183 = vmatprep.subr.bf16.mxu0 0
  %184 = vmatpush1.bf16.msra.mxu0 0
  %185 = vmatprep.subr.bf16.mxu0 0
  %186 = vmatpush1.bf16.msra.mxu0 0
  %187 = vmatprep.subr.bf16.mxu0 0
  %188 = vmatpush1.bf16.msra.mxu0 0
  %189 = vmatprep.subr.bf16.mxu0 0
  %190 = vmatpush1.bf16.msra.mxu0 0
  %191 = vmatprep.mubr.bf16.mxu0 0
  %192 = vmatmul.mubr.bf16.gmra.mrb[0].mxu0 %v157
  %v193 = vpop.f32.mrb[0].mxu0
  %v194 = vadd.f32 0.0, %v193
  %v195 = vpop.f32.mrb[0].mxu0
  %v196 = vpop.f32.mrb[0].mxu0
  %v197 = vadd.f32 0.0, %v196
  %v198 = vpop.f32.mrb[0].mxu0
  %199 = vdwg.mxu0
  %v200 = vadd.f32 %v133, %v194
  %v201 = vadd.f32 %v136, %v197
  %s202 = scalar_lea.vmem %s0, 24
  %v203 = vld [vmem:[%s202] sm:$0xf]
  %v204 = vld [vmem:[%s202 + $0x4] sm:$0xf]
  %s205 = scalar_lea.vmem %s1, 24
  %v206 = vld [vmem:[%s205] sm:$0xf]
  %v207 = vld [vmem:[%s205 + $0x4] sm:$0xf]
  %v210 = vunpack.c.l.b16 %v203
  %v211 = vunpack.c.l.b16 %v204
  %v212 = vpack.c.b16 %v211, %v210
  %v215 = vunpack.c.l.b16 %v206
  %v216 = vunpack.c.l.b16 %v207
  %v217 = vpack.c.b16 %v216, %v215
  %v220 = vsel %vm39, %v212, 0
  %222 = vmatprep.subr.bf16.mxu0 0
  %223 = vmatpush1.bf16.msra.mxu0 %v217
  %224 = vmatprep.subr.bf16.mxu0 0
  %225 = vmatpush1.bf16.msra.mxu0 0
  %226 = vmatprep.subr.bf16.mxu0 0
  %227 = vmatpush1.bf16.msra.mxu0 0
  %228 = vmatprep.subr.bf16.mxu0 0
  %229 = vmatpush1.bf16.msra.mxu0 0
  %230 = vmatprep.subr.bf16.mxu0 0
  %231 = vmatpush1.bf16.msra.mxu0 0
  %232 = vmatprep.subr.bf16.mxu0 0
  %233 = vmatpush1.bf16.msra.mxu0 0
  %234 = vmatprep.subr.bf16.mxu0 0
  %235 = vmatpush1.bf16.msra.mxu0 0
  %236 = vmatprep.subr.bf16.mxu0 0
  %237 = vmatpush1.bf16.msra.mxu0 0
  %238 = vmatprep.subr.bf16.mxu0 0
  %239 = vmatpush1.bf16.msra.mxu0 0
  %240 = vmatprep.subr.bf16.mxu0 0
  %241 = vmatpush1.bf16.msra.mxu0 0
  %242 = vmatprep.subr.bf16.mxu0 0
  %243 = vmatpush1.bf16.msra.mxu0 0
  %244 = vmatprep.subr.bf16.mxu0 0
  %245 = vmatpush1.bf16.msra.mxu0 0
  %246 = vmatprep.subr.bf16.mxu0 0
  %247 = vmatpush1.bf16.msra.mxu0 0
  %248 = vmatprep.subr.bf16.mxu0 0
  %249 = vmatpush1.bf16.msra.mxu0 0
  %250 = vmatprep.subr.bf16.mxu0 0
  %251 = vmatpush1.bf16.msra.mxu0 0
  %252 = vmatprep.subr.bf16.mxu0 0
  %253 = vmatpush1.bf16.msra.mxu0 0
  %254 = vmatprep.mubr.bf16.mxu0 0
  %255 = vmatmul.mubr.bf16.gmra.mrb[0].mxu0 %v220
  %v256 = vpop.f32.mrb[0].mxu0
  %v257 = vadd.f32 0.0, %v256
  %v258 = vpop.f32.mrb[0].mxu0
  %v259 = vpop.f32.mrb[0].mxu0
  %v260 = vadd.f32 0.0, %v259
  %v261 = vpop.f32.mrb[0].mxu0
  %262 = vdwg.mxu0
  %v263 = vadd.f32 %v200, %v257
  %v264 = vadd.f32 %v201, %v260
  %v265 = vld [vmem:[%s2] sm:$0x1]
  %v267 = vlaneseq
  %v268 = vshrl.u32 %v267, 7
  %v269 = vsub.s32 0, %v268
  %v270 = vrot.slane %v265, %v269
  %v272 = vmul.f32 %v263, %v270
  %v273 = vmul.f32 %v264, %v270
  %v274 = vld [vmem:[%s3] sm:$0x1]
  %v276 = vlaneseq
  %v277 = vshrl.u32 %v276, 7
  %v278 = vsub.s32 0, %v277
  %v279 = vrot.slane %v274, %v278
  %v281 = vadd.f32 %v272, %v279
  %v282 = vadd.f32 %v273, %v279
  %v283 = vmax.f32 %v281, 0.0
  %v284 = vmax.f32 %v282, 0.0
  %v285 = vpack.c.bf16 %v284, %v283
  %v287 = vunpack.c.l.b16 %v285
  %v288 = vunpack.c.h.b16 %v285
  %v289 = vpack.c.b16 %v287, %v287
  %v290 = vpack.c.b16 %v288, %v288
  %vm293 = vcmask 257024
  %294 = vst.msk [vmem:[%s4] sm:$0xf] %vm293, %v289
  %295 = vst.msk [vmem:[%s4 + $0x4] sm:$0xf] %vm293, %v290
  // Predicated region
  $region18: #{_lambda_.164} parent=0 // pred_check
    _
  $region19: #{_lambda_.164} parent=0 // pred_check_branch
    %297 = sbr.rel (0) target = $region21
  $region20: #{_lambda_.164} parent=0 // pred_region
    _
  $region21: #{_lambda_.164} parent=0 // pred_fallthru
    _
  // Predicated region
  $region22: #{_lambda_.164} parent=0 // pred_check
    _
  $region23: #{_lambda_.164} parent=0 // pred_check_branch
    %299 = sbr.rel (0) target = $region25
  $region24: #{_lambda_.164} parent=0 // pred_region
    _
  $region25: #{_lambda_.164} parent=0 // pred_fallthru
    _

// kernel: _lambda_.165
$region0: #{_lambda_.165}
  #allocation0 [shape = 'u32[]', space=smem, size = 0x4, offset = 0x4, fixed_abs, tag = 'smem constant byte address 0x4 - core index']
  #allocation1 [shape = 'u32[144,128]{1,0:T(1,128)}', space=vmem, size = 0x12000, scoped, tag = 'internal scratch']
  %s0 = inlined_call_operand.vmem [shape: bf16[1,16,32], index: 0, kind: input, shape index: {}]
  %s1 = inlined_call_operand.vmem [shape: bf16[1,32,64], index: 1, kind: input, shape index: {}]
  %s2 = inlined_call_operand.vmem [shape: f32[1,64], index: 2, kind: input, shape index: {}]
  %s3 = inlined_call_operand.vmem [shape: f32[1,64], index: 3, kind: input, shape index: {}]
  %s4 = inlined_call_operand.vmem [shape: bf16[16,64], index: 4, kind: input, shape index: {}]
  %s5 = inlined_call_operand.vmem [shape: bf16[16,64], index: 5, kind: output, shape index: {}]
  %s6 = sld [smem:[#allocation0]]
  $region30: #{_lambda_.165} parent=0
    _
  %s8 = ssub.s32 1, %s6
  %s9 = scalar_select 0, %s8, %s6
  // Predicated region
  $region2: #{_lambda_.165} parent=0 // pred_check
    _
  $region3: #{_lambda_.165} parent=0 // pred_check_branch
    %11 = sbr.rel (0) target = $region5
  $region4: #{_lambda_.165} parent=0 // pred_region
    _
  $region5: #{_lambda_.165} parent=0 // pred_fallthru
    _
  // Predicated region
  $region6: #{_lambda_.165} parent=0 // pred_check
    _
  $region7: #{_lambda_.165} parent=0 // pred_check_branch
    %13 = sbr.rel (0) target = $region9
  $region8: #{_lambda_.165} parent=0 // pred_region
    _
  $region9: #{_lambda_.165} parent=0 // pred_fallthru
    _
  // Predicated region
  $region10: #{_lambda_.165} parent=0 // pred_check
    _
  $region11: #{_lambda_.165} parent=0 // pred_check_branch
    %15 = sbr.rel (0) target = $region13
  $region12: #{_lambda_.165} parent=0 // pred_region
    _
  $region13: #{_lambda_.165} parent=0 // pred_fallthru
    _
  // Predicated region
  $region14: #{_lambda_.165} parent=0 // pred_check
    _
  $region15: #{_lambda_.165} parent=0 // pred_check_branch
    %17 = sbr.rel (0) target = $region17
  $region16: #{_lambda_.165} parent=0 // pred_region
    _
  $region17: #{_lambda_.165} parent=0 // pred_fallthru
    _
  // Predicated region
  $region18: #{_lambda_.165} parent=0 // pred_check
    _
  $region19: #{_lambda_.165} parent=0 // pred_check_branch
    %19 = sbr.rel (0) target = $region21
  $region20: #{_lambda_.165} parent=0 // pred_region
    _
  $region21: #{_lambda_.165} parent=0 // pred_fallthru
    _
  %v21 = vld [vmem:[%s0] sm:$0xf]
  %v22 = vld [vmem:[%s0 + $0x4] sm:$0xf]
  %v23 = vld [vmem:[%s1] sm:$0xf]
  %v24 = vld [vmem:[%s1 + $0x4] sm:$0xf]
  %v25 = vld [vmem:[%s1 + $0x8] sm:$0xf]
  %v26 = vld [vmem:[%s1 + $0xc] sm:$0xf]
  %v29 = vunpack.c.l.b16 %v21
  %v30 = vunpack.c.l.b16 %v22
  %v31 = vpack.c.b16 %v30, %v29
  %v36 = vunpack.c.l.b16 %v23
  %v37 = vunpack.c.l.b16 %v24
  %v38 = vunpack.c.l.b16 %v25
  %v39 = vunpack.c.l.b16 %v26
  %v40 = vpack.c.b16 %v37, %v36
  %v41 = vpack.c.b16 %v39, %v38
  %vm44 = vcmask 261120
  %v46 = vsel %vm44, %v31, 0
  %48 = vmatprep.subr.bf16.mxu0 0
  %49 = vmatpush1.bf16.msra.mxu0 %v40
  %50 = vmatprep.subr.bf16.mxu0 0
  %51 = vmatpush1.bf16.msra.mxu0 %v41
  %52 = vmatprep.subr.bf16.mxu0 0
  %53 = vmatpush1.bf16.msra.mxu0 0
  %54 = vmatprep.subr.bf16.mxu0 0
  %55 = vmatpush1.bf16.msra.mxu0 0
  %56 = vmatprep.subr.bf16.mxu0 0
  %57 = vmatpush1.bf16.msra.mxu0 0
  %58 = vmatprep.subr.bf16.mxu0 0
  %59 = vmatpush1.bf16.msra.mxu0 0
  %60 = vmatprep.subr.bf16.mxu0 0
  %61 = vmatpush1.bf16.msra.mxu0 0
  %62 = vmatprep.subr.bf16.mxu0 0
  %63 = vmatpush1.bf16.msra.mxu0 0
  %64 = vmatprep.subr.bf16.mxu0 0
  %65 = vmatpush1.bf16.msra.mxu0 0
  %66 = vmatprep.subr.bf16.mxu0 0
  %67 = vmatpush1.bf16.msra.mxu0 0
  %68 = vmatprep.subr.bf16.mxu0 0
  %69 = vmatpush1.bf16.msra.mxu0 0
  %70 = vmatprep.subr.bf16.mxu0 0
  %71 = vmatpush1.bf16.msra.mxu0 0
  %72 = vmatprep.subr.bf16.mxu0 0
  %73 = vmatpush1.bf16.msra.mxu0 0
  %74 = vmatprep.subr.bf16.mxu0 0
  %75 = vmatpush1.bf16.msra.mxu0 0
  %76 = vmatprep.subr.bf16.mxu0 0
  %77 = vmatpush1.bf16.msra.mxu0 0
  %78 = vmatprep.subr.bf16.mxu0 0
  %79 = vmatpush1.bf16.msra.mxu0 0
  %80 = vmatprep.mubr.bf16.mxu0 0
  %81 = vmatmul.mubr.bf16.gmra.mrb[0].mxu0 %v46
  %v82 = vpop.f32.mrb[0].mxu0
  %v83 = vadd.f32 0.0, %v82
  %v84 = vpop.f32.mrb[0].mxu0
  %v85 = vpop.f32.mrb[0].mxu0
  %v86 = vadd.f32 0.0, %v85
  %v87 = vpop.f32.mrb[0].mxu0
  %88 = vdwg.mxu0
  %v89 = vld [vmem:[%s2] sm:$0x1]
  %v91 = vlaneseq
  %v92 = vshrl.u32 %v91, 7
  %v93 = vsub.s32 0, %v92
  %v94 = vrot.slane %v89, %v93
  %v96 = vmul.f32 %v83, %v94
  %v97 = vmul.f32 %v86, %v94
  %v98 = vld [vmem:[%s3] sm:$0x1]
  %v100 = vlaneseq
  %v101 = vshrl.u32 %v100, 7
  %v102 = vsub.s32 0, %v101
  %v103 = vrot.slane %v98, %v102
  %v105 = vadd.f32 %v96, %v103
  %v106 = vadd.f32 %v97, %v103
  %v107 = vld [vmem:[%s4] sm:$0xf]
  %v108 = vld [vmem:[%s4 + $0x4] sm:$0xf]
  %v109 = vunpack.c.l.bf16 %v107
  %v110 = vunpack.c.l.bf16 %v108
  %v111 = vadd.f32 %v105, %v109
  %v112 = vadd.f32 %v106, %v110
  %v113 = vmax.f32 %v111, 0.0
  %v114 = vmax.f32 %v112, 0.0
  %v115 = vpack.c.bf16 %v114, %v113
  %v117 = vunpack.c.l.b16 %v115
  %v118 = vunpack.c.h.b16 %v115
  %v119 = vpack.c.b16 %v117, %v117
  %v120 = vpack.c.b16 %v118, %v118
  %vm123 = vcmask 519168
  %124 = vst.msk [vmem:[%s5] sm:$0xf] %vm123, %v119
  %125 = vst.msk [vmem:[%s5 + $0x4] sm:$0xf] %vm123, %v120
  // Predicated region
  $region22: #{_lambda_.165} parent=0 // pred_check
    _
  $region23: #{_lambda_.165} parent=0 // pred_check_branch
    %127 = sbr.rel (0) target = $region25
  $region24: #{_lambda_.165} parent=0 // pred_region
    _
  $region25: #{_lambda_.165} parent=0 // pred_fallthru
    _
  // Predicated region
  $region26: #{_lambda_.165} parent=0 // pred_check
    _
  $region27: #{_lambda_.165} parent=0 // pred_check_branch
    %129 = sbr.rel (0) target = $region29
  $region28: #{_lambda_.165} parent=0 // pred_region
    _
  $region29: #{_lambda_.165} parent=0 // pred_fallthru
    _

// kernel: _lambda_.172
$region0: #{_lambda_.172}
  #allocation0 [shape = 'u32[]', space=smem, size = 0x4, offset = 0x4, fixed_abs, tag = 'smem constant byte address 0x4 - core index']
  #allocation1 [shape = 'u32[144,128]{1,0:T(1,128)}', space=vmem, size = 0x12000, scoped, tag = 'internal scratch']
  %s0 = inlined_call_operand.vmem [shape: bf16[1,16,64], index: 0, kind: input, shape index: {}]
  %s1 = inlined_call_operand.vmem [shape: bf16[1,64,16], index: 1, kind: input, shape index: {}]
  %s2 = inlined_call_operand.vmem [shape: f32[1,16], index: 2, kind: input, shape index: {}]
  %s3 = inlined_call_operand.vmem [shape: f32[1,16], index: 3, kind: input, shape index: {}]
  %s4 = inlined_call_operand.vmem [shape: bf16[16,16], index: 4, kind: output, shape index: {}]
  %s5 = sld [smem:[#allocation0]]
  $region26: #{_lambda_.172} parent=0
    _
  %s7 = ssub.s32 1, %s5
  %s8 = scalar_select 0, %s7, %s5
  // Predicated region
  $region2: #{_lambda_.172} parent=0 // pred_check
    _
  $region3: #{_lambda_.172} parent=0 // pred_check_branch
    %10 = sbr.rel (0) target = $region5
  $region4: #{_lambda_.172} parent=0 // pred_region
    _
  $region5: #{_lambda_.172} parent=0 // pred_fallthru
    _
  // Predicated region
  $region6: #{_lambda_.172} parent=0 // pred_check
    _
  $region7: #{_lambda_.172} parent=0 // pred_check_branch
    %12 = sbr.rel (0) target = $region9
  $region8: #{_lambda_.172} parent=0 // pred_region
    _
  $region9: #{_lambda_.172} parent=0 // pred_fallthru
    _
  // Predicated region
  $region10: #{_lambda_.172} parent=0 // pred_check
    _
  $region11: #{_lambda_.172} parent=0 // pred_check_branch
    %14 = sbr.rel (0) target = $region13
  $region12: #{_lambda_.172} parent=0 // pred_region
    _
  $region13: #{_lambda_.172} parent=0 // pred_fallthru
    _
  // Predicated region
  $region14: #{_lambda_.172} parent=0 // pred_check
    _
  $region15: #{_lambda_.172} parent=0 // pred_check_branch
    %16 = sbr.rel (0) target = $region17
  $region16: #{_lambda_.172} parent=0 // pred_region
    _
  $region17: #{_lambda_.172} parent=0 // pred_fallthru
    _
  %v18 = vld [vmem:[%s0] sm:$0xf]
  %v19 = vld [vmem:[%s0 + $0x4] sm:$0xf]
  %v20 = vld [vmem:[%s1] sm:$0xf]
  %v21 = vld [vmem:[%s1 + $0x4] sm:$0xf]
  %v22 = vld [vmem:[%s1 + $0x8] sm:$0xf]
  %v23 = vld [vmem:[%s1 + $0xc] sm:$0xf]
  %v24 = vld [vmem:[%s1 + $0x10] sm:$0xf]
  %v25 = vld [vmem:[%s1 + $0x14] sm:$0xf]
  %v26 = vld [vmem:[%s1 + $0x18] sm:$0xf]
  %v27 = vld [vmem:[%s1 + $0x1c] sm:$0xf]
  %v30 = vunpack.c.l.b16 %v18
  %v31 = vunpack.c.l.b16 %v19
  %v32 = vpack.c.b16 %v31, %v30
  %v41 = vunpack.c.l.b16 %v20
  %v42 = vunpack.c.l.b16 %v21
  %v43 = vunpack.c.l.b16 %v22
  %v44 = vunpack.c.l.b16 %v23
  %v45 = vunpack.c.l.b16 %v24
  %v46 = vunpack.c.l.b16 %v25
  %v47 = vunpack.c.l.b16 %v26
  %v48 = vunpack.c.l.b16 %v27
  %v49 = vpack.c.b16 %v42, %v41
  %v50 = vpack.c.b16 %v44, %v43
  %v51 = vpack.c.b16 %v46, %v45
  %v52 = vpack.c.b16 %v48, %v47
  %vm57 = vcmask 523264
  %v59 = vsel %vm57, %v32, 0
  %61 = vmatprep.subr.bf16.mxu0 0
  %62 = vmatpush1.bf16.msra.mxu0 %v49
  %63 = vmatprep.subr.bf16.mxu0 0
  %64 = vmatpush1.bf16.msra.mxu0 %v50
  %65 = vmatprep.subr.bf16.mxu0 0
  %66 = vmatpush1.bf16.msra.mxu0 %v51
  %67 = vmatprep.subr.bf16.mxu0 0
  %68 = vmatpush1.bf16.msra.mxu0 %v52
  %69 = vmatprep.subr.bf16.mxu0 0
  %70 = vmatpush1.bf16.msra.mxu0 0
  %71 = vmatprep.subr.bf16.mxu0 0
  %72 = vmatpush1.bf16.msra.mxu0 0
  %73 = vmatprep.subr.bf16.mxu0 0
  %74 = vmatpush1.bf16.msra.mxu0 0
  %75 = vmatprep.subr.bf16.mxu0 0
  %76 = vmatpush1.bf16.msra.mxu0 0
  %77 = vmatprep.subr.bf16.mxu0 0
  %78 = vmatpush1.bf16.msra.mxu0 0
  %79 = vmatprep.subr.bf16.mxu0 0
  %80 = vmatpush1.bf16.msra.mxu0 0
  %81 = vmatprep.subr.bf16.mxu0 0
  %82 = vmatpush1.bf16.msra.mxu0 0
  %83 = vmatprep.subr.bf16.mxu0 0
  %84 = vmatpush1.bf16.msra.mxu0 0
  %85 = vmatprep.subr.bf16.mxu0 0
  %86 = vmatpush1.bf16.msra.mxu0 0
  %87 = vmatprep.subr.bf16.mxu0 0
  %88 = vmatpush1.bf16.msra.mxu0 0
  %89 = vmatprep.subr.bf16.mxu0 0
  %90 = vmatpush1.bf16.msra.mxu0 0
  %91 = vmatprep.subr.bf16.mxu0 0
  %92 = vmatpush1.bf16.msra.mxu0 0
  %93 = vmatprep.mubr.bf16.mxu0 0
  %94 = vmatmul.mubr.bf16.gmra.mrb[0].mxu0 %v59
  %v95 = vpop.f32.mrb[0].mxu0
  %v96 = vadd.f32 0.0, %v95
  %v97 = vpop.f32.mrb[0].mxu0
  %v98 = vpop.f32.mrb[0].mxu0
  %v99 = vadd.f32 0.0, %v98
  %v100 = vpop.f32.mrb[0].mxu0
  %101 = vdwg.mxu0
  %v102 = vld [vmem:[%s2] sm:$0x1]
  %v104 = vlaneseq
  %v105 = vshrl.u32 %v104, 7
  %v106 = vsub.s32 0, %v105
  %v107 = vrot.slane %v102, %v106
  %v109 = vmul.f32 %v96, %v107
  %v110 = vmul.f32 %v99, %v107
  %v111 = vld [vmem:[%s3] sm:$0x1]
  %v113 = vlaneseq
  %v114 = vshrl.u32 %v113, 7
  %v115 = vsub.s32 0, %v114
  %v116 = vrot.slane %v111, %v115
  %v118 = vadd.f32 %v109, %v116
  %v119 = vadd.f32 %v110, %v116
  %v120 = vpack.c.bf16 %v119, %v118
  %v122 = vunpack.c.l.b16 %v120
  %v123 = vunpack.c.h.b16 %v120
  %v124 = vpack.c.b16 %v122, %v122
  %v125 = vpack.c.b16 %v123, %v123
  %vm128 = vcmask 125952
  %129 = vst.msk [vmem:[%s4] sm:$0xf] %vm128, %v124
  %130 = vst.msk [vmem:[%s4 + $0x4] sm:$0xf] %vm128, %v125
  // Predicated region
  $region18: #{_lambda_.172} parent=0 // pred_check
    _
  $region19: #{_lambda_.172} parent=0 // pred_check_branch
    %132 = sbr.rel (0) target = $region21
  $region20: #{_lambda_.172} parent=0 // pred_region
    _
  $region21: #{_lambda_.172} parent=0 // pred_fallthru
    _
  // Predicated region
  $region22: #{_lambda_.172} parent=0 // pred_check
    _
  $region23: #{_lambda_.172} parent=0 // pred_check_branch
    %134 = sbr.rel (0) target = $region25
  $region24: #{_lambda_.172} parent=0 // pred_region
    _
  $region25: #{_lambda_.172} parent=0 // pred_fallthru
    _

// kernel: tile.1191
$region0: #{tile.1191}
  #allocation0 [shape = 's32[1]{0}', space=sflag, size = 0x4, scoped, tag = 'scoped memory for tile.1191']
  %s0 = inlined_call_operand.vmem [shape: f32[16], index: 0, kind: input, shape index: {}]
  %s1 = inlined_call_operand.vmem [shape: f32[4,16], index: 1, kind: output, shape index: {}]
  // Predicated region
  $region2: #{tile.1191} parent=0 // pred_check
    _
  $region3: #{tile.1191} parent=0 // pred_check_branch
    %3 = sbr.rel (0) target = $region5
  $region4: #{tile.1191} parent=0 // pred_region
    _
  $region5: #{tile.1191} parent=0 // pred_fallthru
    _
  %v4 = vld [vmem:[%s0] ss:$0 sm:$0xff]
  %5 = vst [vmem:[%s1] sm:$0xf] %v4

// kernel: tile.1192
$region0: #{tile.1192}
  %s0 = inlined_call_operand.vmem [shape: f32[4,16], index: 0, kind: input, shape index: {}]
  %s1 = inlined_call_operand.vmem [shape: f32[1,64], index: 1, kind: output, shape index: {}]
  $region1: #{tile.1192} parent=0
    #allocation0 [shape = 'u8[4096]{0}', space=vmem, size = 0x1000, scoped, tag = 'scoped mem for output reshape']
    #allocation1 [shape = 'u8[4096]{0}', space=vmem, size = 0x1000, scoped, tag = 'scoped mem for input reshape']
    %s3 = sshllo.u32 0, 4
    %v4 = vld [vmem:[%s0] sm:%s3]
    %5 = vst [vmem:[#allocation1] sm:%s3] %v4
    %v6 = vld [vmem:[#allocation1] sm:$0x1]
    %vm7 = vcmask 130048
    %8 = vst.msk [vmem:[#allocation0] sm:$0x1] %vm7, %v6
    %s9 = scalar_lea.vmem [#allocation1], 3
    %v10 = vld [vmem:[%s9] sm:$0x1]
    %11 = vrot.lane.b32.xlu0 %v10, 48
    %v12 = vpop.permute.xlu0 %11
    %vm13 = vcmask 523648
    %14 = vst.msk [vmem:[#allocation0] sm:$0x1] %vm13, %v12
    %s15 = scalar_lea.vmem [#allocation1], 2
    %v16 = vld [vmem:[%s15] sm:$0x1]
    %17 = vrot.lane.b32.xlu0 %v16, 32
    %v18 = vpop.permute.xlu0 %17
    %vm19 = vcmask 392448
    %20 = vst.msk [vmem:[#allocation0] sm:$0x1] %vm19, %v18
    %s21 = scalar_lea.vmem [#allocation1], 1
    %v22 = vld [vmem:[%s21] sm:$0x1]
    %23 = vrot.lane.b32.xlu0 %v22, 16
    %v24 = vpop.permute.xlu0 %23
    %vm25 = vcmask 261248
    %26 = vst.msk [vmem:[#allocation0] sm:$0x1] %vm25, %v24
    %s28 = sshllo.u32 0, 1
    %v30 = vld [vmem:[#allocation0] sm:%s28]
    %s31 = sshllo.u32 0, 1
    %32 = vst [vmem:[%s1] sm:%s31] %v30

// kernel: _lambda_.173
$region0: #{_lambda_.173}
  #allocation0 [shape = 'u32[]', space=smem, size = 0x4, offset = 0x4, fixed_abs, tag = 'smem constant byte address 0x4 - core index']
  #allocation1 [shape = 'u32[144,128]{1,0:T(1,128)}', space=vmem, size = 0x12000, scoped, tag = 'internal scratch']
  %s0 = inlined_call_operand.vmem [shape: bf16[1,16,64], index: 0, kind: input, shape index: {}]
  %s1 = inlined_call_operand.vmem [shape: bf16[1,64,16], index: 1, kind: input, shape index: {}]
  %s2 = inlined_call_operand.vmem [shape: f32[1,16], index: 2, kind: input, shape index: {}]
  %s3 = inlined_call_operand.vmem [shape: f32[1,16], index: 3, kind: input, shape index: {}]
  %s4 = inlined_call_operand.vmem [shape: bf16[16,16], index: 4, kind: output, shape index: {}]
  %s5 = sld [smem:[#allocation0]]
  $region26: #{_lambda_.173} parent=0
    _
  %s7 = ssub.s32 1, %s5
  %s8 = scalar_select 0, %s7, %s5
  // Predicated region
  $region2: #{_lambda_.173} parent=0 // pred_check
    _
  $region3: #{_lambda_.173} parent=0 // pred_check_branch
    %10 = sbr.rel (0) target = $region5
  $region4: #{_lambda_.173} parent=0 // pred_region
    _
  $region5: #{_lambda_.173} parent=0 // pred_fallthru
    _
  // Predicated region
  $region6: #{_lambda_.173} parent=0 // pred_check
    _
  $region7: #{_lambda_.173} parent=0 // pred_check_branch
    %12 = sbr.rel (0) target = $region9
  $region8: #{_lambda_.173} parent=0 // pred_region
    _
  $region9: #{_lambda_.173} parent=0 // pred_fallthru
    _
  // Predicated region
  $region10: #{_lambda_.173} parent=0 // pred_check
    _
  $region11: #{_lambda_.173} parent=0 // pred_check_branch
    %14 = sbr.rel (0) target = $region13
  $region12: #{_lambda_.173} parent=0 // pred_region
    _
  $region13: #{_lambda_.173} parent=0 // pred_fallthru
    _
  // Predicated region
  $region14: #{_lambda_.173} parent=0 // pred_check
    _
  $region15: #{_lambda_.173} parent=0 // pred_check_branch
    %16 = sbr.rel (0) target = $region17
  $region16: #{_lambda_.173} parent=0 // pred_region
    _
  $region17: #{_lambda_.173} parent=0 // pred_fallthru
    _
  %v18 = vld [vmem:[%s0] sm:$0xf]
  %v19 = vld [vmem:[%s0 + $0x4] sm:$0xf]
  %v20 = vld [vmem:[%s1] sm:$0xf]
  %v21 = vld [vmem:[%s1 + $0x4] sm:$0xf]
  %v22 = vld [vmem:[%s1 + $0x8] sm:$0xf]
  %v23 = vld [vmem:[%s1 + $0xc] sm:$0xf]
  %v24 = vld [vmem:[%s1 + $0x10] sm:$0xf]
  %v25 = vld [vmem:[%s1 + $0x14] sm:$0xf]
  %v26 = vld [vmem:[%s1 + $0x18] sm:$0xf]
  %v27 = vld [vmem:[%s1 + $0x1c] sm:$0xf]
  %v30 = vunpack.c.l.b16 %v18
  %v31 = vunpack.c.l.b16 %v19
  %v32 = vpack.c.b16 %v31, %v30
  %v41 = vunpack.c.l.b16 %v20
  %v42 = vunpack.c.l.b16 %v21
  %v43 = vunpack.c.l.b16 %v22
  %v44 = vunpack.c.l.b16 %v23
  %v45 = vunpack.c.l.b16 %v24
  %v46 = vunpack.c.l.b16 %v25
  %v47 = vunpack.c.l.b16 %v26
  %v48 = vunpack.c.l.b16 %v27
  %v49 = vpack.c.b16 %v42, %v41
  %v50 = vpack.c.b16 %v44, %v43
  %v51 = vpack.c.b16 %v46, %v45
  %v52 = vpack.c.b16 %v48, %v47
  %vm57 = vcmask 523264
  %v59 = vsel %vm57, %v32, 0
  %61 = vmatprep.subr.bf16.mxu0 0
  %62 = vmatpush1.bf16.msra.mxu0 %v49
  %63 = vmatprep.subr.bf16.mxu0 0
  %64 = vmatpush1.bf16.msra.mxu0 %v50
  %65 = vmatprep.subr.bf16.mxu0 0
  %66 = vmatpush1.bf16.msra.mxu0 %v51
  %67 = vmatprep.subr.bf16.mxu0 0
  %68 = vmatpush1.bf16.msra.mxu0 %v52
  %69 = vmatprep.subr.bf16.mxu0 0
  %70 = vmatpush1.bf16.msra.mxu0 0
  %71 = vmatprep.subr.bf16.mxu0 0
  %72 = vmatpush1.bf16.msra.mxu0 0
  %73 = vmatprep.subr.bf16.mxu0 0
  %74 = vmatpush1.bf16.msra.mxu0 0
  %75 = vmatprep.subr.bf16.mxu0 0
  %76 = vmatpush1.bf16.msra.mxu0 0
  %77 = vmatprep.subr.bf16.mxu0 0
  %78 = vmatpush1.bf16.msra.mxu0 0
  %79 = vmatprep.subr.bf16.mxu0 0
  %80 = vmatpush1.bf16.msra.mxu0 0
  %81 = vmatprep.subr.bf16.mxu0 0
  %82 = vmatpush1.bf16.msra.mxu0 0
  %83 = vmatprep.subr.bf16.mxu0 0
  %84 = vmatpush1.bf16.msra.mxu0 0
  %85 = vmatprep.subr.bf16.mxu0 0
  %86 = vmatpush1.bf16.msra.mxu0 0
  %87 = vmatprep.subr.bf16.mxu0 0
  %88 = vmatpush1.bf16.msra.mxu0 0
  %89 = vmatprep.subr.bf16.mxu0 0
  %90 = vmatpush1.bf16.msra.mxu0 0
  %91 = vmatprep.subr.bf16.mxu0 0
  %92 = vmatpush1.bf16.msra.mxu0 0
  %93 = vmatprep.mubr.bf16.mxu0 0
  %94 = vmatmul.mubr.bf16.gmra.mrb[0].mxu0 %v59
  %v95 = vpop.f32.mrb[0].mxu0
  %v96 = vadd.f32 0.0, %v95
  %v97 = vpop.f32.mrb[0].mxu0
  %v98 = vpop.f32.mrb[0].mxu0
  %v99 = vadd.f32 0.0, %v98
  %v100 = vpop.f32.mrb[0].mxu0
  %101 = vdwg.mxu0
  %v102 = vld [vmem:[%s2] sm:$0x1]
  %v104 = vlaneseq
  %v105 = vshrl.u32 %v104, 7
  %v106 = vsub.s32 0, %v105
  %v107 = vrot.slane %v102, %v106
  %v109 = vmul.f32 %v96, %v107
  %v110 = vmul.f32 %v99, %v107
  %v111 = vld [vmem:[%s3] sm:$0x1]
  %v113 = vlaneseq
  %v114 = vshrl.u32 %v113, 7
  %v115 = vsub.s32 0, %v114
  %v116 = vrot.slane %v111, %v115
  %v118 = vadd.f32 %v109, %v116
  %v119 = vadd.f32 %v110, %v116
  %v120 = vmax.f32 %v118, 0.0
  %v121 = vmax.f32 %v119, 0.0
  %v122 = vpack.c.bf16 %v121, %v120
  %v124 = vunpack.c.l.b16 %v122
  %v125 = vunpack.c.h.b16 %v122
  %v126 = vpack.c.b16 %v124, %v124
  %v127 = vpack.c.b16 %v125, %v125
  %vm130 = vcmask 125952
  %131 = vst.msk [vmem:[%s4] sm:$0xf] %vm130, %v126
  %132 = vst.msk [vmem:[%s4 + $0x4] sm:$0xf] %vm130, %v127
  // Predicated region
  $region18: #{_lambda_.173} parent=0 // pred_check
    _
  $region19: #{_lambda_.173} parent=0 // pred_check_branch
    %134 = sbr.rel (0) target = $region21
  $region20: #{_lambda_.173} parent=0 // pred_region
    _
  $region21: #{_lambda_.173} parent=0 // pred_fallthru
    _
  // Predicated region
  $region22: #{_lambda_.173} parent=0 // pred_check
    _
  $region23: #{_lambda_.173} parent=0 // pred_check_branch
    %136 = sbr.rel (0) target = $region25
  $region24: #{_lambda_.173} parent=0 // pred_region
    _
  $region25: #{_lambda_.173} parent=0 // pred_fallthru
    _

// kernel: _lambda_.174
$region0: #{_lambda_.174}
  #allocation0 [shape = 'u32[]', space=smem, size = 0x4, offset = 0x4, fixed_abs, tag = 'smem constant byte address 0x4 - core index']
  #allocation1 [shape = 'u32[144,128]{1,0:T(1,128)}', space=vmem, size = 0x12000, scoped, tag = 'internal scratch']
  %s0 = inlined_call_operand.vmem [shape: bf16[4,16,16], index: 0, kind: input, shape index: {}]
  %s1 = inlined_call_operand.vmem [shape: bf16[4,16,64], index: 1, kind: input, shape index: {}]
  %s2 = inlined_call_operand.vmem [shape: f32[1,64], index: 2, kind: input, shape index: {}]
  %s3 = inlined_call_operand.vmem [shape: f32[1,64], index: 3, kind: input, shape index: {}]
  %s4 = inlined_call_operand.vmem [shape: bf16[16,64], index: 4, kind: output, shape index: {}]
  %s5 = sld [smem:[#allocation0]]
  $region26: #{_lambda_.174} parent=0
    _
  %s7 = ssub.s32 1, %s5
  %s8 = scalar_select 0, %s7, %s5
  // Predicated region
  $region2: #{_lambda_.174} parent=0 // pred_check
    _
  $region3: #{_lambda_.174} parent=0 // pred_check_branch
    %10 = sbr.rel (0) target = $region5
  $region4: #{_lambda_.174} parent=0 // pred_region
    _
  $region5: #{_lambda_.174} parent=0 // pred_fallthru
    _
  // Predicated region
  $region6: #{_lambda_.174} parent=0 // pred_check
    _
  $region7: #{_lambda_.174} parent=0 // pred_check_branch
    %12 = sbr.rel (0) target = $region9
  $region8: #{_lambda_.174} parent=0 // pred_region
    _
  $region9: #{_lambda_.174} parent=0 // pred_fallthru
    _
  // Predicated region
  $region10: #{_lambda_.174} parent=0 // pred_check
    _
  $region11: #{_lambda_.174} parent=0 // pred_check_branch
    %14 = sbr.rel (0) target = $region13
  $region12: #{_lambda_.174} parent=0 // pred_region
    _
  $region13: #{_lambda_.174} parent=0 // pred_fallthru
    _
  // Predicated region
  $region14: #{_lambda_.174} parent=0 // pred_check
    _
  $region15: #{_lambda_.174} parent=0 // pred_check_branch
    %16 = sbr.rel (0) target = $region17
  $region16: #{_lambda_.174} parent=0 // pred_region
    _
  $region17: #{_lambda_.174} parent=0 // pred_fallthru
    _
  %v18 = vld [vmem:[%s0] sm:$0xf]
  %v19 = vld [vmem:[%s0 + $0x4] sm:$0xf]
  %v20 = vld [vmem:[%s1] sm:$0xf]
  %v21 = vld [vmem:[%s1 + $0x4] sm:$0xf]
  %s22 = scalar_lea.vmem %s0, 8
  %v23 = vld [vmem:[%s22] sm:$0xf]
  %v24 = vld [vmem:[%s22 + $0x4] sm:$0xf]
  %s25 = scalar_lea.vmem %s1, 8
  %v26 = vld [vmem:[%s25] sm:$0xf]
  %v27 = vld [vmem:[%s25 + $0x4] sm:$0xf]
  %v30 = vunpack.c.l.b16 %v23
  %v31 = vunpack.c.l.b16 %v24
  %v32 = vpack.c.b16 %v31, %v30
  %v35 = vunpack.c.l.b16 %v26
  %v36 = vunpack.c.l.b16 %v27
  %v37 = vpack.c.b16 %v36, %v35
  %vm39 = vcmask 130048
  %v41 = vsel %vm39, %v32, 0
  %43 = vmatprep.subr.bf16.mxu0 0
  %44 = vmatpush1.bf16.msra.mxu0 %v37
  %45 = vmatprep.subr.bf16.mxu0 0
  %46 = vmatpush1.bf16.msra.mxu0 0
  %47 = vmatprep.subr.bf16.mxu0 0
  %48 = vmatpush1.bf16.msra.mxu0 0
  %49 = vmatprep.subr.bf16.mxu0 0
  %50 = vmatpush1.bf16.msra.mxu0 0
  %51 = vmatprep.subr.bf16.mxu0 0
  %52 = vmatpush1.bf16.msra.mxu0 0
  %53 = vmatprep.subr.bf16.mxu0 0
  %54 = vmatpush1.bf16.msra.mxu0 0
  %55 = vmatprep.subr.bf16.mxu0 0
  %56 = vmatpush1.bf16.msra.mxu0 0
  %57 = vmatprep.subr.bf16.mxu0 0
  %58 = vmatpush1.bf16.msra.mxu0 0
  %59 = vmatprep.subr.bf16.mxu0 0
  %60 = vmatpush1.bf16.msra.mxu0 0
  %61 = vmatprep.subr.bf16.mxu0 0
  %62 = vmatpush1.bf16.msra.mxu0 0
  %63 = vmatprep.subr.bf16.mxu0 0
  %64 = vmatpush1.bf16.msra.mxu0 0
  %65 = vmatprep.subr.bf16.mxu0 0
  %66 = vmatpush1.bf16.msra.mxu0 0
  %67 = vmatprep.subr.bf16.mxu0 0
  %68 = vmatpush1.bf16.msra.mxu0 0
  %69 = vmatprep.subr.bf16.mxu0 0
  %70 = vmatpush1.bf16.msra.mxu0 0
  %71 = vmatprep.subr.bf16.mxu0 0
  %72 = vmatpush1.bf16.msra.mxu0 0
  %73 = vmatprep.subr.bf16.mxu0 0
  %74 = vmatpush1.bf16.msra.mxu0 0
  %75 = vmatprep.mubr.bf16.mxu0 0
  %76 = vmatmul.mubr.bf16.gmra.mrb[0].mxu0 %v41
  %v77 = vpop.f32.mrb[0].mxu0
  %v78 = vadd.f32 0.0, %v77
  %v79 = vpop.f32.mrb[0].mxu0
  %v80 = vpop.f32.mrb[0].mxu0
  %v81 = vadd.f32 0.0, %v80
  %v82 = vpop.f32.mrb[0].mxu0
  %83 = vdwg.mxu0
  %v86 = vunpack.c.l.b16 %v18
  %v87 = vunpack.c.l.b16 %v19
  %v88 = vpack.c.b16 %v87, %v86
  %v91 = vunpack.c.l.b16 %v20
  %v92 = vunpack.c.l.b16 %v21
  %v93 = vpack.c.b16 %v92, %v91
  %v96 = vsel %vm39, %v88, 0
  %98 = vmatprep.subr.bf16.mxu0 0
  %99 = vmatpush1.bf16.msra.mxu0 %v93
  %100 = vmatprep.subr.bf16.mxu0 0
  %101 = vmatpush1.bf16.msra.mxu0 0
  %102 = vmatprep.subr.bf16.mxu0 0
  %103 = vmatpush1.bf16.msra.mxu0 0
  %104 = vmatprep.subr.bf16.mxu0 0
  %105 = vmatpush1.bf16.msra.mxu0 0
  %106 = vmatprep.subr.bf16.mxu0 0
  %107 = vmatpush1.bf16.msra.mxu0 0
  %108 = vmatprep.subr.bf16.mxu0 0
  %109 = vmatpush1.bf16.msra.mxu0 0
  %110 = vmatprep.subr.bf16.mxu0 0
  %111 = vmatpush1.bf16.msra.mxu0 0
  %112 = vmatprep.subr.bf16.mxu0 0
  %113 = vmatpush1.bf16.msra.mxu0 0
  %114 = vmatprep.subr.bf16.mxu0 0
  %115 = vmatpush1.bf16.msra.mxu0 0
  %116 = vmatprep.subr.bf16.mxu0 0
  %117 = vmatpush1.bf16.msra.mxu0 0
  %118 = vmatprep.subr.bf16.mxu0 0
  %119 = vmatpush1.bf16.msra.mxu0 0
  %120 = vmatprep.subr.bf16.mxu0 0
  %121 = vmatpush1.bf16.msra.mxu0 0
  %122 = vmatprep.subr.bf16.mxu0 0
  %123 = vmatpush1.bf16.msra.mxu0 0
  %124 = vmatprep.subr.bf16.mxu0 0
  %125 = vmatpush1.bf16.msra.mxu0 0
  %126 = vmatprep.subr.bf16.mxu0 0
  %127 = vmatpush1.bf16.msra.mxu0 0
  %128 = vmatprep.subr.bf16.mxu0 0
  %129 = vmatpush1.bf16.msra.mxu0 0
  %130 = vmatprep.mubr.bf16.mxu0 0
  %131 = vmatmul.mubr.bf16.gmra.mrb[0].mxu0 %v96
  %v132 = vpop.f32.mrb[0].mxu0
  %v133 = vadd.f32 %v78, %v132
  %v134 = vpop.f32.mrb[0].mxu0
  %v135 = vpop.f32.mrb[0].mxu0
  %v136 = vadd.f32 %v81, %v135
  %v137 = vpop.f32.mrb[0].mxu0
  %138 = vdwg.mxu0
  %s139 = scalar_lea.vmem %s0, 16
  %v140 = vld [vmem:[%s139] sm:$0xf]
  %v141 = vld [vmem:[%s139 + $0x4] sm:$0xf]
  %s142 = scalar_lea.vmem %s1, 16
  %v143 = vld [vmem:[%s142] sm:$0xf]
  %v144 = vld [vmem:[%s142 + $0x4] sm:$0xf]
  %v147 = vunpack.c.l.b16 %v140
  %v148 = vunpack.c.l.b16 %v141
  %v149 = vpack.c.b16 %v148, %v147
  %v152 = vunpack.c.l.b16 %v143
  %v153 = vunpack.c.l.b16 %v144
  %v154 = vpack.c.b16 %v153, %v152
  %v157 = vsel %vm39, %v149, 0
  %159 = vmatprep.subr.bf16.mxu0 0
  %160 = vmatpush1.bf16.msra.mxu0 %v154
  %161 = vmatprep.subr.bf16.mxu0 0
  %162 = vmatpush1.bf16.msra.mxu0 0
  %163 = vmatprep.subr.bf16.mxu0 0
  %164 = vmatpush1.bf16.msra.mxu0 0
  %165 = vmatprep.subr.bf16.mxu0 0
  %166 = vmatpush1.bf16.msra.mxu0 0
  %167 = vmatprep.subr.bf16.mxu0 0
  %168 = vmatpush1.bf16.msra.mxu0 0
  %169 = vmatprep.subr.bf16.mxu0 0
  %170 = vmatpush1.bf16.msra.mxu0 0
  %171 = vmatprep.subr.bf16.mxu0 0
  %172 = vmatpush1.bf16.msra.mxu0 0
  %173 = vmatprep.subr.bf16.mxu0 0
  %174 = vmatpush1.bf16.msra.mxu0 0
  %175 = vmatprep.subr.bf16.mxu0 0
  %176 = vmatpush1.bf16.msra.mxu0 0
  %177 = vmatprep.subr.bf16.mxu0 0
  %178 = vmatpush1.bf16.msra.mxu0 0
  %179 = vmatprep.subr.bf16.mxu0 0
  %180 = vmatpush1.bf16.msra.mxu0 0
  %181 = vmatprep.subr.bf16.mxu0 0
  %182 = vmatpush1.bf16.msra.mxu0 0
  %183 = vmatprep.subr.bf16.mxu0 0
  %184 = vmatpush1.bf16.msra.mxu0 0
  %185 = vmatprep.subr.bf16.mxu0 0
  %186 = vmatpush1.bf16.msra.mxu0 0
  %187 = vmatprep.subr.bf16.mxu0 0
  %188 = vmatpush1.bf16.msra.mxu0 0
  %189 = vmatprep.subr.bf16.mxu0 0
  %190 = vmatpush1.bf16.msra.mxu0 0
  %191 = vmatprep.mubr.bf16.mxu0 0
  %192 = vmatmul.mubr.bf16.gmra.mrb[0].mxu0 %v157
  %v193 = vpop.f32.mrb[0].mxu0
  %v194 = vadd.f32 0.0, %v193
  %v195 = vpop.f32.mrb[0].mxu0
  %v196 = vpop.f32.mrb[0].mxu0
  %v197 = vadd.f32 0.0, %v196
  %v198 = vpop.f32.mrb[0].mxu0
  %199 = vdwg.mxu0
  %v200 = vadd.f32 %v133, %v194
  %v201 = vadd.f32 %v136, %v197
  %s202 = scalar_lea.vmem %s0, 24
  %v203 = vld [vmem:[%s202] sm:$0xf]
  %v204 = vld [vmem:[%s202 + $0x4] sm:$0xf]
  %s205 = scalar_lea.vmem %s1, 24
  %v206 = vld [vmem:[%s205] sm:$0xf]
  %v207 = vld [vmem:[%s205 + $0x4] sm:$0xf]
  %v210 = vunpack.c.l.b16 %v203
  %v211 = vunpack.c.l.b16 %v204
  %v212 = vpack.c.b16 %v211, %v210
  %v215 = vunpack.c.l.b16 %v206
  %v216 = vunpack.c.l.b16 %v207
  %v217 = vpack.c.b16 %v216, %v215
  %v220 = vsel %vm39, %v212, 0
  %222 = vmatprep.subr.bf16.mxu0 0
  %223 = vmatpush1.bf16.msra.mxu0 %v217
  %224 = vmatprep.subr.bf16.mxu0 0
  %225 = vmatpush1.bf16.msra.mxu0 0
  %226 = vmatprep.subr.bf16.mxu0 0
  %227 = vmatpush1.bf16.msra.mxu0 0
  %228 = vmatprep.subr.bf16.mxu0 0
  %229 = vmatpush1.bf16.msra.mxu0 0
  %230 = vmatprep.subr.bf16.mxu0 0
  %231 = vmatpush1.bf16.msra.mxu0 0
  %232 = vmatprep.subr.bf16.mxu0 0
  %233 = vmatpush1.bf16.msra.mxu0 0
  %234 = vmatprep.subr.bf16.mxu0 0
  %235 = vmatpush1.bf16.msra.mxu0 0
  %236 = vmatprep.subr.bf16.mxu0 0
  %237 = vmatpush1.bf16.msra.mxu0 0
  %238 = vmatprep.subr.bf16.mxu0 0
  %239 = vmatpush1.bf16.msra.mxu0 0
  %240 = vmatprep.subr.bf16.mxu0 0
  %241 = vmatpush1.bf16.msra.mxu0 0
  %242 = vmatprep.subr.bf16.mxu0 0
  %243 = vmatpush1.bf16.msra.mxu0 0
  %244 = vmatprep.subr.bf16.mxu0 0
  %245 = vmatpush1.bf16.msra.mxu0 0
  %246 = vmatprep.subr.bf16.mxu0 0
  %247 = vmatpush1.bf16.msra.mxu0 0
  %248 = vmatprep.subr.bf16.mxu0 0
  %249 = vmatpush1.bf16.msra.mxu0 0
  %250 = vmatprep.subr.bf16.mxu0 0
  %251 = vmatpush1.bf16.msra.mxu0 0
  %252 = vmatprep.subr.bf16.mxu0 0
  %253 = vmatpush1.bf16.msra.mxu0 0
  %254 = vmatprep.mubr.bf16.mxu0 0
  %255 = vmatmul.mubr.bf16.gmra.mrb[0].mxu0 %v220
  %v256 = vpop.f32.mrb[0].mxu0
  %v257 = vadd.f32 0.0, %v256
  %v258 = vpop.f32.mrb[0].mxu0
  %v259 = vpop.f32.mrb[0].mxu0
  %v260 = vadd.f32 0.0, %v259
  %v261 = vpop.f32.mrb[0].mxu0
  %262 = vdwg.mxu0
  %v263 = vadd.f32 %v200, %v257
  %v264 = vadd.f32 %v201, %v260
  %v265 = vld [vmem:[%s2] sm:$0x1]
  %v267 = vlaneseq
  %v268 = vshrl.u32 %v267, 7
  %v269 = vsub.s32 0, %v268
  %v270 = vrot.slane %v265, %v269
  %v272 = vmul.f32 %v263, %v270
  %v273 = vmul.f32 %v264, %v270
  %v274 = vld [vmem:[%s3] sm:$0x1]
  %v276 = vlaneseq
  %v277 = vshrl.u32 %v276, 7
  %v278 = vsub.s32 0, %v277
  %v279 = vrot.slane %v274, %v278
  %v281 = vadd.f32 %v272, %v279
  %v282 = vadd.f32 %v273, %v279
  %v283 = vmax.f32 %v281, 0.0
  %v284 = vmax.f32 %v282, 0.0
  %v285 = vpack.c.bf16 %v284, %v283
  %v287 = vunpack.c.l.b16 %v285
  %v288 = vunpack.c.h.b16 %v285
  %v289 = vpack.c.b16 %v287, %v287
  %v290 = vpack.c.b16 %v288, %v288
  %vm293 = vcmask 519168
  %294 = vst.msk [vmem:[%s4] sm:$0xf] %vm293, %v289
  %295 = vst.msk [vmem:[%s4 + $0x4] sm:$0xf] %vm293, %v290
  // Predicated region
  $region18: #{_lambda_.174} parent=0 // pred_check
    _
  $region19: #{_lambda_.174} parent=0 // pred_check_branch
    %297 = sbr.rel (0) target = $region21
  $region20: #{_lambda_.174} parent=0 // pred_region
    _
  $region21: #{_lambda_.174} parent=0 // pred_fallthru
    _
  // Predicated region
  $region22: #{_lambda_.174} parent=0 // pred_check
    _
  $region23: #{_lambda_.174} parent=0 // pred_check_branch
    %299 = sbr.rel (0) target = $region25
  $region24: #{_lambda_.174} parent=0 // pred_region
    _
  $region25: #{_lambda_.174} parent=0 // pred_fallthru
    _

// kernel: _lambda_.175
$region0: #{_lambda_.175}
  #allocation0 [shape = 'u32[]', space=smem, size = 0x4, offset = 0x4, fixed_abs, tag = 'smem constant byte address 0x4 - core index']
  #allocation1 [shape = 'u32[144,128]{1,0:T(1,128)}', space=vmem, size = 0x12000, scoped, tag = 'internal scratch']
  %s0 = inlined_call_operand.vmem [shape: bf16[1,16,64], index: 0, kind: input, shape index: {}]
  %s1 = inlined_call_operand.vmem [shape: bf16[1,64,64], index: 1, kind: input, shape index: {}]
  %s2 = inlined_call_operand.vmem [shape: f32[1,64], index: 2, kind: input, shape index: {}]
  %s3 = inlined_call_operand.vmem [shape: f32[1,64], index: 3, kind: input, shape index: {}]
  %s4 = inlined_call_operand.vmem [shape: bf16[16,64], index: 4, kind: input, shape index: {}]
  %s5 = inlined_call_operand.vmem [shape: bf16[16,64], index: 5, kind: output, shape index: {}]
  %s6 = sld [smem:[#allocation0]]
  $region30: #{_lambda_.175} parent=0
    _
  %s8 = ssub.s32 1, %s6
  %s9 = scalar_select 0, %s8, %s6
  // Predicated region
  $region2: #{_lambda_.175} parent=0 // pred_check
    _
  $region3: #{_lambda_.175} parent=0 // pred_check_branch
    %11 = sbr.rel (0) target = $region5
  $region4: #{_lambda_.175} parent=0 // pred_region
    _
  $region5: #{_lambda_.175} parent=0 // pred_fallthru
    _
  // Predicated region
  $region6: #{_lambda_.175} parent=0 // pred_check
    _
  $region7: #{_lambda_.175} parent=0 // pred_check_branch
    %13 = sbr.rel (0) target = $region9
  $region8: #{_lambda_.175} parent=0 // pred_region
    _
  $region9: #{_lambda_.175} parent=0 // pred_fallthru
    _
  // Predicated region
  $region10: #{_lambda_.175} parent=0 // pred_check
    _
  $region11: #{_lambda_.175} parent=0 // pred_check_branch
    %15 = sbr.rel (0) target = $region13
  $region12: #{_lambda_.175} parent=0 // pred_region
    _
  $region13: #{_lambda_.175} parent=0 // pred_fallthru
    _
  // Predicated region
  $region14: #{_lambda_.175} parent=0 // pred_check
    _
  $region15: #{_lambda_.175} parent=0 // pred_check_branch
    %17 = sbr.rel (0) target = $region17
  $region16: #{_lambda_.175} parent=0 // pred_region
    _
  $region17: #{_lambda_.175} parent=0 // pred_fallthru
    _
  // Predicated region
  $region18: #{_lambda_.175} parent=0 // pred_check
    _
  $region19: #{_lambda_.175} parent=0 // pred_check_branch
    %19 = sbr.rel (0) target = $region21
  $region20: #{_lambda_.175} parent=0 // pred_region
    _
  $region21: #{_lambda_.175} parent=0 // pred_fallthru
    _
  %v21 = vld [vmem:[%s0] sm:$0xf]
  %v22 = vld [vmem:[%s0 + $0x4] sm:$0xf]
  %v23 = vld [vmem:[%s1] sm:$0xf]
  %v24 = vld [vmem:[%s1 + $0x4] sm:$0xf]
  %v25 = vld [vmem:[%s1 + $0x8] sm:$0xf]
  %v26 = vld [vmem:[%s1 + $0xc] sm:$0xf]
  %v27 = vld [vmem:[%s1 + $0x10] sm:$0xf]
  %v28 = vld [vmem:[%s1 + $0x14] sm:$0xf]
  %v29 = vld [vmem:[%s1 + $0x18] sm:$0xf]
  %v30 = vld [vmem:[%s1 + $0x1c] sm:$0xf]
  %v33 = vunpack.c.l.b16 %v21
  %v34 = vunpack.c.l.b16 %v22
  %v35 = vpack.c.b16 %v34, %v33
  %v44 = vunpack.c.l.b16 %v23
  %v45 = vunpack.c.l.b16 %v24
  %v46 = vunpack.c.l.b16 %v25
  %v47 = vunpack.c.l.b16 %v26
  %v48 = vunpack.c.l.b16 %v27
  %v49 = vunpack.c.l.b16 %v28
  %v50 = vunpack.c.l.b16 %v29
  %v51 = vunpack.c.l.b16 %v30
  %v52 = vpack.c.b16 %v45, %v44
  %v53 = vpack.c.b16 %v47, %v46
  %v54 = vpack.c.b16 %v49, %v48
  %v55 = vpack.c.b16 %v51, %v50
  %vm60 = vcmask 523264
  %v62 = vsel %vm60, %v35, 0
  %64 = vmatprep.subr.bf16.mxu0 0
  %65 = vmatpush1.bf16.msra.mxu0 %v52
  %66 = vmatprep.subr.bf16.mxu0 0
  %67 = vmatpush1.bf16.msra.mxu0 %v53
  %68 = vmatprep.subr.bf16.mxu0 0
  %69 = vmatpush1.bf16.msra.mxu0 %v54
  %70 = vmatprep.subr.bf16.mxu0 0
  %71 = vmatpush1.bf16.msra.mxu0 %v55
  %72 = vmatprep.subr.bf16.mxu0 0
  %73 = vmatpush1.bf16.msra.mxu0 0
  %74 = vmatprep.subr.bf16.mxu0 0
  %75 = vmatpush1.bf16.msra.mxu0 0
  %76 = vmatprep.subr.bf16.mxu0 0
  %77 = vmatpush1.bf16.msra.mxu0 0
  %78 = vmatprep.subr.bf16.mxu0 0
  %79 = vmatpush1.bf16.msra.mxu0 0
  %80 = vmatprep.subr.bf16.mxu0 0
  %81 = vmatpush1.bf16.msra.mxu0 0
  %82 = vmatprep.subr.bf16.mxu0 0
  %83 = vmatpush1.bf16.msra.mxu0 0
  %84 = vmatprep.subr.bf16.mxu0 0
  %85 = vmatpush1.bf16.msra.mxu0 0
  %86 = vmatprep.subr.bf16.mxu0 0
  %87 = vmatpush1.bf16.msra.mxu0 0
  %88 = vmatprep.subr.bf16.mxu0 0
  %89 = vmatpush1.bf16.msra.mxu0 0
  %90 = vmatprep.subr.bf16.mxu0 0
  %91 = vmatpush1.bf16.msra.mxu0 0
  %92 = vmatprep.subr.bf16.mxu0 0
  %93 = vmatpush1.bf16.msra.mxu0 0
  %94 = vmatprep.subr.bf16.mxu0 0
  %95 = vmatpush1.bf16.msra.mxu0 0
  %96 = vmatprep.mubr.bf16.mxu0 0
  %97 = vmatmul.mubr.bf16.gmra.mrb[0].mxu0 %v62
  %v98 = vpop.f32.mrb[0].mxu0
  %v99 = vadd.f32 0.0, %v98
  %v100 = vpop.f32.mrb[0].mxu0
  %v101 = vpop.f32.mrb[0].mxu0
  %v102 = vadd.f32 0.0, %v101
  %v103 = vpop.f32.mrb[0].mxu0
  %104 = vdwg.mxu0
  %v105 = vld [vmem:[%s2] sm:$0x1]
  %v107 = vlaneseq
  %v108 = vshrl.u32 %v107, 7
  %v109 = vsub.s32 0, %v108
  %v110 = vrot.slane %v105, %v109
  %v112 = vmul.f32 %v99, %v110
  %v113 = vmul.f32 %v102, %v110
  %v114 = vld [vmem:[%s3] sm:$0x1]
  %v116 = vlaneseq
  %v117 = vshrl.u32 %v116, 7
  %v118 = vsub.s32 0, %v117
  %v119 = vrot.slane %v114, %v118
  %v121 = vadd.f32 %v112, %v119
  %v122 = vadd.f32 %v113, %v119
  %v123 = vld [vmem:[%s4] sm:$0xf]
  %v124 = vld [vmem:[%s4 + $0x4] sm:$0xf]
  %v125 = vunpack.c.l.bf16 %v123
  %v126 = vunpack.c.l.bf16 %v124
  %v127 = vadd.f32 %v121, %v125
  %v128 = vadd.f32 %v122, %v126
  %v129 = vmax.f32 %v127, 0.0
  %v130 = vmax.f32 %v128, 0.0
  %v131 = vpack.c.bf16 %v130, %v129
  %v133 = vunpack.c.l.b16 %v131
  %v134 = vunpack.c.h.b16 %v131
  %v135 = vpack.c.b16 %v133, %v133
  %v136 = vpack.c.b16 %v134, %v134
  %vm139 = vcmask 519168
  %140 = vst.msk [vmem:[%s5] sm:$0xf] %vm139, %v135
  %141 = vst.msk [vmem:[%s5 + $0x4] sm:$0xf] %vm139, %v136
  // Predicated region
  $region22: #{_lambda_.175} parent=0 // pred_check
    _
  $region23: #{_lambda_.175} parent=0 // pred_check_branch
    %143 = sbr.rel (0) target = $region25
  $region24: #{_lambda_.175} parent=0 // pred_region
    _
  $region25: #{_lambda_.175} parent=0 // pred_fallthru
    _
  // Predicated region
  $region26: #{_lambda_.175} parent=0 // pred_check
    _
  $region27: #{_lambda_.175} parent=0 // pred_check_branch
    %145 = sbr.rel (0) target = $region29
  $region28: #{_lambda_.175} parent=0 // pred_region
    _
  $region29: #{_lambda_.175} parent=0 // pred_fallthru
    _

// kernel: _lambda_.179
$region0: #{_lambda_.179}
  #allocation0 [shape = 'u32[]', space=smem, size = 0x4, offset = 0x4, fixed_abs, tag = 'smem constant byte address 0x4 - core index']
  #allocation1 [shape = 'u32[144,128]{1,0:T(1,128)}', space=vmem, size = 0x12000, scoped, tag = 'internal scratch']
  %s0 = inlined_call_operand.vmem [shape: bf16[1,16,64], index: 0, kind: input, shape index: {}]
  %s1 = inlined_call_operand.vmem [shape: bf16[1,64,64], index: 1, kind: input, shape index: {}]
  %s2 = inlined_call_operand.vmem [shape: f32[1,64], index: 2, kind: input, shape index: {}]
  %s3 = inlined_call_operand.vmem [shape: f32[1,64], index: 3, kind: input, shape index: {}]
  %s4 = inlined_call_operand.vmem [shape: f32[16,64], index: 4, kind: output, shape index: {}]
  %s5 = sld [smem:[#allocation0]]
  $region26: #{_lambda_.179} parent=0
    _
  %s7 = ssub.s32 1, %s5
  %s8 = scalar_select 0, %s7, %s5
  // Predicated region
  $region2: #{_lambda_.179} parent=0 // pred_check
    _
  $region3: #{_lambda_.179} parent=0 // pred_check_branch
    %10 = sbr.rel (0) target = $region5
  $region4: #{_lambda_.179} parent=0 // pred_region
    _
  $region5: #{_lambda_.179} parent=0 // pred_fallthru
    _
  // Predicated region
  $region6: #{_lambda_.179} parent=0 // pred_check
    _
  $region7: #{_lambda_.179} parent=0 // pred_check_branch
    %12 = sbr.rel (0) target = $region9
  $region8: #{_lambda_.179} parent=0 // pred_region
    _
  $region9: #{_lambda_.179} parent=0 // pred_fallthru
    _
  // Predicated region
  $region10: #{_lambda_.179} parent=0 // pred_check
    _
  $region11: #{_lambda_.179} parent=0 // pred_check_branch
    %14 = sbr.rel (0) target = $region13
  $region12: #{_lambda_.179} parent=0 // pred_region
    _
  $region13: #{_lambda_.179} parent=0 // pred_fallthru
    _
  // Predicated region
  $region14: #{_lambda_.179} parent=0 // pred_check
    _
  $region15: #{_lambda_.179} parent=0 // pred_check_branch
    %16 = sbr.rel (0) target = $region17
  $region16: #{_lambda_.179} parent=0 // pred_region
    _
  $region17: #{_lambda_.179} parent=0 // pred_fallthru
    _
  %v18 = vld [vmem:[%s0] sm:$0xf]
  %v19 = vld [vmem:[%s0 + $0x4] sm:$0xf]
  %v20 = vld [vmem:[%s1] sm:$0xf]
  %v21 = vld [vmem:[%s1 + $0x4] sm:$0xf]
  %v22 = vld [vmem:[%s1 + $0x8] sm:$0xf]
  %v23 = vld [vmem:[%s1 + $0xc] sm:$0xf]
  %v24 = vld [vmem:[%s1 + $0x10] sm:$0xf]
  %v25 = vld [vmem:[%s1 + $0x14] sm:$0xf]
  %v26 = vld [vmem:[%s1 + $0x18] sm:$0xf]
  %v27 = vld [vmem:[%s1 + $0x1c] sm:$0xf]
  %v30 = vunpack.c.l.b16 %v18
  %v31 = vunpack.c.l.b16 %v19
  %v32 = vpack.c.b16 %v31, %v30
  %v41 = vunpack.c.l.b16 %v20
  %v42 = vunpack.c.l.b16 %v21
  %v43 = vunpack.c.l.b16 %v22
  %v44 = vunpack.c.l.b16 %v23
  %v45 = vunpack.c.l.b16 %v24
  %v46 = vunpack.c.l.b16 %v25
  %v47 = vunpack.c.l.b16 %v26
  %v48 = vunpack.c.l.b16 %v27
  %v49 = vpack.c.b16 %v42, %v41
  %v50 = vpack.c.b16 %v44, %v43
  %v51 = vpack.c.b16 %v46, %v45
  %v52 = vpack.c.b16 %v48, %v47
  %vm57 = vcmask 523264
  %v59 = vsel %vm57, %v32, 0
  %61 = vmatprep.subr.bf16.mxu0 0
  %62 = vmatpush1.bf16.msra.mxu0 %v49
  %63 = vmatprep.subr.bf16.mxu0 0
  %64 = vmatpush1.bf16.msra.mxu0 %v50
  %65 = vmatprep.subr.bf16.mxu0 0
  %66 = vmatpush1.bf16.msra.mxu0 %v51
  %67 = vmatprep.subr.bf16.mxu0 0
  %68 = vmatpush1.bf16.msra.mxu0 %v52
  %69 = vmatprep.subr.bf16.mxu0 0
  %70 = vmatpush1.bf16.msra.mxu0 0
  %71 = vmatprep.subr.bf16.mxu0 0
  %72 = vmatpush1.bf16.msra.mxu0 0
  %73 = vmatprep.subr.bf16.mxu0 0
  %74 = vmatpush1.bf16.msra.mxu0 0
  %75 = vmatprep.subr.bf16.mxu0 0
  %76 = vmatpush1.bf16.msra.mxu0 0
  %77 = vmatprep.subr.bf16.mxu0 0
  %78 = vmatpush1.bf16.msra.mxu0 0
  %79 = vmatprep.subr.bf16.mxu0 0
  %80 = vmatpush1.bf16.msra.mxu0 0
  %81 = vmatprep.subr.bf16.mxu0 0
  %82 = vmatpush1.bf16.msra.mxu0 0
  %83 = vmatprep.subr.bf16.mxu0 0
  %84 = vmatpush1.bf16.msra.mxu0 0
  %85 = vmatprep.subr.bf16.mxu0 0
  %86 = vmatpush1.bf16.msra.mxu0 0
  %87 = vmatprep.subr.bf16.mxu0 0
  %88 = vmatpush1.bf16.msra.mxu0 0
  %89 = vmatprep.subr.bf16.mxu0 0
  %90 = vmatpush1.bf16.msra.mxu0 0
  %91 = vmatprep.subr.bf16.mxu0 0
  %92 = vmatpush1.bf16.msra.mxu0 0
  %93 = vmatprep.mubr.bf16.mxu0 0
  %94 = vmatmul.mubr.bf16.gmra.mrb[0].mxu0 %v59
  %v95 = vpop.f32.mrb[0].mxu0
  %v96 = vadd.f32 0.0, %v95
  %v97 = vpop.f32.mrb[0].mxu0
  %v98 = vpop.f32.mrb[0].mxu0
  %v99 = vadd.f32 0.0, %v98
  %v100 = vpop.f32.mrb[0].mxu0
  %101 = vdwg.mxu0
  %v102 = vld [vmem:[%s2] sm:$0x1]
  %v104 = vlaneseq
  %v105 = vshrl.u32 %v104, 7
  %v106 = vsub.s32 0, %v105
  %v107 = vrot.slane %v102, %v106
  %v109 = vmul.f32 %v96, %v107
  %v110 = vmul.f32 %v99, %v107
  %v111 = vld [vmem:[%s3] sm:$0x1]
  %v113 = vlaneseq
  %v114 = vshrl.u32 %v113, 7
  %v115 = vsub.s32 0, %v114
  %v116 = vrot.slane %v111, %v115
  %v118 = vadd.f32 %v109, %v116
  %v119 = vadd.f32 %v110, %v116
  %120 = vst.msk [vmem:[%s4] sm:$0xff] %vm57, %v118
  %121 = vst.msk [vmem:[%s4 + $0x8] sm:$0xff] %vm57, %v119
  // Predicated region
  $region18: #{_lambda_.179} parent=0 // pred_check
    _
  $region19: #{_lambda_.179} parent=0 // pred_check_branch
    %123 = sbr.rel (0) target = $region21
  $region20: #{_lambda_.179} parent=0 // pred_region
    _
  $region21: #{_lambda_.179} parent=0 // pred_fallthru
    _
  // Predicated region
  $region22: #{_lambda_.179} parent=0 // pred_check
    _
  $region23: #{_lambda_.179} parent=0 // pred_check_branch
    %125 = sbr.rel (0) target = $region25
  $region24: #{_lambda_.179} parent=0 // pred_region
    _
  $region25: #{_lambda_.179} parent=0 // pred_fallthru
    _

</llo_original>
